<compile_context>
chip_gen: v7x
topology: tpu7x:2x2x1
jax: 0.10.0
libtpu: 0.0.40
codegen_flags: <defaults>
</compile_context>

<pallas_src>
import math

import jax
import jax.numpy as jnp
import numpy as np
from jax.experimental import pallas as pl
from jax.experimental.pallas import tpu as pltpu

# ---- dims from the PyTorch module -------------------------------------------------
WHOLE_CONDITION_DIM = 12 + 12 + 12 + 4 + 4          # 44
VALID_MIDI_COUNT = 18                               # not defined in the snippet; assumption
WHOLE_X_DIM = 2 + VALID_MIDI_COUNT                  # 20
INPUT_DIM = WHOLE_X_DIM + WHOLE_CONDITION_DIM       # 64

HALF_HIDDEN = 32                                    # half_hidden_size
HIDDEN_DIM = HALF_HIDDEN * 2                        # hidden_dim
LSTM_HIDDEN = HIDDEN_DIM // 2                       # per-direction hidden (== half_hidden_size)
NUM_LAYERS = 2

NOTES_PER_BAR = 16
N_BLK_MAX = 256                                     # bars per grid step


def _round_up(x, m):
    return ((x + m - 1) // m) * m


# ---- fused multi-layer bidirectional LSTM kernel -----------------------------------
def _make_bilstm_kernel(num_layers, T, H, n_blk, in_dim):
    H2, H3, H4, H8 = 2 * H, 3 * H, 4 * H, 8 * H

    def kernel(x_ref, *args):
        # args = [w_in_0, bias_0, whh_0, ..., out_ref, xw_sc, hseq_sc]
        nw = 3 * num_layers
        w_refs = args[:nw]
        out_ref = args[nw]
        xw_sc, hseq_sc = args[nw + 1:]

        h_finals = []
        for layer in range(num_layers):
            w_in, bias, whh = w_refs[3 * layer:3 * layer + 3]
            last_layer = layer == num_layers - 1

            # ---- (1) hoisted input projection, batched over time -----------------
            # One (T*n_blk, Din) x (Din, 8H) bf16 MXU matmul; bias added once.
            # Columns: [fwd: i,f,o,2*g | bwd: i,f,o,2*g]; stored time-aligned.
            if layer == 0:
                src = x_ref[...].astype(jnp.bfloat16).reshape(T * n_blk, in_dim)
            else:
                src = hseq_sc[...].reshape(T * n_blk, H2).astype(jnp.bfloat16)
            proj = jnp.dot(src, w_in[...], preferred_element_type=jnp.float32) + bias[...]
            xw_sc[...] = proj.reshape(T, n_blk, H8)

            whh_v = whh[...]                          # (2H, 8H) bf16, block-diag by dir

            # ---- (2) fused bidirectional recurrence (h/c carried as values) ------
            hf = hb = cf = cb = None
            for s in range(T):                        # fully unrolled, static indices
                if s == 0:
                    gf = xw_sc[0, :, :H4]             # h_0 == 0 -> skip the W_hh matmul
                    gb = xw_sc[T - 1, :, H4:]
                else:
                    h_cat = jnp.concatenate([hf, hb], axis=-1).astype(jnp.bfloat16)
                    gh = jnp.dot(h_cat, whh_v, preferred_element_type=jnp.float32)
                    gf = gh[:, :H4] + xw_sc[s, :, :H4]          # fwd sees time s
                    gb = gh[:, H4:] + xw_sc[T - 1 - s, :, H4:]  # bwd sees time T-1-s
                # one sigmoid over the whole 4H gate block per direction;
                # g was pre-scaled by 2 so tanh(g_pre) == 2*sigmoid(2*g_pre) - 1
                sf = jax.nn.sigmoid(gf)
                sb = jax.nn.sigmoid(gb)
                gf_t = 2.0 * sf[:, H3:] - 1.0
                gb_t = 2.0 * sb[:, H3:] - 1.0
                if s == 0:
                    cf = sf[:, :H] * gf_t             # c_0 == 0
                    cb = sb[:, :H] * gb_t
                else:
                    cf = sf[:, H:H2] * cf + sf[:, :H] * gf_t
                    cb = sb[:, H:H2] * cb + sb[:, :H] * gb_t
                hf = sf[:, H2:H3] * jnp.tanh(cf)
                hb = sb[:, H2:H3] * jnp.tanh(cb)
                if not last_layer:
                    # time-aligned inter-layer hidden: hseq[t] = [h_f(t) | h_b(t)]
                    hseq_sc[s, :, :H] = hf
                    hseq_sc[T - 1 - s, :, H:] = hb
            h_finals += [hf, hb]

        # single lane-dense (n_blk, num_layers*2H) store
        out_ref[...] = jnp.concatenate(h_finals, axis=-1).astype(out_ref.dtype)

    return kernel


# ---- parameter init (deterministic, PyTorch layout U(-1/sqrt(H), 1/sqrt(H))) --------
def init_lstm_params(key, input_dim, hidden, num_layers):
    bound = 1.0 / math.sqrt(hidden)
    params = []
    for layer in range(num_layers):
        in_dim = input_dim if layer == 0 else 2 * hidden
        layer_p = {}
        for direction in ("fwd", "bwd"):
            key, k1, k2, k3, k4 = jax.random.split(key, 5)
            w_ih = jax.random.uniform(k1, (4 * hidden, in_dim), jnp.float32, -bound, bound)
            w_hh = jax.random.uniform(k2, (4 * hidden, hidden), jnp.float32, -bound, bound)
            b_ih = jax.random.uniform(k3, (4 * hidden,), jnp.float32, -bound, bound)
            b_hh = jax.random.uniform(k4, (4 * hidden,), jnp.float32, -bound, bound)
            layer_p[direction] = (w_ih, w_hh, b_ih, b_hh)   # torch layout, gate order i,f,g,o
        params.append(layer_p)
    return params


def convert_params_for_kernel(raw_params, hidden):
    """Torch (i,f,g,o) -> kernel layout.

    Per layer: W_in (Din, 8H) bf16, bias (1, 8H) f32, W_hh (2H, 8H) bf16 block-diagonal.
    Columns: [fwd 4H | bwd 4H], gate order (i, f, o, g) within each direction, with the
    g-gate columns scaled by 2 (exact in bf16) so that tanh(z) == 2*sigmoid(2z) - 1 can be
    computed with the same wide sigmoid as i/f/o.
    """
    H = hidden
    reorder = np.concatenate([np.arange(0, H), np.arange(H, 2 * H),
                              np.arange(3 * H, 4 * H), np.arange(2 * H, 3 * H)])
    gscale = np.concatenate([np.ones(3 * H, np.float32),
                             np.full((H,), 2.0, np.float32)])
    flat = []
    for lp in raw_params:
        per_dir = {}
        for d in ("fwd", "bwd"):
            w_ih, w_hh, b_ih, b_hh = lp[d]
            w_in = jnp.transpose(w_ih[reorder]) * gscale          # (Din, 4H)
            u_hh = jnp.transpose(w_hh[reorder]) * gscale          # (H,   4H)
            b = ((b_ih + b_hh)[reorder] * gscale)[None, :]        # (1,   4H)
            per_dir[d] = (w_in, u_hh, b)
        w_in = jnp.concatenate([per_dir["fwd"][0], per_dir["bwd"][0]], axis=1)  # (Din, 8H)
        b = jnp.concatenate([per_dir["fwd"][2], per_dir["bwd"][2]], axis=1)     # (1, 8H)
        whh = jnp.zeros((2 * H, 8 * H), jnp.float32)
        whh = whh.at[:H, :4 * H].set(per_dir["fwd"][1])           # fwd block
        whh = whh.at[H:, 4 * H:].set(per_dir["bwd"][1])           # bwd block
        flat += [w_in.astype(jnp.bfloat16),
                 b.astype(jnp.float32),
                 whh.astype(jnp.bfloat16)]
    return flat


# ---- LocalEncoder.forward -----------------------------------------------------------
def local_encoder_forward(x, raw_params, half_hidden, num_layers):
    """x: (B, L, INPUT_DIM) -> (B, L//16, hidden_dim*num_layers)."""
    B, L, D = x.shape
    if L % NOTES_PER_BAR != 0:
        raise ValueError("sequence length (in notes) must be a multiple of 16")
    H = half_hidden
    T = NOTES_PER_BAR
    N = (B * L) // T
    out_dim = num_layers * 2 * H

    flat_w = convert_params_for_kernel(raw_params, H)

    # batch-first -> bars -> time-major
    x_bars = x.reshape(N, T, D)
    x_tm = jnp.transpose(x_bars, (1, 0, 2)).astype(jnp.float32)    # (T, N, D)

    # Block size: aim for >=2 grid steps (v7x megacore sharding of the "parallel"
    # bar axis) while capping per-block VMEM; remainder-aware to limit padded work.
    half = (N + 1) // 2
    n_blk = min(max(_round_up(half, 8), 8), N_BLK_MAX)
    n_pad = _round_up(N, n_blk)
    if n_pad != N:
        x_tm = jnp.pad(x_tm, ((0, 0), (0, n_pad - N), (0, 0)))

    in_specs = [pl.BlockSpec((T, n_blk, D), lambda n: (0, n, 0))]
    for layer in range(num_layers):
        din = D if layer == 0 else 2 * H
        in_specs += [
            pl.BlockSpec((din, 8 * H), lambda n: (0, 0)),   # W_in  (bf16)
            pl.BlockSpec((1, 8 * H), lambda n: (0, 0)),     # bias  (f32)
            pl.BlockSpec((2 * H, 8 * H), lambda n: (0, 0)),  # W_hh (bf16, block-diag)
        ]

    kernel = _make_bilstm_kernel(num_layers, T, H, n_blk, D)

    out = pl.pallas_call(
        kernel,
        out_shape=jax.ShapeDtypeStruct((n_pad, out_dim), jnp.float32),
        grid=(n_pad // n_blk,),
        in_specs=in_specs,
        out_specs=pl.BlockSpec((n_blk, out_dim), lambda n: (n, 0)),
        scratch_shapes=[
            pltpu.VMEM((T, n_blk, 8 * H), jnp.float32),   # combined x@W_ih (+b), both dirs
            pltpu.VMEM((T, n_blk, 2 * H), jnp.float32),   # inter-layer hidden sequence
        ],
        compiler_params=pltpu.CompilerParams(
            dimension_semantics=("parallel",),
            vmem_limit_bytes=32 * 1024 * 1024,
        ),
    )(x_tm, *flat_w)

    h = out[:N]                                            # drop padded bars
    return h.reshape(B, L // T, out_dim)


# ---- pure-numpy reference (torch conventions; matmul operands rounded to bf16) ------
def _sigmoid(z):
    return 1.0 / (1.0 + np.exp(-z))


def _bf16(a):
    return np.asarray(jnp.asarray(np.asarray(a, np.float32))
                      .astype(jnp.bfloat16).astype(jnp.float32))


def _ref_direction(seq, w_ih, w_hh, b_ih, b_hh):
    N, T, _ = seq.shape
    H = w_hh.shape[1]
    w_ih_b = _bf16(w_ih)
    w_hh_b = _bf16(w_hh)
    b = np.asarray(b_ih + b_hh, np.float32)
    h = np.zeros((N, H), np.float32)
    c = np.zeros((N, H), np.float32)
    hs = []
    for t in range(T):
        g = _bf16(seq[:, t]) @ w_ih_b.T + _bf16(h) @ w_hh_b.T + b
        i = _sigmoid(g[:, 0 * H:1 * H])
        f = _sigmoid(g[:, 1 * H:2 * H])
        gg = np.tanh(g[:, 2 * H:3 * H])
        o = _sigmoid(g[:, 3 * H:4 * H])
        c = f * c + i * gg
        h = o * np.tanh(c)
        hs.append(h)
    return np.stack(hs, axis=1), h


def reference_forward(x, raw_params, hidden, num_layers):
    x = np.asarray(x, np.float32)
    B, L, D = x.shape
    N = (B * L) // 16
    layer_in = x.reshape(N, 16, D)
    h_lasts = []
    for layer in range(num_layers):
        wf = [np.asarray(a) for a in raw_params[layer]["fwd"]]
        wb = [np.asarray(a) for a in raw_params[layer]["bwd"]]
        hseq_f, hlast_f = _ref_direction(layer_in, *wf)
        hseq_b_rev, hlast_b = _ref_direction(layer_in[:, ::-1], *wb)
        hseq_b = hseq_b_rev[:, ::-1]
        layer_in = np.concatenate([hseq_f, hseq_b], axis=-1)
        h_lasts += [hlast_f, hlast_b]                      # torch h order: l0_f, l0_b, l1_f, l1_b
    h = np.stack(h_lasts, axis=0).transpose(1, 0, 2)
    return h.reshape(B, L // 16, 2 * num_layers * hidden)


if __name__ == "__main__":
    key = jax.random.PRNGKey(0)
    pkey, xkey = jax.random.split(key)

    params = init_lstm_params(pkey, INPUT_DIM, LSTM_HIDDEN, NUM_LAYERS)

    B, L = 2, 32                                           # 2 sequences of 2 bars (16 notes/bar)
    x = jax.random.normal(xkey, (B, L, INPUT_DIM), jnp.float32)

    out = local_encoder_forward(x, params, LSTM_HIDDEN, NUM_LAYERS)
    out = jax.block_until_ready(out)

    assert out.shape == (B, L // 16, HIDDEN_DIM * NUM_LAYERS), out.shape

    ref = reference_forward(x, params, LSTM_HIDDEN, NUM_LAYERS)
    # tolerance deliberately relaxed for bf16 MXU operands (f32 accumulation / gate math)
    np.testing.assert_allclose(np.asarray(out), ref, atol=2e-3, rtol=2e-3)

    print("KERNEL_OK")
</pallas_src>

<mosaic_0001>
module attributes {stable_mosaic.version = 11 : i64} {
  func.func @kernel(%arg0: i32, %arg1: memref<16x8x64xf32, #tpu.memory_space<vmem>>, %arg2: memref<64x256xbf16, #tpu.memory_space<vmem>>, %arg3: memref<1x256xf32, #tpu.memory_space<vmem>>, %arg4: memref<64x256xbf16, #tpu.memory_space<vmem>>, %arg5: memref<64x256xbf16, #tpu.memory_space<vmem>>, %arg6: memref<1x256xf32, #tpu.memory_space<vmem>>, %arg7: memref<64x256xbf16, #tpu.memory_space<vmem>>, %arg8: memref<8x128xf32, #tpu.memory_space<vmem>>, %arg9: memref<16x8x256xf32, #tpu.memory_space<vmem>>, %arg10: memref<16x8x64xf32, #tpu.memory_space<vmem>>) attributes {dimension_semantics = [#tpu.dimension_semantics<parallel>], iteration_bounds = array<i64: 1>, scalar_prefetch = 0 : i64, scratch_operands = 2 : i64, tpu.core_type = #tpu.core_type<tc>, window_params = [{transform_indices = @transform_0, window_bounds = array<i64: 16, 8, 64>}, {pipeline_mode = #tpu.pipeline_mode<synchronous>, transform_indices = @transform_1, window_bounds = array<i64: 64, 256>}, {pipeline_mode = #tpu.pipeline_mode<synchronous>, transform_indices = @transform_2, window_bounds = array<i64: 1, 256>}, {pipeline_mode = #tpu.pipeline_mode<synchronous>, transform_indices = @transform_3, window_bounds = array<i64: 64, 256>}, {pipeline_mode = #tpu.pipeline_mode<synchronous>, transform_indices = @transform_4, window_bounds = array<i64: 64, 256>}, {pipeline_mode = #tpu.pipeline_mode<synchronous>, transform_indices = @transform_5, window_bounds = array<i64: 1, 256>}, {pipeline_mode = #tpu.pipeline_mode<synchronous>, transform_indices = @transform_6, window_bounds = array<i64: 64, 256>}, {transform_indices = @transform_7, window_bounds = array<i64: 8, 128>}]} {
    %c0 = arith.constant 0 : index
    %c0_0 = arith.constant 0 : index
    %c0_1 = arith.constant 0 : index
    %0 = vector.load %arg1[%c0, %c0_0, %c0_1] : memref<16x8x64xf32, #tpu.memory_space<vmem>>, vector<16x8x64xf32>
    %1 = arith.truncf %0 : vector<16x8x64xf32> to vector<16x8x64xbf16>
    %2 = vector.shape_cast %1 : vector<16x8x64xbf16> to vector<128x64xbf16>
    %c0_2 = arith.constant 0 : index
    %c0_3 = arith.constant 0 : index
    %3 = vector.load %arg2[%c0_2, %c0_3] : memref<64x256xbf16, #tpu.memory_space<vmem>>, vector<64x256xbf16>
    %cst = arith.constant dense<0.000000e+00> : vector<128x256xf32>
    %4 = tpu.matmul %2, %3, %cst {dimension_numbers = #tpu.dot_dimension_numbers<[1], [0], [0], [1], [0, 0, 1, 1], [], []>} : vector<128x64xbf16>, vector<64x256xbf16>, vector<128x256xf32> -> vector<128x256xf32>
    %c0_4 = arith.constant 0 : index
    %c0_5 = arith.constant 0 : index
    %5 = vector.load %arg3[%c0_4, %c0_5] : memref<1x256xf32, #tpu.memory_space<vmem>>, vector<1x256xf32>
    %6 = vector.broadcast %5 : vector<1x256xf32> to vector<128x256xf32>
    %7 = arith.addf %4, %6 : vector<128x256xf32>
    %8 = vector.shape_cast %7 : vector<128x256xf32> to vector<16x8x256xf32>
    %c0_6 = arith.constant 0 : index
    %c0_7 = arith.constant 0 : index
    %c0_8 = arith.constant 0 : index
    %9 = vector.load %arg9[%c0_6, %c0_7, %c0_8] : memref<16x8x256xf32, #tpu.memory_space<vmem>>, vector<16x8x256xf32>
    tpu.vector_store %arg9[%c0_6, %c0_7, %c0_8], %8 {strides = array<i32>} : memref<16x8x256xf32, #tpu.memory_space<vmem>>, vector<16x8x256xf32>,
    %c0_9 = arith.constant 0 : index
    %c0_10 = arith.constant 0 : index
    %10 = vector.load %arg4[%c0_9, %c0_10] : memref<64x256xbf16, #tpu.memory_space<vmem>>, vector<64x256xbf16>
    %c0_11 = arith.constant 0 : index
    %c0_12 = arith.constant 0 : index
    %c0_13 = arith.constant 0 : index
    %11 = vector.load %arg9[%c0_11, %c0_12, %c0_13] : memref<16x8x256xf32, #tpu.memory_space<vmem>>, vector<1x8x128xf32>
    %12 = vector.shape_cast %11 : vector<1x8x128xf32> to vector<8x128xf32>
    %c15 = arith.constant 15 : index
    %c0_14 = arith.constant 0 : index
    %c128 = arith.constant 128 : index
    %13 = vector.load %arg9[%c15, %c0_14, %c128] : memref<16x8x256xf32, #tpu.memory_space<vmem>>, vector<1x8x128xf32>
    %14 = vector.shape_cast %13 : vector<1x8x128xf32> to vector<8x128xf32>
    %15 = arith.negf %12 : vector<8x128xf32>
    %16 = math.exp %15 : vector<8x128xf32>
    %cst_15 = arith.constant 1.000000e+00 : f32
    %17 = vector.broadcast %cst_15 : f32 to vector<8x128xf32>
    %18 = arith.addf %17, %16 : vector<8x128xf32>
    %19 = arith.divf %17, %18 : vector<8x128xf32>
    %20 = arith.negf %14 : vector<8x128xf32>
    %21 = math.exp %20 : vector<8x128xf32>
    %cst_16 = arith.constant 1.000000e+00 : f32
    %22 = vector.broadcast %cst_16 : f32 to vector<8x128xf32>
    %23 = arith.addf %22, %21 : vector<8x128xf32>
    %24 = arith.divf %22, %23 : vector<8x128xf32>
    %25 = vector.extract_strided_slice %19 {offsets = [0, 96], sizes = [8, 32], strides = [1, 1]} : vector<8x128xf32> to vector<8x32xf32>
    %cst_17 = arith.constant 2.000000e+00 : f32
    %26 = vector.broadcast %cst_17 : f32 to vector<8x32xf32>
    %27 = arith.mulf %26, %25 : vector<8x32xf32>
    %cst_18 = arith.constant 1.000000e+00 : f32
    %28 = vector.broadcast %cst_18 : f32 to vector<8x32xf32>
    %29 = arith.subf %27, %28 : vector<8x32xf32>
    %30 = vector.extract_strided_slice %24 {offsets = [0, 96], sizes = [8, 32], strides = [1, 1]} : vector<8x128xf32> to vector<8x32xf32>
    %cst_19 = arith.constant 2.000000e+00 : f32
    %31 = vector.broadcast %cst_19 : f32 to vector<8x32xf32>
    %32 = arith.mulf %31, %30 : vector<8x32xf32>
    %cst_20 = arith.constant 1.000000e+00 : f32
    %33 = vector.broadcast %cst_20 : f32 to vector<8x32xf32>
    %34 = arith.subf %32, %33 : vector<8x32xf32>
    %35 = vector.extract_strided_slice %19 {offsets = [0, 0], sizes = [8, 32], strides = [1, 1]} : vector<8x128xf32> to vector<8x32xf32>
    %36 = arith.mulf %35, %29 : vector<8x32xf32>
    %37 = vector.extract_strided_slice %24 {offsets = [0, 0], sizes = [8, 32], strides = [1, 1]} : vector<8x128xf32> to vector<8x32xf32>
    %38 = arith.mulf %37, %34 : vector<8x32xf32>
    %39 = vector.extract_strided_slice %19 {offsets = [0, 64], sizes = [8, 32], strides = [1, 1]} : vector<8x128xf32> to vector<8x32xf32>
    %40 = math.tanh %36 : vector<8x32xf32>
    %41 = arith.mulf %39, %40 : vector<8x32xf32>
    %42 = vector.extract_strided_slice %24 {offsets = [0, 64], sizes = [8, 32], strides = [1, 1]} : vector<8x128xf32> to vector<8x32xf32>
    %43 = math.tanh %38 : vector<8x32xf32>
    %44 = arith.mulf %42, %43 : vector<8x32xf32>
    %c0_21 = arith.constant 0 : index
    %c0_22 = arith.constant 0 : index
    %c0_23 = arith.constant 0 : index
    %45 = vector.load %arg10[%c0_21, %c0_22, %c0_23] : memref<16x8x64xf32, #tpu.memory_space<vmem>>, vector<1x8x32xf32>
    %46 = vector.shape_cast %45 : vector<1x8x32xf32> to vector<8x32xf32>
    %47 = vector.shape_cast %41 : vector<8x32xf32> to vector<1x8x32xf32>
    tpu.vector_store %arg10[%c0_21, %c0_22, %c0_23], %47 {strides = array<i32>} : memref<16x8x64xf32, #tpu.memory_space<vmem>>, vector<1x8x32xf32>,
    %c15_24 = arith.constant 15 : index
    %c0_25 = arith.constant 0 : index
    %c32 = arith.constant 32 : index
    %48 = vector.load %arg10[%c15_24, %c0_25, %c32] : memref<16x8x64xf32, #tpu.memory_space<vmem>>, vector<1x8x32xf32>
    %49 = vector.shape_cast %48 : vector<1x8x32xf32> to vector<8x32xf32>
    %50 = vector.shape_cast %44 : vector<8x32xf32> to vector<1x8x32xf32>
    tpu.vector_store %arg10[%c15_24, %c0_25, %c32], %50 {strides = array<i32>} : memref<16x8x64xf32, #tpu.memory_space<vmem>>, vector<1x8x32xf32>,
    %51 = tpu.concatenate %41, %44 in 1 : vector<8x32xf32>, vector<8x32xf32> -> vector<8x64xf32>
    %52 = arith.truncf %51 : vector<8x64xf32> to vector<8x64xbf16>
    %cst_26 = arith.constant dense<0.000000e+00> : vector<8x256xf32>
    %53 = tpu.matmul %52, %10, %cst_26 {dimension_numbers = #tpu.dot_dimension_numbers<[1], [0], [0], [1], [0, 0, 1, 1], [], []>} : vector<8x64xbf16>, vector<64x256xbf16>, vector<8x256xf32> -> vector<8x256xf32>
    %54 = vector.extract_strided_slice %53 {offsets = [0, 0], sizes = [8, 128], strides = [1, 1]} : vector<8x256xf32> to vector<8x128xf32>
    %c1 = arith.constant 1 : index
    %c0_27 = arith.constant 0 : index
    %c0_28 = arith.constant 0 : index
    %55 = vector.load %arg9[%c1, %c0_27, %c0_28] : memref<16x8x256xf32, #tpu.memory_space<vmem>>, vector<1x8x128xf32>
    %56 = vector.shape_cast %55 : vector<1x8x128xf32> to vector<8x128xf32>
    %57 = arith.addf %54, %56 : vector<8x128xf32>
    %58 = vector.extract_strided_slice %53 {offsets = [0, 128], sizes = [8, 128], strides = [1, 1]} : vector<8x256xf32> to vector<8x128xf32>
    %c14 = arith.constant 14 : index
    %c0_29 = arith.constant 0 : index
    %c128_30 = arith.constant 128 : index
    %59 = vector.load %arg9[%c14, %c0_29, %c128_30] : memref<16x8x256xf32, #tpu.memory_space<vmem>>, vector<1x8x128xf32>
    %60 = vector.shape_cast %59 : vector<1x8x128xf32> to vector<8x128xf32>
    %61 = arith.addf %58, %60 : vector<8x128xf32>
    %62 = arith.negf %57 : vector<8x128xf32>
    %63 = math.exp %62 : vector<8x128xf32>
    %cst_31 = arith.constant 1.000000e+00 : f32
    %64 = vector.broadcast %cst_31 : f32 to vector<8x128xf32>
    %65 = arith.addf %64, %63 : vector<8x128xf32>
    %66 = arith.divf %64, %65 : vector<8x128xf32>
    %67 = arith.negf %61 : vector<8x128xf32>
    %68 = math.exp %67 : vector<8x128xf32>
    %cst_32 = arith.constant 1.000000e+00 : f32
    %69 = vector.broadcast %cst_32 : f32 to vector<8x128xf32>
    %70 = arith.addf %69, %68 : vector<8x128xf32>
    %71 = arith.divf %69, %70 : vector<8x128xf32>
    %72 = vector.extract_strided_slice %66 {offsets = [0, 96], sizes = [8, 32], strides = [1, 1]} : vector<8x128xf32> to vector<8x32xf32>
    %cst_33 = arith.constant 2.000000e+00 : f32
    %73 = vector.broadcast %cst_33 : f32 to vector<8x32xf32>
    %74 = arith.mulf %73, %72 : vector<8x32xf32>
    %cst_34 = arith.constant 1.000000e+00 : f32
    %75 = vector.broadcast %cst_34 : f32 to vector<8x32xf32>
    %76 = arith.subf %74, %75 : vector<8x32xf32>
    %77 = vector.extract_strided_slice %71 {offsets = [0, 96], sizes = [8, 32], strides = [1, 1]} : vector<8x128xf32> to vector<8x32xf32>
    %cst_35 = arith.constant 2.000000e+00 : f32
    %78 = vector.broadcast %cst_35 : f32 to vector<8x32xf32>
    %79 = arith.mulf %78, %77 : vector<8x32xf32>
    %cst_36 = arith.constant 1.000000e+00 : f32
    %80 = vector.broadcast %cst_36 : f32 to vector<8x32xf32>
    %81 = arith.subf %79, %80 : vector<8x32xf32>
    %82 = vector.extract_strided_slice %66 {offsets = [0, 32], sizes = [8, 32], strides = [1, 1]} : vector<8x128xf32> to vector<8x32xf32>
    %83 = arith.mulf %82, %36 : vector<8x32xf32>
    %84 = vector.extract_strided_slice %66 {offsets = [0, 0], sizes = [8, 32], strides = [1, 1]} : vector<8x128xf32> to vector<8x32xf32>
    %85 = arith.mulf %84, %76 : vector<8x32xf32>
    %86 = arith.addf %83, %85 : vector<8x32xf32>
    %87 = vector.extract_strided_slice %71 {offsets = [0, 32], sizes = [8, 32], strides = [1, 1]} : vector<8x128xf32> to vector<8x32xf32>
    %88 = arith.mulf %87, %38 : vector<8x32xf32>
    %89 = vector.extract_strided_slice %71 {offsets = [0, 0], sizes = [8, 32], strides = [1, 1]} : vector<8x128xf32> to vector<8x32xf32>
    %90 = arith.mulf %89, %81 : vector<8x32xf32>
    %91 = arith.addf %88, %90 : vector<8x32xf32>
    %92 = vector.extract_strided_slice %66 {offsets = [0, 64], sizes = [8, 32], strides = [1, 1]} : vector<8x128xf32> to vector<8x32xf32>
    %93 = math.tanh %86 : vector<8x32xf32>
    %94 = arith.mulf %92, %93 : vector<8x32xf32>
    %95 = vector.extract_strided_slice %71 {offsets = [0, 64], sizes = [8, 32], strides = [1, 1]} : vector<8x128xf32> to vector<8x32xf32>
    %96 = math.tanh %91 : vector<8x32xf32>
    %97 = arith.mulf %95, %96 : vector<8x32xf32>
    %c1_37 = arith.constant 1 : index
    %c0_38 = arith.constant 0 : index
    %c0_39 = arith.constant 0 : index
    %98 = vector.load %arg10[%c1_37, %c0_38, %c0_39] : memref<16x8x64xf32, #tpu.memory_space<vmem>>, vector<1x8x32xf32>
    %99 = vector.shape_cast %98 : vector<1x8x32xf32> to vector<8x32xf32>
    %100 = vector.shape_cast %94 : vector<8x32xf32> to vector<1x8x32xf32>
    tpu.vector_store %arg10[%c1_37, %c0_38, %c0_39], %100 {strides = array<i32>} : memref<16x8x64xf32, #tpu.memory_space<vmem>>, vector<1x8x32xf32>,
    %c14_40 = arith.constant 14 : index
    %c0_41 = arith.constant 0 : index
    %c32_42 = arith.constant 32 : index
    %101 = vector.load %arg10[%c14_40, %c0_41, %c32_42] : memref<16x8x64xf32, #tpu.memory_space<vmem>>, vector<1x8x32xf32>
    %102 = vector.shape_cast %101 : vector<1x8x32xf32> to vector<8x32xf32>
    %103 = vector.shape_cast %97 : vector<8x32xf32> to vector<1x8x32xf32>
    tpu.vector_store %arg10[%c14_40, %c0_41, %c32_42], %103 {strides = array<i32>} : memref<16x8x64xf32, #tpu.memory_space<vmem>>, vector<1x8x32xf32>,
    %104 = tpu.concatenate %94, %97 in 1 : vector<8x32xf32>, vector<8x32xf32> -> vector<8x64xf32>
    %105 = arith.truncf %104 : vector<8x64xf32> to vector<8x64xbf16>
    %cst_43 = arith.constant dense<0.000000e+00> : vector<8x256xf32>
    %106 = tpu.matmul %105, %10, %cst_43 {dimension_numbers = #tpu.dot_dimension_numbers<[1], [0], [0], [1], [0, 0, 1, 1], [], []>} : vector<8x64xbf16>, vector<64x256xbf16>, vector<8x256xf32> -> vector<8x256xf32>
    %107 = vector.extract_strided_slice %106 {offsets = [0, 0], sizes = [8, 128], strides = [1, 1]} : vector<8x256xf32> to vector<8x128xf32>
    %c2 = arith.constant 2 : index
    %c0_44 = arith.constant 0 : index
    %c0_45 = arith.constant 0 : index
    %108 = vector.load %arg9[%c2, %c0_44, %c0_45] : memref<16x8x256xf32, #tpu.memory_space<vmem>>, vector<1x8x128xf32>
    %109 = vector.shape_cast %108 : vector<1x8x128xf32> to vector<8x128xf32>
    %110 = arith.addf %107, %109 : vector<8x128xf32>
    %111 = vector.extract_strided_slice %106 {offsets = [0, 128], sizes = [8, 128], strides = [1, 1]} : vector<8x256xf32> to vector<8x128xf32>
    %c13 = arith.constant 13 : index
    %c0_46 = arith.constant 0 : index
    %c128_47 = arith.constant 128 : index
    %112 = vector.load %arg9[%c13, %c0_46, %c128_47] : memref<16x8x256xf32, #tpu.memory_space<vmem>>, vector<1x8x128xf32>
    %113 = vector.shape_cast %112 : vector<1x8x128xf32> to vector<8x128xf32>
    %114 = arith.addf %111, %113 : vector<8x128xf32>
    %115 = arith.negf %110 : vector<8x128xf32>
    %116 = math.exp %115 : vector<8x128xf32>
    %cst_48 = arith.constant 1.000000e+00 : f32
    %117 = vector.broadcast %cst_48 : f32 to vector<8x128xf32>
    %118 = arith.addf %117, %116 : vector<8x128xf32>
    %119 = arith.divf %117, %118 : vector<8x128xf32>
    %120 = arith.negf %114 : vector<8x128xf32>
    %121 = math.exp %120 : vector<8x128xf32>
    %cst_49 = arith.constant 1.000000e+00 : f32
    %122 = vector.broadcast %cst_49 : f32 to vector<8x128xf32>
    %123 = arith.addf %122, %121 : vector<8x128xf32>
    %124 = arith.divf %122, %123 : vector<8x128xf32>
    %125 = vector.extract_strided_slice %119 {offsets = [0, 96], sizes = [8, 32], strides = [1, 1]} : vector<8x128xf32> to vector<8x32xf32>
    %cst_50 = arith.constant 2.000000e+00 : f32
    %126 = vector.broadcast %cst_50 : f32 to vector<8x32xf32>
    %127 = arith.mulf %126, %125 : vector<8x32xf32>
    %cst_51 = arith.constant 1.000000e+00 : f32
    %128 = vector.broadcast %cst_51 : f32 to vector<8x32xf32>
    %129 = arith.subf %127, %128 : vector<8x32xf32>
    %130 = vector.extract_strided_slice %124 {offsets = [0, 96], sizes = [8, 32], strides = [1, 1]} : vector<8x128xf32> to vector<8x32xf32>
    %cst_52 = arith.constant 2.000000e+00 : f32
    %131 = vector.broadcast %cst_52 : f32 to vector<8x32xf32>
    %132 = arith.mulf %131, %130 : vector<8x32xf32>
    %cst_53 = arith.constant 1.000000e+00 : f32
    %133 = vector.broadcast %cst_53 : f32 to vector<8x32xf32>
    %134 = arith.subf %132, %133 : vector<8x32xf32>
    %135 = vector.extract_strided_slice %119 {offsets = [0, 32], sizes = [8, 32], strides = [1, 1]} : vector<8x128xf32> to vector<8x32xf32>
    %136 = arith.mulf %135, %86 : vector<8x32xf32>
    %137 = vector.extract_strided_slice %119 {offsets = [0, 0], sizes = [8, 32], strides = [1, 1]} : vector<8x128xf32> to vector<8x32xf32>
    %138 = arith.mulf %137, %129 : vector<8x32xf32>
    %139 = arith.addf %136, %138 : vector<8x32xf32>
    %140 = vector.extract_strided_slice %124 {offsets = [0, 32], sizes = [8, 32], strides = [1, 1]} : vector<8x128xf32> to vector<8x32xf32>
    %141 = arith.mulf %140, %91 : vector<8x32xf32>
    %142 = vector.extract_strided_slice %124 {offsets = [0, 0], sizes = [8, 32], strides = [1, 1]} : vector<8x128xf32> to vector<8x32xf32>
    %143 = arith.mulf %142, %134 : vector<8x32xf32>
    %144 = arith.addf %141, %143 : vector<8x32xf32>
    %145 = vector.extract_strided_slice %119 {offsets = [0, 64], sizes = [8, 32], strides = [1, 1]} : vector<8x128xf32> to vector<8x32xf32>
    %146 = math.tanh %139 : vector<8x32xf32>
    %147 = arith.mulf %145, %146 : vector<8x32xf32>
    %148 = vector.extract_strided_slice %124 {offsets = [0, 64], sizes = [8, 32], strides = [1, 1]} : vector<8x128xf32> to vector<8x32xf32>
    %149 = math.tanh %144 : vector<8x32xf32>
    %150 = arith.mulf %148, %149 : vector<8x32xf32>
    %c2_54 = arith.constant 2 : index
    %c0_55 = arith.constant 0 : index
    %c0_56 = arith.constant 0 : index
    %151 = vector.load %arg10[%c2_54, %c0_55, %c0_56] : memref<16x8x64xf32, #tpu.memory_space<vmem>>, vector<1x8x32xf32>
    %152 = vector.shape_cast %151 : vector<1x8x32xf32> to vector<8x32xf32>
    %153 = vector.shape_cast %147 : vector<8x32xf32> to vector<1x8x32xf32>
    tpu.vector_store %arg10[%c2_54, %c0_55, %c0_56], %153 {strides = array<i32>} : memref<16x8x64xf32, #tpu.memory_space<vmem>>, vector<1x8x32xf32>,
    %c13_57 = arith.constant 13 : index
    %c0_58 = arith.constant 0 : index
    %c32_59 = arith.constant 32 : index
    %154 = vector.load %arg10[%c13_57, %c0_58, %c32_59] : memref<16x8x64xf32, #tpu.memory_space<vmem>>, vector<1x8x32xf32>
    %155 = vector.shape_cast %154 : vector<1x8x32xf32> to vector<8x32xf32>
    %156 = vector.shape_cast %150 : vector<8x32xf32> to vector<1x8x32xf32>
    tpu.vector_store %arg10[%c13_57, %c0_58, %c32_59], %156 {strides = array<i32>} : memref<16x8x64xf32, #tpu.memory_space<vmem>>, vector<1x8x32xf32>,
    %157 = tpu.concatenate %147, %150 in 1 : vector<8x32xf32>, vector<8x32xf32> -> vector<8x64xf32>
    %158 = arith.truncf %157 : vector<8x64xf32> to vector<8x64xbf16>
    %cst_60 = arith.constant dense<0.000000e+00> : vector<8x256xf32>
    %159 = tpu.matmul %158, %10, %cst_60 {dimension_numbers = #tpu.dot_dimension_numbers<[1], [0], [0], [1], [0, 0, 1, 1], [], []>} : vector<8x64xbf16>, vector<64x256xbf16>, vector<8x256xf32> -> vector<8x256xf32>
    %160 = vector.extract_strided_slice %159 {offsets = [0, 0], sizes = [8, 128], strides = [1, 1]} : vector<8x256xf32> to vector<8x128xf32>
    %c3 = arith.constant 3 : index
    %c0_61 = arith.constant 0 : index
    %c0_62 = arith.constant 0 : index
    %161 = vector.load %arg9[%c3, %c0_61, %c0_62] : memref<16x8x256xf32, #tpu.memory_space<vmem>>, vector<1x8x128xf32>
    %162 = vector.shape_cast %161 : vector<1x8x128xf32> to vector<8x128xf32>
    %163 = arith.addf %160, %162 : vector<8x128xf32>
    %164 = vector.extract_strided_slice %159 {offsets = [0, 128], sizes = [8, 128], strides = [1, 1]} : vector<8x256xf32> to vector<8x128xf32>
    %c12 = arith.constant 12 : index
    %c0_63 = arith.constant 0 : index
    %c128_64 = arith.constant 128 : index
    %165 = vector.load %arg9[%c12, %c0_63, %c128_64] : memref<16x8x256xf32, #tpu.memory_space<vmem>>, vector<1x8x128xf32>
    %166 = vector.shape_cast %165 : vector<1x8x128xf32> to vector<8x128xf32>
    %167 = arith.addf %164, %166 : vector<8x128xf32>
    %168 = arith.negf %163 : vector<8x128xf32>
    %169 = math.exp %168 : vector<8x128xf32>
    %cst_65 = arith.constant 1.000000e+00 : f32
    %170 = vector.broadcast %cst_65 : f32 to vector<8x128xf32>
    %171 = arith.addf %170, %169 : vector<8x128xf32>
    %172 = arith.divf %170, %171 : vector<8x128xf32>
    %173 = arith.negf %167 : vector<8x128xf32>
    %174 = math.exp %173 : vector<8x128xf32>
    %cst_66 = arith.constant 1.000000e+00 : f32
    %175 = vector.broadcast %cst_66 : f32 to vector<8x128xf32>
    %176 = arith.addf %175, %174 : vector<8x128xf32>
    %177 = arith.divf %175, %176 : vector<8x128xf32>
    %178 = vector.extract_strided_slice %172 {offsets = [0, 96], sizes = [8, 32], strides = [1, 1]} : vector<8x128xf32> to vector<8x32xf32>
    %cst_67 = arith.constant 2.000000e+00 : f32
    %179 = vector.broadcast %cst_67 : f32 to vector<8x32xf32>
    %180 = arith.mulf %179, %178 : vector<8x32xf32>
    %cst_68 = arith.constant 1.000000e+00 : f32
    %181 = vector.broadcast %cst_68 : f32 to vector<8x32xf32>
    %182 = arith.subf %180, %181 : vector<8x32xf32>
    %183 = vector.extract_strided_slice %177 {offsets = [0, 96], sizes = [8, 32], strides = [1, 1]} : vector<8x128xf32> to vector<8x32xf32>
    %cst_69 = arith.constant 2.000000e+00 : f32
    %184 = vector.broadcast %cst_69 : f32 to vector<8x32xf32>
    %185 = arith.mulf %184, %183 : vector<8x32xf32>
    %cst_70 = arith.constant 1.000000e+00 : f32
    %186 = vector.broadcast %cst_70 : f32 to vector<8x32xf32>
    %187 = arith.subf %185, %186 : vector<8x32xf32>
    %188 = vector.extract_strided_slice %172 {offsets = [0, 32], sizes = [8, 32], strides = [1, 1]} : vector<8x128xf32> to vector<8x32xf32>
    %189 = arith.mulf %188, %139 : vector<8x32xf32>
    %190 = vector.extract_strided_slice %172 {offsets = [0, 0], sizes = [8, 32], strides = [1, 1]} : vector<8x128xf32> to vector<8x32xf32>
    %191 = arith.mulf %190, %182 : vector<8x32xf32>
    %192 = arith.addf %189, %191 : vector<8x32xf32>
    %193 = vector.extract_strided_slice %177 {offsets = [0, 32], sizes = [8, 32], strides = [1, 1]} : vector<8x128xf32> to vector<8x32xf32>
    %194 = arith.mulf %193, %144 : vector<8x32xf32>
    %195 = vector.extract_strided_slice %177 {offsets = [0, 0], sizes = [8, 32], strides = [1, 1]} : vector<8x128xf32> to vector<8x32xf32>
    %196 = arith.mulf %195, %187 : vector<8x32xf32>
    %197 = arith.addf %194, %196 : vector<8x32xf32>
    %198 = vector.extract_strided_slice %172 {offsets = [0, 64], sizes = [8, 32], strides = [1, 1]} : vector<8x128xf32> to vector<8x32xf32>
    %199 = math.tanh %192 : vector<8x32xf32>
    %200 = arith.mulf %198, %199 : vector<8x32xf32>
    %201 = vector.extract_strided_slice %177 {offsets = [0, 64], sizes = [8, 32], strides = [1, 1]} : vector<8x128xf32> to vector<8x32xf32>
    %202 = math.tanh %197 : vector<8x32xf32>
    %203 = arith.mulf %201, %202 : vector<8x32xf32>
    %c3_71 = arith.constant 3 : index
    %c0_72 = arith.constant 0 : index
    %c0_73 = arith.constant 0 : index
    %204 = vector.load %arg10[%c3_71, %c0_72, %c0_73] : memref<16x8x64xf32, #tpu.memory_space<vmem>>, vector<1x8x32xf32>
    %205 = vector.shape_cast %204 : vector<1x8x32xf32> to vector<8x32xf32>
    %206 = vector.shape_cast %200 : vector<8x32xf32> to vector<1x8x32xf32>
    tpu.vector_store %arg10[%c3_71, %c0_72, %c0_73], %206 {strides = array<i32>} : memref<16x8x64xf32, #tpu.memory_space<vmem>>, vector<1x8x32xf32>,
    %c12_74 = arith.constant 12 : index
    %c0_75 = arith.constant 0 : index
    %c32_76 = arith.constant 32 : index
    %207 = vector.load %arg10[%c12_74, %c0_75, %c32_76] : memref<16x8x64xf32, #tpu.memory_space<vmem>>, vector<1x8x32xf32>
    %208 = vector.shape_cast %207 : vector<1x8x32xf32> to vector<8x32xf32>
    %209 = vector.shape_cast %203 : vector<8x32xf32> to vector<1x8x32xf32>
    tpu.vector_store %arg10[%c12_74, %c0_75, %c32_76], %209 {strides = array<i32>} : memref<16x8x64xf32, #tpu.memory_space<vmem>>, vector<1x8x32xf32>,
    %210 = tpu.concatenate %200, %203 in 1 : vector<8x32xf32>, vector<8x32xf32> -> vector<8x64xf32>
    %211 = arith.truncf %210 : vector<8x64xf32> to vector<8x64xbf16>
    %cst_77 = arith.constant dense<0.000000e+00> : vector<8x256xf32>
    %212 = tpu.matmul %211, %10, %cst_77 {dimension_numbers = #tpu.dot_dimension_numbers<[1], [0], [0], [1], [0, 0, 1, 1], [], []>} : vector<8x64xbf16>, vector<64x256xbf16>, vector<8x256xf32> -> vector<8x256xf32>
    %213 = vector.extract_strided_slice %212 {offsets = [0, 0], sizes = [8, 128], strides = [1, 1]} : vector<8x256xf32> to vector<8x128xf32>
    %c4 = arith.constant 4 : index
    %c0_78 = arith.constant 0 : index
    %c0_79 = arith.constant 0 : index
    %214 = vector.load %arg9[%c4, %c0_78, %c0_79] : memref<16x8x256xf32, #tpu.memory_space<vmem>>, vector<1x8x128xf32>
    %215 = vector.shape_cast %214 : vector<1x8x128xf32> to vector<8x128xf32>
    %216 = arith.addf %213, %215 : vector<8x128xf32>
    %217 = vector.extract_strided_slice %212 {offsets = [0, 128], sizes = [8, 128], strides = [1, 1]} : vector<8x256xf32> to vector<8x128xf32>
    %c11 = arith.constant 11 : index
    %c0_80 = arith.constant 0 : index
    %c128_81 = arith.constant 128 : index
    %218 = vector.load %arg9[%c11, %c0_80, %c128_81] : memref<16x8x256xf32, #tpu.memory_space<vmem>>, vector<1x8x128xf32>
    %219 = vector.shape_cast %218 : vector<1x8x128xf32> to vector<8x128xf32>
    %220 = arith.addf %217, %219 : vector<8x128xf32>
    %221 = arith.negf %216 : vector<8x128xf32>
    %222 = math.exp %221 : vector<8x128xf32>
    %cst_82 = arith.constant 1.000000e+00 : f32
    %223 = vector.broadcast %cst_82 : f32 to vector<8x128xf32>
    %224 = arith.addf %223, %222 : vector<8x128xf32>
    %225 = arith.divf %223, %224 : vector<8x128xf32>
    %226 = arith.negf %220 : vector<8x128xf32>
    %227 = math.exp %226 : vector<8x128xf32>
    %cst_83 = arith.constant 1.000000e+00 : f32
    %228 = vector.broadcast %cst_83 : f32 to vector<8x128xf32>
    %229 = arith.addf %228, %227 : vector<8x128xf32>
    %230 = arith.divf %228, %229 : vector<8x128xf32>
    %231 = vector.extract_strided_slice %225 {offsets = [0, 96], sizes = [8, 32], strides = [1, 1]} : vector<8x128xf32> to vector<8x32xf32>
    %cst_84 = arith.constant 2.000000e+00 : f32
    %232 = vector.broadcast %cst_84 : f32 to vector<8x32xf32>
    %233 = arith.mulf %232, %231 : vector<8x32xf32>
    %cst_85 = arith.constant 1.000000e+00 : f32
    %234 = vector.broadcast %cst_85 : f32 to vector<8x32xf32>
    %235 = arith.subf %233, %234 : vector<8x32xf32>
    %236 = vector.extract_strided_slice %230 {offsets = [0, 96], sizes = [8, 32], strides = [1, 1]} : vector<8x128xf32> to vector<8x32xf32>
    %cst_86 = arith.constant 2.000000e+00 : f32
    %237 = vector.broadcast %cst_86 : f32 to vector<8x32xf32>
    %238 = arith.mulf %237, %236 : vector<8x32xf32>
    %cst_87 = arith.constant 1.000000e+00 : f32
    %239 = vector.broadcast %cst_87 : f32 to vector<8x32xf32>
    %240 = arith.subf %238, %239 : vector<8x32xf32>
    %241 = vector.extract_strided_slice %225 {offsets = [0, 32], sizes = [8, 32], strides = [1, 1]} : vector<8x128xf32> to vector<8x32xf32>
    %242 = arith.mulf %241, %192 : vector<8x32xf32>
    %243 = vector.extract_strided_slice %225 {offsets = [0, 0], sizes = [8, 32], strides = [1, 1]} : vector<8x128xf32> to vector<8x32xf32>
    %244 = arith.mulf %243, %235 : vector<8x32xf32>
    %245 = arith.addf %242, %244 : vector<8x32xf32>
    %246 = vector.extract_strided_slice %230 {offsets = [0, 32], sizes = [8, 32], strides = [1, 1]} : vector<8x128xf32> to vector<8x32xf32>
    %247 = arith.mulf %246, %197 : vector<8x32xf32>
    %248 = vector.extract_strided_slice %230 {offsets = [0, 0], sizes = [8, 32], strides = [1, 1]} : vector<8x128xf32> to vector<8x32xf32>
    %249 = arith.mulf %248, %240 : vector<8x32xf32>
    %250 = arith.addf %247, %249 : vector<8x32xf32>
    %251 = vector.extract_strided_slice %225 {offsets = [0, 64], sizes = [8, 32], strides = [1, 1]} : vector<8x128xf32> to vector<8x32xf32>
    %252 = math.tanh %245 : vector<8x32xf32>
    %253 = arith.mulf %251, %252 : vector<8x32xf32>
    %254 = vector.extract_strided_slice %230 {offsets = [0, 64], sizes = [8, 32], strides = [1, 1]} : vector<8x128xf32> to vector<8x32xf32>
    %255 = math.tanh %250 : vector<8x32xf32>
    %256 = arith.mulf %254, %255 : vector<8x32xf32>
    %c4_88 = arith.constant 4 : index
    %c0_89 = arith.constant 0 : index
    %c0_90 = arith.constant 0 : index
    %257 = vector.load %arg10[%c4_88, %c0_89, %c0_90] : memref<16x8x64xf32, #tpu.memory_space<vmem>>, vector<1x8x32xf32>
    %258 = vector.shape_cast %257 : vector<1x8x32xf32> to vector<8x32xf32>
    %259 = vector.shape_cast %253 : vector<8x32xf32> to vector<1x8x32xf32>
    tpu.vector_store %arg10[%c4_88, %c0_89, %c0_90], %259 {strides = array<i32>} : memref<16x8x64xf32, #tpu.memory_space<vmem>>, vector<1x8x32xf32>,
    %c11_91 = arith.constant 11 : index
    %c0_92 = arith.constant 0 : index
    %c32_93 = arith.constant 32 : index
    %260 = vector.load %arg10[%c11_91, %c0_92, %c32_93] : memref<16x8x64xf32, #tpu.memory_space<vmem>>, vector<1x8x32xf32>
    %261 = vector.shape_cast %260 : vector<1x8x32xf32> to vector<8x32xf32>
    %262 = vector.shape_cast %256 : vector<8x32xf32> to vector<1x8x32xf32>
    tpu.vector_store %arg10[%c11_91, %c0_92, %c32_93], %262 {strides = array<i32>} : memref<16x8x64xf32, #tpu.memory_space<vmem>>, vector<1x8x32xf32>,
    %263 = tpu.concatenate %253, %256 in 1 : vector<8x32xf32>, vector<8x32xf32> -> vector<8x64xf32>
    %264 = arith.truncf %263 : vector<8x64xf32> to vector<8x64xbf16>
    %cst_94 = arith.constant dense<0.000000e+00> : vector<8x256xf32>
    %265 = tpu.matmul %264, %10, %cst_94 {dimension_numbers = #tpu.dot_dimension_numbers<[1], [0], [0], [1], [0, 0, 1, 1], [], []>} : vector<8x64xbf16>, vector<64x256xbf16>, vector<8x256xf32> -> vector<8x256xf32>
    %266 = vector.extract_strided_slice %265 {offsets = [0, 0], sizes = [8, 128], strides = [1, 1]} : vector<8x256xf32> to vector<8x128xf32>
    %c5 = arith.constant 5 : index
    %c0_95 = arith.constant 0 : index
    %c0_96 = arith.constant 0 : index
    %267 = vector.load %arg9[%c5, %c0_95, %c0_96] : memref<16x8x256xf32, #tpu.memory_space<vmem>>, vector<1x8x128xf32>
    %268 = vector.shape_cast %267 : vector<1x8x128xf32> to vector<8x128xf32>
    %269 = arith.addf %266, %268 : vector<8x128xf32>
    %270 = vector.extract_strided_slice %265 {offsets = [0, 128], sizes = [8, 128], strides = [1, 1]} : vector<8x256xf32> to vector<8x128xf32>
    %c10 = arith.constant 10 : index
    %c0_97 = arith.constant 0 : index
    %c128_98 = arith.constant 128 : index
    %271 = vector.load %arg9[%c10, %c0_97, %c128_98] : memref<16x8x256xf32, #tpu.memory_space<vmem>>, vector<1x8x128xf32>
    %272 = vector.shape_cast %271 : vector<1x8x128xf32> to vector<8x128xf32>
    %273 = arith.addf %270, %272 : vector<8x128xf32>
    %274 = arith.negf %269 : vector<8x128xf32>
    %275 = math.exp %274 : vector<8x128xf32>
    %cst_99 = arith.constant 1.000000e+00 : f32
    %276 = vector.broadcast %cst_99 : f32 to vector<8x128xf32>
    %277 = arith.addf %276, %275 : vector<8x128xf32>
    %278 = arith.divf %276, %277 : vector<8x128xf32>
    %279 = arith.negf %273 : vector<8x128xf32>
    %280 = math.exp %279 : vector<8x128xf32>
    %cst_100 = arith.constant 1.000000e+00 : f32
    %281 = vector.broadcast %cst_100 : f32 to vector<8x128xf32>
    %282 = arith.addf %281, %280 : vector<8x128xf32>
    %283 = arith.divf %281, %282 : vector<8x128xf32>
    %284 = vector.extract_strided_slice %278 {offsets = [0, 96], sizes = [8, 32], strides = [1, 1]} : vector<8x128xf32> to vector<8x32xf32>
    %cst_101 = arith.constant 2.000000e+00 : f32
    %285 = vector.broadcast %cst_101 : f32 to vector<8x32xf32>
    %286 = arith.mulf %285, %284 : vector<8x32xf32>
    %cst_102 = arith.constant 1.000000e+00 : f32
    %287 = vector.broadcast %cst_102 : f32 to vector<8x32xf32>
    %288 = arith.subf %286, %287 : vector<8x32xf32>
    %289 = vector.extract_strided_slice %283 {offsets = [0, 96], sizes = [8, 32], strides = [1, 1]} : vector<8x128xf32> to vector<8x32xf32>
    %cst_103 = arith.constant 2.000000e+00 : f32
    %290 = vector.broadcast %cst_103 : f32 to vector<8x32xf32>
    %291 = arith.mulf %290, %289 : vector<8x32xf32>
    %cst_104 = arith.constant 1.000000e+00 : f32
    %292 = vector.broadcast %cst_104 : f32 to vector<8x32xf32>
    %293 = arith.subf %291, %292 : vector<8x32xf32>
    %294 = vector.extract_strided_slice %278 {offsets = [0, 32], sizes = [8, 32], strides = [1, 1]} : vector<8x128xf32> to vector<8x32xf32>
    %295 = arith.mulf %294, %245 : vector<8x32xf32>
    %296 = vector.extract_strided_slice %278 {offsets = [0, 0], sizes = [8, 32], strides = [1, 1]} : vector<8x128xf32> to vector<8x32xf32>
    %297 = arith.mulf %296, %288 : vector<8x32xf32>
    %298 = arith.addf %295, %297 : vector<8x32xf32>
    %299 = vector.extract_strided_slice %283 {offsets = [0, 32], sizes = [8, 32], strides = [1, 1]} : vector<8x128xf32> to vector<8x32xf32>
    %300 = arith.mulf %299, %250 : vector<8x32xf32>
    %301 = vector.extract_strided_slice %283 {offsets = [0, 0], sizes = [8, 32], strides = [1, 1]} : vector<8x128xf32> to vector<8x32xf32>
    %302 = arith.mulf %301, %293 : vector<8x32xf32>
    %303 = arith.addf %300, %302 : vector<8x32xf32>
    %304 = vector.extract_strided_slice %278 {offsets = [0, 64], sizes = [8, 32], strides = [1, 1]} : vector<8x128xf32> to vector<8x32xf32>
    %305 = math.tanh %298 : vector<8x32xf32>
    %306 = arith.mulf %304, %305 : vector<8x32xf32>
    %307 = vector.extract_strided_slice %283 {offsets = [0, 64], sizes = [8, 32], strides = [1, 1]} : vector<8x128xf32> to vector<8x32xf32>
    %308 = math.tanh %303 : vector<8x32xf32>
    %309 = arith.mulf %307, %308 : vector<8x32xf32>
    %c5_105 = arith.constant 5 : index
    %c0_106 = arith.constant 0 : index
    %c0_107 = arith.constant 0 : index
    %310 = vector.load %arg10[%c5_105, %c0_106, %c0_107] : memref<16x8x64xf32, #tpu.memory_space<vmem>>, vector<1x8x32xf32>
    %311 = vector.shape_cast %310 : vector<1x8x32xf32> to vector<8x32xf32>
    %312 = vector.shape_cast %306 : vector<8x32xf32> to vector<1x8x32xf32>
    tpu.vector_store %arg10[%c5_105, %c0_106, %c0_107], %312 {strides = array<i32>} : memref<16x8x64xf32, #tpu.memory_space<vmem>>, vector<1x8x32xf32>,
    %c10_108 = arith.constant 10 : index
    %c0_109 = arith.constant 0 : index
    %c32_110 = arith.constant 32 : index
    %313 = vector.load %arg10[%c10_108, %c0_109, %c32_110] : memref<16x8x64xf32, #tpu.memory_space<vmem>>, vector<1x8x32xf32>
    %314 = vector.shape_cast %313 : vector<1x8x32xf32> to vector<8x32xf32>
    %315 = vector.shape_cast %309 : vector<8x32xf32> to vector<1x8x32xf32>
    tpu.vector_store %arg10[%c10_108, %c0_109, %c32_110], %315 {strides = array<i32>} : memref<16x8x64xf32, #tpu.memory_space<vmem>>, vector<1x8x32xf32>,
    %316 = tpu.concatenate %306, %309 in 1 : vector<8x32xf32>, vector<8x32xf32> -> vector<8x64xf32>
    %317 = arith.truncf %316 : vector<8x64xf32> to vector<8x64xbf16>
    %cst_111 = arith.constant dense<0.000000e+00> : vector<8x256xf32>
    %318 = tpu.matmul %317, %10, %cst_111 {dimension_numbers = #tpu.dot_dimension_numbers<[1], [0], [0], [1], [0, 0, 1, 1], [], []>} : vector<8x64xbf16>, vector<64x256xbf16>, vector<8x256xf32> -> vector<8x256xf32>
    %319 = vector.extract_strided_slice %318 {offsets = [0, 0], sizes = [8, 128], strides = [1, 1]} : vector<8x256xf32> to vector<8x128xf32>
    %c6 = arith.constant 6 : index
    %c0_112 = arith.constant 0 : index
    %c0_113 = arith.constant 0 : index
    %320 = vector.load %arg9[%c6, %c0_112, %c0_113] : memref<16x8x256xf32, #tpu.memory_space<vmem>>, vector<1x8x128xf32>
    %321 = vector.shape_cast %320 : vector<1x8x128xf32> to vector<8x128xf32>
    %322 = arith.addf %319, %321 : vector<8x128xf32>
    %323 = vector.extract_strided_slice %318 {offsets = [0, 128], sizes = [8, 128], strides = [1, 1]} : vector<8x256xf32> to vector<8x128xf32>
    %c9 = arith.constant 9 : index
    %c0_114 = arith.constant 0 : index
    %c128_115 = arith.constant 128 : index
    %324 = vector.load %arg9[%c9, %c0_114, %c128_115] : memref<16x8x256xf32, #tpu.memory_space<vmem>>, vector<1x8x128xf32>
    %325 = vector.shape_cast %324 : vector<1x8x128xf32> to vector<8x128xf32>
    %326 = arith.addf %323, %325 : vector<8x128xf32>
    %327 = arith.negf %322 : vector<8x128xf32>
    %328 = math.exp %327 : vector<8x128xf32>
    %cst_116 = arith.constant 1.000000e+00 : f32
    %329 = vector.broadcast %cst_116 : f32 to vector<8x128xf32>
    %330 = arith.addf %329, %328 : vector<8x128xf32>
    %331 = arith.divf %329, %330 : vector<8x128xf32>
    %332 = arith.negf %326 : vector<8x128xf32>
    %333 = math.exp %332 : vector<8x128xf32>
    %cst_117 = arith.constant 1.000000e+00 : f32
    %334 = vector.broadcast %cst_117 : f32 to vector<8x128xf32>
    %335 = arith.addf %334, %333 : vector<8x128xf32>
    %336 = arith.divf %334, %335 : vector<8x128xf32>
    %337 = vector.extract_strided_slice %331 {offsets = [0, 96], sizes = [8, 32], strides = [1, 1]} : vector<8x128xf32> to vector<8x32xf32>
    %cst_118 = arith.constant 2.000000e+00 : f32
    %338 = vector.broadcast %cst_118 : f32 to vector<8x32xf32>
    %339 = arith.mulf %338, %337 : vector<8x32xf32>
    %cst_119 = arith.constant 1.000000e+00 : f32
    %340 = vector.broadcast %cst_119 : f32 to vector<8x32xf32>
    %341 = arith.subf %339, %340 : vector<8x32xf32>
    %342 = vector.extract_strided_slice %336 {offsets = [0, 96], sizes = [8, 32], strides = [1, 1]} : vector<8x128xf32> to vector<8x32xf32>
    %cst_120 = arith.constant 2.000000e+00 : f32
    %343 = vector.broadcast %cst_120 : f32 to vector<8x32xf32>
    %344 = arith.mulf %343, %342 : vector<8x32xf32>
    %cst_121 = arith.constant 1.000000e+00 : f32
    %345 = vector.broadcast %cst_121 : f32 to vector<8x32xf32>
    %346 = arith.subf %344, %345 : vector<8x32xf32>
    %347 = vector.extract_strided_slice %331 {offsets = [0, 32], sizes = [8, 32], strides = [1, 1]} : vector<8x128xf32> to vector<8x32xf32>
    %348 = arith.mulf %347, %298 : vector<8x32xf32>
    %349 = vector.extract_strided_slice %331 {offsets = [0, 0], sizes = [8, 32], strides = [1, 1]} : vector<8x128xf32> to vector<8x32xf32>
    %350 = arith.mulf %349, %341 : vector<8x32xf32>
    %351 = arith.addf %348, %350 : vector<8x32xf32>
    %352 = vector.extract_strided_slice %336 {offsets = [0, 32], sizes = [8, 32], strides = [1, 1]} : vector<8x128xf32> to vector<8x32xf32>
    %353 = arith.mulf %352, %303 : vector<8x32xf32>
    %354 = vector.extract_strided_slice %336 {offsets = [0, 0], sizes = [8, 32], strides = [1, 1]} : vector<8x128xf32> to vector<8x32xf32>
    %355 = arith.mulf %354, %346 : vector<8x32xf32>
    %356 = arith.addf %353, %355 : vector<8x32xf32>
    %357 = vector.extract_strided_slice %331 {offsets = [0, 64], sizes = [8, 32], strides = [1, 1]} : vector<8x128xf32> to vector<8x32xf32>
    %358 = math.tanh %351 : vector<8x32xf32>
    %359 = arith.mulf %357, %358 : vector<8x32xf32>
    %360 = vector.extract_strided_slice %336 {offsets = [0, 64], sizes = [8, 32], strides = [1, 1]} : vector<8x128xf32> to vector<8x32xf32>
    %361 = math.tanh %356 : vector<8x32xf32>
    %362 = arith.mulf %360, %361 : vector<8x32xf32>
    %c6_122 = arith.constant 6 : index
    %c0_123 = arith.constant 0 : index
    %c0_124 = arith.constant 0 : index
    %363 = vector.load %arg10[%c6_122, %c0_123, %c0_124] : memref<16x8x64xf32, #tpu.memory_space<vmem>>, vector<1x8x32xf32>
    %364 = vector.shape_cast %363 : vector<1x8x32xf32> to vector<8x32xf32>
    %365 = vector.shape_cast %359 : vector<8x32xf32> to vector<1x8x32xf32>
    tpu.vector_store %arg10[%c6_122, %c0_123, %c0_124], %365 {strides = array<i32>} : memref<16x8x64xf32, #tpu.memory_space<vmem>>, vector<1x8x32xf32>,
    %c9_125 = arith.constant 9 : index
    %c0_126 = arith.constant 0 : index
    %c32_127 = arith.constant 32 : index
    %366 = vector.load %arg10[%c9_125, %c0_126, %c32_127] : memref<16x8x64xf32, #tpu.memory_space<vmem>>, vector<1x8x32xf32>
    %367 = vector.shape_cast %366 : vector<1x8x32xf32> to vector<8x32xf32>
    %368 = vector.shape_cast %362 : vector<8x32xf32> to vector<1x8x32xf32>
    tpu.vector_store %arg10[%c9_125, %c0_126, %c32_127], %368 {strides = array<i32>} : memref<16x8x64xf32, #tpu.memory_space<vmem>>, vector<1x8x32xf32>,
    %369 = tpu.concatenate %359, %362 in 1 : vector<8x32xf32>, vector<8x32xf32> -> vector<8x64xf32>
    %370 = arith.truncf %369 : vector<8x64xf32> to vector<8x64xbf16>
    %cst_128 = arith.constant dense<0.000000e+00> : vector<8x256xf32>
    %371 = tpu.matmul %370, %10, %cst_128 {dimension_numbers = #tpu.dot_dimension_numbers<[1], [0], [0], [1], [0, 0, 1, 1], [], []>} : vector<8x64xbf16>, vector<64x256xbf16>, vector<8x256xf32> -> vector<8x256xf32>
    %372 = vector.extract_strided_slice %371 {offsets = [0, 0], sizes = [8, 128], strides = [1, 1]} : vector<8x256xf32> to vector<8x128xf32>
    %c7 = arith.constant 7 : index
    %c0_129 = arith.constant 0 : index
    %c0_130 = arith.constant 0 : index
    %373 = vector.load %arg9[%c7, %c0_129, %c0_130] : memref<16x8x256xf32, #tpu.memory_space<vmem>>, vector<1x8x128xf32>
    %374 = vector.shape_cast %373 : vector<1x8x128xf32> to vector<8x128xf32>
    %375 = arith.addf %372, %374 : vector<8x128xf32>
    %376 = vector.extract_strided_slice %371 {offsets = [0, 128], sizes = [8, 128], strides = [1, 1]} : vector<8x256xf32> to vector<8x128xf32>
    %c8 = arith.constant 8 : index
    %c0_131 = arith.constant 0 : index
    %c128_132 = arith.constant 128 : index
    %377 = vector.load %arg9[%c8, %c0_131, %c128_132] : memref<16x8x256xf32, #tpu.memory_space<vmem>>, vector<1x8x128xf32>
    %378 = vector.shape_cast %377 : vector<1x8x128xf32> to vector<8x128xf32>
    %379 = arith.addf %376, %378 : vector<8x128xf32>
    %380 = arith.negf %375 : vector<8x128xf32>
    %381 = math.exp %380 : vector<8x128xf32>
    %cst_133 = arith.constant 1.000000e+00 : f32
    %382 = vector.broadcast %cst_133 : f32 to vector<8x128xf32>
    %383 = arith.addf %382, %381 : vector<8x128xf32>
    %384 = arith.divf %382, %383 : vector<8x128xf32>
    %385 = arith.negf %379 : vector<8x128xf32>
    %386 = math.exp %385 : vector<8x128xf32>
    %cst_134 = arith.constant 1.000000e+00 : f32
    %387 = vector.broadcast %cst_134 : f32 to vector<8x128xf32>
    %388 = arith.addf %387, %386 : vector<8x128xf32>
    %389 = arith.divf %387, %388 : vector<8x128xf32>
    %390 = vector.extract_strided_slice %384 {offsets = [0, 96], sizes = [8, 32], strides = [1, 1]} : vector<8x128xf32> to vector<8x32xf32>
    %cst_135 = arith.constant 2.000000e+00 : f32
    %391 = vector.broadcast %cst_135 : f32 to vector<8x32xf32>
    %392 = arith.mulf %391, %390 : vector<8x32xf32>
    %cst_136 = arith.constant 1.000000e+00 : f32
    %393 = vector.broadcast %cst_136 : f32 to vector<8x32xf32>
    %394 = arith.subf %392, %393 : vector<8x32xf32>
    %395 = vector.extract_strided_slice %389 {offsets = [0, 96], sizes = [8, 32], strides = [1, 1]} : vector<8x128xf32> to vector<8x32xf32>
    %cst_137 = arith.constant 2.000000e+00 : f32
    %396 = vector.broadcast %cst_137 : f32 to vector<8x32xf32>
    %397 = arith.mulf %396, %395 : vector<8x32xf32>
    %cst_138 = arith.constant 1.000000e+00 : f32
    %398 = vector.broadcast %cst_138 : f32 to vector<8x32xf32>
    %399 = arith.subf %397, %398 : vector<8x32xf32>
    %400 = vector.extract_strided_slice %384 {offsets = [0, 32], sizes = [8, 32], strides = [1, 1]} : vector<8x128xf32> to vector<8x32xf32>
    %401 = arith.mulf %400, %351 : vector<8x32xf32>
    %402 = vector.extract_strided_slice %384 {offsets = [0, 0], sizes = [8, 32], strides = [1, 1]} : vector<8x128xf32> to vector<8x32xf32>
    %403 = arith.mulf %402, %394 : vector<8x32xf32>
    %404 = arith.addf %401, %403 : vector<8x32xf32>
    %405 = vector.extract_strided_slice %389 {offsets = [0, 32], sizes = [8, 32], strides = [1, 1]} : vector<8x128xf32> to vector<8x32xf32>
    %406 = arith.mulf %405, %356 : vector<8x32xf32>
    %407 = vector.extract_strided_slice %389 {offsets = [0, 0], sizes = [8, 32], strides = [1, 1]} : vector<8x128xf32> to vector<8x32xf32>
    %408 = arith.mulf %407, %399 : vector<8x32xf32>
    %409 = arith.addf %406, %408 : vector<8x32xf32>
    %410 = vector.extract_strided_slice %384 {offsets = [0, 64], sizes = [8, 32], strides = [1, 1]} : vector<8x128xf32> to vector<8x32xf32>
    %411 = math.tanh %404 : vector<8x32xf32>
    %412 = arith.mulf %410, %411 : vector<8x32xf32>
    %413 = vector.extract_strided_slice %389 {offsets = [0, 64], sizes = [8, 32], strides = [1, 1]} : vector<8x128xf32> to vector<8x32xf32>
    %414 = math.tanh %409 : vector<8x32xf32>
    %415 = arith.mulf %413, %414 : vector<8x32xf32>
    %c7_139 = arith.constant 7 : index
    %c0_140 = arith.constant 0 : index
    %c0_141 = arith.constant 0 : index
    %416 = vector.load %arg10[%c7_139, %c0_140, %c0_141] : memref<16x8x64xf32, #tpu.memory_space<vmem>>, vector<1x8x32xf32>
    %417 = vector.shape_cast %416 : vector<1x8x32xf32> to vector<8x32xf32>
    %418 = vector.shape_cast %412 : vector<8x32xf32> to vector<1x8x32xf32>
    tpu.vector_store %arg10[%c7_139, %c0_140, %c0_141], %418 {strides = array<i32>} : memref<16x8x64xf32, #tpu.memory_space<vmem>>, vector<1x8x32xf32>,
    %c8_142 = arith.constant 8 : index
    %c0_143 = arith.constant 0 : index
    %c32_144 = arith.constant 32 : index
    %419 = vector.load %arg10[%c8_142, %c0_143, %c32_144] : memref<16x8x64xf32, #tpu.memory_space<vmem>>, vector<1x8x32xf32>
    %420 = vector.shape_cast %419 : vector<1x8x32xf32> to vector<8x32xf32>
    %421 = vector.shape_cast %415 : vector<8x32xf32> to vector<1x8x32xf32>
    tpu.vector_store %arg10[%c8_142, %c0_143, %c32_144], %421 {strides = array<i32>} : memref<16x8x64xf32, #tpu.memory_space<vmem>>, vector<1x8x32xf32>,
    %422 = tpu.concatenate %412, %415 in 1 : vector<8x32xf32>, vector<8x32xf32> -> vector<8x64xf32>
    %423 = arith.truncf %422 : vector<8x64xf32> to vector<8x64xbf16>
    %cst_145 = arith.constant dense<0.000000e+00> : vector<8x256xf32>
    %424 = tpu.matmul %423, %10, %cst_145 {dimension_numbers = #tpu.dot_dimension_numbers<[1], [0], [0], [1], [0, 0, 1, 1], [], []>} : vector<8x64xbf16>, vector<64x256xbf16>, vector<8x256xf32> -> vector<8x256xf32>
    %425 = vector.extract_strided_slice %424 {offsets = [0, 0], sizes = [8, 128], strides = [1, 1]} : vector<8x256xf32> to vector<8x128xf32>
    %c8_146 = arith.constant 8 : index
    %c0_147 = arith.constant 0 : index
    %c0_148 = arith.constant 0 : index
    %426 = vector.load %arg9[%c8_146, %c0_147, %c0_148] : memref<16x8x256xf32, #tpu.memory_space<vmem>>, vector<1x8x128xf32>
    %427 = vector.shape_cast %426 : vector<1x8x128xf32> to vector<8x128xf32>
    %428 = arith.addf %425, %427 : vector<8x128xf32>
    %429 = vector.extract_strided_slice %424 {offsets = [0, 128], sizes = [8, 128], strides = [1, 1]} : vector<8x256xf32> to vector<8x128xf32>
    %c7_149 = arith.constant 7 : index
    %c0_150 = arith.constant 0 : index
    %c128_151 = arith.constant 128 : index
    %430 = vector.load %arg9[%c7_149, %c0_150, %c128_151] : memref<16x8x256xf32, #tpu.memory_space<vmem>>, vector<1x8x128xf32>
    %431 = vector.shape_cast %430 : vector<1x8x128xf32> to vector<8x128xf32>
    %432 = arith.addf %429, %431 : vector<8x128xf32>
    %433 = arith.negf %428 : vector<8x128xf32>
    %434 = math.exp %433 : vector<8x128xf32>
    %cst_152 = arith.constant 1.000000e+00 : f32
    %435 = vector.broadcast %cst_152 : f32 to vector<8x128xf32>
    %436 = arith.addf %435, %434 : vector<8x128xf32>
    %437 = arith.divf %435, %436 : vector<8x128xf32>
    %438 = arith.negf %432 : vector<8x128xf32>
    %439 = math.exp %438 : vector<8x128xf32>
    %cst_153 = arith.constant 1.000000e+00 : f32
    %440 = vector.broadcast %cst_153 : f32 to vector<8x128xf32>
    %441 = arith.addf %440, %439 : vector<8x128xf32>
    %442 = arith.divf %440, %441 : vector<8x128xf32>
    %443 = vector.extract_strided_slice %437 {offsets = [0, 96], sizes = [8, 32], strides = [1, 1]} : vector<8x128xf32> to vector<8x32xf32>
    %cst_154 = arith.constant 2.000000e+00 : f32
    %444 = vector.broadcast %cst_154 : f32 to vector<8x32xf32>
    %445 = arith.mulf %444, %443 : vector<8x32xf32>
    %cst_155 = arith.constant 1.000000e+00 : f32
    %446 = vector.broadcast %cst_155 : f32 to vector<8x32xf32>
    %447 = arith.subf %445, %446 : vector<8x32xf32>
    %448 = vector.extract_strided_slice %442 {offsets = [0, 96], sizes = [8, 32], strides = [1, 1]} : vector<8x128xf32> to vector<8x32xf32>
    %cst_156 = arith.constant 2.000000e+00 : f32
    %449 = vector.broadcast %cst_156 : f32 to vector<8x32xf32>
    %450 = arith.mulf %449, %448 : vector<8x32xf32>
    %cst_157 = arith.constant 1.000000e+00 : f32
    %451 = vector.broadcast %cst_157 : f32 to vector<8x32xf32>
    %452 = arith.subf %450, %451 : vector<8x32xf32>
    %453 = vector.extract_strided_slice %437 {offsets = [0, 32], sizes = [8, 32], strides = [1, 1]} : vector<8x128xf32> to vector<8x32xf32>
    %454 = arith.mulf %453, %404 : vector<8x32xf32>
    %455 = vector.extract_strided_slice %437 {offsets = [0, 0], sizes = [8, 32], strides = [1, 1]} : vector<8x128xf32> to vector<8x32xf32>
    %456 = arith.mulf %455, %447 : vector<8x32xf32>
    %457 = arith.addf %454, %456 : vector<8x32xf32>
    %458 = vector.extract_strided_slice %442 {offsets = [0, 32], sizes = [8, 32], strides = [1, 1]} : vector<8x128xf32> to vector<8x32xf32>
    %459 = arith.mulf %458, %409 : vector<8x32xf32>
    %460 = vector.extract_strided_slice %442 {offsets = [0, 0], sizes = [8, 32], strides = [1, 1]} : vector<8x128xf32> to vector<8x32xf32>
    %461 = arith.mulf %460, %452 : vector<8x32xf32>
    %462 = arith.addf %459, %461 : vector<8x32xf32>
    %463 = vector.extract_strided_slice %437 {offsets = [0, 64], sizes = [8, 32], strides = [1, 1]} : vector<8x128xf32> to vector<8x32xf32>
    %464 = math.tanh %457 : vector<8x32xf32>
    %465 = arith.mulf %463, %464 : vector<8x32xf32>
    %466 = vector.extract_strided_slice %442 {offsets = [0, 64], sizes = [8, 32], strides = [1, 1]} : vector<8x128xf32> to vector<8x32xf32>
    %467 = math.tanh %462 : vector<8x32xf32>
    %468 = arith.mulf %466, %467 : vector<8x32xf32>
    %c8_158 = arith.constant 8 : index
    %c0_159 = arith.constant 0 : index
    %c0_160 = arith.constant 0 : index
    %469 = vector.load %arg10[%c8_158, %c0_159, %c0_160] : memref<16x8x64xf32, #tpu.memory_space<vmem>>, vector<1x8x32xf32>
    %470 = vector.shape_cast %469 : vector<1x8x32xf32> to vector<8x32xf32>
    %471 = vector.shape_cast %465 : vector<8x32xf32> to vector<1x8x32xf32>
    tpu.vector_store %arg10[%c8_158, %c0_159, %c0_160], %471 {strides = array<i32>} : memref<16x8x64xf32, #tpu.memory_space<vmem>>, vector<1x8x32xf32>,
    %c7_161 = arith.constant 7 : index
    %c0_162 = arith.constant 0 : index
    %c32_163 = arith.constant 32 : index
    %472 = vector.load %arg10[%c7_161, %c0_162, %c32_163] : memref<16x8x64xf32, #tpu.memory_space<vmem>>, vector<1x8x32xf32>
    %473 = vector.shape_cast %472 : vector<1x8x32xf32> to vector<8x32xf32>
    %474 = vector.shape_cast %468 : vector<8x32xf32> to vector<1x8x32xf32>
    tpu.vector_store %arg10[%c7_161, %c0_162, %c32_163], %474 {strides = array<i32>} : memref<16x8x64xf32, #tpu.memory_space<vmem>>, vector<1x8x32xf32>,
    %475 = tpu.concatenate %465, %468 in 1 : vector<8x32xf32>, vector<8x32xf32> -> vector<8x64xf32>
    %476 = arith.truncf %475 : vector<8x64xf32> to vector<8x64xbf16>
    %cst_164 = arith.constant dense<0.000000e+00> : vector<8x256xf32>
    %477 = tpu.matmul %476, %10, %cst_164 {dimension_numbers = #tpu.dot_dimension_numbers<[1], [0], [0], [1], [0, 0, 1, 1], [], []>} : vector<8x64xbf16>, vector<64x256xbf16>, vector<8x256xf32> -> vector<8x256xf32>
    %478 = vector.extract_strided_slice %477 {offsets = [0, 0], sizes = [8, 128], strides = [1, 1]} : vector<8x256xf32> to vector<8x128xf32>
    %c9_165 = arith.constant 9 : index
    %c0_166 = arith.constant 0 : index
    %c0_167 = arith.constant 0 : index
    %479 = vector.load %arg9[%c9_165, %c0_166, %c0_167] : memref<16x8x256xf32, #tpu.memory_space<vmem>>, vector<1x8x128xf32>
    %480 = vector.shape_cast %479 : vector<1x8x128xf32> to vector<8x128xf32>
    %481 = arith.addf %478, %480 : vector<8x128xf32>
    %482 = vector.extract_strided_slice %477 {offsets = [0, 128], sizes = [8, 128], strides = [1, 1]} : vector<8x256xf32> to vector<8x128xf32>
    %c6_168 = arith.constant 6 : index
    %c0_169 = arith.constant 0 : index
    %c128_170 = arith.constant 128 : index
    %483 = vector.load %arg9[%c6_168, %c0_169, %c128_170] : memref<16x8x256xf32, #tpu.memory_space<vmem>>, vector<1x8x128xf32>
    %484 = vector.shape_cast %483 : vector<1x8x128xf32> to vector<8x128xf32>
    %485 = arith.addf %482, %484 : vector<8x128xf32>
    %486 = arith.negf %481 : vector<8x128xf32>
    %487 = math.exp %486 : vector<8x128xf32>
    %cst_171 = arith.constant 1.000000e+00 : f32
    %488 = vector.broadcast %cst_171 : f32 to vector<8x128xf32>
    %489 = arith.addf %488, %487 : vector<8x128xf32>
    %490 = arith.divf %488, %489 : vector<8x128xf32>
    %491 = arith.negf %485 : vector<8x128xf32>
    %492 = math.exp %491 : vector<8x128xf32>
    %cst_172 = arith.constant 1.000000e+00 : f32
    %493 = vector.broadcast %cst_172 : f32 to vector<8x128xf32>
    %494 = arith.addf %493, %492 : vector<8x128xf32>
    %495 = arith.divf %493, %494 : vector<8x128xf32>
    %496 = vector.extract_strided_slice %490 {offsets = [0, 96], sizes = [8, 32], strides = [1, 1]} : vector<8x128xf32> to vector<8x32xf32>
    %cst_173 = arith.constant 2.000000e+00 : f32
    %497 = vector.broadcast %cst_173 : f32 to vector<8x32xf32>
    %498 = arith.mulf %497, %496 : vector<8x32xf32>
    %cst_174 = arith.constant 1.000000e+00 : f32
    %499 = vector.broadcast %cst_174 : f32 to vector<8x32xf32>
    %500 = arith.subf %498, %499 : vector<8x32xf32>
    %501 = vector.extract_strided_slice %495 {offsets = [0, 96], sizes = [8, 32], strides = [1, 1]} : vector<8x128xf32> to vector<8x32xf32>
    %cst_175 = arith.constant 2.000000e+00 : f32
    %502 = vector.broadcast %cst_175 : f32 to vector<8x32xf32>
    %503 = arith.mulf %502, %501 : vector<8x32xf32>
    %cst_176 = arith.constant 1.000000e+00 : f32
    %504 = vector.broadcast %cst_176 : f32 to vector<8x32xf32>
    %505 = arith.subf %503, %504 : vector<8x32xf32>
    %506 = vector.extract_strided_slice %490 {offsets = [0, 32], sizes = [8, 32], strides = [1, 1]} : vector<8x128xf32> to vector<8x32xf32>
    %507 = arith.mulf %506, %457 : vector<8x32xf32>
    %508 = vector.extract_strided_slice %490 {offsets = [0, 0], sizes = [8, 32], strides = [1, 1]} : vector<8x128xf32> to vector<8x32xf32>
    %509 = arith.mulf %508, %500 : vector<8x32xf32>
    %510 = arith.addf %507, %509 : vector<8x32xf32>
    %511 = vector.extract_strided_slice %495 {offsets = [0, 32], sizes = [8, 32], strides = [1, 1]} : vector<8x128xf32> to vector<8x32xf32>
    %512 = arith.mulf %511, %462 : vector<8x32xf32>
    %513 = vector.extract_strided_slice %495 {offsets = [0, 0], sizes = [8, 32], strides = [1, 1]} : vector<8x128xf32> to vector<8x32xf32>
    %514 = arith.mulf %513, %505 : vector<8x32xf32>
    %515 = arith.addf %512, %514 : vector<8x32xf32>
    %516 = vector.extract_strided_slice %490 {offsets = [0, 64], sizes = [8, 32], strides = [1, 1]} : vector<8x128xf32> to vector<8x32xf32>
    %517 = math.tanh %510 : vector<8x32xf32>
    %518 = arith.mulf %516, %517 : vector<8x32xf32>
    %519 = vector.extract_strided_slice %495 {offsets = [0, 64], sizes = [8, 32], strides = [1, 1]} : vector<8x128xf32> to vector<8x32xf32>
    %520 = math.tanh %515 : vector<8x32xf32>
    %521 = arith.mulf %519, %520 : vector<8x32xf32>
    %c9_177 = arith.constant 9 : index
    %c0_178 = arith.constant 0 : index
    %c0_179 = arith.constant 0 : index
    %522 = vector.load %arg10[%c9_177, %c0_178, %c0_179] : memref<16x8x64xf32, #tpu.memory_space<vmem>>, vector<1x8x32xf32>
    %523 = vector.shape_cast %522 : vector<1x8x32xf32> to vector<8x32xf32>
    %524 = vector.shape_cast %518 : vector<8x32xf32> to vector<1x8x32xf32>
    tpu.vector_store %arg10[%c9_177, %c0_178, %c0_179], %524 {strides = array<i32>} : memref<16x8x64xf32, #tpu.memory_space<vmem>>, vector<1x8x32xf32>,
    %c6_180 = arith.constant 6 : index
    %c0_181 = arith.constant 0 : index
    %c32_182 = arith.constant 32 : index
    %525 = vector.load %arg10[%c6_180, %c0_181, %c32_182] : memref<16x8x64xf32, #tpu.memory_space<vmem>>, vector<1x8x32xf32>
    %526 = vector.shape_cast %525 : vector<1x8x32xf32> to vector<8x32xf32>
    %527 = vector.shape_cast %521 : vector<8x32xf32> to vector<1x8x32xf32>
    tpu.vector_store %arg10[%c6_180, %c0_181, %c32_182], %527 {strides = array<i32>} : memref<16x8x64xf32, #tpu.memory_space<vmem>>, vector<1x8x32xf32>,
    %528 = tpu.concatenate %518, %521 in 1 : vector<8x32xf32>, vector<8x32xf32> -> vector<8x64xf32>
    %529 = arith.truncf %528 : vector<8x64xf32> to vector<8x64xbf16>
    %cst_183 = arith.constant dense<0.000000e+00> : vector<8x256xf32>
    %530 = tpu.matmul %529, %10, %cst_183 {dimension_numbers = #tpu.dot_dimension_numbers<[1], [0], [0], [1], [0, 0, 1, 1], [], []>} : vector<8x64xbf16>, vector<64x256xbf16>, vector<8x256xf32> -> vector<8x256xf32>
    %531 = vector.extract_strided_slice %530 {offsets = [0, 0], sizes = [8, 128], strides = [1, 1]} : vector<8x256xf32> to vector<8x128xf32>
    %c10_184 = arith.constant 10 : index
    %c0_185 = arith.constant 0 : index
    %c0_186 = arith.constant 0 : index
    %532 = vector.load %arg9[%c10_184, %c0_185, %c0_186] : memref<16x8x256xf32, #tpu.memory_space<vmem>>, vector<1x8x128xf32>
    %533 = vector.shape_cast %532 : vector<1x8x128xf32> to vector<8x128xf32>
    %534 = arith.addf %531, %533 : vector<8x128xf32>
    %535 = vector.extract_strided_slice %530 {offsets = [0, 128], sizes = [8, 128], strides = [1, 1]} : vector<8x256xf32> to vector<8x128xf32>
    %c5_187 = arith.constant 5 : index
    %c0_188 = arith.constant 0 : index
    %c128_189 = arith.constant 128 : index
    %536 = vector.load %arg9[%c5_187, %c0_188, %c128_189] : memref<16x8x256xf32, #tpu.memory_space<vmem>>, vector<1x8x128xf32>
    %537 = vector.shape_cast %536 : vector<1x8x128xf32> to vector<8x128xf32>
    %538 = arith.addf %535, %537 : vector<8x128xf32>
    %539 = arith.negf %534 : vector<8x128xf32>
    %540 = math.exp %539 : vector<8x128xf32>
    %cst_190 = arith.constant 1.000000e+00 : f32
    %541 = vector.broadcast %cst_190 : f32 to vector<8x128xf32>
    %542 = arith.addf %541, %540 : vector<8x128xf32>
    %543 = arith.divf %541, %542 : vector<8x128xf32>
    %544 = arith.negf %538 : vector<8x128xf32>
    %545 = math.exp %544 : vector<8x128xf32>
    %cst_191 = arith.constant 1.000000e+00 : f32
    %546 = vector.broadcast %cst_191 : f32 to vector<8x128xf32>
    %547 = arith.addf %546, %545 : vector<8x128xf32>
    %548 = arith.divf %546, %547 : vector<8x128xf32>
    %549 = vector.extract_strided_slice %543 {offsets = [0, 96], sizes = [8, 32], strides = [1, 1]} : vector<8x128xf32> to vector<8x32xf32>
    %cst_192 = arith.constant 2.000000e+00 : f32
    %550 = vector.broadcast %cst_192 : f32 to vector<8x32xf32>
    %551 = arith.mulf %550, %549 : vector<8x32xf32>
    %cst_193 = arith.constant 1.000000e+00 : f32
    %552 = vector.broadcast %cst_193 : f32 to vector<8x32xf32>
    %553 = arith.subf %551, %552 : vector<8x32xf32>
    %554 = vector.extract_strided_slice %548 {offsets = [0, 96], sizes = [8, 32], strides = [1, 1]} : vector<8x128xf32> to vector<8x32xf32>
    %cst_194 = arith.constant 2.000000e+00 : f32
    %555 = vector.broadcast %cst_194 : f32 to vector<8x32xf32>
    %556 = arith.mulf %555, %554 : vector<8x32xf32>
    %cst_195 = arith.constant 1.000000e+00 : f32
    %557 = vector.broadcast %cst_195 : f32 to vector<8x32xf32>
    %558 = arith.subf %556, %557 : vector<8x32xf32>
    %559 = vector.extract_strided_slice %543 {offsets = [0, 32], sizes = [8, 32], strides = [1, 1]} : vector<8x128xf32> to vector<8x32xf32>
    %560 = arith.mulf %559, %510 : vector<8x32xf32>
    %561 = vector.extract_strided_slice %543 {offsets = [0, 0], sizes = [8, 32], strides = [1, 1]} : vector<8x128xf32> to vector<8x32xf32>
    %562 = arith.mulf %561, %553 : vector<8x32xf32>
    %563 = arith.addf %560, %562 : vector<8x32xf32>
    %564 = vector.extract_strided_slice %548 {offsets = [0, 32], sizes = [8, 32], strides = [1, 1]} : vector<8x128xf32> to vector<8x32xf32>
    %565 = arith.mulf %564, %515 : vector<8x32xf32>
    %566 = vector.extract_strided_slice %548 {offsets = [0, 0], sizes = [8, 32], strides = [1, 1]} : vector<8x128xf32> to vector<8x32xf32>
    %567 = arith.mulf %566, %558 : vector<8x32xf32>
    %568 = arith.addf %565, %567 : vector<8x32xf32>
    %569 = vector.extract_strided_slice %543 {offsets = [0, 64], sizes = [8, 32], strides = [1, 1]} : vector<8x128xf32> to vector<8x32xf32>
    %570 = math.tanh %563 : vector<8x32xf32>
    %571 = arith.mulf %569, %570 : vector<8x32xf32>
    %572 = vector.extract_strided_slice %548 {offsets = [0, 64], sizes = [8, 32], strides = [1, 1]} : vector<8x128xf32> to vector<8x32xf32>
    %573 = math.tanh %568 : vector<8x32xf32>
    %574 = arith.mulf %572, %573 : vector<8x32xf32>
    %c10_196 = arith.constant 10 : index
    %c0_197 = arith.constant 0 : index
    %c0_198 = arith.constant 0 : index
    %575 = vector.load %arg10[%c10_196, %c0_197, %c0_198] : memref<16x8x64xf32, #tpu.memory_space<vmem>>, vector<1x8x32xf32>
    %576 = vector.shape_cast %575 : vector<1x8x32xf32> to vector<8x32xf32>
    %577 = vector.shape_cast %571 : vector<8x32xf32> to vector<1x8x32xf32>
    tpu.vector_store %arg10[%c10_196, %c0_197, %c0_198], %577 {strides = array<i32>} : memref<16x8x64xf32, #tpu.memory_space<vmem>>, vector<1x8x32xf32>,
    %c5_199 = arith.constant 5 : index
    %c0_200 = arith.constant 0 : index
    %c32_201 = arith.constant 32 : index
    %578 = vector.load %arg10[%c5_199, %c0_200, %c32_201] : memref<16x8x64xf32, #tpu.memory_space<vmem>>, vector<1x8x32xf32>
    %579 = vector.shape_cast %578 : vector<1x8x32xf32> to vector<8x32xf32>
    %580 = vector.shape_cast %574 : vector<8x32xf32> to vector<1x8x32xf32>
    tpu.vector_store %arg10[%c5_199, %c0_200, %c32_201], %580 {strides = array<i32>} : memref<16x8x64xf32, #tpu.memory_space<vmem>>, vector<1x8x32xf32>,
    %581 = tpu.concatenate %571, %574 in 1 : vector<8x32xf32>, vector<8x32xf32> -> vector<8x64xf32>
    %582 = arith.truncf %581 : vector<8x64xf32> to vector<8x64xbf16>
    %cst_202 = arith.constant dense<0.000000e+00> : vector<8x256xf32>
    %583 = tpu.matmul %582, %10, %cst_202 {dimension_numbers = #tpu.dot_dimension_numbers<[1], [0], [0], [1], [0, 0, 1, 1], [], []>} : vector<8x64xbf16>, vector<64x256xbf16>, vector<8x256xf32> -> vector<8x256xf32>
    %584 = vector.extract_strided_slice %583 {offsets = [0, 0], sizes = [8, 128], strides = [1, 1]} : vector<8x256xf32> to vector<8x128xf32>
    %c11_203 = arith.constant 11 : index
    %c0_204 = arith.constant 0 : index
    %c0_205 = arith.constant 0 : index
    %585 = vector.load %arg9[%c11_203, %c0_204, %c0_205] : memref<16x8x256xf32, #tpu.memory_space<vmem>>, vector<1x8x128xf32>
    %586 = vector.shape_cast %585 : vector<1x8x128xf32> to vector<8x128xf32>
    %587 = arith.addf %584, %586 : vector<8x128xf32>
    %588 = vector.extract_strided_slice %583 {offsets = [0, 128], sizes = [8, 128], strides = [1, 1]} : vector<8x256xf32> to vector<8x128xf32>
    %c4_206 = arith.constant 4 : index
    %c0_207 = arith.constant 0 : index
    %c128_208 = arith.constant 128 : index
    %589 = vector.load %arg9[%c4_206, %c0_207, %c128_208] : memref<16x8x256xf32, #tpu.memory_space<vmem>>, vector<1x8x128xf32>
    %590 = vector.shape_cast %589 : vector<1x8x128xf32> to vector<8x128xf32>
    %591 = arith.addf %588, %590 : vector<8x128xf32>
    %592 = arith.negf %587 : vector<8x128xf32>
    %593 = math.exp %592 : vector<8x128xf32>
    %cst_209 = arith.constant 1.000000e+00 : f32
    %594 = vector.broadcast %cst_209 : f32 to vector<8x128xf32>
    %595 = arith.addf %594, %593 : vector<8x128xf32>
    %596 = arith.divf %594, %595 : vector<8x128xf32>
    %597 = arith.negf %591 : vector<8x128xf32>
    %598 = math.exp %597 : vector<8x128xf32>
    %cst_210 = arith.constant 1.000000e+00 : f32
    %599 = vector.broadcast %cst_210 : f32 to vector<8x128xf32>
    %600 = arith.addf %599, %598 : vector<8x128xf32>
    %601 = arith.divf %599, %600 : vector<8x128xf32>
    %602 = vector.extract_strided_slice %596 {offsets = [0, 96], sizes = [8, 32], strides = [1, 1]} : vector<8x128xf32> to vector<8x32xf32>
    %cst_211 = arith.constant 2.000000e+00 : f32
    %603 = vector.broadcast %cst_211 : f32 to vector<8x32xf32>
    %604 = arith.mulf %603, %602 : vector<8x32xf32>
    %cst_212 = arith.constant 1.000000e+00 : f32
    %605 = vector.broadcast %cst_212 : f32 to vector<8x32xf32>
    %606 = arith.subf %604, %605 : vector<8x32xf32>
    %607 = vector.extract_strided_slice %601 {offsets = [0, 96], sizes = [8, 32], strides = [1, 1]} : vector<8x128xf32> to vector<8x32xf32>
    %cst_213 = arith.constant 2.000000e+00 : f32
    %608 = vector.broadcast %cst_213 : f32 to vector<8x32xf32>
    %609 = arith.mulf %608, %607 : vector<8x32xf32>
    %cst_214 = arith.constant 1.000000e+00 : f32
    %610 = vector.broadcast %cst_214 : f32 to vector<8x32xf32>
    %611 = arith.subf %609, %610 : vector<8x32xf32>
    %612 = vector.extract_strided_slice %596 {offsets = [0, 32], sizes = [8, 32], strides = [1, 1]} : vector<8x128xf32> to vector<8x32xf32>
    %613 = arith.mulf %612, %563 : vector<8x32xf32>
    %614 = vector.extract_strided_slice %596 {offsets = [0, 0], sizes = [8, 32], strides = [1, 1]} : vector<8x128xf32> to vector<8x32xf32>
    %615 = arith.mulf %614, %606 : vector<8x32xf32>
    %616 = arith.addf %613, %615 : vector<8x32xf32>
    %617 = vector.extract_strided_slice %601 {offsets = [0, 32], sizes = [8, 32], strides = [1, 1]} : vector<8x128xf32> to vector<8x32xf32>
    %618 = arith.mulf %617, %568 : vector<8x32xf32>
    %619 = vector.extract_strided_slice %601 {offsets = [0, 0], sizes = [8, 32], strides = [1, 1]} : vector<8x128xf32> to vector<8x32xf32>
    %620 = arith.mulf %619, %611 : vector<8x32xf32>
    %621 = arith.addf %618, %620 : vector<8x32xf32>
    %622 = vector.extract_strided_slice %596 {offsets = [0, 64], sizes = [8, 32], strides = [1, 1]} : vector<8x128xf32> to vector<8x32xf32>
    %623 = math.tanh %616 : vector<8x32xf32>
    %624 = arith.mulf %622, %623 : vector<8x32xf32>
    %625 = vector.extract_strided_slice %601 {offsets = [0, 64], sizes = [8, 32], strides = [1, 1]} : vector<8x128xf32> to vector<8x32xf32>
    %626 = math.tanh %621 : vector<8x32xf32>
    %627 = arith.mulf %625, %626 : vector<8x32xf32>
    %c11_215 = arith.constant 11 : index
    %c0_216 = arith.constant 0 : index
    %c0_217 = arith.constant 0 : index
    %628 = vector.load %arg10[%c11_215, %c0_216, %c0_217] : memref<16x8x64xf32, #tpu.memory_space<vmem>>, vector<1x8x32xf32>
    %629 = vector.shape_cast %628 : vector<1x8x32xf32> to vector<8x32xf32>
    %630 = vector.shape_cast %624 : vector<8x32xf32> to vector<1x8x32xf32>
    tpu.vector_store %arg10[%c11_215, %c0_216, %c0_217], %630 {strides = array<i32>} : memref<16x8x64xf32, #tpu.memory_space<vmem>>, vector<1x8x32xf32>,
    %c4_218 = arith.constant 4 : index
    %c0_219 = arith.constant 0 : index
    %c32_220 = arith.constant 32 : index
    %631 = vector.load %arg10[%c4_218, %c0_219, %c32_220] : memref<16x8x64xf32, #tpu.memory_space<vmem>>, vector<1x8x32xf32>
    %632 = vector.shape_cast %631 : vector<1x8x32xf32> to vector<8x32xf32>
    %633 = vector.shape_cast %627 : vector<8x32xf32> to vector<1x8x32xf32>
    tpu.vector_store %arg10[%c4_218, %c0_219, %c32_220], %633 {strides = array<i32>} : memref<16x8x64xf32, #tpu.memory_space<vmem>>, vector<1x8x32xf32>,
    %634 = tpu.concatenate %624, %627 in 1 : vector<8x32xf32>, vector<8x32xf32> -> vector<8x64xf32>
    %635 = arith.truncf %634 : vector<8x64xf32> to vector<8x64xbf16>
    %cst_221 = arith.constant dense<0.000000e+00> : vector<8x256xf32>
    %636 = tpu.matmul %635, %10, %cst_221 {dimension_numbers = #tpu.dot_dimension_numbers<[1], [0], [0], [1], [0, 0, 1, 1], [], []>} : vector<8x64xbf16>, vector<64x256xbf16>, vector<8x256xf32> -> vector<8x256xf32>
    %637 = vector.extract_strided_slice %636 {offsets = [0, 0], sizes = [8, 128], strides = [1, 1]} : vector<8x256xf32> to vector<8x128xf32>
    %c12_222 = arith.constant 12 : index
    %c0_223 = arith.constant 0 : index
    %c0_224 = arith.constant 0 : index
    %638 = vector.load %arg9[%c12_222, %c0_223, %c0_224] : memref<16x8x256xf32, #tpu.memory_space<vmem>>, vector<1x8x128xf32>
    %639 = vector.shape_cast %638 : vector<1x8x128xf32> to vector<8x128xf32>
    %640 = arith.addf %637, %639 : vector<8x128xf32>
    %641 = vector.extract_strided_slice %636 {offsets = [0, 128], sizes = [8, 128], strides = [1, 1]} : vector<8x256xf32> to vector<8x128xf32>
    %c3_225 = arith.constant 3 : index
    %c0_226 = arith.constant 0 : index
    %c128_227 = arith.constant 128 : index
    %642 = vector.load %arg9[%c3_225, %c0_226, %c128_227] : memref<16x8x256xf32, #tpu.memory_space<vmem>>, vector<1x8x128xf32>
    %643 = vector.shape_cast %642 : vector<1x8x128xf32> to vector<8x128xf32>
    %644 = arith.addf %641, %643 : vector<8x128xf32>
    %645 = arith.negf %640 : vector<8x128xf32>
    %646 = math.exp %645 : vector<8x128xf32>
    %cst_228 = arith.constant 1.000000e+00 : f32
    %647 = vector.broadcast %cst_228 : f32 to vector<8x128xf32>
    %648 = arith.addf %647, %646 : vector<8x128xf32>
    %649 = arith.divf %647, %648 : vector<8x128xf32>
    %650 = arith.negf %644 : vector<8x128xf32>
    %651 = math.exp %650 : vector<8x128xf32>
    %cst_229 = arith.constant 1.000000e+00 : f32
    %652 = vector.broadcast %cst_229 : f32 to vector<8x128xf32>
    %653 = arith.addf %652, %651 : vector<8x128xf32>
    %654 = arith.divf %652, %653 : vector<8x128xf32>
    %655 = vector.extract_strided_slice %649 {offsets = [0, 96], sizes = [8, 32], strides = [1, 1]} : vector<8x128xf32> to vector<8x32xf32>
    %cst_230 = arith.constant 2.000000e+00 : f32
    %656 = vector.broadcast %cst_230 : f32 to vector<8x32xf32>
    %657 = arith.mulf %656, %655 : vector<8x32xf32>
    %cst_231 = arith.constant 1.000000e+00 : f32
    %658 = vector.broadcast %cst_231 : f32 to vector<8x32xf32>
    %659 = arith.subf %657, %658 : vector<8x32xf32>
    %660 = vector.extract_strided_slice %654 {offsets = [0, 96], sizes = [8, 32], strides = [1, 1]} : vector<8x128xf32> to vector<8x32xf32>
    %cst_232 = arith.constant 2.000000e+00 : f32
    %661 = vector.broadcast %cst_232 : f32 to vector<8x32xf32>
    %662 = arith.mulf %661, %660 : vector<8x32xf32>
    %cst_233 = arith.constant 1.000000e+00 : f32
    %663 = vector.broadcast %cst_233 : f32 to vector<8x32xf32>
    %664 = arith.subf %662, %663 : vector<8x32xf32>
    %665 = vector.extract_strided_slice %649 {offsets = [0, 32], sizes = [8, 32], strides = [1, 1]} : vector<8x128xf32> to vector<8x32xf32>
    %666 = arith.mulf %665, %616 : vector<8x32xf32>
    %667 = vector.extract_strided_slice %649 {offsets = [0, 0], sizes = [8, 32], strides = [1, 1]} : vector<8x128xf32> to vector<8x32xf32>
    %668 = arith.mulf %667, %659 : vector<8x32xf32>
    %669 = arith.addf %666, %668 : vector<8x32xf32>
    %670 = vector.extract_strided_slice %654 {offsets = [0, 32], sizes = [8, 32], strides = [1, 1]} : vector<8x128xf32> to vector<8x32xf32>
    %671 = arith.mulf %670, %621 : vector<8x32xf32>
    %672 = vector.extract_strided_slice %654 {offsets = [0, 0], sizes = [8, 32], strides = [1, 1]} : vector<8x128xf32> to vector<8x32xf32>
    %673 = arith.mulf %672, %664 : vector<8x32xf32>
    %674 = arith.addf %671, %673 : vector<8x32xf32>
    %675 = vector.extract_strided_slice %649 {offsets = [0, 64], sizes = [8, 32], strides = [1, 1]} : vector<8x128xf32> to vector<8x32xf32>
    %676 = math.tanh %669 : vector<8x32xf32>
    %677 = arith.mulf %675, %676 : vector<8x32xf32>
    %678 = vector.extract_strided_slice %654 {offsets = [0, 64], sizes = [8, 32], strides = [1, 1]} : vector<8x128xf32> to vector<8x32xf32>
    %679 = math.tanh %674 : vector<8x32xf32>
    %680 = arith.mulf %678, %679 : vector<8x32xf32>
    %c12_234 = arith.constant 12 : index
    %c0_235 = arith.constant 0 : index
    %c0_236 = arith.constant 0 : index
    %681 = vector.load %arg10[%c12_234, %c0_235, %c0_236] : memref<16x8x64xf32, #tpu.memory_space<vmem>>, vector<1x8x32xf32>
    %682 = vector.shape_cast %681 : vector<1x8x32xf32> to vector<8x32xf32>
    %683 = vector.shape_cast %677 : vector<8x32xf32> to vector<1x8x32xf32>
    tpu.vector_store %arg10[%c12_234, %c0_235, %c0_236], %683 {strides = array<i32>} : memref<16x8x64xf32, #tpu.memory_space<vmem>>, vector<1x8x32xf32>,
    %c3_237 = arith.constant 3 : index
    %c0_238 = arith.constant 0 : index
    %c32_239 = arith.constant 32 : index
    %684 = vector.load %arg10[%c3_237, %c0_238, %c32_239] : memref<16x8x64xf32, #tpu.memory_space<vmem>>, vector<1x8x32xf32>
    %685 = vector.shape_cast %684 : vector<1x8x32xf32> to vector<8x32xf32>
    %686 = vector.shape_cast %680 : vector<8x32xf32> to vector<1x8x32xf32>
    tpu.vector_store %arg10[%c3_237, %c0_238, %c32_239], %686 {strides = array<i32>} : memref<16x8x64xf32, #tpu.memory_space<vmem>>, vector<1x8x32xf32>,
    %687 = tpu.concatenate %677, %680 in 1 : vector<8x32xf32>, vector<8x32xf32> -> vector<8x64xf32>
    %688 = arith.truncf %687 : vector<8x64xf32> to vector<8x64xbf16>
    %cst_240 = arith.constant dense<0.000000e+00> : vector<8x256xf32>
    %689 = tpu.matmul %688, %10, %cst_240 {dimension_numbers = #tpu.dot_dimension_numbers<[1], [0], [0], [1], [0, 0, 1, 1], [], []>} : vector<8x64xbf16>, vector<64x256xbf16>, vector<8x256xf32> -> vector<8x256xf32>
    %690 = vector.extract_strided_slice %689 {offsets = [0, 0], sizes = [8, 128], strides = [1, 1]} : vector<8x256xf32> to vector<8x128xf32>
    %c13_241 = arith.constant 13 : index
    %c0_242 = arith.constant 0 : index
    %c0_243 = arith.constant 0 : index
    %691 = vector.load %arg9[%c13_241, %c0_242, %c0_243] : memref<16x8x256xf32, #tpu.memory_space<vmem>>, vector<1x8x128xf32>
    %692 = vector.shape_cast %691 : vector<1x8x128xf32> to vector<8x128xf32>
    %693 = arith.addf %690, %692 : vector<8x128xf32>
    %694 = vector.extract_strided_slice %689 {offsets = [0, 128], sizes = [8, 128], strides = [1, 1]} : vector<8x256xf32> to vector<8x128xf32>
    %c2_244 = arith.constant 2 : index
    %c0_245 = arith.constant 0 : index
    %c128_246 = arith.constant 128 : index
    %695 = vector.load %arg9[%c2_244, %c0_245, %c128_246] : memref<16x8x256xf32, #tpu.memory_space<vmem>>, vector<1x8x128xf32>
    %696 = vector.shape_cast %695 : vector<1x8x128xf32> to vector<8x128xf32>
    %697 = arith.addf %694, %696 : vector<8x128xf32>
    %698 = arith.negf %693 : vector<8x128xf32>
    %699 = math.exp %698 : vector<8x128xf32>
    %cst_247 = arith.constant 1.000000e+00 : f32
    %700 = vector.broadcast %cst_247 : f32 to vector<8x128xf32>
    %701 = arith.addf %700, %699 : vector<8x128xf32>
    %702 = arith.divf %700, %701 : vector<8x128xf32>
    %703 = arith.negf %697 : vector<8x128xf32>
    %704 = math.exp %703 : vector<8x128xf32>
    %cst_248 = arith.constant 1.000000e+00 : f32
    %705 = vector.broadcast %cst_248 : f32 to vector<8x128xf32>
    %706 = arith.addf %705, %704 : vector<8x128xf32>
    %707 = arith.divf %705, %706 : vector<8x128xf32>
    %708 = vector.extract_strided_slice %702 {offsets = [0, 96], sizes = [8, 32], strides = [1, 1]} : vector<8x128xf32> to vector<8x32xf32>
    %cst_249 = arith.constant 2.000000e+00 : f32
    %709 = vector.broadcast %cst_249 : f32 to vector<8x32xf32>
    %710 = arith.mulf %709, %708 : vector<8x32xf32>
    %cst_250 = arith.constant 1.000000e+00 : f32
    %711 = vector.broadcast %cst_250 : f32 to vector<8x32xf32>
    %712 = arith.subf %710, %711 : vector<8x32xf32>
    %713 = vector.extract_strided_slice %707 {offsets = [0, 96], sizes = [8, 32], strides = [1, 1]} : vector<8x128xf32> to vector<8x32xf32>
    %cst_251 = arith.constant 2.000000e+00 : f32
    %714 = vector.broadcast %cst_251 : f32 to vector<8x32xf32>
    %715 = arith.mulf %714, %713 : vector<8x32xf32>
    %cst_252 = arith.constant 1.000000e+00 : f32
    %716 = vector.broadcast %cst_252 : f32 to vector<8x32xf32>
    %717 = arith.subf %715, %716 : vector<8x32xf32>
    %718 = vector.extract_strided_slice %702 {offsets = [0, 32], sizes = [8, 32], strides = [1, 1]} : vector<8x128xf32> to vector<8x32xf32>
    %719 = arith.mulf %718, %669 : vector<8x32xf32>
    %720 = vector.extract_strided_slice %702 {offsets = [0, 0], sizes = [8, 32], strides = [1, 1]} : vector<8x128xf32> to vector<8x32xf32>
    %721 = arith.mulf %720, %712 : vector<8x32xf32>
    %722 = arith.addf %719, %721 : vector<8x32xf32>
    %723 = vector.extract_strided_slice %707 {offsets = [0, 32], sizes = [8, 32], strides = [1, 1]} : vector<8x128xf32> to vector<8x32xf32>
    %724 = arith.mulf %723, %674 : vector<8x32xf32>
    %725 = vector.extract_strided_slice %707 {offsets = [0, 0], sizes = [8, 32], strides = [1, 1]} : vector<8x128xf32> to vector<8x32xf32>
    %726 = arith.mulf %725, %717 : vector<8x32xf32>
    %727 = arith.addf %724, %726 : vector<8x32xf32>
    %728 = vector.extract_strided_slice %702 {offsets = [0, 64], sizes = [8, 32], strides = [1, 1]} : vector<8x128xf32> to vector<8x32xf32>
    %729 = math.tanh %722 : vector<8x32xf32>
    %730 = arith.mulf %728, %729 : vector<8x32xf32>
    %731 = vector.extract_strided_slice %707 {offsets = [0, 64], sizes = [8, 32], strides = [1, 1]} : vector<8x128xf32> to vector<8x32xf32>
    %732 = math.tanh %727 : vector<8x32xf32>
    %733 = arith.mulf %731, %732 : vector<8x32xf32>
    %c13_253 = arith.constant 13 : index
    %c0_254 = arith.constant 0 : index
    %c0_255 = arith.constant 0 : index
    %734 = vector.load %arg10[%c13_253, %c0_254, %c0_255] : memref<16x8x64xf32, #tpu.memory_space<vmem>>, vector<1x8x32xf32>
    %735 = vector.shape_cast %734 : vector<1x8x32xf32> to vector<8x32xf32>
    %736 = vector.shape_cast %730 : vector<8x32xf32> to vector<1x8x32xf32>
    tpu.vector_store %arg10[%c13_253, %c0_254, %c0_255], %736 {strides = array<i32>} : memref<16x8x64xf32, #tpu.memory_space<vmem>>, vector<1x8x32xf32>,
    %c2_256 = arith.constant 2 : index
    %c0_257 = arith.constant 0 : index
    %c32_258 = arith.constant 32 : index
    %737 = vector.load %arg10[%c2_256, %c0_257, %c32_258] : memref<16x8x64xf32, #tpu.memory_space<vmem>>, vector<1x8x32xf32>
    %738 = vector.shape_cast %737 : vector<1x8x32xf32> to vector<8x32xf32>
    %739 = vector.shape_cast %733 : vector<8x32xf32> to vector<1x8x32xf32>
    tpu.vector_store %arg10[%c2_256, %c0_257, %c32_258], %739 {strides = array<i32>} : memref<16x8x64xf32, #tpu.memory_space<vmem>>, vector<1x8x32xf32>,
    %740 = tpu.concatenate %730, %733 in 1 : vector<8x32xf32>, vector<8x32xf32> -> vector<8x64xf32>
    %741 = arith.truncf %740 : vector<8x64xf32> to vector<8x64xbf16>
    %cst_259 = arith.constant dense<0.000000e+00> : vector<8x256xf32>
    %742 = tpu.matmul %741, %10, %cst_259 {dimension_numbers = #tpu.dot_dimension_numbers<[1], [0], [0], [1], [0, 0, 1, 1], [], []>} : vector<8x64xbf16>, vector<64x256xbf16>, vector<8x256xf32> -> vector<8x256xf32>
    %743 = vector.extract_strided_slice %742 {offsets = [0, 0], sizes = [8, 128], strides = [1, 1]} : vector<8x256xf32> to vector<8x128xf32>
    %c14_260 = arith.constant 14 : index
    %c0_261 = arith.constant 0 : index
    %c0_262 = arith.constant 0 : index
    %744 = vector.load %arg9[%c14_260, %c0_261, %c0_262] : memref<16x8x256xf32, #tpu.memory_space<vmem>>, vector<1x8x128xf32>
    %745 = vector.shape_cast %744 : vector<1x8x128xf32> to vector<8x128xf32>
    %746 = arith.addf %743, %745 : vector<8x128xf32>
    %747 = vector.extract_strided_slice %742 {offsets = [0, 128], sizes = [8, 128], strides = [1, 1]} : vector<8x256xf32> to vector<8x128xf32>
    %c1_263 = arith.constant 1 : index
    %c0_264 = arith.constant 0 : index
    %c128_265 = arith.constant 128 : index
    %748 = vector.load %arg9[%c1_263, %c0_264, %c128_265] : memref<16x8x256xf32, #tpu.memory_space<vmem>>, vector<1x8x128xf32>
    %749 = vector.shape_cast %748 : vector<1x8x128xf32> to vector<8x128xf32>
    %750 = arith.addf %747, %749 : vector<8x128xf32>
    %751 = arith.negf %746 : vector<8x128xf32>
    %752 = math.exp %751 : vector<8x128xf32>
    %cst_266 = arith.constant 1.000000e+00 : f32
    %753 = vector.broadcast %cst_266 : f32 to vector<8x128xf32>
    %754 = arith.addf %753, %752 : vector<8x128xf32>
    %755 = arith.divf %753, %754 : vector<8x128xf32>
    %756 = arith.negf %750 : vector<8x128xf32>
    %757 = math.exp %756 : vector<8x128xf32>
    %cst_267 = arith.constant 1.000000e+00 : f32
    %758 = vector.broadcast %cst_267 : f32 to vector<8x128xf32>
    %759 = arith.addf %758, %757 : vector<8x128xf32>
    %760 = arith.divf %758, %759 : vector<8x128xf32>
    %761 = vector.extract_strided_slice %755 {offsets = [0, 96], sizes = [8, 32], strides = [1, 1]} : vector<8x128xf32> to vector<8x32xf32>
    %cst_268 = arith.constant 2.000000e+00 : f32
    %762 = vector.broadcast %cst_268 : f32 to vector<8x32xf32>
    %763 = arith.mulf %762, %761 : vector<8x32xf32>
    %cst_269 = arith.constant 1.000000e+00 : f32
    %764 = vector.broadcast %cst_269 : f32 to vector<8x32xf32>
    %765 = arith.subf %763, %764 : vector<8x32xf32>
    %766 = vector.extract_strided_slice %760 {offsets = [0, 96], sizes = [8, 32], strides = [1, 1]} : vector<8x128xf32> to vector<8x32xf32>
    %cst_270 = arith.constant 2.000000e+00 : f32
    %767 = vector.broadcast %cst_270 : f32 to vector<8x32xf32>
    %768 = arith.mulf %767, %766 : vector<8x32xf32>
    %cst_271 = arith.constant 1.000000e+00 : f32
    %769 = vector.broadcast %cst_271 : f32 to vector<8x32xf32>
    %770 = arith.subf %768, %769 : vector<8x32xf32>
    %771 = vector.extract_strided_slice %755 {offsets = [0, 32], sizes = [8, 32], strides = [1, 1]} : vector<8x128xf32> to vector<8x32xf32>
    %772 = arith.mulf %771, %722 : vector<8x32xf32>
    %773 = vector.extract_strided_slice %755 {offsets = [0, 0], sizes = [8, 32], strides = [1, 1]} : vector<8x128xf32> to vector<8x32xf32>
    %774 = arith.mulf %773, %765 : vector<8x32xf32>
    %775 = arith.addf %772, %774 : vector<8x32xf32>
    %776 = vector.extract_strided_slice %760 {offsets = [0, 32], sizes = [8, 32], strides = [1, 1]} : vector<8x128xf32> to vector<8x32xf32>
    %777 = arith.mulf %776, %727 : vector<8x32xf32>
    %778 = vector.extract_strided_slice %760 {offsets = [0, 0], sizes = [8, 32], strides = [1, 1]} : vector<8x128xf32> to vector<8x32xf32>
    %779 = arith.mulf %778, %770 : vector<8x32xf32>
    %780 = arith.addf %777, %779 : vector<8x32xf32>
    %781 = vector.extract_strided_slice %755 {offsets = [0, 64], sizes = [8, 32], strides = [1, 1]} : vector<8x128xf32> to vector<8x32xf32>
    %782 = math.tanh %775 : vector<8x32xf32>
    %783 = arith.mulf %781, %782 : vector<8x32xf32>
    %784 = vector.extract_strided_slice %760 {offsets = [0, 64], sizes = [8, 32], strides = [1, 1]} : vector<8x128xf32> to vector<8x32xf32>
    %785 = math.tanh %780 : vector<8x32xf32>
    %786 = arith.mulf %784, %785 : vector<8x32xf32>
    %c14_272 = arith.constant 14 : index
    %c0_273 = arith.constant 0 : index
    %c0_274 = arith.constant 0 : index
    %787 = vector.load %arg10[%c14_272, %c0_273, %c0_274] : memref<16x8x64xf32, #tpu.memory_space<vmem>>, vector<1x8x32xf32>
    %788 = vector.shape_cast %787 : vector<1x8x32xf32> to vector<8x32xf32>
    %789 = vector.shape_cast %783 : vector<8x32xf32> to vector<1x8x32xf32>
    tpu.vector_store %arg10[%c14_272, %c0_273, %c0_274], %789 {strides = array<i32>} : memref<16x8x64xf32, #tpu.memory_space<vmem>>, vector<1x8x32xf32>,
    %c1_275 = arith.constant 1 : index
    %c0_276 = arith.constant 0 : index
    %c32_277 = arith.constant 32 : index
    %790 = vector.load %arg10[%c1_275, %c0_276, %c32_277] : memref<16x8x64xf32, #tpu.memory_space<vmem>>, vector<1x8x32xf32>
    %791 = vector.shape_cast %790 : vector<1x8x32xf32> to vector<8x32xf32>
    %792 = vector.shape_cast %786 : vector<8x32xf32> to vector<1x8x32xf32>
    tpu.vector_store %arg10[%c1_275, %c0_276, %c32_277], %792 {strides = array<i32>} : memref<16x8x64xf32, #tpu.memory_space<vmem>>, vector<1x8x32xf32>,
    %793 = tpu.concatenate %783, %786 in 1 : vector<8x32xf32>, vector<8x32xf32> -> vector<8x64xf32>
    %794 = arith.truncf %793 : vector<8x64xf32> to vector<8x64xbf16>
    %cst_278 = arith.constant dense<0.000000e+00> : vector<8x256xf32>
    %795 = tpu.matmul %794, %10, %cst_278 {dimension_numbers = #tpu.dot_dimension_numbers<[1], [0], [0], [1], [0, 0, 1, 1], [], []>} : vector<8x64xbf16>, vector<64x256xbf16>, vector<8x256xf32> -> vector<8x256xf32>
    %796 = vector.extract_strided_slice %795 {offsets = [0, 0], sizes = [8, 128], strides = [1, 1]} : vector<8x256xf32> to vector<8x128xf32>
    %c15_279 = arith.constant 15 : index
    %c0_280 = arith.constant 0 : index
    %c0_281 = arith.constant 0 : index
    %797 = vector.load %arg9[%c15_279, %c0_280, %c0_281] : memref<16x8x256xf32, #tpu.memory_space<vmem>>, vector<1x8x128xf32>
    %798 = vector.shape_cast %797 : vector<1x8x128xf32> to vector<8x128xf32>
    %799 = arith.addf %796, %798 : vector<8x128xf32>
    %800 = vector.extract_strided_slice %795 {offsets = [0, 128], sizes = [8, 128], strides = [1, 1]} : vector<8x256xf32> to vector<8x128xf32>
    %c0_282 = arith.constant 0 : index
    %c0_283 = arith.constant 0 : index
    %c128_284 = arith.constant 128 : index
    %801 = vector.load %arg9[%c0_282, %c0_283, %c128_284] : memref<16x8x256xf32, #tpu.memory_space<vmem>>, vector<1x8x128xf32>
    %802 = vector.shape_cast %801 : vector<1x8x128xf32> to vector<8x128xf32>
    %803 = arith.addf %800, %802 : vector<8x128xf32>
    %804 = arith.negf %799 : vector<8x128xf32>
    %805 = math.exp %804 : vector<8x128xf32>
    %cst_285 = arith.constant 1.000000e+00 : f32
    %806 = vector.broadcast %cst_285 : f32 to vector<8x128xf32>
    %807 = arith.addf %806, %805 : vector<8x128xf32>
    %808 = arith.divf %806, %807 : vector<8x128xf32>
    %809 = arith.negf %803 : vector<8x128xf32>
    %810 = math.exp %809 : vector<8x128xf32>
    %cst_286 = arith.constant 1.000000e+00 : f32
    %811 = vector.broadcast %cst_286 : f32 to vector<8x128xf32>
    %812 = arith.addf %811, %810 : vector<8x128xf32>
    %813 = arith.divf %811, %812 : vector<8x128xf32>
    %814 = vector.extract_strided_slice %808 {offsets = [0, 96], sizes = [8, 32], strides = [1, 1]} : vector<8x128xf32> to vector<8x32xf32>
    %cst_287 = arith.constant 2.000000e+00 : f32
    %815 = vector.broadcast %cst_287 : f32 to vector<8x32xf32>
    %816 = arith.mulf %815, %814 : vector<8x32xf32>
    %cst_288 = arith.constant 1.000000e+00 : f32
    %817 = vector.broadcast %cst_288 : f32 to vector<8x32xf32>
    %818 = arith.subf %816, %817 : vector<8x32xf32>
    %819 = vector.extract_strided_slice %813 {offsets = [0, 96], sizes = [8, 32], strides = [1, 1]} : vector<8x128xf32> to vector<8x32xf32>
    %cst_289 = arith.constant 2.000000e+00 : f32
    %820 = vector.broadcast %cst_289 : f32 to vector<8x32xf32>
    %821 = arith.mulf %820, %819 : vector<8x32xf32>
    %cst_290 = arith.constant 1.000000e+00 : f32
    %822 = vector.broadcast %cst_290 : f32 to vector<8x32xf32>
    %823 = arith.subf %821, %822 : vector<8x32xf32>
    %824 = vector.extract_strided_slice %808 {offsets = [0, 32], sizes = [8, 32], strides = [1, 1]} : vector<8x128xf32> to vector<8x32xf32>
    %825 = arith.mulf %824, %775 : vector<8x32xf32>
    %826 = vector.extract_strided_slice %808 {offsets = [0, 0], sizes = [8, 32], strides = [1, 1]} : vector<8x128xf32> to vector<8x32xf32>
    %827 = arith.mulf %826, %818 : vector<8x32xf32>
    %828 = arith.addf %825, %827 : vector<8x32xf32>
    %829 = vector.extract_strided_slice %813 {offsets = [0, 32], sizes = [8, 32], strides = [1, 1]} : vector<8x128xf32> to vector<8x32xf32>
    %830 = arith.mulf %829, %780 : vector<8x32xf32>
    %831 = vector.extract_strided_slice %813 {offsets = [0, 0], sizes = [8, 32], strides = [1, 1]} : vector<8x128xf32> to vector<8x32xf32>
    %832 = arith.mulf %831, %823 : vector<8x32xf32>
    %833 = arith.addf %830, %832 : vector<8x32xf32>
    %834 = vector.extract_strided_slice %808 {offsets = [0, 64], sizes = [8, 32], strides = [1, 1]} : vector<8x128xf32> to vector<8x32xf32>
    %835 = math.tanh %828 : vector<8x32xf32>
    %836 = arith.mulf %834, %835 : vector<8x32xf32>
    %837 = vector.extract_strided_slice %813 {offsets = [0, 64], sizes = [8, 32], strides = [1, 1]} : vector<8x128xf32> to vector<8x32xf32>
    %838 = math.tanh %833 : vector<8x32xf32>
    %839 = arith.mulf %837, %838 : vector<8x32xf32>
    %c15_291 = arith.constant 15 : index
    %c0_292 = arith.constant 0 : index
    %c0_293 = arith.constant 0 : index
    %840 = vector.load %arg10[%c15_291, %c0_292, %c0_293] : memref<16x8x64xf32, #tpu.memory_space<vmem>>, vector<1x8x32xf32>
    %841 = vector.shape_cast %840 : vector<1x8x32xf32> to vector<8x32xf32>
    %842 = vector.shape_cast %836 : vector<8x32xf32> to vector<1x8x32xf32>
    tpu.vector_store %arg10[%c15_291, %c0_292, %c0_293], %842 {strides = array<i32>} : memref<16x8x64xf32, #tpu.memory_space<vmem>>, vector<1x8x32xf32>,
    %c0_294 = arith.constant 0 : index
    %c0_295 = arith.constant 0 : index
    %c32_296 = arith.constant 32 : index
    %843 = vector.load %arg10[%c0_294, %c0_295, %c32_296] : memref<16x8x64xf32, #tpu.memory_space<vmem>>, vector<1x8x32xf32>
    %844 = vector.shape_cast %843 : vector<1x8x32xf32> to vector<8x32xf32>
    %845 = vector.shape_cast %839 : vector<8x32xf32> to vector<1x8x32xf32>
    tpu.vector_store %arg10[%c0_294, %c0_295, %c32_296], %845 {strides = array<i32>} : memref<16x8x64xf32, #tpu.memory_space<vmem>>, vector<1x8x32xf32>,
    %c0_297 = arith.constant 0 : index
    %c0_298 = arith.constant 0 : index
    %c0_299 = arith.constant 0 : index
    %846 = vector.load %arg10[%c0_297, %c0_298, %c0_299] : memref<16x8x64xf32, #tpu.memory_space<vmem>>, vector<16x8x64xf32>
    %847 = vector.shape_cast %846 : vector<16x8x64xf32> to vector<128x64xf32>
    %848 = arith.truncf %847 : vector<128x64xf32> to vector<128x64xbf16>
    %c0_300 = arith.constant 0 : index
    %c0_301 = arith.constant 0 : index
    %849 = vector.load %arg5[%c0_300, %c0_301] : memref<64x256xbf16, #tpu.memory_space<vmem>>, vector<64x256xbf16>
    %cst_302 = arith.constant dense<0.000000e+00> : vector<128x256xf32>
    %850 = tpu.matmul %848, %849, %cst_302 {dimension_numbers = #tpu.dot_dimension_numbers<[1], [0], [0], [1], [0, 0, 1, 1], [], []>} : vector<128x64xbf16>, vector<64x256xbf16>, vector<128x256xf32> -> vector<128x256xf32>
    %c0_303 = arith.constant 0 : index
    %c0_304 = arith.constant 0 : index
    %851 = vector.load %arg6[%c0_303, %c0_304] : memref<1x256xf32, #tpu.memory_space<vmem>>, vector<1x256xf32>
    %852 = vector.broadcast %851 : vector<1x256xf32> to vector<128x256xf32>
    %853 = arith.addf %850, %852 : vector<128x256xf32>
    %854 = vector.shape_cast %853 : vector<128x256xf32> to vector<16x8x256xf32>
    %c0_305 = arith.constant 0 : index
    %c0_306 = arith.constant 0 : index
    %c0_307 = arith.constant 0 : index
    %855 = vector.load %arg9[%c0_305, %c0_306, %c0_307] : memref<16x8x256xf32, #tpu.memory_space<vmem>>, vector<16x8x256xf32>
    tpu.vector_store %arg9[%c0_305, %c0_306, %c0_307], %854 {strides = array<i32>} : memref<16x8x256xf32, #tpu.memory_space<vmem>>, vector<16x8x256xf32>,
    %c0_308 = arith.constant 0 : index
    %c0_309 = arith.constant 0 : index
    %856 = vector.load %arg7[%c0_308, %c0_309] : memref<64x256xbf16, #tpu.memory_space<vmem>>, vector<64x256xbf16>
    %c0_310 = arith.constant 0 : index
    %c0_311 = arith.constant 0 : index
    %c0_312 = arith.constant 0 : index
    %857 = vector.load %arg9[%c0_310, %c0_311, %c0_312] : memref<16x8x256xf32, #tpu.memory_space<vmem>>, vector<1x8x128xf32>
    %858 = vector.shape_cast %857 : vector<1x8x128xf32> to vector<8x128xf32>
    %c15_313 = arith.constant 15 : index
    %c0_314 = arith.constant 0 : index
    %c128_315 = arith.constant 128 : index
    %859 = vector.load %arg9[%c15_313, %c0_314, %c128_315] : memref<16x8x256xf32, #tpu.memory_space<vmem>>, vector<1x8x128xf32>
    %860 = vector.shape_cast %859 : vector<1x8x128xf32> to vector<8x128xf32>
    %861 = arith.negf %858 : vector<8x128xf32>
    %862 = math.exp %861 : vector<8x128xf32>
    %cst_316 = arith.constant 1.000000e+00 : f32
    %863 = vector.broadcast %cst_316 : f32 to vector<8x128xf32>
    %864 = arith.addf %863, %862 : vector<8x128xf32>
    %865 = arith.divf %863, %864 : vector<8x128xf32>
    %866 = arith.negf %860 : vector<8x128xf32>
    %867 = math.exp %866 : vector<8x128xf32>
    %cst_317 = arith.constant 1.000000e+00 : f32
    %868 = vector.broadcast %cst_317 : f32 to vector<8x128xf32>
    %869 = arith.addf %868, %867 : vector<8x128xf32>
    %870 = arith.divf %868, %869 : vector<8x128xf32>
    %871 = vector.extract_strided_slice %865 {offsets = [0, 96], sizes = [8, 32], strides = [1, 1]} : vector<8x128xf32> to vector<8x32xf32>
    %cst_318 = arith.constant 2.000000e+00 : f32
    %872 = vector.broadcast %cst_318 : f32 to vector<8x32xf32>
    %873 = arith.mulf %872, %871 : vector<8x32xf32>
    %cst_319 = arith.constant 1.000000e+00 : f32
    %874 = vector.broadcast %cst_319 : f32 to vector<8x32xf32>
    %875 = arith.subf %873, %874 : vector<8x32xf32>
    %876 = vector.extract_strided_slice %870 {offsets = [0, 96], sizes = [8, 32], strides = [1, 1]} : vector<8x128xf32> to vector<8x32xf32>
    %cst_320 = arith.constant 2.000000e+00 : f32
    %877 = vector.broadcast %cst_320 : f32 to vector<8x32xf32>
    %878 = arith.mulf %877, %876 : vector<8x32xf32>
    %cst_321 = arith.constant 1.000000e+00 : f32
    %879 = vector.broadcast %cst_321 : f32 to vector<8x32xf32>
    %880 = arith.subf %878, %879 : vector<8x32xf32>
    %881 = vector.extract_strided_slice %865 {offsets = [0, 0], sizes = [8, 32], strides = [1, 1]} : vector<8x128xf32> to vector<8x32xf32>
    %882 = arith.mulf %881, %875 : vector<8x32xf32>
    %883 = vector.extract_strided_slice %870 {offsets = [0, 0], sizes = [8, 32], strides = [1, 1]} : vector<8x128xf32> to vector<8x32xf32>
    %884 = arith.mulf %883, %880 : vector<8x32xf32>
    %885 = vector.extract_strided_slice %865 {offsets = [0, 64], sizes = [8, 32], strides = [1, 1]} : vector<8x128xf32> to vector<8x32xf32>
    %886 = math.tanh %882 : vector<8x32xf32>
    %887 = arith.mulf %885, %886 : vector<8x32xf32>
    %888 = vector.extract_strided_slice %870 {offsets = [0, 64], sizes = [8, 32], strides = [1, 1]} : vector<8x128xf32> to vector<8x32xf32>
    %889 = math.tanh %884 : vector<8x32xf32>
    %890 = arith.mulf %888, %889 : vector<8x32xf32>
    %891 = tpu.concatenate %887, %890 in 1 : vector<8x32xf32>, vector<8x32xf32> -> vector<8x64xf32>
    %892 = arith.truncf %891 : vector<8x64xf32> to vector<8x64xbf16>
    %cst_322 = arith.constant dense<0.000000e+00> : vector<8x256xf32>
    %893 = tpu.matmul %892, %856, %cst_322 {dimension_numbers = #tpu.dot_dimension_numbers<[1], [0], [0], [1], [0, 0, 1, 1], [], []>} : vector<8x64xbf16>, vector<64x256xbf16>, vector<8x256xf32> -> vector<8x256xf32>
    %894 = vector.extract_strided_slice %893 {offsets = [0, 0], sizes = [8, 128], strides = [1, 1]} : vector<8x256xf32> to vector<8x128xf32>
    %c1_323 = arith.constant 1 : index
    %c0_324 = arith.constant 0 : index
    %c0_325 = arith.constant 0 : index
    %895 = vector.load %arg9[%c1_323, %c0_324, %c0_325] : memref<16x8x256xf32, #tpu.memory_space<vmem>>, vector<1x8x128xf32>
    %896 = vector.shape_cast %895 : vector<1x8x128xf32> to vector<8x128xf32>
    %897 = arith.addf %894, %896 : vector<8x128xf32>
    %898 = vector.extract_strided_slice %893 {offsets = [0, 128], sizes = [8, 128], strides = [1, 1]} : vector<8x256xf32> to vector<8x128xf32>
    %c14_326 = arith.constant 14 : index
    %c0_327 = arith.constant 0 : index
    %c128_328 = arith.constant 128 : index
    %899 = vector.load %arg9[%c14_326, %c0_327, %c128_328] : memref<16x8x256xf32, #tpu.memory_space<vmem>>, vector<1x8x128xf32>
    %900 = vector.shape_cast %899 : vector<1x8x128xf32> to vector<8x128xf32>
    %901 = arith.addf %898, %900 : vector<8x128xf32>
    %902 = arith.negf %897 : vector<8x128xf32>
    %903 = math.exp %902 : vector<8x128xf32>
    %cst_329 = arith.constant 1.000000e+00 : f32
    %904 = vector.broadcast %cst_329 : f32 to vector<8x128xf32>
    %905 = arith.addf %904, %903 : vector<8x128xf32>
    %906 = arith.divf %904, %905 : vector<8x128xf32>
    %907 = arith.negf %901 : vector<8x128xf32>
    %908 = math.exp %907 : vector<8x128xf32>
    %cst_330 = arith.constant 1.000000e+00 : f32
    %909 = vector.broadcast %cst_330 : f32 to vector<8x128xf32>
    %910 = arith.addf %909, %908 : vector<8x128xf32>
    %911 = arith.divf %909, %910 : vector<8x128xf32>
    %912 = vector.extract_strided_slice %906 {offsets = [0, 96], sizes = [8, 32], strides = [1, 1]} : vector<8x128xf32> to vector<8x32xf32>
    %cst_331 = arith.constant 2.000000e+00 : f32
    %913 = vector.broadcast %cst_331 : f32 to vector<8x32xf32>
    %914 = arith.mulf %913, %912 : vector<8x32xf32>
    %cst_332 = arith.constant 1.000000e+00 : f32
    %915 = vector.broadcast %cst_332 : f32 to vector<8x32xf32>
    %916 = arith.subf %914, %915 : vector<8x32xf32>
    %917 = vector.extract_strided_slice %911 {offsets = [0, 96], sizes = [8, 32], strides = [1, 1]} : vector<8x128xf32> to vector<8x32xf32>
    %cst_333 = arith.constant 2.000000e+00 : f32
    %918 = vector.broadcast %cst_333 : f32 to vector<8x32xf32>
    %919 = arith.mulf %918, %917 : vector<8x32xf32>
    %cst_334 = arith.constant 1.000000e+00 : f32
    %920 = vector.broadcast %cst_334 : f32 to vector<8x32xf32>
    %921 = arith.subf %919, %920 : vector<8x32xf32>
    %922 = vector.extract_strided_slice %906 {offsets = [0, 32], sizes = [8, 32], strides = [1, 1]} : vector<8x128xf32> to vector<8x32xf32>
    %923 = arith.mulf %922, %882 : vector<8x32xf32>
    %924 = vector.extract_strided_slice %906 {offsets = [0, 0], sizes = [8, 32], strides = [1, 1]} : vector<8x128xf32> to vector<8x32xf32>
    %925 = arith.mulf %924, %916 : vector<8x32xf32>
    %926 = arith.addf %923, %925 : vector<8x32xf32>
    %927 = vector.extract_strided_slice %911 {offsets = [0, 32], sizes = [8, 32], strides = [1, 1]} : vector<8x128xf32> to vector<8x32xf32>
    %928 = arith.mulf %927, %884 : vector<8x32xf32>
    %929 = vector.extract_strided_slice %911 {offsets = [0, 0], sizes = [8, 32], strides = [1, 1]} : vector<8x128xf32> to vector<8x32xf32>
    %930 = arith.mulf %929, %921 : vector<8x32xf32>
    %931 = arith.addf %928, %930 : vector<8x32xf32>
    %932 = vector.extract_strided_slice %906 {offsets = [0, 64], sizes = [8, 32], strides = [1, 1]} : vector<8x128xf32> to vector<8x32xf32>
    %933 = math.tanh %926 : vector<8x32xf32>
    %934 = arith.mulf %932, %933 : vector<8x32xf32>
    %935 = vector.extract_strided_slice %911 {offsets = [0, 64], sizes = [8, 32], strides = [1, 1]} : vector<8x128xf32> to vector<8x32xf32>
    %936 = math.tanh %931 : vector<8x32xf32>
    %937 = arith.mulf %935, %936 : vector<8x32xf32>
    %938 = tpu.concatenate %934, %937 in 1 : vector<8x32xf32>, vector<8x32xf32> -> vector<8x64xf32>
    %939 = arith.truncf %938 : vector<8x64xf32> to vector<8x64xbf16>
    %cst_335 = arith.constant dense<0.000000e+00> : vector<8x256xf32>
    %940 = tpu.matmul %939, %856, %cst_335 {dimension_numbers = #tpu.dot_dimension_numbers<[1], [0], [0], [1], [0, 0, 1, 1], [], []>} : vector<8x64xbf16>, vector<64x256xbf16>, vector<8x256xf32> -> vector<8x256xf32>
    %941 = vector.extract_strided_slice %940 {offsets = [0, 0], sizes = [8, 128], strides = [1, 1]} : vector<8x256xf32> to vector<8x128xf32>
    %c2_336 = arith.constant 2 : index
    %c0_337 = arith.constant 0 : index
    %c0_338 = arith.constant 0 : index
    %942 = vector.load %arg9[%c2_336, %c0_337, %c0_338] : memref<16x8x256xf32, #tpu.memory_space<vmem>>, vector<1x8x128xf32>
    %943 = vector.shape_cast %942 : vector<1x8x128xf32> to vector<8x128xf32>
    %944 = arith.addf %941, %943 : vector<8x128xf32>
    %945 = vector.extract_strided_slice %940 {offsets = [0, 128], sizes = [8, 128], strides = [1, 1]} : vector<8x256xf32> to vector<8x128xf32>
    %c13_339 = arith.constant 13 : index
    %c0_340 = arith.constant 0 : index
    %c128_341 = arith.constant 128 : index
    %946 = vector.load %arg9[%c13_339, %c0_340, %c128_341] : memref<16x8x256xf32, #tpu.memory_space<vmem>>, vector<1x8x128xf32>
    %947 = vector.shape_cast %946 : vector<1x8x128xf32> to vector<8x128xf32>
    %948 = arith.addf %945, %947 : vector<8x128xf32>
    %949 = arith.negf %944 : vector<8x128xf32>
    %950 = math.exp %949 : vector<8x128xf32>
    %cst_342 = arith.constant 1.000000e+00 : f32
    %951 = vector.broadcast %cst_342 : f32 to vector<8x128xf32>
    %952 = arith.addf %951, %950 : vector<8x128xf32>
    %953 = arith.divf %951, %952 : vector<8x128xf32>
    %954 = arith.negf %948 : vector<8x128xf32>
    %955 = math.exp %954 : vector<8x128xf32>
    %cst_343 = arith.constant 1.000000e+00 : f32
    %956 = vector.broadcast %cst_343 : f32 to vector<8x128xf32>
    %957 = arith.addf %956, %955 : vector<8x128xf32>
    %958 = arith.divf %956, %957 : vector<8x128xf32>
    %959 = vector.extract_strided_slice %953 {offsets = [0, 96], sizes = [8, 32], strides = [1, 1]} : vector<8x128xf32> to vector<8x32xf32>
    %cst_344 = arith.constant 2.000000e+00 : f32
    %960 = vector.broadcast %cst_344 : f32 to vector<8x32xf32>
    %961 = arith.mulf %960, %959 : vector<8x32xf32>
    %cst_345 = arith.constant 1.000000e+00 : f32
    %962 = vector.broadcast %cst_345 : f32 to vector<8x32xf32>
    %963 = arith.subf %961, %962 : vector<8x32xf32>
    %964 = vector.extract_strided_slice %958 {offsets = [0, 96], sizes = [8, 32], strides = [1, 1]} : vector<8x128xf32> to vector<8x32xf32>
    %cst_346 = arith.constant 2.000000e+00 : f32
    %965 = vector.broadcast %cst_346 : f32 to vector<8x32xf32>
    %966 = arith.mulf %965, %964 : vector<8x32xf32>
    %cst_347 = arith.constant 1.000000e+00 : f32
    %967 = vector.broadcast %cst_347 : f32 to vector<8x32xf32>
    %968 = arith.subf %966, %967 : vector<8x32xf32>
    %969 = vector.extract_strided_slice %953 {offsets = [0, 32], sizes = [8, 32], strides = [1, 1]} : vector<8x128xf32> to vector<8x32xf32>
    %970 = arith.mulf %969, %926 : vector<8x32xf32>
    %971 = vector.extract_strided_slice %953 {offsets = [0, 0], sizes = [8, 32], strides = [1, 1]} : vector<8x128xf32> to vector<8x32xf32>
    %972 = arith.mulf %971, %963 : vector<8x32xf32>
    %973 = arith.addf %970, %972 : vector<8x32xf32>
    %974 = vector.extract_strided_slice %958 {offsets = [0, 32], sizes = [8, 32], strides = [1, 1]} : vector<8x128xf32> to vector<8x32xf32>
    %975 = arith.mulf %974, %931 : vector<8x32xf32>
    %976 = vector.extract_strided_slice %958 {offsets = [0, 0], sizes = [8, 32], strides = [1, 1]} : vector<8x128xf32> to vector<8x32xf32>
    %977 = arith.mulf %976, %968 : vector<8x32xf32>
    %978 = arith.addf %975, %977 : vector<8x32xf32>
    %979 = vector.extract_strided_slice %953 {offsets = [0, 64], sizes = [8, 32], strides = [1, 1]} : vector<8x128xf32> to vector<8x32xf32>
    %980 = math.tanh %973 : vector<8x32xf32>
    %981 = arith.mulf %979, %980 : vector<8x32xf32>
    %982 = vector.extract_strided_slice %958 {offsets = [0, 64], sizes = [8, 32], strides = [1, 1]} : vector<8x128xf32> to vector<8x32xf32>
    %983 = math.tanh %978 : vector<8x32xf32>
    %984 = arith.mulf %982, %983 : vector<8x32xf32>
    %985 = tpu.concatenate %981, %984 in 1 : vector<8x32xf32>, vector<8x32xf32> -> vector<8x64xf32>
    %986 = arith.truncf %985 : vector<8x64xf32> to vector<8x64xbf16>
    %cst_348 = arith.constant dense<0.000000e+00> : vector<8x256xf32>
    %987 = tpu.matmul %986, %856, %cst_348 {dimension_numbers = #tpu.dot_dimension_numbers<[1], [0], [0], [1], [0, 0, 1, 1], [], []>} : vector<8x64xbf16>, vector<64x256xbf16>, vector<8x256xf32> -> vector<8x256xf32>
    %988 = vector.extract_strided_slice %987 {offsets = [0, 0], sizes = [8, 128], strides = [1, 1]} : vector<8x256xf32> to vector<8x128xf32>
    %c3_349 = arith.constant 3 : index
    %c0_350 = arith.constant 0 : index
    %c0_351 = arith.constant 0 : index
    %989 = vector.load %arg9[%c3_349, %c0_350, %c0_351] : memref<16x8x256xf32, #tpu.memory_space<vmem>>, vector<1x8x128xf32>
    %990 = vector.shape_cast %989 : vector<1x8x128xf32> to vector<8x128xf32>
    %991 = arith.addf %988, %990 : vector<8x128xf32>
    %992 = vector.extract_strided_slice %987 {offsets = [0, 128], sizes = [8, 128], strides = [1, 1]} : vector<8x256xf32> to vector<8x128xf32>
    %c12_352 = arith.constant 12 : index
    %c0_353 = arith.constant 0 : index
    %c128_354 = arith.constant 128 : index
    %993 = vector.load %arg9[%c12_352, %c0_353, %c128_354] : memref<16x8x256xf32, #tpu.memory_space<vmem>>, vector<1x8x128xf32>
    %994 = vector.shape_cast %993 : vector<1x8x128xf32> to vector<8x128xf32>
    %995 = arith.addf %992, %994 : vector<8x128xf32>
    %996 = arith.negf %991 : vector<8x128xf32>
    %997 = math.exp %996 : vector<8x128xf32>
    %cst_355 = arith.constant 1.000000e+00 : f32
    %998 = vector.broadcast %cst_355 : f32 to vector<8x128xf32>
    %999 = arith.addf %998, %997 : vector<8x128xf32>
    %1000 = arith.divf %998, %999 : vector<8x128xf32>
    %1001 = arith.negf %995 : vector<8x128xf32>
    %1002 = math.exp %1001 : vector<8x128xf32>
    %cst_356 = arith.constant 1.000000e+00 : f32
    %1003 = vector.broadcast %cst_356 : f32 to vector<8x128xf32>
    %1004 = arith.addf %1003, %1002 : vector<8x128xf32>
    %1005 = arith.divf %1003, %1004 : vector<8x128xf32>
    %1006 = vector.extract_strided_slice %1000 {offsets = [0, 96], sizes = [8, 32], strides = [1, 1]} : vector<8x128xf32> to vector<8x32xf32>
    %cst_357 = arith.constant 2.000000e+00 : f32
    %1007 = vector.broadcast %cst_357 : f32 to vector<8x32xf32>
    %1008 = arith.mulf %1007, %1006 : vector<8x32xf32>
    %cst_358 = arith.constant 1.000000e+00 : f32
    %1009 = vector.broadcast %cst_358 : f32 to vector<8x32xf32>
    %1010 = arith.subf %1008, %1009 : vector<8x32xf32>
    %1011 = vector.extract_strided_slice %1005 {offsets = [0, 96], sizes = [8, 32], strides = [1, 1]} : vector<8x128xf32> to vector<8x32xf32>
    %cst_359 = arith.constant 2.000000e+00 : f32
    %1012 = vector.broadcast %cst_359 : f32 to vector<8x32xf32>
    %1013 = arith.mulf %1012, %1011 : vector<8x32xf32>
    %cst_360 = arith.constant 1.000000e+00 : f32
    %1014 = vector.broadcast %cst_360 : f32 to vector<8x32xf32>
    %1015 = arith.subf %1013, %1014 : vector<8x32xf32>
    %1016 = vector.extract_strided_slice %1000 {offsets = [0, 32], sizes = [8, 32], strides = [1, 1]} : vector<8x128xf32> to vector<8x32xf32>
    %1017 = arith.mulf %1016, %973 : vector<8x32xf32>
    %1018 = vector.extract_strided_slice %1000 {offsets = [0, 0], sizes = [8, 32], strides = [1, 1]} : vector<8x128xf32> to vector<8x32xf32>
    %1019 = arith.mulf %1018, %1010 : vector<8x32xf32>
    %1020 = arith.addf %1017, %1019 : vector<8x32xf32>
    %1021 = vector.extract_strided_slice %1005 {offsets = [0, 32], sizes = [8, 32], strides = [1, 1]} : vector<8x128xf32> to vector<8x32xf32>
    %1022 = arith.mulf %1021, %978 : vector<8x32xf32>
    %1023 = vector.extract_strided_slice %1005 {offsets = [0, 0], sizes = [8, 32], strides = [1, 1]} : vector<8x128xf32> to vector<8x32xf32>
    %1024 = arith.mulf %1023, %1015 : vector<8x32xf32>
    %1025 = arith.addf %1022, %1024 : vector<8x32xf32>
    %1026 = vector.extract_strided_slice %1000 {offsets = [0, 64], sizes = [8, 32], strides = [1, 1]} : vector<8x128xf32> to vector<8x32xf32>
    %1027 = math.tanh %1020 : vector<8x32xf32>
    %1028 = arith.mulf %1026, %1027 : vector<8x32xf32>
    %1029 = vector.extract_strided_slice %1005 {offsets = [0, 64], sizes = [8, 32], strides = [1, 1]} : vector<8x128xf32> to vector<8x32xf32>
    %1030 = math.tanh %1025 : vector<8x32xf32>
    %1031 = arith.mulf %1029, %1030 : vector<8x32xf32>
    %1032 = tpu.concatenate %1028, %1031 in 1 : vector<8x32xf32>, vector<8x32xf32> -> vector<8x64xf32>
    %1033 = arith.truncf %1032 : vector<8x64xf32> to vector<8x64xbf16>
    %cst_361 = arith.constant dense<0.000000e+00> : vector<8x256xf32>
    %1034 = tpu.matmul %1033, %856, %cst_361 {dimension_numbers = #tpu.dot_dimension_numbers<[1], [0], [0], [1], [0, 0, 1, 1], [], []>} : vector<8x64xbf16>, vector<64x256xbf16>, vector<8x256xf32> -> vector<8x256xf32>
    %1035 = vector.extract_strided_slice %1034 {offsets = [0, 0], sizes = [8, 128], strides = [1, 1]} : vector<8x256xf32> to vector<8x128xf32>
    %c4_362 = arith.constant 4 : index
    %c0_363 = arith.constant 0 : index
    %c0_364 = arith.constant 0 : index
    %1036 = vector.load %arg9[%c4_362, %c0_363, %c0_364] : memref<16x8x256xf32, #tpu.memory_space<vmem>>, vector<1x8x128xf32>
    %1037 = vector.shape_cast %1036 : vector<1x8x128xf32> to vector<8x128xf32>
    %1038 = arith.addf %1035, %1037 : vector<8x128xf32>
    %1039 = vector.extract_strided_slice %1034 {offsets = [0, 128], sizes = [8, 128], strides = [1, 1]} : vector<8x256xf32> to vector<8x128xf32>
    %c11_365 = arith.constant 11 : index
    %c0_366 = arith.constant 0 : index
    %c128_367 = arith.constant 128 : index
    %1040 = vector.load %arg9[%c11_365, %c0_366, %c128_367] : memref<16x8x256xf32, #tpu.memory_space<vmem>>, vector<1x8x128xf32>
    %1041 = vector.shape_cast %1040 : vector<1x8x128xf32> to vector<8x128xf32>
    %1042 = arith.addf %1039, %1041 : vector<8x128xf32>
    %1043 = arith.negf %1038 : vector<8x128xf32>
    %1044 = math.exp %1043 : vector<8x128xf32>
    %cst_368 = arith.constant 1.000000e+00 : f32
    %1045 = vector.broadcast %cst_368 : f32 to vector<8x128xf32>
    %1046 = arith.addf %1045, %1044 : vector<8x128xf32>
    %1047 = arith.divf %1045, %1046 : vector<8x128xf32>
    %1048 = arith.negf %1042 : vector<8x128xf32>
    %1049 = math.exp %1048 : vector<8x128xf32>
    %cst_369 = arith.constant 1.000000e+00 : f32
    %1050 = vector.broadcast %cst_369 : f32 to vector<8x128xf32>
    %1051 = arith.addf %1050, %1049 : vector<8x128xf32>
    %1052 = arith.divf %1050, %1051 : vector<8x128xf32>
    %1053 = vector.extract_strided_slice %1047 {offsets = [0, 96], sizes = [8, 32], strides = [1, 1]} : vector<8x128xf32> to vector<8x32xf32>
    %cst_370 = arith.constant 2.000000e+00 : f32
    %1054 = vector.broadcast %cst_370 : f32 to vector<8x32xf32>
    %1055 = arith.mulf %1054, %1053 : vector<8x32xf32>
    %cst_371 = arith.constant 1.000000e+00 : f32
    %1056 = vector.broadcast %cst_371 : f32 to vector<8x32xf32>
    %1057 = arith.subf %1055, %1056 : vector<8x32xf32>
    %1058 = vector.extract_strided_slice %1052 {offsets = [0, 96], sizes = [8, 32], strides = [1, 1]} : vector<8x128xf32> to vector<8x32xf32>
    %cst_372 = arith.constant 2.000000e+00 : f32
    %1059 = vector.broadcast %cst_372 : f32 to vector<8x32xf32>
    %1060 = arith.mulf %1059, %1058 : vector<8x32xf32>
    %cst_373 = arith.constant 1.000000e+00 : f32
    %1061 = vector.broadcast %cst_373 : f32 to vector<8x32xf32>
    %1062 = arith.subf %1060, %1061 : vector<8x32xf32>
    %1063 = vector.extract_strided_slice %1047 {offsets = [0, 32], sizes = [8, 32], strides = [1, 1]} : vector<8x128xf32> to vector<8x32xf32>
    %1064 = arith.mulf %1063, %1020 : vector<8x32xf32>
    %1065 = vector.extract_strided_slice %1047 {offsets = [0, 0], sizes = [8, 32], strides = [1, 1]} : vector<8x128xf32> to vector<8x32xf32>
    %1066 = arith.mulf %1065, %1057 : vector<8x32xf32>
    %1067 = arith.addf %1064, %1066 : vector<8x32xf32>
    %1068 = vector.extract_strided_slice %1052 {offsets = [0, 32], sizes = [8, 32], strides = [1, 1]} : vector<8x128xf32> to vector<8x32xf32>
    %1069 = arith.mulf %1068, %1025 : vector<8x32xf32>
    %1070 = vector.extract_strided_slice %1052 {offsets = [0, 0], sizes = [8, 32], strides = [1, 1]} : vector<8x128xf32> to vector<8x32xf32>
    %1071 = arith.mulf %1070, %1062 : vector<8x32xf32>
    %1072 = arith.addf %1069, %1071 : vector<8x32xf32>
    %1073 = vector.extract_strided_slice %1047 {offsets = [0, 64], sizes = [8, 32], strides = [1, 1]} : vector<8x128xf32> to vector<8x32xf32>
    %1074 = math.tanh %1067 : vector<8x32xf32>
    %1075 = arith.mulf %1073, %1074 : vector<8x32xf32>
    %1076 = vector.extract_strided_slice %1052 {offsets = [0, 64], sizes = [8, 32], strides = [1, 1]} : vector<8x128xf32> to vector<8x32xf32>
    %1077 = math.tanh %1072 : vector<8x32xf32>
    %1078 = arith.mulf %1076, %1077 : vector<8x32xf32>
    %1079 = tpu.concatenate %1075, %1078 in 1 : vector<8x32xf32>, vector<8x32xf32> -> vector<8x64xf32>
    %1080 = arith.truncf %1079 : vector<8x64xf32> to vector<8x64xbf16>
    %cst_374 = arith.constant dense<0.000000e+00> : vector<8x256xf32>
    %1081 = tpu.matmul %1080, %856, %cst_374 {dimension_numbers = #tpu.dot_dimension_numbers<[1], [0], [0], [1], [0, 0, 1, 1], [], []>} : vector<8x64xbf16>, vector<64x256xbf16>, vector<8x256xf32> -> vector<8x256xf32>
    %1082 = vector.extract_strided_slice %1081 {offsets = [0, 0], sizes = [8, 128], strides = [1, 1]} : vector<8x256xf32> to vector<8x128xf32>
    %c5_375 = arith.constant 5 : index
    %c0_376 = arith.constant 0 : index
    %c0_377 = arith.constant 0 : index
    %1083 = vector.load %arg9[%c5_375, %c0_376, %c0_377] : memref<16x8x256xf32, #tpu.memory_space<vmem>>, vector<1x8x128xf32>
    %1084 = vector.shape_cast %1083 : vector<1x8x128xf32> to vector<8x128xf32>
    %1085 = arith.addf %1082, %1084 : vector<8x128xf32>
    %1086 = vector.extract_strided_slice %1081 {offsets = [0, 128], sizes = [8, 128], strides = [1, 1]} : vector<8x256xf32> to vector<8x128xf32>
    %c10_378 = arith.constant 10 : index
    %c0_379 = arith.constant 0 : index
    %c128_380 = arith.constant 128 : index
    %1087 = vector.load %arg9[%c10_378, %c0_379, %c128_380] : memref<16x8x256xf32, #tpu.memory_space<vmem>>, vector<1x8x128xf32>
    %1088 = vector.shape_cast %1087 : vector<1x8x128xf32> to vector<8x128xf32>
    %1089 = arith.addf %1086, %1088 : vector<8x128xf32>
    %1090 = arith.negf %1085 : vector<8x128xf32>
    %1091 = math.exp %1090 : vector<8x128xf32>
    %cst_381 = arith.constant 1.000000e+00 : f32
    %1092 = vector.broadcast %cst_381 : f32 to vector<8x128xf32>
    %1093 = arith.addf %1092, %1091 : vector<8x128xf32>
    %1094 = arith.divf %1092, %1093 : vector<8x128xf32>
    %1095 = arith.negf %1089 : vector<8x128xf32>
    %1096 = math.exp %1095 : vector<8x128xf32>
    %cst_382 = arith.constant 1.000000e+00 : f32
    %1097 = vector.broadcast %cst_382 : f32 to vector<8x128xf32>
    %1098 = arith.addf %1097, %1096 : vector<8x128xf32>
    %1099 = arith.divf %1097, %1098 : vector<8x128xf32>
    %1100 = vector.extract_strided_slice %1094 {offsets = [0, 96], sizes = [8, 32], strides = [1, 1]} : vector<8x128xf32> to vector<8x32xf32>
    %cst_383 = arith.constant 2.000000e+00 : f32
    %1101 = vector.broadcast %cst_383 : f32 to vector<8x32xf32>
    %1102 = arith.mulf %1101, %1100 : vector<8x32xf32>
    %cst_384 = arith.constant 1.000000e+00 : f32
    %1103 = vector.broadcast %cst_384 : f32 to vector<8x32xf32>
    %1104 = arith.subf %1102, %1103 : vector<8x32xf32>
    %1105 = vector.extract_strided_slice %1099 {offsets = [0, 96], sizes = [8, 32], strides = [1, 1]} : vector<8x128xf32> to vector<8x32xf32>
    %cst_385 = arith.constant 2.000000e+00 : f32
    %1106 = vector.broadcast %cst_385 : f32 to vector<8x32xf32>
    %1107 = arith.mulf %1106, %1105 : vector<8x32xf32>
    %cst_386 = arith.constant 1.000000e+00 : f32
    %1108 = vector.broadcast %cst_386 : f32 to vector<8x32xf32>
    %1109 = arith.subf %1107, %1108 : vector<8x32xf32>
    %1110 = vector.extract_strided_slice %1094 {offsets = [0, 32], sizes = [8, 32], strides = [1, 1]} : vector<8x128xf32> to vector<8x32xf32>
    %1111 = arith.mulf %1110, %1067 : vector<8x32xf32>
    %1112 = vector.extract_strided_slice %1094 {offsets = [0, 0], sizes = [8, 32], strides = [1, 1]} : vector<8x128xf32> to vector<8x32xf32>
    %1113 = arith.mulf %1112, %1104 : vector<8x32xf32>
    %1114 = arith.addf %1111, %1113 : vector<8x32xf32>
    %1115 = vector.extract_strided_slice %1099 {offsets = [0, 32], sizes = [8, 32], strides = [1, 1]} : vector<8x128xf32> to vector<8x32xf32>
    %1116 = arith.mulf %1115, %1072 : vector<8x32xf32>
    %1117 = vector.extract_strided_slice %1099 {offsets = [0, 0], sizes = [8, 32], strides = [1, 1]} : vector<8x128xf32> to vector<8x32xf32>
    %1118 = arith.mulf %1117, %1109 : vector<8x32xf32>
    %1119 = arith.addf %1116, %1118 : vector<8x32xf32>
    %1120 = vector.extract_strided_slice %1094 {offsets = [0, 64], sizes = [8, 32], strides = [1, 1]} : vector<8x128xf32> to vector<8x32xf32>
    %1121 = math.tanh %1114 : vector<8x32xf32>
    %1122 = arith.mulf %1120, %1121 : vector<8x32xf32>
    %1123 = vector.extract_strided_slice %1099 {offsets = [0, 64], sizes = [8, 32], strides = [1, 1]} : vector<8x128xf32> to vector<8x32xf32>
    %1124 = math.tanh %1119 : vector<8x32xf32>
    %1125 = arith.mulf %1123, %1124 : vector<8x32xf32>
    %1126 = tpu.concatenate %1122, %1125 in 1 : vector<8x32xf32>, vector<8x32xf32> -> vector<8x64xf32>
    %1127 = arith.truncf %1126 : vector<8x64xf32> to vector<8x64xbf16>
    %cst_387 = arith.constant dense<0.000000e+00> : vector<8x256xf32>
    %1128 = tpu.matmul %1127, %856, %cst_387 {dimension_numbers = #tpu.dot_dimension_numbers<[1], [0], [0], [1], [0, 0, 1, 1], [], []>} : vector<8x64xbf16>, vector<64x256xbf16>, vector<8x256xf32> -> vector<8x256xf32>
    %1129 = vector.extract_strided_slice %1128 {offsets = [0, 0], sizes = [8, 128], strides = [1, 1]} : vector<8x256xf32> to vector<8x128xf32>
    %c6_388 = arith.constant 6 : index
    %c0_389 = arith.constant 0 : index
    %c0_390 = arith.constant 0 : index
    %1130 = vector.load %arg9[%c6_388, %c0_389, %c0_390] : memref<16x8x256xf32, #tpu.memory_space<vmem>>, vector<1x8x128xf32>
    %1131 = vector.shape_cast %1130 : vector<1x8x128xf32> to vector<8x128xf32>
    %1132 = arith.addf %1129, %1131 : vector<8x128xf32>
    %1133 = vector.extract_strided_slice %1128 {offsets = [0, 128], sizes = [8, 128], strides = [1, 1]} : vector<8x256xf32> to vector<8x128xf32>
    %c9_391 = arith.constant 9 : index
    %c0_392 = arith.constant 0 : index
    %c128_393 = arith.constant 128 : index
    %1134 = vector.load %arg9[%c9_391, %c0_392, %c128_393] : memref<16x8x256xf32, #tpu.memory_space<vmem>>, vector<1x8x128xf32>
    %1135 = vector.shape_cast %1134 : vector<1x8x128xf32> to vector<8x128xf32>
    %1136 = arith.addf %1133, %1135 : vector<8x128xf32>
    %1137 = arith.negf %1132 : vector<8x128xf32>
    %1138 = math.exp %1137 : vector<8x128xf32>
    %cst_394 = arith.constant 1.000000e+00 : f32
    %1139 = vector.broadcast %cst_394 : f32 to vector<8x128xf32>
    %1140 = arith.addf %1139, %1138 : vector<8x128xf32>
    %1141 = arith.divf %1139, %1140 : vector<8x128xf32>
    %1142 = arith.negf %1136 : vector<8x128xf32>
    %1143 = math.exp %1142 : vector<8x128xf32>
    %cst_395 = arith.constant 1.000000e+00 : f32
    %1144 = vector.broadcast %cst_395 : f32 to vector<8x128xf32>
    %1145 = arith.addf %1144, %1143 : vector<8x128xf32>
    %1146 = arith.divf %1144, %1145 : vector<8x128xf32>
    %1147 = vector.extract_strided_slice %1141 {offsets = [0, 96], sizes = [8, 32], strides = [1, 1]} : vector<8x128xf32> to vector<8x32xf32>
    %cst_396 = arith.constant 2.000000e+00 : f32
    %1148 = vector.broadcast %cst_396 : f32 to vector<8x32xf32>
    %1149 = arith.mulf %1148, %1147 : vector<8x32xf32>
    %cst_397 = arith.constant 1.000000e+00 : f32
    %1150 = vector.broadcast %cst_397 : f32 to vector<8x32xf32>
    %1151 = arith.subf %1149, %1150 : vector<8x32xf32>
    %1152 = vector.extract_strided_slice %1146 {offsets = [0, 96], sizes = [8, 32], strides = [1, 1]} : vector<8x128xf32> to vector<8x32xf32>
    %cst_398 = arith.constant 2.000000e+00 : f32
    %1153 = vector.broadcast %cst_398 : f32 to vector<8x32xf32>
    %1154 = arith.mulf %1153, %1152 : vector<8x32xf32>
    %cst_399 = arith.constant 1.000000e+00 : f32
    %1155 = vector.broadcast %cst_399 : f32 to vector<8x32xf32>
    %1156 = arith.subf %1154, %1155 : vector<8x32xf32>
    %1157 = vector.extract_strided_slice %1141 {offsets = [0, 32], sizes = [8, 32], strides = [1, 1]} : vector<8x128xf32> to vector<8x32xf32>
    %1158 = arith.mulf %1157, %1114 : vector<8x32xf32>
    %1159 = vector.extract_strided_slice %1141 {offsets = [0, 0], sizes = [8, 32], strides = [1, 1]} : vector<8x128xf32> to vector<8x32xf32>
    %1160 = arith.mulf %1159, %1151 : vector<8x32xf32>
    %1161 = arith.addf %1158, %1160 : vector<8x32xf32>
    %1162 = vector.extract_strided_slice %1146 {offsets = [0, 32], sizes = [8, 32], strides = [1, 1]} : vector<8x128xf32> to vector<8x32xf32>
    %1163 = arith.mulf %1162, %1119 : vector<8x32xf32>
    %1164 = vector.extract_strided_slice %1146 {offsets = [0, 0], sizes = [8, 32], strides = [1, 1]} : vector<8x128xf32> to vector<8x32xf32>
    %1165 = arith.mulf %1164, %1156 : vector<8x32xf32>
    %1166 = arith.addf %1163, %1165 : vector<8x32xf32>
    %1167 = vector.extract_strided_slice %1141 {offsets = [0, 64], sizes = [8, 32], strides = [1, 1]} : vector<8x128xf32> to vector<8x32xf32>
    %1168 = math.tanh %1161 : vector<8x32xf32>
    %1169 = arith.mulf %1167, %1168 : vector<8x32xf32>
    %1170 = vector.extract_strided_slice %1146 {offsets = [0, 64], sizes = [8, 32], strides = [1, 1]} : vector<8x128xf32> to vector<8x32xf32>
    %1171 = math.tanh %1166 : vector<8x32xf32>
    %1172 = arith.mulf %1170, %1171 : vector<8x32xf32>
    %1173 = tpu.concatenate %1169, %1172 in 1 : vector<8x32xf32>, vector<8x32xf32> -> vector<8x64xf32>
    %1174 = arith.truncf %1173 : vector<8x64xf32> to vector<8x64xbf16>
    %cst_400 = arith.constant dense<0.000000e+00> : vector<8x256xf32>
    %1175 = tpu.matmul %1174, %856, %cst_400 {dimension_numbers = #tpu.dot_dimension_numbers<[1], [0], [0], [1], [0, 0, 1, 1], [], []>} : vector<8x64xbf16>, vector<64x256xbf16>, vector<8x256xf32> -> vector<8x256xf32>
    %1176 = vector.extract_strided_slice %1175 {offsets = [0, 0], sizes = [8, 128], strides = [1, 1]} : vector<8x256xf32> to vector<8x128xf32>
    %c7_401 = arith.constant 7 : index
    %c0_402 = arith.constant 0 : index
    %c0_403 = arith.constant 0 : index
    %1177 = vector.load %arg9[%c7_401, %c0_402, %c0_403] : memref<16x8x256xf32, #tpu.memory_space<vmem>>, vector<1x8x128xf32>
    %1178 = vector.shape_cast %1177 : vector<1x8x128xf32> to vector<8x128xf32>
    %1179 = arith.addf %1176, %1178 : vector<8x128xf32>
    %1180 = vector.extract_strided_slice %1175 {offsets = [0, 128], sizes = [8, 128], strides = [1, 1]} : vector<8x256xf32> to vector<8x128xf32>
    %c8_404 = arith.constant 8 : index
    %c0_405 = arith.constant 0 : index
    %c128_406 = arith.constant 128 : index
    %1181 = vector.load %arg9[%c8_404, %c0_405, %c128_406] : memref<16x8x256xf32, #tpu.memory_space<vmem>>, vector<1x8x128xf32>
    %1182 = vector.shape_cast %1181 : vector<1x8x128xf32> to vector<8x128xf32>
    %1183 = arith.addf %1180, %1182 : vector<8x128xf32>
    %1184 = arith.negf %1179 : vector<8x128xf32>
    %1185 = math.exp %1184 : vector<8x128xf32>
    %cst_407 = arith.constant 1.000000e+00 : f32
    %1186 = vector.broadcast %cst_407 : f32 to vector<8x128xf32>
    %1187 = arith.addf %1186, %1185 : vector<8x128xf32>
    %1188 = arith.divf %1186, %1187 : vector<8x128xf32>
    %1189 = arith.negf %1183 : vector<8x128xf32>
    %1190 = math.exp %1189 : vector<8x128xf32>
    %cst_408 = arith.constant 1.000000e+00 : f32
    %1191 = vector.broadcast %cst_408 : f32 to vector<8x128xf32>
    %1192 = arith.addf %1191, %1190 : vector<8x128xf32>
    %1193 = arith.divf %1191, %1192 : vector<8x128xf32>
    %1194 = vector.extract_strided_slice %1188 {offsets = [0, 96], sizes = [8, 32], strides = [1, 1]} : vector<8x128xf32> to vector<8x32xf32>
    %cst_409 = arith.constant 2.000000e+00 : f32
    %1195 = vector.broadcast %cst_409 : f32 to vector<8x32xf32>
    %1196 = arith.mulf %1195, %1194 : vector<8x32xf32>
    %cst_410 = arith.constant 1.000000e+00 : f32
    %1197 = vector.broadcast %cst_410 : f32 to vector<8x32xf32>
    %1198 = arith.subf %1196, %1197 : vector<8x32xf32>
    %1199 = vector.extract_strided_slice %1193 {offsets = [0, 96], sizes = [8, 32], strides = [1, 1]} : vector<8x128xf32> to vector<8x32xf32>
    %cst_411 = arith.constant 2.000000e+00 : f32
    %1200 = vector.broadcast %cst_411 : f32 to vector<8x32xf32>
    %1201 = arith.mulf %1200, %1199 : vector<8x32xf32>
    %cst_412 = arith.constant 1.000000e+00 : f32
    %1202 = vector.broadcast %cst_412 : f32 to vector<8x32xf32>
    %1203 = arith.subf %1201, %1202 : vector<8x32xf32>
    %1204 = vector.extract_strided_slice %1188 {offsets = [0, 32], sizes = [8, 32], strides = [1, 1]} : vector<8x128xf32> to vector<8x32xf32>
    %1205 = arith.mulf %1204, %1161 : vector<8x32xf32>
    %1206 = vector.extract_strided_slice %1188 {offsets = [0, 0], sizes = [8, 32], strides = [1, 1]} : vector<8x128xf32> to vector<8x32xf32>
    %1207 = arith.mulf %1206, %1198 : vector<8x32xf32>
    %1208 = arith.addf %1205, %1207 : vector<8x32xf32>
    %1209 = vector.extract_strided_slice %1193 {offsets = [0, 32], sizes = [8, 32], strides = [1, 1]} : vector<8x128xf32> to vector<8x32xf32>
    %1210 = arith.mulf %1209, %1166 : vector<8x32xf32>
    %1211 = vector.extract_strided_slice %1193 {offsets = [0, 0], sizes = [8, 32], strides = [1, 1]} : vector<8x128xf32> to vector<8x32xf32>
    %1212 = arith.mulf %1211, %1203 : vector<8x32xf32>
    %1213 = arith.addf %1210, %1212 : vector<8x32xf32>
    %1214 = vector.extract_strided_slice %1188 {offsets = [0, 64], sizes = [8, 32], strides = [1, 1]} : vector<8x128xf32> to vector<8x32xf32>
    %1215 = math.tanh %1208 : vector<8x32xf32>
    %1216 = arith.mulf %1214, %1215 : vector<8x32xf32>
    %1217 = vector.extract_strided_slice %1193 {offsets = [0, 64], sizes = [8, 32], strides = [1, 1]} : vector<8x128xf32> to vector<8x32xf32>
    %1218 = math.tanh %1213 : vector<8x32xf32>
    %1219 = arith.mulf %1217, %1218 : vector<8x32xf32>
    %1220 = tpu.concatenate %1216, %1219 in 1 : vector<8x32xf32>, vector<8x32xf32> -> vector<8x64xf32>
    %1221 = arith.truncf %1220 : vector<8x64xf32> to vector<8x64xbf16>
    %cst_413 = arith.constant dense<0.000000e+00> : vector<8x256xf32>
    %1222 = tpu.matmul %1221, %856, %cst_413 {dimension_numbers = #tpu.dot_dimension_numbers<[1], [0], [0], [1], [0, 0, 1, 1], [], []>} : vector<8x64xbf16>, vector<64x256xbf16>, vector<8x256xf32> -> vector<8x256xf32>
    %1223 = vector.extract_strided_slice %1222 {offsets = [0, 0], sizes = [8, 128], strides = [1, 1]} : vector<8x256xf32> to vector<8x128xf32>
    %c8_414 = arith.constant 8 : index
    %c0_415 = arith.constant 0 : index
    %c0_416 = arith.constant 0 : index
    %1224 = vector.load %arg9[%c8_414, %c0_415, %c0_416] : memref<16x8x256xf32, #tpu.memory_space<vmem>>, vector<1x8x128xf32>
    %1225 = vector.shape_cast %1224 : vector<1x8x128xf32> to vector<8x128xf32>
    %1226 = arith.addf %1223, %1225 : vector<8x128xf32>
    %1227 = vector.extract_strided_slice %1222 {offsets = [0, 128], sizes = [8, 128], strides = [1, 1]} : vector<8x256xf32> to vector<8x128xf32>
    %c7_417 = arith.constant 7 : index
    %c0_418 = arith.constant 0 : index
    %c128_419 = arith.constant 128 : index
    %1228 = vector.load %arg9[%c7_417, %c0_418, %c128_419] : memref<16x8x256xf32, #tpu.memory_space<vmem>>, vector<1x8x128xf32>
    %1229 = vector.shape_cast %1228 : vector<1x8x128xf32> to vector<8x128xf32>
    %1230 = arith.addf %1227, %1229 : vector<8x128xf32>
    %1231 = arith.negf %1226 : vector<8x128xf32>
    %1232 = math.exp %1231 : vector<8x128xf32>
    %cst_420 = arith.constant 1.000000e+00 : f32
    %1233 = vector.broadcast %cst_420 : f32 to vector<8x128xf32>
    %1234 = arith.addf %1233, %1232 : vector<8x128xf32>
    %1235 = arith.divf %1233, %1234 : vector<8x128xf32>
    %1236 = arith.negf %1230 : vector<8x128xf32>
    %1237 = math.exp %1236 : vector<8x128xf32>
    %cst_421 = arith.constant 1.000000e+00 : f32
    %1238 = vector.broadcast %cst_421 : f32 to vector<8x128xf32>
    %1239 = arith.addf %1238, %1237 : vector<8x128xf32>
    %1240 = arith.divf %1238, %1239 : vector<8x128xf32>
    %1241 = vector.extract_strided_slice %1235 {offsets = [0, 96], sizes = [8, 32], strides = [1, 1]} : vector<8x128xf32> to vector<8x32xf32>
    %cst_422 = arith.constant 2.000000e+00 : f32
    %1242 = vector.broadcast %cst_422 : f32 to vector<8x32xf32>
    %1243 = arith.mulf %1242, %1241 : vector<8x32xf32>
    %cst_423 = arith.constant 1.000000e+00 : f32
    %1244 = vector.broadcast %cst_423 : f32 to vector<8x32xf32>
    %1245 = arith.subf %1243, %1244 : vector<8x32xf32>
    %1246 = vector.extract_strided_slice %1240 {offsets = [0, 96], sizes = [8, 32], strides = [1, 1]} : vector<8x128xf32> to vector<8x32xf32>
    %cst_424 = arith.constant 2.000000e+00 : f32
    %1247 = vector.broadcast %cst_424 : f32 to vector<8x32xf32>
    %1248 = arith.mulf %1247, %1246 : vector<8x32xf32>
    %cst_425 = arith.constant 1.000000e+00 : f32
    %1249 = vector.broadcast %cst_425 : f32 to vector<8x32xf32>
    %1250 = arith.subf %1248, %1249 : vector<8x32xf32>
    %1251 = vector.extract_strided_slice %1235 {offsets = [0, 32], sizes = [8, 32], strides = [1, 1]} : vector<8x128xf32> to vector<8x32xf32>
    %1252 = arith.mulf %1251, %1208 : vector<8x32xf32>
    %1253 = vector.extract_strided_slice %1235 {offsets = [0, 0], sizes = [8, 32], strides = [1, 1]} : vector<8x128xf32> to vector<8x32xf32>
    %1254 = arith.mulf %1253, %1245 : vector<8x32xf32>
    %1255 = arith.addf %1252, %1254 : vector<8x32xf32>
    %1256 = vector.extract_strided_slice %1240 {offsets = [0, 32], sizes = [8, 32], strides = [1, 1]} : vector<8x128xf32> to vector<8x32xf32>
    %1257 = arith.mulf %1256, %1213 : vector<8x32xf32>
    %1258 = vector.extract_strided_slice %1240 {offsets = [0, 0], sizes = [8, 32], strides = [1, 1]} : vector<8x128xf32> to vector<8x32xf32>
    %1259 = arith.mulf %1258, %1250 : vector<8x32xf32>
    %1260 = arith.addf %1257, %1259 : vector<8x32xf32>
    %1261 = vector.extract_strided_slice %1235 {offsets = [0, 64], sizes = [8, 32], strides = [1, 1]} : vector<8x128xf32> to vector<8x32xf32>
    %1262 = math.tanh %1255 : vector<8x32xf32>
    %1263 = arith.mulf %1261, %1262 : vector<8x32xf32>
    %1264 = vector.extract_strided_slice %1240 {offsets = [0, 64], sizes = [8, 32], strides = [1, 1]} : vector<8x128xf32> to vector<8x32xf32>
    %1265 = math.tanh %1260 : vector<8x32xf32>
    %1266 = arith.mulf %1264, %1265 : vector<8x32xf32>
    %1267 = tpu.concatenate %1263, %1266 in 1 : vector<8x32xf32>, vector<8x32xf32> -> vector<8x64xf32>
    %1268 = arith.truncf %1267 : vector<8x64xf32> to vector<8x64xbf16>
    %cst_426 = arith.constant dense<0.000000e+00> : vector<8x256xf32>
    %1269 = tpu.matmul %1268, %856, %cst_426 {dimension_numbers = #tpu.dot_dimension_numbers<[1], [0], [0], [1], [0, 0, 1, 1], [], []>} : vector<8x64xbf16>, vector<64x256xbf16>, vector<8x256xf32> -> vector<8x256xf32>
    %1270 = vector.extract_strided_slice %1269 {offsets = [0, 0], sizes = [8, 128], strides = [1, 1]} : vector<8x256xf32> to vector<8x128xf32>
    %c9_427 = arith.constant 9 : index
    %c0_428 = arith.constant 0 : index
    %c0_429 = arith.constant 0 : index
    %1271 = vector.load %arg9[%c9_427, %c0_428, %c0_429] : memref<16x8x256xf32, #tpu.memory_space<vmem>>, vector<1x8x128xf32>
    %1272 = vector.shape_cast %1271 : vector<1x8x128xf32> to vector<8x128xf32>
    %1273 = arith.addf %1270, %1272 : vector<8x128xf32>
    %1274 = vector.extract_strided_slice %1269 {offsets = [0, 128], sizes = [8, 128], strides = [1, 1]} : vector<8x256xf32> to vector<8x128xf32>
    %c6_430 = arith.constant 6 : index
    %c0_431 = arith.constant 0 : index
    %c128_432 = arith.constant 128 : index
    %1275 = vector.load %arg9[%c6_430, %c0_431, %c128_432] : memref<16x8x256xf32, #tpu.memory_space<vmem>>, vector<1x8x128xf32>
    %1276 = vector.shape_cast %1275 : vector<1x8x128xf32> to vector<8x128xf32>
    %1277 = arith.addf %1274, %1276 : vector<8x128xf32>
    %1278 = arith.negf %1273 : vector<8x128xf32>
    %1279 = math.exp %1278 : vector<8x128xf32>
    %cst_433 = arith.constant 1.000000e+00 : f32
    %1280 = vector.broadcast %cst_433 : f32 to vector<8x128xf32>
    %1281 = arith.addf %1280, %1279 : vector<8x128xf32>
    %1282 = arith.divf %1280, %1281 : vector<8x128xf32>
    %1283 = arith.negf %1277 : vector<8x128xf32>
    %1284 = math.exp %1283 : vector<8x128xf32>
    %cst_434 = arith.constant 1.000000e+00 : f32
    %1285 = vector.broadcast %cst_434 : f32 to vector<8x128xf32>
    %1286 = arith.addf %1285, %1284 : vector<8x128xf32>
    %1287 = arith.divf %1285, %1286 : vector<8x128xf32>
    %1288 = vector.extract_strided_slice %1282 {offsets = [0, 96], sizes = [8, 32], strides = [1, 1]} : vector<8x128xf32> to vector<8x32xf32>
    %cst_435 = arith.constant 2.000000e+00 : f32
    %1289 = vector.broadcast %cst_435 : f32 to vector<8x32xf32>
    %1290 = arith.mulf %1289, %1288 : vector<8x32xf32>
    %cst_436 = arith.constant 1.000000e+00 : f32
    %1291 = vector.broadcast %cst_436 : f32 to vector<8x32xf32>
    %1292 = arith.subf %1290, %1291 : vector<8x32xf32>
    %1293 = vector.extract_strided_slice %1287 {offsets = [0, 96], sizes = [8, 32], strides = [1, 1]} : vector<8x128xf32> to vector<8x32xf32>
    %cst_437 = arith.constant 2.000000e+00 : f32
    %1294 = vector.broadcast %cst_437 : f32 to vector<8x32xf32>
    %1295 = arith.mulf %1294, %1293 : vector<8x32xf32>
    %cst_438 = arith.constant 1.000000e+00 : f32
    %1296 = vector.broadcast %cst_438 : f32 to vector<8x32xf32>
    %1297 = arith.subf %1295, %1296 : vector<8x32xf32>
    %1298 = vector.extract_strided_slice %1282 {offsets = [0, 32], sizes = [8, 32], strides = [1, 1]} : vector<8x128xf32> to vector<8x32xf32>
    %1299 = arith.mulf %1298, %1255 : vector<8x32xf32>
    %1300 = vector.extract_strided_slice %1282 {offsets = [0, 0], sizes = [8, 32], strides = [1, 1]} : vector<8x128xf32> to vector<8x32xf32>
    %1301 = arith.mulf %1300, %1292 : vector<8x32xf32>
    %1302 = arith.addf %1299, %1301 : vector<8x32xf32>
    %1303 = vector.extract_strided_slice %1287 {offsets = [0, 32], sizes = [8, 32], strides = [1, 1]} : vector<8x128xf32> to vector<8x32xf32>
    %1304 = arith.mulf %1303, %1260 : vector<8x32xf32>
    %1305 = vector.extract_strided_slice %1287 {offsets = [0, 0], sizes = [8, 32], strides = [1, 1]} : vector<8x128xf32> to vector<8x32xf32>
    %1306 = arith.mulf %1305, %1297 : vector<8x32xf32>
    %1307 = arith.addf %1304, %1306 : vector<8x32xf32>
    %1308 = vector.extract_strided_slice %1282 {offsets = [0, 64], sizes = [8, 32], strides = [1, 1]} : vector<8x128xf32> to vector<8x32xf32>
    %1309 = math.tanh %1302 : vector<8x32xf32>
    %1310 = arith.mulf %1308, %1309 : vector<8x32xf32>
    %1311 = vector.extract_strided_slice %1287 {offsets = [0, 64], sizes = [8, 32], strides = [1, 1]} : vector<8x128xf32> to vector<8x32xf32>
    %1312 = math.tanh %1307 : vector<8x32xf32>
    %1313 = arith.mulf %1311, %1312 : vector<8x32xf32>
    %1314 = tpu.concatenate %1310, %1313 in 1 : vector<8x32xf32>, vector<8x32xf32> -> vector<8x64xf32>
    %1315 = arith.truncf %1314 : vector<8x64xf32> to vector<8x64xbf16>
    %cst_439 = arith.constant dense<0.000000e+00> : vector<8x256xf32>
    %1316 = tpu.matmul %1315, %856, %cst_439 {dimension_numbers = #tpu.dot_dimension_numbers<[1], [0], [0], [1], [0, 0, 1, 1], [], []>} : vector<8x64xbf16>, vector<64x256xbf16>, vector<8x256xf32> -> vector<8x256xf32>
    %1317 = vector.extract_strided_slice %1316 {offsets = [0, 0], sizes = [8, 128], strides = [1, 1]} : vector<8x256xf32> to vector<8x128xf32>
    %c10_440 = arith.constant 10 : index
    %c0_441 = arith.constant 0 : index
    %c0_442 = arith.constant 0 : index
    %1318 = vector.load %arg9[%c10_440, %c0_441, %c0_442] : memref<16x8x256xf32, #tpu.memory_space<vmem>>, vector<1x8x128xf32>
    %1319 = vector.shape_cast %1318 : vector<1x8x128xf32> to vector<8x128xf32>
    %1320 = arith.addf %1317, %1319 : vector<8x128xf32>
    %1321 = vector.extract_strided_slice %1316 {offsets = [0, 128], sizes = [8, 128], strides = [1, 1]} : vector<8x256xf32> to vector<8x128xf32>
    %c5_443 = arith.constant 5 : index
    %c0_444 = arith.constant 0 : index
    %c128_445 = arith.constant 128 : index
    %1322 = vector.load %arg9[%c5_443, %c0_444, %c128_445] : memref<16x8x256xf32, #tpu.memory_space<vmem>>, vector<1x8x128xf32>
    %1323 = vector.shape_cast %1322 : vector<1x8x128xf32> to vector<8x128xf32>
    %1324 = arith.addf %1321, %1323 : vector<8x128xf32>
    %1325 = arith.negf %1320 : vector<8x128xf32>
    %1326 = math.exp %1325 : vector<8x128xf32>
    %cst_446 = arith.constant 1.000000e+00 : f32
    %1327 = vector.broadcast %cst_446 : f32 to vector<8x128xf32>
    %1328 = arith.addf %1327, %1326 : vector<8x128xf32>
    %1329 = arith.divf %1327, %1328 : vector<8x128xf32>
    %1330 = arith.negf %1324 : vector<8x128xf32>
    %1331 = math.exp %1330 : vector<8x128xf32>
    %cst_447 = arith.constant 1.000000e+00 : f32
    %1332 = vector.broadcast %cst_447 : f32 to vector<8x128xf32>
    %1333 = arith.addf %1332, %1331 : vector<8x128xf32>
    %1334 = arith.divf %1332, %1333 : vector<8x128xf32>
    %1335 = vector.extract_strided_slice %1329 {offsets = [0, 96], sizes = [8, 32], strides = [1, 1]} : vector<8x128xf32> to vector<8x32xf32>
    %cst_448 = arith.constant 2.000000e+00 : f32
    %1336 = vector.broadcast %cst_448 : f32 to vector<8x32xf32>
    %1337 = arith.mulf %1336, %1335 : vector<8x32xf32>
    %cst_449 = arith.constant 1.000000e+00 : f32
    %1338 = vector.broadcast %cst_449 : f32 to vector<8x32xf32>
    %1339 = arith.subf %1337, %1338 : vector<8x32xf32>
    %1340 = vector.extract_strided_slice %1334 {offsets = [0, 96], sizes = [8, 32], strides = [1, 1]} : vector<8x128xf32> to vector<8x32xf32>
    %cst_450 = arith.constant 2.000000e+00 : f32
    %1341 = vector.broadcast %cst_450 : f32 to vector<8x32xf32>
    %1342 = arith.mulf %1341, %1340 : vector<8x32xf32>
    %cst_451 = arith.constant 1.000000e+00 : f32
    %1343 = vector.broadcast %cst_451 : f32 to vector<8x32xf32>
    %1344 = arith.subf %1342, %1343 : vector<8x32xf32>
    %1345 = vector.extract_strided_slice %1329 {offsets = [0, 32], sizes = [8, 32], strides = [1, 1]} : vector<8x128xf32> to vector<8x32xf32>
    %1346 = arith.mulf %1345, %1302 : vector<8x32xf32>
    %1347 = vector.extract_strided_slice %1329 {offsets = [0, 0], sizes = [8, 32], strides = [1, 1]} : vector<8x128xf32> to vector<8x32xf32>
    %1348 = arith.mulf %1347, %1339 : vector<8x32xf32>
    %1349 = arith.addf %1346, %1348 : vector<8x32xf32>
    %1350 = vector.extract_strided_slice %1334 {offsets = [0, 32], sizes = [8, 32], strides = [1, 1]} : vector<8x128xf32> to vector<8x32xf32>
    %1351 = arith.mulf %1350, %1307 : vector<8x32xf32>
    %1352 = vector.extract_strided_slice %1334 {offsets = [0, 0], sizes = [8, 32], strides = [1, 1]} : vector<8x128xf32> to vector<8x32xf32>
    %1353 = arith.mulf %1352, %1344 : vector<8x32xf32>
    %1354 = arith.addf %1351, %1353 : vector<8x32xf32>
    %1355 = vector.extract_strided_slice %1329 {offsets = [0, 64], sizes = [8, 32], strides = [1, 1]} : vector<8x128xf32> to vector<8x32xf32>
    %1356 = math.tanh %1349 : vector<8x32xf32>
    %1357 = arith.mulf %1355, %1356 : vector<8x32xf32>
    %1358 = vector.extract_strided_slice %1334 {offsets = [0, 64], sizes = [8, 32], strides = [1, 1]} : vector<8x128xf32> to vector<8x32xf32>
    %1359 = math.tanh %1354 : vector<8x32xf32>
    %1360 = arith.mulf %1358, %1359 : vector<8x32xf32>
    %1361 = tpu.concatenate %1357, %1360 in 1 : vector<8x32xf32>, vector<8x32xf32> -> vector<8x64xf32>
    %1362 = arith.truncf %1361 : vector<8x64xf32> to vector<8x64xbf16>
    %cst_452 = arith.constant dense<0.000000e+00> : vector<8x256xf32>
    %1363 = tpu.matmul %1362, %856, %cst_452 {dimension_numbers = #tpu.dot_dimension_numbers<[1], [0], [0], [1], [0, 0, 1, 1], [], []>} : vector<8x64xbf16>, vector<64x256xbf16>, vector<8x256xf32> -> vector<8x256xf32>
    %1364 = vector.extract_strided_slice %1363 {offsets = [0, 0], sizes = [8, 128], strides = [1, 1]} : vector<8x256xf32> to vector<8x128xf32>
    %c11_453 = arith.constant 11 : index
    %c0_454 = arith.constant 0 : index
    %c0_455 = arith.constant 0 : index
    %1365 = vector.load %arg9[%c11_453, %c0_454, %c0_455] : memref<16x8x256xf32, #tpu.memory_space<vmem>>, vector<1x8x128xf32>
    %1366 = vector.shape_cast %1365 : vector<1x8x128xf32> to vector<8x128xf32>
    %1367 = arith.addf %1364, %1366 : vector<8x128xf32>
    %1368 = vector.extract_strided_slice %1363 {offsets = [0, 128], sizes = [8, 128], strides = [1, 1]} : vector<8x256xf32> to vector<8x128xf32>
    %c4_456 = arith.constant 4 : index
    %c0_457 = arith.constant 0 : index
    %c128_458 = arith.constant 128 : index
    %1369 = vector.load %arg9[%c4_456, %c0_457, %c128_458] : memref<16x8x256xf32, #tpu.memory_space<vmem>>, vector<1x8x128xf32>
    %1370 = vector.shape_cast %1369 : vector<1x8x128xf32> to vector<8x128xf32>
    %1371 = arith.addf %1368, %1370 : vector<8x128xf32>
    %1372 = arith.negf %1367 : vector<8x128xf32>
    %1373 = math.exp %1372 : vector<8x128xf32>
    %cst_459 = arith.constant 1.000000e+00 : f32
    %1374 = vector.broadcast %cst_459 : f32 to vector<8x128xf32>
    %1375 = arith.addf %1374, %1373 : vector<8x128xf32>
    %1376 = arith.divf %1374, %1375 : vector<8x128xf32>
    %1377 = arith.negf %1371 : vector<8x128xf32>
    %1378 = math.exp %1377 : vector<8x128xf32>
    %cst_460 = arith.constant 1.000000e+00 : f32
    %1379 = vector.broadcast %cst_460 : f32 to vector<8x128xf32>
    %1380 = arith.addf %1379, %1378 : vector<8x128xf32>
    %1381 = arith.divf %1379, %1380 : vector<8x128xf32>
    %1382 = vector.extract_strided_slice %1376 {offsets = [0, 96], sizes = [8, 32], strides = [1, 1]} : vector<8x128xf32> to vector<8x32xf32>
    %cst_461 = arith.constant 2.000000e+00 : f32
    %1383 = vector.broadcast %cst_461 : f32 to vector<8x32xf32>
    %1384 = arith.mulf %1383, %1382 : vector<8x32xf32>
    %cst_462 = arith.constant 1.000000e+00 : f32
    %1385 = vector.broadcast %cst_462 : f32 to vector<8x32xf32>
    %1386 = arith.subf %1384, %1385 : vector<8x32xf32>
    %1387 = vector.extract_strided_slice %1381 {offsets = [0, 96], sizes = [8, 32], strides = [1, 1]} : vector<8x128xf32> to vector<8x32xf32>
    %cst_463 = arith.constant 2.000000e+00 : f32
    %1388 = vector.broadcast %cst_463 : f32 to vector<8x32xf32>
    %1389 = arith.mulf %1388, %1387 : vector<8x32xf32>
    %cst_464 = arith.constant 1.000000e+00 : f32
    %1390 = vector.broadcast %cst_464 : f32 to vector<8x32xf32>
    %1391 = arith.subf %1389, %1390 : vector<8x32xf32>
    %1392 = vector.extract_strided_slice %1376 {offsets = [0, 32], sizes = [8, 32], strides = [1, 1]} : vector<8x128xf32> to vector<8x32xf32>
    %1393 = arith.mulf %1392, %1349 : vector<8x32xf32>
    %1394 = vector.extract_strided_slice %1376 {offsets = [0, 0], sizes = [8, 32], strides = [1, 1]} : vector<8x128xf32> to vector<8x32xf32>
    %1395 = arith.mulf %1394, %1386 : vector<8x32xf32>
    %1396 = arith.addf %1393, %1395 : vector<8x32xf32>
    %1397 = vector.extract_strided_slice %1381 {offsets = [0, 32], sizes = [8, 32], strides = [1, 1]} : vector<8x128xf32> to vector<8x32xf32>
    %1398 = arith.mulf %1397, %1354 : vector<8x32xf32>
    %1399 = vector.extract_strided_slice %1381 {offsets = [0, 0], sizes = [8, 32], strides = [1, 1]} : vector<8x128xf32> to vector<8x32xf32>
    %1400 = arith.mulf %1399, %1391 : vector<8x32xf32>
    %1401 = arith.addf %1398, %1400 : vector<8x32xf32>
    %1402 = vector.extract_strided_slice %1376 {offsets = [0, 64], sizes = [8, 32], strides = [1, 1]} : vector<8x128xf32> to vector<8x32xf32>
    %1403 = math.tanh %1396 : vector<8x32xf32>
    %1404 = arith.mulf %1402, %1403 : vector<8x32xf32>
    %1405 = vector.extract_strided_slice %1381 {offsets = [0, 64], sizes = [8, 32], strides = [1, 1]} : vector<8x128xf32> to vector<8x32xf32>
    %1406 = math.tanh %1401 : vector<8x32xf32>
    %1407 = arith.mulf %1405, %1406 : vector<8x32xf32>
    %1408 = tpu.concatenate %1404, %1407 in 1 : vector<8x32xf32>, vector<8x32xf32> -> vector<8x64xf32>
    %1409 = arith.truncf %1408 : vector<8x64xf32> to vector<8x64xbf16>
    %cst_465 = arith.constant dense<0.000000e+00> : vector<8x256xf32>
    %1410 = tpu.matmul %1409, %856, %cst_465 {dimension_numbers = #tpu.dot_dimension_numbers<[1], [0], [0], [1], [0, 0, 1, 1], [], []>} : vector<8x64xbf16>, vector<64x256xbf16>, vector<8x256xf32> -> vector<8x256xf32>
    %1411 = vector.extract_strided_slice %1410 {offsets = [0, 0], sizes = [8, 128], strides = [1, 1]} : vector<8x256xf32> to vector<8x128xf32>
    %c12_466 = arith.constant 12 : index
    %c0_467 = arith.constant 0 : index
    %c0_468 = arith.constant 0 : index
    %1412 = vector.load %arg9[%c12_466, %c0_467, %c0_468] : memref<16x8x256xf32, #tpu.memory_space<vmem>>, vector<1x8x128xf32>
    %1413 = vector.shape_cast %1412 : vector<1x8x128xf32> to vector<8x128xf32>
    %1414 = arith.addf %1411, %1413 : vector<8x128xf32>
    %1415 = vector.extract_strided_slice %1410 {offsets = [0, 128], sizes = [8, 128], strides = [1, 1]} : vector<8x256xf32> to vector<8x128xf32>
    %c3_469 = arith.constant 3 : index
    %c0_470 = arith.constant 0 : index
    %c128_471 = arith.constant 128 : index
    %1416 = vector.load %arg9[%c3_469, %c0_470, %c128_471] : memref<16x8x256xf32, #tpu.memory_space<vmem>>, vector<1x8x128xf32>
    %1417 = vector.shape_cast %1416 : vector<1x8x128xf32> to vector<8x128xf32>
    %1418 = arith.addf %1415, %1417 : vector<8x128xf32>
    %1419 = arith.negf %1414 : vector<8x128xf32>
    %1420 = math.exp %1419 : vector<8x128xf32>
    %cst_472 = arith.constant 1.000000e+00 : f32
    %1421 = vector.broadcast %cst_472 : f32 to vector<8x128xf32>
    %1422 = arith.addf %1421, %1420 : vector<8x128xf32>
    %1423 = arith.divf %1421, %1422 : vector<8x128xf32>
    %1424 = arith.negf %1418 : vector<8x128xf32>
    %1425 = math.exp %1424 : vector<8x128xf32>
    %cst_473 = arith.constant 1.000000e+00 : f32
    %1426 = vector.broadcast %cst_473 : f32 to vector<8x128xf32>
    %1427 = arith.addf %1426, %1425 : vector<8x128xf32>
    %1428 = arith.divf %1426, %1427 : vector<8x128xf32>
    %1429 = vector.extract_strided_slice %1423 {offsets = [0, 96], sizes = [8, 32], strides = [1, 1]} : vector<8x128xf32> to vector<8x32xf32>
    %cst_474 = arith.constant 2.000000e+00 : f32
    %1430 = vector.broadcast %cst_474 : f32 to vector<8x32xf32>
    %1431 = arith.mulf %1430, %1429 : vector<8x32xf32>
    %cst_475 = arith.constant 1.000000e+00 : f32
    %1432 = vector.broadcast %cst_475 : f32 to vector<8x32xf32>
    %1433 = arith.subf %1431, %1432 : vector<8x32xf32>
    %1434 = vector.extract_strided_slice %1428 {offsets = [0, 96], sizes = [8, 32], strides = [1, 1]} : vector<8x128xf32> to vector<8x32xf32>
    %cst_476 = arith.constant 2.000000e+00 : f32
    %1435 = vector.broadcast %cst_476 : f32 to vector<8x32xf32>
    %1436 = arith.mulf %1435, %1434 : vector<8x32xf32>
    %cst_477 = arith.constant 1.000000e+00 : f32
    %1437 = vector.broadcast %cst_477 : f32 to vector<8x32xf32>
    %1438 = arith.subf %1436, %1437 : vector<8x32xf32>
    %1439 = vector.extract_strided_slice %1423 {offsets = [0, 32], sizes = [8, 32], strides = [1, 1]} : vector<8x128xf32> to vector<8x32xf32>
    %1440 = arith.mulf %1439, %1396 : vector<8x32xf32>
    %1441 = vector.extract_strided_slice %1423 {offsets = [0, 0], sizes = [8, 32], strides = [1, 1]} : vector<8x128xf32> to vector<8x32xf32>
    %1442 = arith.mulf %1441, %1433 : vector<8x32xf32>
    %1443 = arith.addf %1440, %1442 : vector<8x32xf32>
    %1444 = vector.extract_strided_slice %1428 {offsets = [0, 32], sizes = [8, 32], strides = [1, 1]} : vector<8x128xf32> to vector<8x32xf32>
    %1445 = arith.mulf %1444, %1401 : vector<8x32xf32>
    %1446 = vector.extract_strided_slice %1428 {offsets = [0, 0], sizes = [8, 32], strides = [1, 1]} : vector<8x128xf32> to vector<8x32xf32>
    %1447 = arith.mulf %1446, %1438 : vector<8x32xf32>
    %1448 = arith.addf %1445, %1447 : vector<8x32xf32>
    %1449 = vector.extract_strided_slice %1423 {offsets = [0, 64], sizes = [8, 32], strides = [1, 1]} : vector<8x128xf32> to vector<8x32xf32>
    %1450 = math.tanh %1443 : vector<8x32xf32>
    %1451 = arith.mulf %1449, %1450 : vector<8x32xf32>
    %1452 = vector.extract_strided_slice %1428 {offsets = [0, 64], sizes = [8, 32], strides = [1, 1]} : vector<8x128xf32> to vector<8x32xf32>
    %1453 = math.tanh %1448 : vector<8x32xf32>
    %1454 = arith.mulf %1452, %1453 : vector<8x32xf32>
    %1455 = tpu.concatenate %1451, %1454 in 1 : vector<8x32xf32>, vector<8x32xf32> -> vector<8x64xf32>
    %1456 = arith.truncf %1455 : vector<8x64xf32> to vector<8x64xbf16>
    %cst_478 = arith.constant dense<0.000000e+00> : vector<8x256xf32>
    %1457 = tpu.matmul %1456, %856, %cst_478 {dimension_numbers = #tpu.dot_dimension_numbers<[1], [0], [0], [1], [0, 0, 1, 1], [], []>} : vector<8x64xbf16>, vector<64x256xbf16>, vector<8x256xf32> -> vector<8x256xf32>
    %1458 = vector.extract_strided_slice %1457 {offsets = [0, 0], sizes = [8, 128], strides = [1, 1]} : vector<8x256xf32> to vector<8x128xf32>
    %c13_479 = arith.constant 13 : index
    %c0_480 = arith.constant 0 : index
    %c0_481 = arith.constant 0 : index
    %1459 = vector.load %arg9[%c13_479, %c0_480, %c0_481] : memref<16x8x256xf32, #tpu.memory_space<vmem>>, vector<1x8x128xf32>
    %1460 = vector.shape_cast %1459 : vector<1x8x128xf32> to vector<8x128xf32>
    %1461 = arith.addf %1458, %1460 : vector<8x128xf32>
    %1462 = vector.extract_strided_slice %1457 {offsets = [0, 128], sizes = [8, 128], strides = [1, 1]} : vector<8x256xf32> to vector<8x128xf32>
    %c2_482 = arith.constant 2 : index
    %c0_483 = arith.constant 0 : index
    %c128_484 = arith.constant 128 : index
    %1463 = vector.load %arg9[%c2_482, %c0_483, %c128_484] : memref<16x8x256xf32, #tpu.memory_space<vmem>>, vector<1x8x128xf32>
    %1464 = vector.shape_cast %1463 : vector<1x8x128xf32> to vector<8x128xf32>
    %1465 = arith.addf %1462, %1464 : vector<8x128xf32>
    %1466 = arith.negf %1461 : vector<8x128xf32>
    %1467 = math.exp %1466 : vector<8x128xf32>
    %cst_485 = arith.constant 1.000000e+00 : f32
    %1468 = vector.broadcast %cst_485 : f32 to vector<8x128xf32>
    %1469 = arith.addf %1468, %1467 : vector<8x128xf32>
    %1470 = arith.divf %1468, %1469 : vector<8x128xf32>
    %1471 = arith.negf %1465 : vector<8x128xf32>
    %1472 = math.exp %1471 : vector<8x128xf32>
    %cst_486 = arith.constant 1.000000e+00 : f32
    %1473 = vector.broadcast %cst_486 : f32 to vector<8x128xf32>
    %1474 = arith.addf %1473, %1472 : vector<8x128xf32>
    %1475 = arith.divf %1473, %1474 : vector<8x128xf32>
    %1476 = vector.extract_strided_slice %1470 {offsets = [0, 96], sizes = [8, 32], strides = [1, 1]} : vector<8x128xf32> to vector<8x32xf32>
    %cst_487 = arith.constant 2.000000e+00 : f32
    %1477 = vector.broadcast %cst_487 : f32 to vector<8x32xf32>
    %1478 = arith.mulf %1477, %1476 : vector<8x32xf32>
    %cst_488 = arith.constant 1.000000e+00 : f32
    %1479 = vector.broadcast %cst_488 : f32 to vector<8x32xf32>
    %1480 = arith.subf %1478, %1479 : vector<8x32xf32>
    %1481 = vector.extract_strided_slice %1475 {offsets = [0, 96], sizes = [8, 32], strides = [1, 1]} : vector<8x128xf32> to vector<8x32xf32>
    %cst_489 = arith.constant 2.000000e+00 : f32
    %1482 = vector.broadcast %cst_489 : f32 to vector<8x32xf32>
    %1483 = arith.mulf %1482, %1481 : vector<8x32xf32>
    %cst_490 = arith.constant 1.000000e+00 : f32
    %1484 = vector.broadcast %cst_490 : f32 to vector<8x32xf32>
    %1485 = arith.subf %1483, %1484 : vector<8x32xf32>
    %1486 = vector.extract_strided_slice %1470 {offsets = [0, 32], sizes = [8, 32], strides = [1, 1]} : vector<8x128xf32> to vector<8x32xf32>
    %1487 = arith.mulf %1486, %1443 : vector<8x32xf32>
    %1488 = vector.extract_strided_slice %1470 {offsets = [0, 0], sizes = [8, 32], strides = [1, 1]} : vector<8x128xf32> to vector<8x32xf32>
    %1489 = arith.mulf %1488, %1480 : vector<8x32xf32>
    %1490 = arith.addf %1487, %1489 : vector<8x32xf32>
    %1491 = vector.extract_strided_slice %1475 {offsets = [0, 32], sizes = [8, 32], strides = [1, 1]} : vector<8x128xf32> to vector<8x32xf32>
    %1492 = arith.mulf %1491, %1448 : vector<8x32xf32>
    %1493 = vector.extract_strided_slice %1475 {offsets = [0, 0], sizes = [8, 32], strides = [1, 1]} : vector<8x128xf32> to vector<8x32xf32>
    %1494 = arith.mulf %1493, %1485 : vector<8x32xf32>
    %1495 = arith.addf %1492, %1494 : vector<8x32xf32>
    %1496 = vector.extract_strided_slice %1470 {offsets = [0, 64], sizes = [8, 32], strides = [1, 1]} : vector<8x128xf32> to vector<8x32xf32>
    %1497 = math.tanh %1490 : vector<8x32xf32>
    %1498 = arith.mulf %1496, %1497 : vector<8x32xf32>
    %1499 = vector.extract_strided_slice %1475 {offsets = [0, 64], sizes = [8, 32], strides = [1, 1]} : vector<8x128xf32> to vector<8x32xf32>
    %1500 = math.tanh %1495 : vector<8x32xf32>
    %1501 = arith.mulf %1499, %1500 : vector<8x32xf32>
    %1502 = tpu.concatenate %1498, %1501 in 1 : vector<8x32xf32>, vector<8x32xf32> -> vector<8x64xf32>
    %1503 = arith.truncf %1502 : vector<8x64xf32> to vector<8x64xbf16>
    %cst_491 = arith.constant dense<0.000000e+00> : vector<8x256xf32>
    %1504 = tpu.matmul %1503, %856, %cst_491 {dimension_numbers = #tpu.dot_dimension_numbers<[1], [0], [0], [1], [0, 0, 1, 1], [], []>} : vector<8x64xbf16>, vector<64x256xbf16>, vector<8x256xf32> -> vector<8x256xf32>
    %1505 = vector.extract_strided_slice %1504 {offsets = [0, 0], sizes = [8, 128], strides = [1, 1]} : vector<8x256xf32> to vector<8x128xf32>
    %c14_492 = arith.constant 14 : index
    %c0_493 = arith.constant 0 : index
    %c0_494 = arith.constant 0 : index
    %1506 = vector.load %arg9[%c14_492, %c0_493, %c0_494] : memref<16x8x256xf32, #tpu.memory_space<vmem>>, vector<1x8x128xf32>
    %1507 = vector.shape_cast %1506 : vector<1x8x128xf32> to vector<8x128xf32>
    %1508 = arith.addf %1505, %1507 : vector<8x128xf32>
    %1509 = vector.extract_strided_slice %1504 {offsets = [0, 128], sizes = [8, 128], strides = [1, 1]} : vector<8x256xf32> to vector<8x128xf32>
    %c1_495 = arith.constant 1 : index
    %c0_496 = arith.constant 0 : index
    %c128_497 = arith.constant 128 : index
    %1510 = vector.load %arg9[%c1_495, %c0_496, %c128_497] : memref<16x8x256xf32, #tpu.memory_space<vmem>>, vector<1x8x128xf32>
    %1511 = vector.shape_cast %1510 : vector<1x8x128xf32> to vector<8x128xf32>
    %1512 = arith.addf %1509, %1511 : vector<8x128xf32>
    %1513 = arith.negf %1508 : vector<8x128xf32>
    %1514 = math.exp %1513 : vector<8x128xf32>
    %cst_498 = arith.constant 1.000000e+00 : f32
    %1515 = vector.broadcast %cst_498 : f32 to vector<8x128xf32>
    %1516 = arith.addf %1515, %1514 : vector<8x128xf32>
    %1517 = arith.divf %1515, %1516 : vector<8x128xf32>
    %1518 = arith.negf %1512 : vector<8x128xf32>
    %1519 = math.exp %1518 : vector<8x128xf32>
    %cst_499 = arith.constant 1.000000e+00 : f32
    %1520 = vector.broadcast %cst_499 : f32 to vector<8x128xf32>
    %1521 = arith.addf %1520, %1519 : vector<8x128xf32>
    %1522 = arith.divf %1520, %1521 : vector<8x128xf32>
    %1523 = vector.extract_strided_slice %1517 {offsets = [0, 96], sizes = [8, 32], strides = [1, 1]} : vector<8x128xf32> to vector<8x32xf32>
    %cst_500 = arith.constant 2.000000e+00 : f32
    %1524 = vector.broadcast %cst_500 : f32 to vector<8x32xf32>
    %1525 = arith.mulf %1524, %1523 : vector<8x32xf32>
    %cst_501 = arith.constant 1.000000e+00 : f32
    %1526 = vector.broadcast %cst_501 : f32 to vector<8x32xf32>
    %1527 = arith.subf %1525, %1526 : vector<8x32xf32>
    %1528 = vector.extract_strided_slice %1522 {offsets = [0, 96], sizes = [8, 32], strides = [1, 1]} : vector<8x128xf32> to vector<8x32xf32>
    %cst_502 = arith.constant 2.000000e+00 : f32
    %1529 = vector.broadcast %cst_502 : f32 to vector<8x32xf32>
    %1530 = arith.mulf %1529, %1528 : vector<8x32xf32>
    %cst_503 = arith.constant 1.000000e+00 : f32
    %1531 = vector.broadcast %cst_503 : f32 to vector<8x32xf32>
    %1532 = arith.subf %1530, %1531 : vector<8x32xf32>
    %1533 = vector.extract_strided_slice %1517 {offsets = [0, 32], sizes = [8, 32], strides = [1, 1]} : vector<8x128xf32> to vector<8x32xf32>
    %1534 = arith.mulf %1533, %1490 : vector<8x32xf32>
    %1535 = vector.extract_strided_slice %1517 {offsets = [0, 0], sizes = [8, 32], strides = [1, 1]} : vector<8x128xf32> to vector<8x32xf32>
    %1536 = arith.mulf %1535, %1527 : vector<8x32xf32>
    %1537 = arith.addf %1534, %1536 : vector<8x32xf32>
    %1538 = vector.extract_strided_slice %1522 {offsets = [0, 32], sizes = [8, 32], strides = [1, 1]} : vector<8x128xf32> to vector<8x32xf32>
    %1539 = arith.mulf %1538, %1495 : vector<8x32xf32>
    %1540 = vector.extract_strided_slice %1522 {offsets = [0, 0], sizes = [8, 32], strides = [1, 1]} : vector<8x128xf32> to vector<8x32xf32>
    %1541 = arith.mulf %1540, %1532 : vector<8x32xf32>
    %1542 = arith.addf %1539, %1541 : vector<8x32xf32>
    %1543 = vector.extract_strided_slice %1517 {offsets = [0, 64], sizes = [8, 32], strides = [1, 1]} : vector<8x128xf32> to vector<8x32xf32>
    %1544 = math.tanh %1537 : vector<8x32xf32>
    %1545 = arith.mulf %1543, %1544 : vector<8x32xf32>
    %1546 = vector.extract_strided_slice %1522 {offsets = [0, 64], sizes = [8, 32], strides = [1, 1]} : vector<8x128xf32> to vector<8x32xf32>
    %1547 = math.tanh %1542 : vector<8x32xf32>
    %1548 = arith.mulf %1546, %1547 : vector<8x32xf32>
    %1549 = tpu.concatenate %1545, %1548 in 1 : vector<8x32xf32>, vector<8x32xf32> -> vector<8x64xf32>
    %1550 = arith.truncf %1549 : vector<8x64xf32> to vector<8x64xbf16>
    %cst_504 = arith.constant dense<0.000000e+00> : vector<8x256xf32>
    %1551 = tpu.matmul %1550, %856, %cst_504 {dimension_numbers = #tpu.dot_dimension_numbers<[1], [0], [0], [1], [0, 0, 1, 1], [], []>} : vector<8x64xbf16>, vector<64x256xbf16>, vector<8x256xf32> -> vector<8x256xf32>
    %1552 = vector.extract_strided_slice %1551 {offsets = [0, 0], sizes = [8, 128], strides = [1, 1]} : vector<8x256xf32> to vector<8x128xf32>
    %c15_505 = arith.constant 15 : index
    %c0_506 = arith.constant 0 : index
    %c0_507 = arith.constant 0 : index
    %1553 = vector.load %arg9[%c15_505, %c0_506, %c0_507] : memref<16x8x256xf32, #tpu.memory_space<vmem>>, vector<1x8x128xf32>
    %1554 = vector.shape_cast %1553 : vector<1x8x128xf32> to vector<8x128xf32>
    %1555 = arith.addf %1552, %1554 : vector<8x128xf32>
    %1556 = vector.extract_strided_slice %1551 {offsets = [0, 128], sizes = [8, 128], strides = [1, 1]} : vector<8x256xf32> to vector<8x128xf32>
    %c0_508 = arith.constant 0 : index
    %c0_509 = arith.constant 0 : index
    %c128_510 = arith.constant 128 : index
    %1557 = vector.load %arg9[%c0_508, %c0_509, %c128_510] : memref<16x8x256xf32, #tpu.memory_space<vmem>>, vector<1x8x128xf32>
    %1558 = vector.shape_cast %1557 : vector<1x8x128xf32> to vector<8x128xf32>
    %1559 = arith.addf %1556, %1558 : vector<8x128xf32>
    %1560 = arith.negf %1555 : vector<8x128xf32>
    %1561 = math.exp %1560 : vector<8x128xf32>
    %cst_511 = arith.constant 1.000000e+00 : f32
    %1562 = vector.broadcast %cst_511 : f32 to vector<8x128xf32>
    %1563 = arith.addf %1562, %1561 : vector<8x128xf32>
    %1564 = arith.divf %1562, %1563 : vector<8x128xf32>
    %1565 = arith.negf %1559 : vector<8x128xf32>
    %1566 = math.exp %1565 : vector<8x128xf32>
    %cst_512 = arith.constant 1.000000e+00 : f32
    %1567 = vector.broadcast %cst_512 : f32 to vector<8x128xf32>
    %1568 = arith.addf %1567, %1566 : vector<8x128xf32>
    %1569 = arith.divf %1567, %1568 : vector<8x128xf32>
    %1570 = vector.extract_strided_slice %1564 {offsets = [0, 96], sizes = [8, 32], strides = [1, 1]} : vector<8x128xf32> to vector<8x32xf32>
    %cst_513 = arith.constant 2.000000e+00 : f32
    %1571 = vector.broadcast %cst_513 : f32 to vector<8x32xf32>
    %1572 = arith.mulf %1571, %1570 : vector<8x32xf32>
    %cst_514 = arith.constant 1.000000e+00 : f32
    %1573 = vector.broadcast %cst_514 : f32 to vector<8x32xf32>
    %1574 = arith.subf %1572, %1573 : vector<8x32xf32>
    %1575 = vector.extract_strided_slice %1569 {offsets = [0, 96], sizes = [8, 32], strides = [1, 1]} : vector<8x128xf32> to vector<8x32xf32>
    %cst_515 = arith.constant 2.000000e+00 : f32
    %1576 = vector.broadcast %cst_515 : f32 to vector<8x32xf32>
    %1577 = arith.mulf %1576, %1575 : vector<8x32xf32>
    %cst_516 = arith.constant 1.000000e+00 : f32
    %1578 = vector.broadcast %cst_516 : f32 to vector<8x32xf32>
    %1579 = arith.subf %1577, %1578 : vector<8x32xf32>
    %1580 = vector.extract_strided_slice %1564 {offsets = [0, 32], sizes = [8, 32], strides = [1, 1]} : vector<8x128xf32> to vector<8x32xf32>
    %1581 = arith.mulf %1580, %1537 : vector<8x32xf32>
    %1582 = vector.extract_strided_slice %1564 {offsets = [0, 0], sizes = [8, 32], strides = [1, 1]} : vector<8x128xf32> to vector<8x32xf32>
    %1583 = arith.mulf %1582, %1574 : vector<8x32xf32>
    %1584 = arith.addf %1581, %1583 : vector<8x32xf32>
    %1585 = vector.extract_strided_slice %1569 {offsets = [0, 32], sizes = [8, 32], strides = [1, 1]} : vector<8x128xf32> to vector<8x32xf32>
    %1586 = arith.mulf %1585, %1542 : vector<8x32xf32>
    %1587 = vector.extract_strided_slice %1569 {offsets = [0, 0], sizes = [8, 32], strides = [1, 1]} : vector<8x128xf32> to vector<8x32xf32>
    %1588 = arith.mulf %1587, %1579 : vector<8x32xf32>
    %1589 = arith.addf %1586, %1588 : vector<8x32xf32>
    %1590 = vector.extract_strided_slice %1564 {offsets = [0, 64], sizes = [8, 32], strides = [1, 1]} : vector<8x128xf32> to vector<8x32xf32>
    %1591 = math.tanh %1584 : vector<8x32xf32>
    %1592 = arith.mulf %1590, %1591 : vector<8x32xf32>
    %1593 = vector.extract_strided_slice %1569 {offsets = [0, 64], sizes = [8, 32], strides = [1, 1]} : vector<8x128xf32> to vector<8x32xf32>
    %1594 = math.tanh %1589 : vector<8x32xf32>
    %1595 = arith.mulf %1593, %1594 : vector<8x32xf32>
    %1596 = tpu.concatenate %836, %839, %1592, %1595 in 1 : vector<8x32xf32>, vector<8x32xf32>, vector<8x32xf32>, vector<8x32xf32> -> vector<8x128xf32>
    %c0_517 = arith.constant 0 : index
    %c0_518 = arith.constant 0 : index
    %1597 = vector.load %arg8[%c0_517, %c0_518] : memref<8x128xf32, #tpu.memory_space<vmem>>, vector<8x128xf32>
    tpu.vector_store %arg8[%c0_517, %c0_518], %1596 {strides = array<i32>} : memref<8x128xf32, #tpu.memory_space<vmem>>, vector<8x128xf32>,
    return
  }
  func.func @transform_0(%arg0: i32) -> (i32, i32, i32) {
    %c0_i32 = arith.constant 0 : i32
    %c0_i32_0 = arith.constant 0 : i32
    %c0_i32_1 = arith.constant 0 : i32
    return %c0_i32, %arg0, %c0_i32_0 : i32, i32, i32
  }
  func.func @transform_1(%arg0: i32) -> (i32, i32) {
    %c0_i32 = arith.constant 0 : i32
    %c0_i32_0 = arith.constant 0 : i32
    %c0_i32_1 = arith.constant 0 : i32
    return %c0_i32, %c0_i32_0 : i32, i32
  }
  func.func @transform_2(%arg0: i32) -> (i32, i32) {
    %c0_i32 = arith.constant 0 : i32
    %c0_i32_0 = arith.constant 0 : i32
    %c0_i32_1 = arith.constant 0 : i32
    return %c0_i32, %c0_i32_0 : i32, i32
  }
  func.func @transform_3(%arg0: i32) -> (i32, i32) {
    %c0_i32 = arith.constant 0 : i32
    %c0_i32_0 = arith.constant 0 : i32
    %c0_i32_1 = arith.constant 0 : i32
    return %c0_i32, %c0_i32_0 : i32, i32
  }
  func.func @transform_4(%arg0: i32) -> (i32, i32) {
    %c0_i32 = arith.constant 0 : i32
    %c0_i32_0 = arith.constant 0 : i32
    %c0_i32_1 = arith.constant 0 : i32
    return %c0_i32, %c0_i32_0 : i32, i32
  }
  func.func @transform_5(%arg0: i32) -> (i32, i32) {
    %c0_i32 = arith.constant 0 : i32
    %c0_i32_0 = arith.constant 0 : i32
    %c0_i32_1 = arith.constant 0 : i32
    return %c0_i32, %c0_i32_0 : i32, i32
  }
  func.func @transform_6(%arg0: i32) -> (i32, i32) {
    %c0_i32 = arith.constant 0 : i32
    %c0_i32_0 = arith.constant 0 : i32
    %c0_i32_1 = arith.constant 0 : i32
    return %c0_i32, %c0_i32_0 : i32, i32
  }
  func.func @transform_7(%arg0: i32) -> (i32, i32) {
    %c0_i32 = arith.constant 0 : i32
    %c0_i32_0 = arith.constant 0 : i32
    return %arg0, %c0_i32 : i32, i32
  }
}

</mosaic_0001>

<llo_original>
// kernel: tpu_custom_call.1
$region0: #{tpu_custom_call.1}
  #allocation0 [shape = 'u32[]', space=smem, size = 0x4, offset = 0x4, fixed_abs, tag = 'smem constant byte address 0x4 - core index']
  #allocation1 [shape = 'u32[144,128]{1,0:T(1,128)}', space=vmem, size = 0x12000, scoped, tag = 'internal scratch']
  #allocation2 [shape = 'f32[16,8,256]{2,1,0:T(8,128)}', space=vmem, size = 0x20000, scoped, tag = 'scratch operand']
  #allocation3 [shape = 'f32[16,8,64]{2,1,0:T(8,128)}', space=vmem, size = 0x10000, scoped, tag = 'scratch operand']
  %s0 = inlined_call_operand.hbm [shape: f32[16,8,64], index: 0, kind: input, shape index: {}]
  %s1 = inlined_call_operand.hbm [shape: bf16[64,256], index: 1, kind: input, shape index: {}]
  %s2 = inlined_call_operand.vmem [shape: f32[1,256], index: 2, kind: input, shape index: {}]
  %s3 = inlined_call_operand.hbm [shape: bf16[64,256], index: 3, kind: input, shape index: {}]
  %s4 = inlined_call_operand.hbm [shape: bf16[64,256], index: 4, kind: input, shape index: {}]
  %s5 = inlined_call_operand.vmem [shape: f32[1,256], index: 5, kind: input, shape index: {}]
  %s6 = inlined_call_operand.hbm [shape: bf16[64,256], index: 6, kind: input, shape index: {}]
  %s7 = inlined_call_operand.hbm [shape: f32[8,128], index: 7, kind: output, shape index: {}]
  %s8 = sld [smem:[#allocation0]]
  $region58: #{tpu_custom_call.1} parent=0
    _
  %s10 = ssub.s32 1, %s8
  %s11 = scalar_select 0, %s10, %s8
  $region1: #{tpu_custom_call.1} parent=0
    #allocation4 [shape = 'u8[65536]{0}', space=vmem, size = 0x10000, scoped, tag = 'input window, operand 0, single buffered']
    #allocation5 [shape = 's32[1]{0}', space=sflag, size = 0x4, scoped, tag = 'scoped memory for tpu_custom_call.1']
    #allocation6 [shape = 's32[1]{0}', space=sflag, size = 0x4, scoped, tag = 'scoped memory for tpu_custom_call.1']
    #allocation7 [shape = 'u8[32768]{0}', space=vmem, size = 0x8000, scoped, tag = 'input window, operand 1, single buffered']
    #allocation8 [shape = 's32[1]{0}', space=sflag, size = 0x4, scoped, tag = 'scoped memory for tpu_custom_call.1']
    #allocation9 [shape = 'u8[32768]{0}', space=vmem, size = 0x8000, scoped, tag = 'input window, operand 3, single buffered']
    #allocation10 [shape = 'u8[32768]{0}', space=vmem, size = 0x8000, scoped, tag = 'input window, operand 4, single buffered']
    #allocation11 [shape = 's32[1]{0}', space=sflag, size = 0x4, scoped, tag = 'scoped memory for tpu_custom_call.1']
    #allocation12 [shape = 'u8[32768]{0}', space=vmem, size = 0x8000, scoped, tag = 'input window, operand 6, single buffered']
    #allocation13 [shape = 'u8[4096]{0}', space=vmem, size = 0x1000, scoped, tag = 'output window, operand 0, single buffered']
    %12 = vsyncpa [#allocation5], 0
    %13 = vsyncpa [#allocation8], 0
    %14 = vsyncpa [#allocation11], 0
    %15 = vsyncpa [#allocation6], 0
    // Predicated region
    $region2: #{tpu_custom_call.1} parent=1 // pred_check
      _
    $region3: #{tpu_custom_call.1} parent=1 // pred_check_branch
      %17 = sbr.rel (0) target = $region5
    $region4: #{tpu_custom_call.1} parent=1 // pred_region
      %s19 = ssub.s32 2048, 2048
      %20 = vsyncadd [#allocation5], %s19
      %s21 = sshll.u32 [#allocation4], 4
      %s22 = int_to_ptr.vmem [resolvable:$true] %s21
      %27 = dma.hbm_to_vmem [thread:$0]  %s0, 2048, %s22, [#allocation5], 128, 128, 8
    $region5: #{tpu_custom_call.1} parent=1 // pred_fallthru
      _
    // Predicated region
    $region6: #{tpu_custom_call.1} parent=1 // pred_check
      _
    $region7: #{tpu_custom_call.1} parent=1 // pred_check_branch
      %29 = sbr.rel (0) target = $region9
    $region8: #{tpu_custom_call.1} parent=1 // pred_region
      %s31 = ssub.s32 1024, 1024
      %32 = vsyncadd [#allocation8], %s31
      %s33 = sshll.u32 [#allocation7], 4
      %s34 = int_to_ptr.vmem [resolvable:$true] %s33
      %39 = dma.hbm_to_vmem [thread:$0]  %s1, 1024, %s34, [#allocation8], 128, 128, 8
    $region9: #{tpu_custom_call.1} parent=1 // pred_fallthru
      _
    // Predicated region
    $region10: #{tpu_custom_call.1} parent=1 // pred_check
      _
    $region11: #{tpu_custom_call.1} parent=1 // pred_check_branch
      %41 = sbr.rel (0) target = $region13
    $region12: #{tpu_custom_call.1} parent=1 // pred_region
      _
    $region13: #{tpu_custom_call.1} parent=1 // pred_fallthru
      _
    // Predicated region
    $region14: #{tpu_custom_call.1} parent=1 // pred_check
      _
    $region15: #{tpu_custom_call.1} parent=1 // pred_check_branch
      %43 = sbr.rel (0) target = $region17
    $region16: #{tpu_custom_call.1} parent=1 // pred_region
      %s45 = ssub.s32 1024, 1024
      %46 = vsyncadd [#allocation8], %s45
      %s47 = sshll.u32 [#allocation9], 4
      %s48 = int_to_ptr.vmem [resolvable:$true] %s47
      %53 = dma.hbm_to_vmem [thread:$0]  %s3, 1024, %s48, [#allocation8], 128, 128, 8
    $region17: #{tpu_custom_call.1} parent=1 // pred_fallthru
      _
    // Predicated region
    $region18: #{tpu_custom_call.1} parent=1 // pred_check
      _
    $region19: #{tpu_custom_call.1} parent=1 // pred_check_branch
      %55 = sbr.rel (0) target = $region21
    $region20: #{tpu_custom_call.1} parent=1 // pred_region
      %s57 = ssub.s32 1024, 1024
      %58 = vsyncadd [#allocation11], %s57
      %s59 = sshll.u32 [#allocation10], 4
      %s60 = int_to_ptr.vmem [resolvable:$true] %s59
      %65 = dma.hbm_to_vmem [thread:$0]  %s4, 1024, %s60, [#allocation11], 128, 128, 8
    $region21: #{tpu_custom_call.1} parent=1 // pred_fallthru
      _
    // Predicated region
    $region22: #{tpu_custom_call.1} parent=1 // pred_check
      _
    $region23: #{tpu_custom_call.1} parent=1 // pred_check_branch
      %67 = sbr.rel (0) target = $region25
    $region24: #{tpu_custom_call.1} parent=1 // pred_region
      _
    $region25: #{tpu_custom_call.1} parent=1 // pred_fallthru
      _
    // Predicated region
    $region26: #{tpu_custom_call.1} parent=1 // pred_check
      _
    $region27: #{tpu_custom_call.1} parent=1 // pred_check_branch
      %69 = sbr.rel (0) target = $region29
    $region28: #{tpu_custom_call.1} parent=1 // pred_region
      %s71 = ssub.s32 1024, 1024
      %72 = vsyncadd [#allocation11], %s71
      %s73 = sshll.u32 [#allocation12], 4
      %s74 = int_to_ptr.vmem [resolvable:$true] %s73
      %79 = dma.hbm_to_vmem [thread:$0]  %s6, 1024, %s74, [#allocation11], 128, 128, 8
    $region29: #{tpu_custom_call.1} parent=1 // pred_fallthru
      _
    // Predicated region
    $region30: #{tpu_custom_call.1} parent=1 // pred_check
      _
    $region31: #{tpu_custom_call.1} parent=1 // pred_check_branch
      %81 = sbr.rel (0) target = $region33
    $region32: #{tpu_custom_call.1} parent=1 // pred_region
      %82 = dma.done [#allocation5], 2048
    $region33: #{tpu_custom_call.1} parent=1 // pred_fallthru
      _
    // Predicated region
    $region34: #{tpu_custom_call.1} parent=1 // pred_check
      _
    $region35: #{tpu_custom_call.1} parent=1 // pred_check_branch
      %84 = sbr.rel (0) target = $region37
    $region36: #{tpu_custom_call.1} parent=1 // pred_region
      %85 = dma.done [#allocation8], 1024
    $region37: #{tpu_custom_call.1} parent=1 // pred_fallthru
      _
    // Predicated region
    $region38: #{tpu_custom_call.1} parent=1 // pred_check
      _
    $region39: #{tpu_custom_call.1} parent=1 // pred_check_branch
      %87 = sbr.rel (0) target = $region41
    $region40: #{tpu_custom_call.1} parent=1 // pred_region
      %88 = dma.done [#allocation8], 1024
    $region41: #{tpu_custom_call.1} parent=1 // pred_fallthru
      _
    // Predicated region
    $region42: #{tpu_custom_call.1} parent=1 // pred_check
      _
    $region43: #{tpu_custom_call.1} parent=1 // pred_check_branch
      %90 = sbr.rel (0) target = $region45
    $region44: #{tpu_custom_call.1} parent=1 // pred_region
      %91 = dma.done [#allocation11], 1024
    $region45: #{tpu_custom_call.1} parent=1 // pred_fallthru
      _
    // Predicated region
    $region46: #{tpu_custom_call.1} parent=1 // pred_check
      _
    $region47: #{tpu_custom_call.1} parent=1 // pred_check_branch
      %93 = sbr.rel (0) target = $region49
    $region48: #{tpu_custom_call.1} parent=1 // pred_region
      %94 = dma.done [#allocation11], 1024
    $region49: #{tpu_custom_call.1} parent=1 // pred_fallthru
      _
    %v96 = vld [vmem:[#allocation4] sm:$0xff]
    %v97 = vld [vmem:[#allocation4 + $0x8] sm:$0xff]
    %v98 = vld [vmem:[#allocation4 + $0x10] sm:$0xff]
    %v99 = vld [vmem:[#allocation4 + $0x18] sm:$0xff]
    %v100 = vld [vmem:[#allocation4 + $0x20] sm:$0xff]
    %v101 = vld [vmem:[#allocation4 + $0x28] sm:$0xff]
    %v102 = vld [vmem:[#allocation4 + $0x30] sm:$0xff]
    %v103 = vld [vmem:[#allocation4 + $0x38] sm:$0xff]
    %v104 = vld [vmem:[#allocation4 + $0x40] sm:$0xff]
    %v105 = vld [vmem:[#allocation4 + $0x48] sm:$0xff]
    %v106 = vld [vmem:[#allocation4 + $0x50] sm:$0xff]
    %v107 = vld [vmem:[#allocation4 + $0x58] sm:$0xff]
    %v108 = vld [vmem:[#allocation4 + $0x60] sm:$0xff]
    %v109 = vld [vmem:[#allocation4 + $0x68] sm:$0xff]
    %v110 = vld [vmem:[#allocation4 + $0x70] sm:$0xff]
    %v111 = vld [vmem:[#allocation4 + $0x78] sm:$0xff]
    %v112 = vpack.c.bf16 %v96, %v96
    %v113 = vpack.c.bf16 %v97, %v97
    %v114 = vpack.c.bf16 %v98, %v98
    %v115 = vpack.c.bf16 %v99, %v99
    %v116 = vpack.c.bf16 %v100, %v100
    %v117 = vpack.c.bf16 %v101, %v101
    %v118 = vpack.c.bf16 %v102, %v102
    %v119 = vpack.c.bf16 %v103, %v103
    %v120 = vpack.c.bf16 %v104, %v104
    %v121 = vpack.c.bf16 %v105, %v105
    %v122 = vpack.c.bf16 %v106, %v106
    %v123 = vpack.c.bf16 %v107, %v107
    %v124 = vpack.c.bf16 %v108, %v108
    %v125 = vpack.c.bf16 %v109, %v109
    %v126 = vpack.c.bf16 %v110, %v110
    %v127 = vpack.c.bf16 %v111, %v111
    %v128 = vld [vmem:[#allocation7] sm:$0xff]
    %v129 = vld [vmem:[#allocation7 + $0x8] sm:$0xff]
    %v130 = vld [vmem:[#allocation7 + $0x10] sm:$0xff]
    %v131 = vld [vmem:[#allocation7 + $0x18] sm:$0xff]
    %v132 = vld [vmem:[#allocation7 + $0x20] sm:$0xff]
    %v133 = vld [vmem:[#allocation7 + $0x28] sm:$0xff]
    %v134 = vld [vmem:[#allocation7 + $0x30] sm:$0xff]
    %v135 = vld [vmem:[#allocation7 + $0x38] sm:$0xff]
    %v136 = vld [vmem:[%s2] sm:$0x3]
    %v138 = vlaneseq
    %v139 = vshrl.u32 %v138, 7
    %v140 = vsub.s32 0, %v139
    %v141 = vrot.slane %v136, %v140
    %v142 = vlaneseq
    %v143 = vshrl.u32 %v142, 7
    %v144 = vsub.s32 1, %v143
    %v145 = vrot.slane %v136, %v144
    %v164 = vunpack.c.l.b16 %v112
    %v165 = vunpack.c.l.b16 %v113
    %v166 = vunpack.c.l.b16 %v114
    %v167 = vunpack.c.l.b16 %v115
    %v168 = vunpack.c.l.b16 %v116
    %v169 = vunpack.c.l.b16 %v117
    %v170 = vunpack.c.l.b16 %v118
    %v171 = vunpack.c.l.b16 %v119
    %v172 = vunpack.c.l.b16 %v120
    %v173 = vunpack.c.l.b16 %v121
    %v174 = vunpack.c.l.b16 %v122
    %v175 = vunpack.c.l.b16 %v123
    %v176 = vunpack.c.l.b16 %v124
    %v177 = vunpack.c.l.b16 %v125
    %v178 = vunpack.c.l.b16 %v126
    %v179 = vunpack.c.l.b16 %v127
    %v180 = vpack.c.b16 %v165, %v164
    %v181 = vpack.c.b16 %v167, %v166
    %v182 = vpack.c.b16 %v169, %v168
    %v183 = vpack.c.b16 %v171, %v170
    %v184 = vpack.c.b16 %v173, %v172
    %v185 = vpack.c.b16 %v175, %v174
    %v186 = vpack.c.b16 %v177, %v176
    %v187 = vpack.c.b16 %v179, %v178
    %v196 = vunpack.c.l.b16 %v128
    %v197 = vunpack.c.h.b16 %v128
    %v198 = vunpack.c.l.b16 %v129
    %v199 = vunpack.c.h.b16 %v129
    %v200 = vunpack.c.l.b16 %v130
    %v201 = vunpack.c.h.b16 %v130
    %v202 = vunpack.c.l.b16 %v131
    %v203 = vunpack.c.h.b16 %v131
    %v204 = vunpack.c.l.b16 %v132
    %v205 = vunpack.c.h.b16 %v132
    %v206 = vunpack.c.l.b16 %v133
    %v207 = vunpack.c.h.b16 %v133
    %v208 = vunpack.c.l.b16 %v134
    %v209 = vunpack.c.h.b16 %v134
    %v210 = vunpack.c.l.b16 %v135
    %v211 = vunpack.c.h.b16 %v135
    %v212 = vpack.c.b16 %v198, %v196
    %v213 = vpack.c.b16 %v199, %v197
    %v214 = vpack.c.b16 %v202, %v200
    %v215 = vpack.c.b16 %v203, %v201
    %v216 = vpack.c.b16 %v206, %v204
    %v217 = vpack.c.b16 %v207, %v205
    %v218 = vpack.c.b16 %v210, %v208
    %v219 = vpack.c.b16 %v211, %v209
    %vm228 = vcmask 523264
    %v230 = vsel %vm228, %v180, 0
    %v233 = vsel %vm228, %v181, 0
    %v236 = vsel %vm228, %v182, 0
    %v239 = vsel %vm228, %v183, 0
    %v242 = vsel %vm228, %v184, 0
    %v245 = vsel %vm228, %v185, 0
    %v248 = vsel %vm228, %v186, 0
    %v251 = vsel %vm228, %v187, 0
    %253 = vmatprep.subr.bf16.mxu0 %v213
    %254 = vmatpush1.bf16.msra.mxu0 %v212
    %255 = vmatprep.subr.bf16.mxu0 %v215
    %256 = vmatpush1.bf16.msra.mxu0 %v214
    %257 = vmatprep.subr.bf16.mxu0 %v217
    %258 = vmatpush1.bf16.msra.mxu0 %v216
    %259 = vmatprep.subr.bf16.mxu0 %v219
    %260 = vmatpush1.bf16.msra.mxu0 %v218
    %261 = vmatprep.subr.bf16.mxu0 0
    %262 = vmatpush1.bf16.msra.mxu0 0
    %263 = vmatprep.subr.bf16.mxu0 0
    %264 = vmatpush1.bf16.msra.mxu0 0
    %265 = vmatprep.subr.bf16.mxu0 0
    %266 = vmatpush1.bf16.msra.mxu0 0
    %267 = vmatprep.subr.bf16.mxu0 0
    %268 = vmatpush1.bf16.msra.mxu0 0
    %269 = vmatprep.subr.bf16.mxu0 0
    %270 = vmatpush1.bf16.msra.mxu0 0
    %271 = vmatprep.subr.bf16.mxu0 0
    %272 = vmatpush1.bf16.msra.mxu0 0
    %273 = vmatprep.subr.bf16.mxu0 0
    %274 = vmatpush1.bf16.msra.mxu0 0
    %275 = vmatprep.subr.bf16.mxu0 0
    %276 = vmatpush1.bf16.msra.mxu0 0
    %277 = vmatprep.subr.bf16.mxu0 0
    %278 = vmatpush1.bf16.msra.mxu0 0
    %279 = vmatprep.subr.bf16.mxu0 0
    %280 = vmatpush1.bf16.msra.mxu0 0
    %281 = vmatprep.subr.bf16.mxu0 0
    %282 = vmatpush1.bf16.msra.mxu0 0
    %283 = vmatprep.subr.bf16.mxu0 0
    %284 = vmatpush1.bf16.msra.mxu0 0
    %285 = vmatprep.mubr.bf16.mxu0 0
    %286 = vmatmul.mubr.bf16.gmra.mrb[0].mxu0 %v230
    %v287 = vpop.f32.mrb[0].mxu0
    %v288 = vadd.f32 %v141, %v287
    %v289 = vpop.f32.mrb[0].mxu0
    %v290 = vadd.f32 %v145, %v289
    %v291 = vpop.f32.mrb[0].mxu0
    %v292 = vadd.f32 %v141, %v291
    %v293 = vpop.f32.mrb[0].mxu0
    %v294 = vadd.f32 %v145, %v293
    %295 = vmatprep.mubr.bf16.mxu0 0
    %296 = vmatmul.mubr.bf16.gmra.mrb[0].mxu0 %v233
    %v297 = vpop.f32.mrb[0].mxu0
    %v298 = vadd.f32 %v141, %v297
    %v299 = vpop.f32.mrb[0].mxu0
    %v300 = vadd.f32 %v145, %v299
    %v301 = vpop.f32.mrb[0].mxu0
    %v302 = vadd.f32 %v141, %v301
    %v303 = vpop.f32.mrb[0].mxu0
    %v304 = vadd.f32 %v145, %v303
    %305 = vmatprep.mubr.bf16.mxu0 0
    %306 = vmatmul.mubr.bf16.gmra.mrb[0].mxu0 %v236
    %v307 = vpop.f32.mrb[0].mxu0
    %v308 = vadd.f32 %v141, %v307
    %v309 = vpop.f32.mrb[0].mxu0
    %v310 = vadd.f32 %v145, %v309
    %v311 = vpop.f32.mrb[0].mxu0
    %v312 = vadd.f32 %v141, %v311
    %v313 = vpop.f32.mrb[0].mxu0
    %v314 = vadd.f32 %v145, %v313
    %315 = vmatprep.mubr.bf16.mxu0 0
    %316 = vmatmul.mubr.bf16.gmra.mrb[0].mxu0 %v239
    %v317 = vpop.f32.mrb[0].mxu0
    %v318 = vadd.f32 %v141, %v317
    %v319 = vpop.f32.mrb[0].mxu0
    %v320 = vadd.f32 %v145, %v319
    %v321 = vpop.f32.mrb[0].mxu0
    %v322 = vadd.f32 %v141, %v321
    %v323 = vpop.f32.mrb[0].mxu0
    %v324 = vadd.f32 %v145, %v323
    %325 = vmatprep.mubr.bf16.mxu0 0
    %326 = vmatmul.mubr.bf16.gmra.mrb[0].mxu0 %v242
    %v327 = vpop.f32.mrb[0].mxu0
    %v328 = vadd.f32 %v141, %v327
    %v329 = vpop.f32.mrb[0].mxu0
    %v330 = vadd.f32 %v145, %v329
    %v331 = vpop.f32.mrb[0].mxu0
    %v332 = vadd.f32 %v141, %v331
    %v333 = vpop.f32.mrb[0].mxu0
    %v334 = vadd.f32 %v145, %v333
    %335 = vmatprep.mubr.bf16.mxu0 0
    %336 = vmatmul.mubr.bf16.gmra.mrb[0].mxu0 %v245
    %v337 = vpop.f32.mrb[0].mxu0
    %v338 = vadd.f32 %v141, %v337
    %v339 = vpop.f32.mrb[0].mxu0
    %v340 = vadd.f32 %v145, %v339
    %v341 = vpop.f32.mrb[0].mxu0
    %v342 = vadd.f32 %v141, %v341
    %v343 = vpop.f32.mrb[0].mxu0
    %v344 = vadd.f32 %v145, %v343
    %345 = vmatprep.mubr.bf16.mxu0 0
    %346 = vmatmul.mubr.bf16.gmra.mrb[0].mxu0 %v248
    %v347 = vpop.f32.mrb[0].mxu0
    %v348 = vadd.f32 %v141, %v347
    %v349 = vpop.f32.mrb[0].mxu0
    %v350 = vadd.f32 %v145, %v349
    %v351 = vpop.f32.mrb[0].mxu0
    %v352 = vadd.f32 %v141, %v351
    %v353 = vpop.f32.mrb[0].mxu0
    %v354 = vadd.f32 %v145, %v353
    %355 = vmatprep.mubr.bf16.mxu0 0
    %356 = vmatmul.mubr.bf16.gmra.mrb[0].mxu0 %v251
    %v357 = vpop.f32.mrb[0].mxu0
    %v358 = vadd.f32 %v141, %v357
    %v359 = vpop.f32.mrb[0].mxu0
    %v360 = vadd.f32 %v145, %v359
    %v361 = vpop.f32.mrb[0].mxu0
    %v362 = vadd.f32 %v141, %v361
    %v363 = vpop.f32.mrb[0].mxu0
    %v364 = vadd.f32 %v145, %v363
    %365 = vdwg.mxu0
    %366 = vst [vmem:[#allocation2] sm:$0xff] %v288
    %367 = vst [vmem:[#allocation2 + $0x8] sm:$0xff] %v290
    %368 = vst [vmem:[#allocation2 + $0x10] sm:$0xff] %v292
    %369 = vst [vmem:[#allocation2 + $0x18] sm:$0xff] %v294
    %370 = vst [vmem:[#allocation2 + $0x20] sm:$0xff] %v298
    %371 = vst [vmem:[#allocation2 + $0x28] sm:$0xff] %v300
    %372 = vst [vmem:[#allocation2 + $0x30] sm:$0xff] %v302
    %373 = vst [vmem:[#allocation2 + $0x38] sm:$0xff] %v304
    %374 = vst [vmem:[#allocation2 + $0x40] sm:$0xff] %v308
    %375 = vst [vmem:[#allocation2 + $0x48] sm:$0xff] %v310
    %376 = vst [vmem:[#allocation2 + $0x50] sm:$0xff] %v312
    %377 = vst [vmem:[#allocation2 + $0x58] sm:$0xff] %v314
    %378 = vst [vmem:[#allocation2 + $0x60] sm:$0xff] %v318
    %379 = vst [vmem:[#allocation2 + $0x68] sm:$0xff] %v320
    %380 = vst [vmem:[#allocation2 + $0x70] sm:$0xff] %v322
    %381 = vst [vmem:[#allocation2 + $0x78] sm:$0xff] %v324
    %382 = vst [vmem:[#allocation2 + $0x80] sm:$0xff] %v328
    %383 = vst [vmem:[#allocation2 + $0x88] sm:$0xff] %v330
    %384 = vst [vmem:[#allocation2 + $0x90] sm:$0xff] %v332
    %385 = vst [vmem:[#allocation2 + $0x98] sm:$0xff] %v334
    %386 = vst [vmem:[#allocation2 + $0xa0] sm:$0xff] %v338
    %387 = vst [vmem:[#allocation2 + $0xa8] sm:$0xff] %v340
    %388 = vst [vmem:[#allocation2 + $0xb0] sm:$0xff] %v342
    %389 = vst [vmem:[#allocation2 + $0xb8] sm:$0xff] %v344
    %390 = vst [vmem:[#allocation2 + $0xc0] sm:$0xff] %v348
    %391 = vst [vmem:[#allocation2 + $0xc8] sm:$0xff] %v350
    %392 = vst [vmem:[#allocation2 + $0xd0] sm:$0xff] %v352
    %393 = vst [vmem:[#allocation2 + $0xd8] sm:$0xff] %v354
    %394 = vst [vmem:[#allocation2 + $0xe0] sm:$0xff] %v358
    %395 = vst [vmem:[#allocation2 + $0xe8] sm:$0xff] %v360
    %396 = vst [vmem:[#allocation2 + $0xf0] sm:$0xff] %v362
    %397 = vst [vmem:[#allocation2 + $0xf8] sm:$0xff] %v364
    %v398 = vld [vmem:[#allocation9] sm:$0xff]
    %v399 = vld [vmem:[#allocation9 + $0x8] sm:$0xff]
    %v400 = vld [vmem:[#allocation9 + $0x10] sm:$0xff]
    %v401 = vld [vmem:[#allocation9 + $0x18] sm:$0xff]
    %v402 = vld [vmem:[#allocation9 + $0x20] sm:$0xff]
    %v403 = vld [vmem:[#allocation9 + $0x28] sm:$0xff]
    %v404 = vld [vmem:[#allocation9 + $0x30] sm:$0xff]
    %v405 = vld [vmem:[#allocation9 + $0x38] sm:$0xff]
    %v406 = vld [vmem:[#allocation2] sm:$0xff]
    %s407 = scalar_lea.vmem [#allocation2], 240
    %v408 = vld [vmem:[%s407 + $0x8] sm:$0xff]
    %v409 = vxor.u32 %v406, 2147483648
    %v410 = vmul.f32 %v409, 1.442695
    %v411 = vpow.pop %v410
    %v412 = vadd.f32 %v411, 1.0
    %v413 = vrcp.pop %v412
    %v414 = vmul.f32 1.0, %v413
    %v415 = vxor.u32 %v408, 2147483648
    %v416 = vmul.f32 %v415, 1.442695
    %v417 = vpow.pop %v416
    %v418 = vadd.f32 %v417, 1.0
    %v419 = vrcp.pop %v418
    %v420 = vmul.f32 1.0, %v419
    %v421 = vmul.f32 %v414, 2.0
    %v422 = vsub.f32 %v421, 1.0
    %v423 = vmul.f32 %v420, 2.0
    %v424 = vsub.f32 %v423, 1.0
    %426 = vrot.lane.b32.xlu0 %v422, 32
    %v427 = vpop.permute.xlu0 %426
    %v429 = vmul.f32 %v414, %v427
    %431 = vrot.lane.b32.xlu0 %v424, 32
    %v432 = vpop.permute.xlu0 %431
    %v434 = vmul.f32 %v420, %v432
    %v435 = vtanh.pop %v429
    %437 = vrot.lane.b32.xlu0 %v435, 64
    %v438 = vpop.permute.xlu0 %437
    %v440 = vmul.f32 %v414, %v438
    %v441 = vtanh.pop %v434
    %443 = vrot.lane.b32.xlu0 %v441, 64
    %v444 = vpop.permute.xlu0 %443
    %v446 = vmul.f32 %v420, %v444
    %448 = vrot.lane.b32.xlu0 %v440, 64
    %v449 = vpop.permute.xlu0 %448
    %vm451 = vcmask 261120
    %452 = vst.msk [vmem:[#allocation3] sm:$0xff] %vm451, %v449
    %454 = vrot.lane.b32.xlu0 %v446, 96
    %v455 = vpop.permute.xlu0 %454
    %s457 = scalar_lea.vmem [#allocation3], 120
    %vm458 = vcmask 523520
    %459 = vst.msk [vmem:[%s457] sm:$0xff] %vm458, %v455
    %v460 = vsel %vm451, %v449, %v455
    %v461 = vpack.c.bf16 %v460, %v460
    %v470 = vunpack.c.l.b16 %v398
    %v471 = vunpack.c.h.b16 %v398
    %v472 = vunpack.c.l.b16 %v399
    %v473 = vunpack.c.h.b16 %v399
    %v474 = vunpack.c.l.b16 %v400
    %v475 = vunpack.c.h.b16 %v400
    %v476 = vunpack.c.l.b16 %v401
    %v477 = vunpack.c.h.b16 %v401
    %v478 = vunpack.c.l.b16 %v402
    %v479 = vunpack.c.h.b16 %v402
    %v480 = vunpack.c.l.b16 %v403
    %v481 = vunpack.c.h.b16 %v403
    %v482 = vunpack.c.l.b16 %v404
    %v483 = vunpack.c.h.b16 %v404
    %v484 = vunpack.c.l.b16 %v405
    %v485 = vunpack.c.h.b16 %v405
    %v486 = vpack.c.b16 %v472, %v470
    %v487 = vpack.c.b16 %v473, %v471
    %v488 = vpack.c.b16 %v476, %v474
    %v489 = vpack.c.b16 %v477, %v475
    %v490 = vpack.c.b16 %v480, %v478
    %v491 = vpack.c.b16 %v481, %v479
    %v492 = vpack.c.b16 %v484, %v482
    %v493 = vpack.c.b16 %v485, %v483
    %v503 = vsel %vm228, %v461, 0
    %505 = vmatprep.subr.bf16.mxu0 %v487
    %506 = vmatpush1.bf16.msra.mxu0 %v486
    %507 = vmatprep.subr.bf16.mxu0 %v489
    %508 = vmatpush1.bf16.msra.mxu0 %v488
    %509 = vmatprep.subr.bf16.mxu0 %v491
    %510 = vmatpush1.bf16.msra.mxu0 %v490
    %511 = vmatprep.subr.bf16.mxu0 %v493
    %512 = vmatpush1.bf16.msra.mxu0 %v492
    %513 = vmatprep.subr.bf16.mxu0 0
    %514 = vmatpush1.bf16.msra.mxu0 0
    %515 = vmatprep.subr.bf16.mxu0 0
    %516 = vmatpush1.bf16.msra.mxu0 0
    %517 = vmatprep.subr.bf16.mxu0 0
    %518 = vmatpush1.bf16.msra.mxu0 0
    %519 = vmatprep.subr.bf16.mxu0 0
    %520 = vmatpush1.bf16.msra.mxu0 0
    %521 = vmatprep.subr.bf16.mxu0 0
    %522 = vmatpush1.bf16.msra.mxu0 0
    %523 = vmatprep.subr.bf16.mxu0 0
    %524 = vmatpush1.bf16.msra.mxu0 0
    %525 = vmatprep.subr.bf16.mxu0 0
    %526 = vmatpush1.bf16.msra.mxu0 0
    %527 = vmatprep.subr.bf16.mxu0 0
    %528 = vmatpush1.bf16.msra.mxu0 0
    %529 = vmatprep.subr.bf16.mxu0 0
    %530 = vmatpush1.bf16.msra.mxu0 0
    %531 = vmatprep.subr.bf16.mxu0 0
    %532 = vmatpush1.bf16.msra.mxu0 0
    %533 = vmatprep.subr.bf16.mxu0 0
    %534 = vmatpush1.bf16.msra.mxu0 0
    %535 = vmatprep.subr.bf16.mxu0 0
    %536 = vmatpush1.bf16.msra.mxu0 0
    %537 = vmatprep.mubr.bf16.mxu0 0
    %538 = vmatmul.mubr.bf16.gmra.mrb[0].mxu0 %v503
    %v539 = vpop.f32.mrb[0].mxu0
    %v540 = vadd.f32 0.0, %v539
    %v541 = vpop.f32.mrb[0].mxu0
    %v542 = vadd.f32 0.0, %v541
    %v543 = vpop.f32.mrb[0].mxu0
    %v544 = vpop.f32.mrb[0].mxu0
    %545 = vdwg.mxu0
    %s546 = scalar_lea.vmem [#allocation2], 16
    %v547 = vld [vmem:[%s546] sm:$0xff]
    %v548 = vadd.f32 %v540, %v547
    %s549 = scalar_lea.vmem [#allocation2], 224
    %v550 = vld [vmem:[%s549 + $0x8] sm:$0xff]
    %v551 = vadd.f32 %v542, %v550
    %v552 = vxor.u32 %v548, 2147483648
    %v553 = vmul.f32 %v552, 1.442695
    %v554 = vpow.pop %v553
    %v555 = vadd.f32 %v554, 1.0
    %v556 = vrcp.pop %v555
    %v557 = vmul.f32 1.0, %v556
    %v558 = vxor.u32 %v551, 2147483648
    %v559 = vmul.f32 %v558, 1.442695
    %v560 = vpow.pop %v559
    %v561 = vadd.f32 %v560, 1.0
    %v562 = vrcp.pop %v561
    %v563 = vmul.f32 1.0, %v562
    %v564 = vmul.f32 %v557, 2.0
    %v565 = vsub.f32 %v564, 1.0
    %v566 = vmul.f32 %v563, 2.0
    %v567 = vsub.f32 %v566, 1.0
    %569 = vrot.lane.b32.xlu0 %v429, 32
    %v570 = vpop.permute.xlu0 %569
    %v572 = vmul.f32 %v557, %v570
    %574 = vrot.lane.b32.xlu0 %v565, 32
    %v575 = vpop.permute.xlu0 %574
    %v577 = vmul.f32 %v557, %v575
    %579 = vrot.lane.b32.xlu0 %v577, 32
    %v580 = vpop.permute.xlu0 %579
    %v582 = vadd.f32 %v572, %v580
    %584 = vrot.lane.b32.xlu0 %v434, 32
    %v585 = vpop.permute.xlu0 %584
    %v587 = vmul.f32 %v563, %v585
    %589 = vrot.lane.b32.xlu0 %v567, 32
    %v590 = vpop.permute.xlu0 %589
    %v592 = vmul.f32 %v563, %v590
    %594 = vrot.lane.b32.xlu0 %v592, 32
    %v595 = vpop.permute.xlu0 %594
    %v597 = vadd.f32 %v587, %v595
    %v598 = vtanh.pop %v582
    %600 = vrot.lane.b32.xlu0 %v598, 32
    %v601 = vpop.permute.xlu0 %600
    %v603 = vmul.f32 %v557, %v601
    %v604 = vtanh.pop %v597
    %606 = vrot.lane.b32.xlu0 %v604, 32
    %v607 = vpop.permute.xlu0 %606
    %v609 = vmul.f32 %v563, %v607
    %611 = vrot.lane.b32.xlu0 %v603, 64
    %v612 = vpop.permute.xlu0 %611
    %s614 = scalar_lea.vmem [#allocation3], 8
    %615 = vst.msk [vmem:[%s614] sm:$0xff] %vm451, %v612
    %617 = vrot.lane.b32.xlu0 %v609, 96
    %v618 = vpop.permute.xlu0 %617
    %s620 = scalar_lea.vmem [#allocation3], 112
    %621 = vst.msk [vmem:[%s620] sm:$0xff] %vm458, %v618
    %v622 = vsel %vm451, %v612, %v618
    %v623 = vpack.c.bf16 %v622, %v622
    %v625 = vsel %vm228, %v623, 0
    %627 = vmatprep.subr.bf16.mxu0 %v487
    %628 = vmatpush1.bf16.msra.mxu0 %v486
    %629 = vmatprep.subr.bf16.mxu0 %v489
    %630 = vmatpush1.bf16.msra.mxu0 %v488
    %631 = vmatprep.subr.bf16.mxu0 %v491
    %632 = vmatpush1.bf16.msra.mxu0 %v490
    %633 = vmatprep.subr.bf16.mxu0 %v493
    %634 = vmatpush1.bf16.msra.mxu0 %v492
    %635 = vmatprep.subr.bf16.mxu0 0
    %636 = vmatpush1.bf16.msra.mxu0 0
    %637 = vmatprep.subr.bf16.mxu0 0
    %638 = vmatpush1.bf16.msra.mxu0 0
    %639 = vmatprep.subr.bf16.mxu0 0
    %640 = vmatpush1.bf16.msra.mxu0 0
    %641 = vmatprep.subr.bf16.mxu0 0
    %642 = vmatpush1.bf16.msra.mxu0 0
    %643 = vmatprep.subr.bf16.mxu0 0
    %644 = vmatpush1.bf16.msra.mxu0 0
    %645 = vmatprep.subr.bf16.mxu0 0
    %646 = vmatpush1.bf16.msra.mxu0 0
    %647 = vmatprep.subr.bf16.mxu0 0
    %648 = vmatpush1.bf16.msra.mxu0 0
    %649 = vmatprep.subr.bf16.mxu0 0
    %650 = vmatpush1.bf16.msra.mxu0 0
    %651 = vmatprep.subr.bf16.mxu0 0
    %652 = vmatpush1.bf16.msra.mxu0 0
    %653 = vmatprep.subr.bf16.mxu0 0
    %654 = vmatpush1.bf16.msra.mxu0 0
    %655 = vmatprep.subr.bf16.mxu0 0
    %656 = vmatpush1.bf16.msra.mxu0 0
    %657 = vmatprep.subr.bf16.mxu0 0
    %658 = vmatpush1.bf16.msra.mxu0 0
    %659 = vmatprep.mubr.bf16.mxu0 0
    %660 = vmatmul.mubr.bf16.gmra.mrb[0].mxu0 %v625
    %v661 = vpop.f32.mrb[0].mxu0
    %v662 = vadd.f32 0.0, %v661
    %v663 = vpop.f32.mrb[0].mxu0
    %v664 = vadd.f32 0.0, %v663
    %v665 = vpop.f32.mrb[0].mxu0
    %v666 = vpop.f32.mrb[0].mxu0
    %667 = vdwg.mxu0
    %s668 = scalar_lea.vmem [#allocation2], 32
    %v669 = vld [vmem:[%s668] sm:$0xff]
    %v670 = vadd.f32 %v662, %v669
    %s671 = scalar_lea.vmem [#allocation2], 208
    %v672 = vld [vmem:[%s671 + $0x8] sm:$0xff]
    %v673 = vadd.f32 %v664, %v672
    %v674 = vxor.u32 %v670, 2147483648
    %v675 = vmul.f32 %v674, 1.442695
    %v676 = vpow.pop %v675
    %v677 = vadd.f32 %v676, 1.0
    %v678 = vrcp.pop %v677
    %v679 = vmul.f32 1.0, %v678
    %v680 = vxor.u32 %v673, 2147483648
    %v681 = vmul.f32 %v680, 1.442695
    %v682 = vpow.pop %v681
    %v683 = vadd.f32 %v682, 1.0
    %v684 = vrcp.pop %v683
    %v685 = vmul.f32 1.0, %v684
    %v686 = vmul.f32 %v679, 2.0
    %v687 = vsub.f32 %v686, 1.0
    %v688 = vmul.f32 %v685, 2.0
    %v689 = vsub.f32 %v688, 1.0
    %v690 = vmul.f32 %v679, %v582
    %692 = vrot.lane.b32.xlu0 %v687, 32
    %v693 = vpop.permute.xlu0 %692
    %v695 = vmul.f32 %v679, %v693
    %697 = vrot.lane.b32.xlu0 %v695, 32
    %v698 = vpop.permute.xlu0 %697
    %v700 = vadd.f32 %v690, %v698
    %v701 = vmul.f32 %v685, %v597
    %703 = vrot.lane.b32.xlu0 %v689, 32
    %v704 = vpop.permute.xlu0 %703
    %v706 = vmul.f32 %v685, %v704
    %708 = vrot.lane.b32.xlu0 %v706, 32
    %v709 = vpop.permute.xlu0 %708
    %v711 = vadd.f32 %v701, %v709
    %v712 = vtanh.pop %v700
    %714 = vrot.lane.b32.xlu0 %v712, 32
    %v715 = vpop.permute.xlu0 %714
    %v717 = vmul.f32 %v679, %v715
    %v718 = vtanh.pop %v711
    %720 = vrot.lane.b32.xlu0 %v718, 32
    %v721 = vpop.permute.xlu0 %720
    %v723 = vmul.f32 %v685, %v721
    %725 = vrot.lane.b32.xlu0 %v717, 64
    %v726 = vpop.permute.xlu0 %725
    %s728 = scalar_lea.vmem [#allocation3], 16
    %729 = vst.msk [vmem:[%s728] sm:$0xff] %vm451, %v726
    %731 = vrot.lane.b32.xlu0 %v723, 96
    %v732 = vpop.permute.xlu0 %731
    %s734 = scalar_lea.vmem [#allocation3], 104
    %735 = vst.msk [vmem:[%s734] sm:$0xff] %vm458, %v732
    %v736 = vsel %vm451, %v726, %v732
    %v737 = vpack.c.bf16 %v736, %v736
    %v739 = vsel %vm228, %v737, 0
    %741 = vmatprep.subr.bf16.mxu0 %v487
    %742 = vmatpush1.bf16.msra.mxu0 %v486
    %743 = vmatprep.subr.bf16.mxu0 %v489
    %744 = vmatpush1.bf16.msra.mxu0 %v488
    %745 = vmatprep.subr.bf16.mxu0 %v491
    %746 = vmatpush1.bf16.msra.mxu0 %v490
    %747 = vmatprep.subr.bf16.mxu0 %v493
    %748 = vmatpush1.bf16.msra.mxu0 %v492
    %749 = vmatprep.subr.bf16.mxu0 0
    %750 = vmatpush1.bf16.msra.mxu0 0
    %751 = vmatprep.subr.bf16.mxu0 0
    %752 = vmatpush1.bf16.msra.mxu0 0
    %753 = vmatprep.subr.bf16.mxu0 0
    %754 = vmatpush1.bf16.msra.mxu0 0
    %755 = vmatprep.subr.bf16.mxu0 0
    %756 = vmatpush1.bf16.msra.mxu0 0
    %757 = vmatprep.subr.bf16.mxu0 0
    %758 = vmatpush1.bf16.msra.mxu0 0
    %759 = vmatprep.subr.bf16.mxu0 0
    %760 = vmatpush1.bf16.msra.mxu0 0
    %761 = vmatprep.subr.bf16.mxu0 0
    %762 = vmatpush1.bf16.msra.mxu0 0
    %763 = vmatprep.subr.bf16.mxu0 0
    %764 = vmatpush1.bf16.msra.mxu0 0
    %765 = vmatprep.subr.bf16.mxu0 0
    %766 = vmatpush1.bf16.msra.mxu0 0
    %767 = vmatprep.subr.bf16.mxu0 0
    %768 = vmatpush1.bf16.msra.mxu0 0
    %769 = vmatprep.subr.bf16.mxu0 0
    %770 = vmatpush1.bf16.msra.mxu0 0
    %771 = vmatprep.subr.bf16.mxu0 0
    %772 = vmatpush1.bf16.msra.mxu0 0
    %773 = vmatprep.mubr.bf16.mxu0 0
    %774 = vmatmul.mubr.bf16.gmra.mrb[0].mxu0 %v739
    %v775 = vpop.f32.mrb[0].mxu0
    %v776 = vadd.f32 0.0, %v775
    %v777 = vpop.f32.mrb[0].mxu0
    %v778 = vadd.f32 0.0, %v777
    %v779 = vpop.f32.mrb[0].mxu0
    %v780 = vpop.f32.mrb[0].mxu0
    %781 = vdwg.mxu0
    %s782 = scalar_lea.vmem [#allocation2], 48
    %v783 = vld [vmem:[%s782] sm:$0xff]
    %v784 = vadd.f32 %v776, %v783
    %s785 = scalar_lea.vmem [#allocation2], 192
    %v786 = vld [vmem:[%s785 + $0x8] sm:$0xff]
    %v787 = vadd.f32 %v778, %v786
    %v788 = vxor.u32 %v784, 2147483648
    %v789 = vmul.f32 %v788, 1.442695
    %v790 = vpow.pop %v789
    %v791 = vadd.f32 %v790, 1.0
    %v792 = vrcp.pop %v791
    %v793 = vmul.f32 1.0, %v792
    %v794 = vxor.u32 %v787, 2147483648
    %v795 = vmul.f32 %v794, 1.442695
    %v796 = vpow.pop %v795
    %v797 = vadd.f32 %v796, 1.0
    %v798 = vrcp.pop %v797
    %v799 = vmul.f32 1.0, %v798
    %v800 = vmul.f32 %v793, 2.0
    %v801 = vsub.f32 %v800, 1.0
    %v802 = vmul.f32 %v799, 2.0
    %v803 = vsub.f32 %v802, 1.0
    %v804 = vmul.f32 %v793, %v700
    %806 = vrot.lane.b32.xlu0 %v801, 32
    %v807 = vpop.permute.xlu0 %806
    %v809 = vmul.f32 %v793, %v807
    %811 = vrot.lane.b32.xlu0 %v809, 32
    %v812 = vpop.permute.xlu0 %811
    %v814 = vadd.f32 %v804, %v812
    %v815 = vmul.f32 %v799, %v711
    %817 = vrot.lane.b32.xlu0 %v803, 32
    %v818 = vpop.permute.xlu0 %817
    %v820 = vmul.f32 %v799, %v818
    %822 = vrot.lane.b32.xlu0 %v820, 32
    %v823 = vpop.permute.xlu0 %822
    %v825 = vadd.f32 %v815, %v823
    %v826 = vtanh.pop %v814
    %828 = vrot.lane.b32.xlu0 %v826, 32
    %v829 = vpop.permute.xlu0 %828
    %v831 = vmul.f32 %v793, %v829
    %v832 = vtanh.pop %v825
    %834 = vrot.lane.b32.xlu0 %v832, 32
    %v835 = vpop.permute.xlu0 %834
    %v837 = vmul.f32 %v799, %v835
    %839 = vrot.lane.b32.xlu0 %v831, 64
    %v840 = vpop.permute.xlu0 %839
    %s842 = scalar_lea.vmem [#allocation3], 24
    %843 = vst.msk [vmem:[%s842] sm:$0xff] %vm451, %v840
    %845 = vrot.lane.b32.xlu0 %v837, 96
    %v846 = vpop.permute.xlu0 %845
    %s848 = scalar_lea.vmem [#allocation3], 96
    %849 = vst.msk [vmem:[%s848] sm:$0xff] %vm458, %v846
    %v850 = vsel %vm451, %v840, %v846
    %v851 = vpack.c.bf16 %v850, %v850
    %v853 = vsel %vm228, %v851, 0
    %855 = vmatprep.subr.bf16.mxu0 %v487
    %856 = vmatpush1.bf16.msra.mxu0 %v486
    %857 = vmatprep.subr.bf16.mxu0 %v489
    %858 = vmatpush1.bf16.msra.mxu0 %v488
    %859 = vmatprep.subr.bf16.mxu0 %v491
    %860 = vmatpush1.bf16.msra.mxu0 %v490
    %861 = vmatprep.subr.bf16.mxu0 %v493
    %862 = vmatpush1.bf16.msra.mxu0 %v492
    %863 = vmatprep.subr.bf16.mxu0 0
    %864 = vmatpush1.bf16.msra.mxu0 0
    %865 = vmatprep.subr.bf16.mxu0 0
    %866 = vmatpush1.bf16.msra.mxu0 0
    %867 = vmatprep.subr.bf16.mxu0 0
    %868 = vmatpush1.bf16.msra.mxu0 0
    %869 = vmatprep.subr.bf16.mxu0 0
    %870 = vmatpush1.bf16.msra.mxu0 0
    %871 = vmatprep.subr.bf16.mxu0 0
    %872 = vmatpush1.bf16.msra.mxu0 0
    %873 = vmatprep.subr.bf16.mxu0 0
    %874 = vmatpush1.bf16.msra.mxu0 0
    %875 = vmatprep.subr.bf16.mxu0 0
    %876 = vmatpush1.bf16.msra.mxu0 0
    %877 = vmatprep.subr.bf16.mxu0 0
    %878 = vmatpush1.bf16.msra.mxu0 0
    %879 = vmatprep.subr.bf16.mxu0 0
    %880 = vmatpush1.bf16.msra.mxu0 0
    %881 = vmatprep.subr.bf16.mxu0 0
    %882 = vmatpush1.bf16.msra.mxu0 0
    %883 = vmatprep.subr.bf16.mxu0 0
    %884 = vmatpush1.bf16.msra.mxu0 0
    %885 = vmatprep.subr.bf16.mxu0 0
    %886 = vmatpush1.bf16.msra.mxu0 0
    %887 = vmatprep.mubr.bf16.mxu0 0
    %888 = vmatmul.mubr.bf16.gmra.mrb[0].mxu0 %v853
    %v889 = vpop.f32.mrb[0].mxu0
    %v890 = vadd.f32 0.0, %v889
    %v891 = vpop.f32.mrb[0].mxu0
    %v892 = vadd.f32 0.0, %v891
    %v893 = vpop.f32.mrb[0].mxu0
    %v894 = vpop.f32.mrb[0].mxu0
    %895 = vdwg.mxu0
    %s896 = scalar_lea.vmem [#allocation2], 64
    %v897 = vld [vmem:[%s896] sm:$0xff]
    %v898 = vadd.f32 %v890, %v897
    %s899 = scalar_lea.vmem [#allocation2], 176
    %v900 = vld [vmem:[%s899 + $0x8] sm:$0xff]
    %v901 = vadd.f32 %v892, %v900
    %v902 = vxor.u32 %v898, 2147483648
    %v903 = vmul.f32 %v902, 1.442695
    %v904 = vpow.pop %v903
    %v905 = vadd.f32 %v904, 1.0
    %v906 = vrcp.pop %v905
    %v907 = vmul.f32 1.0, %v906
    %v908 = vxor.u32 %v901, 2147483648
    %v909 = vmul.f32 %v908, 1.442695
    %v910 = vpow.pop %v909
    %v911 = vadd.f32 %v910, 1.0
    %v912 = vrcp.pop %v911
    %v913 = vmul.f32 1.0, %v912
    %v914 = vmul.f32 %v907, 2.0
    %v915 = vsub.f32 %v914, 1.0
    %v916 = vmul.f32 %v913, 2.0
    %v917 = vsub.f32 %v916, 1.0
    %v918 = vmul.f32 %v907, %v814
    %920 = vrot.lane.b32.xlu0 %v915, 32
    %v921 = vpop.permute.xlu0 %920
    %v923 = vmul.f32 %v907, %v921
    %925 = vrot.lane.b32.xlu0 %v923, 32
    %v926 = vpop.permute.xlu0 %925
    %v928 = vadd.f32 %v918, %v926
    %v929 = vmul.f32 %v913, %v825
    %931 = vrot.lane.b32.xlu0 %v917, 32
    %v932 = vpop.permute.xlu0 %931
    %v934 = vmul.f32 %v913, %v932
    %936 = vrot.lane.b32.xlu0 %v934, 32
    %v937 = vpop.permute.xlu0 %936
    %v939 = vadd.f32 %v929, %v937
    %v940 = vtanh.pop %v928
    %942 = vrot.lane.b32.xlu0 %v940, 32
    %v943 = vpop.permute.xlu0 %942
    %v945 = vmul.f32 %v907, %v943
    %v946 = vtanh.pop %v939
    %948 = vrot.lane.b32.xlu0 %v946, 32
    %v949 = vpop.permute.xlu0 %948
    %v951 = vmul.f32 %v913, %v949
    %953 = vrot.lane.b32.xlu0 %v945, 64
    %v954 = vpop.permute.xlu0 %953
    %s956 = scalar_lea.vmem [#allocation3], 32
    %957 = vst.msk [vmem:[%s956] sm:$0xff] %vm451, %v954
    %959 = vrot.lane.b32.xlu0 %v951, 96
    %v960 = vpop.permute.xlu0 %959
    %s962 = scalar_lea.vmem [#allocation3], 88
    %963 = vst.msk [vmem:[%s962] sm:$0xff] %vm458, %v960
    %v964 = vsel %vm451, %v954, %v960
    %v965 = vpack.c.bf16 %v964, %v964
    %v967 = vsel %vm228, %v965, 0
    %969 = vmatprep.subr.bf16.mxu0 %v487
    %970 = vmatpush1.bf16.msra.mxu0 %v486
    %971 = vmatprep.subr.bf16.mxu0 %v489
    %972 = vmatpush1.bf16.msra.mxu0 %v488
    %973 = vmatprep.subr.bf16.mxu0 %v491
    %974 = vmatpush1.bf16.msra.mxu0 %v490
    %975 = vmatprep.subr.bf16.mxu0 %v493
    %976 = vmatpush1.bf16.msra.mxu0 %v492
    %977 = vmatprep.subr.bf16.mxu0 0
    %978 = vmatpush1.bf16.msra.mxu0 0
    %979 = vmatprep.subr.bf16.mxu0 0
    %980 = vmatpush1.bf16.msra.mxu0 0
    %981 = vmatprep.subr.bf16.mxu0 0
    %982 = vmatpush1.bf16.msra.mxu0 0
    %983 = vmatprep.subr.bf16.mxu0 0
    %984 = vmatpush1.bf16.msra.mxu0 0
    %985 = vmatprep.subr.bf16.mxu0 0
    %986 = vmatpush1.bf16.msra.mxu0 0
    %987 = vmatprep.subr.bf16.mxu0 0
    %988 = vmatpush1.bf16.msra.mxu0 0
    %989 = vmatprep.subr.bf16.mxu0 0
    %990 = vmatpush1.bf16.msra.mxu0 0
    %991 = vmatprep.subr.bf16.mxu0 0
    %992 = vmatpush1.bf16.msra.mxu0 0
    %993 = vmatprep.subr.bf16.mxu0 0
    %994 = vmatpush1.bf16.msra.mxu0 0
    %995 = vmatprep.subr.bf16.mxu0 0
    %996 = vmatpush1.bf16.msra.mxu0 0
    %997 = vmatprep.subr.bf16.mxu0 0
    %998 = vmatpush1.bf16.msra.mxu0 0
    %999 = vmatprep.subr.bf16.mxu0 0
    %1000 = vmatpush1.bf16.msra.mxu0 0
    %1001 = vmatprep.mubr.bf16.mxu0 0
    %1002 = vmatmul.mubr.bf16.gmra.mrb[0].mxu0 %v967
    %v1003 = vpop.f32.mrb[0].mxu0
    %v1004 = vadd.f32 0.0, %v1003
    %v1005 = vpop.f32.mrb[0].mxu0
    %v1006 = vadd.f32 0.0, %v1005
    %v1007 = vpop.f32.mrb[0].mxu0
    %v1008 = vpop.f32.mrb[0].mxu0
    %1009 = vdwg.mxu0
    %s1010 = scalar_lea.vmem [#allocation2], 80
    %v1011 = vld [vmem:[%s1010] sm:$0xff]
    %v1012 = vadd.f32 %v1004, %v1011
    %s1013 = scalar_lea.vmem [#allocation2], 160
    %v1014 = vld [vmem:[%s1013 + $0x8] sm:$0xff]
    %v1015 = vadd.f32 %v1006, %v1014
    %v1016 = vxor.u32 %v1012, 2147483648
    %v1017 = vmul.f32 %v1016, 1.442695
    %v1018 = vpow.pop %v1017
    %v1019 = vadd.f32 %v1018, 1.0
    %v1020 = vrcp.pop %v1019
    %v1021 = vmul.f32 1.0, %v1020
    %v1022 = vxor.u32 %v1015, 2147483648
    %v1023 = vmul.f32 %v1022, 1.442695
    %v1024 = vpow.pop %v1023
    %v1025 = vadd.f32 %v1024, 1.0
    %v1026 = vrcp.pop %v1025
    %v1027 = vmul.f32 1.0, %v1026
    %v1028 = vmul.f32 %v1021, 2.0
    %v1029 = vsub.f32 %v1028, 1.0
    %v1030 = vmul.f32 %v1027, 2.0
    %v1031 = vsub.f32 %v1030, 1.0
    %v1032 = vmul.f32 %v1021, %v928
    %1034 = vrot.lane.b32.xlu0 %v1029, 32
    %v1035 = vpop.permute.xlu0 %1034
    %v1037 = vmul.f32 %v1021, %v1035
    %1039 = vrot.lane.b32.xlu0 %v1037, 32
    %v1040 = vpop.permute.xlu0 %1039
    %v1042 = vadd.f32 %v1032, %v1040
    %v1043 = vmul.f32 %v1027, %v939
    %1045 = vrot.lane.b32.xlu0 %v1031, 32
    %v1046 = vpop.permute.xlu0 %1045
    %v1048 = vmul.f32 %v1027, %v1046
    %1050 = vrot.lane.b32.xlu0 %v1048, 32
    %v1051 = vpop.permute.xlu0 %1050
    %v1053 = vadd.f32 %v1043, %v1051
    %v1054 = vtanh.pop %v1042
    %1056 = vrot.lane.b32.xlu0 %v1054, 32
    %v1057 = vpop.permute.xlu0 %1056
    %v1059 = vmul.f32 %v1021, %v1057
    %v1060 = vtanh.pop %v1053
    %1062 = vrot.lane.b32.xlu0 %v1060, 32
    %v1063 = vpop.permute.xlu0 %1062
    %v1065 = vmul.f32 %v1027, %v1063
    %1067 = vrot.lane.b32.xlu0 %v1059, 64
    %v1068 = vpop.permute.xlu0 %1067
    %s1070 = scalar_lea.vmem [#allocation3], 40
    %1071 = vst.msk [vmem:[%s1070] sm:$0xff] %vm451, %v1068
    %1073 = vrot.lane.b32.xlu0 %v1065, 96
    %v1074 = vpop.permute.xlu0 %1073
    %s1076 = scalar_lea.vmem [#allocation3], 80
    %1077 = vst.msk [vmem:[%s1076] sm:$0xff] %vm458, %v1074
    %v1078 = vsel %vm451, %v1068, %v1074
    %v1079 = vpack.c.bf16 %v1078, %v1078
    %v1081 = vsel %vm228, %v1079, 0
    %1083 = vmatprep.subr.bf16.mxu0 %v487
    %1084 = vmatpush1.bf16.msra.mxu0 %v486
    %1085 = vmatprep.subr.bf16.mxu0 %v489
    %1086 = vmatpush1.bf16.msra.mxu0 %v488
    %1087 = vmatprep.subr.bf16.mxu0 %v491
    %1088 = vmatpush1.bf16.msra.mxu0 %v490
    %1089 = vmatprep.subr.bf16.mxu0 %v493
    %1090 = vmatpush1.bf16.msra.mxu0 %v492
    %1091 = vmatprep.subr.bf16.mxu0 0
    %1092 = vmatpush1.bf16.msra.mxu0 0
    %1093 = vmatprep.subr.bf16.mxu0 0
    %1094 = vmatpush1.bf16.msra.mxu0 0
    %1095 = vmatprep.subr.bf16.mxu0 0
    %1096 = vmatpush1.bf16.msra.mxu0 0
    %1097 = vmatprep.subr.bf16.mxu0 0
    %1098 = vmatpush1.bf16.msra.mxu0 0
    %1099 = vmatprep.subr.bf16.mxu0 0
    %1100 = vmatpush1.bf16.msra.mxu0 0
    %1101 = vmatprep.subr.bf16.mxu0 0
    %1102 = vmatpush1.bf16.msra.mxu0 0
    %1103 = vmatprep.subr.bf16.mxu0 0
    %1104 = vmatpush1.bf16.msra.mxu0 0
    %1105 = vmatprep.subr.bf16.mxu0 0
    %1106 = vmatpush1.bf16.msra.mxu0 0
    %1107 = vmatprep.subr.bf16.mxu0 0
    %1108 = vmatpush1.bf16.msra.mxu0 0
    %1109 = vmatprep.subr.bf16.mxu0 0
    %1110 = vmatpush1.bf16.msra.mxu0 0
    %1111 = vmatprep.subr.bf16.mxu0 0
    %1112 = vmatpush1.bf16.msra.mxu0 0
    %1113 = vmatprep.subr.bf16.mxu0 0
    %1114 = vmatpush1.bf16.msra.mxu0 0
    %1115 = vmatprep.mubr.bf16.mxu0 0
    %1116 = vmatmul.mubr.bf16.gmra.mrb[0].mxu0 %v1081
    %v1117 = vpop.f32.mrb[0].mxu0
    %v1118 = vadd.f32 0.0, %v1117
    %v1119 = vpop.f32.mrb[0].mxu0
    %v1120 = vadd.f32 0.0, %v1119
    %v1121 = vpop.f32.mrb[0].mxu0
    %v1122 = vpop.f32.mrb[0].mxu0
    %1123 = vdwg.mxu0
    %s1124 = scalar_lea.vmem [#allocation2], 96
    %v1125 = vld [vmem:[%s1124] sm:$0xff]
    %v1126 = vadd.f32 %v1118, %v1125
    %s1127 = scalar_lea.vmem [#allocation2], 144
    %v1128 = vld [vmem:[%s1127 + $0x8] sm:$0xff]
    %v1129 = vadd.f32 %v1120, %v1128
    %v1130 = vxor.u32 %v1126, 2147483648
    %v1131 = vmul.f32 %v1130, 1.442695
    %v1132 = vpow.pop %v1131
    %v1133 = vadd.f32 %v1132, 1.0
    %v1134 = vrcp.pop %v1133
    %v1135 = vmul.f32 1.0, %v1134
    %v1136 = vxor.u32 %v1129, 2147483648
    %v1137 = vmul.f32 %v1136, 1.442695
    %v1138 = vpow.pop %v1137
    %v1139 = vadd.f32 %v1138, 1.0
    %v1140 = vrcp.pop %v1139
    %v1141 = vmul.f32 1.0, %v1140
    %v1142 = vmul.f32 %v1135, 2.0
    %v1143 = vsub.f32 %v1142, 1.0
    %v1144 = vmul.f32 %v1141, 2.0
    %v1145 = vsub.f32 %v1144, 1.0
    %v1146 = vmul.f32 %v1135, %v1042
    %1148 = vrot.lane.b32.xlu0 %v1143, 32
    %v1149 = vpop.permute.xlu0 %1148
    %v1151 = vmul.f32 %v1135, %v1149
    %1153 = vrot.lane.b32.xlu0 %v1151, 32
    %v1154 = vpop.permute.xlu0 %1153
    %v1156 = vadd.f32 %v1146, %v1154
    %v1157 = vmul.f32 %v1141, %v1053
    %1159 = vrot.lane.b32.xlu0 %v1145, 32
    %v1160 = vpop.permute.xlu0 %1159
    %v1162 = vmul.f32 %v1141, %v1160
    %1164 = vrot.lane.b32.xlu0 %v1162, 32
    %v1165 = vpop.permute.xlu0 %1164
    %v1167 = vadd.f32 %v1157, %v1165
    %v1168 = vtanh.pop %v1156
    %1170 = vrot.lane.b32.xlu0 %v1168, 32
    %v1171 = vpop.permute.xlu0 %1170
    %v1173 = vmul.f32 %v1135, %v1171
    %v1174 = vtanh.pop %v1167
    %1176 = vrot.lane.b32.xlu0 %v1174, 32
    %v1177 = vpop.permute.xlu0 %1176
    %v1179 = vmul.f32 %v1141, %v1177
    %1181 = vrot.lane.b32.xlu0 %v1173, 64
    %v1182 = vpop.permute.xlu0 %1181
    %s1184 = scalar_lea.vmem [#allocation3], 48
    %1185 = vst.msk [vmem:[%s1184] sm:$0xff] %vm451, %v1182
    %1187 = vrot.lane.b32.xlu0 %v1179, 96
    %v1188 = vpop.permute.xlu0 %1187
    %s1190 = scalar_lea.vmem [#allocation3], 72
    %1191 = vst.msk [vmem:[%s1190] sm:$0xff] %vm458, %v1188
    %v1192 = vsel %vm451, %v1182, %v1188
    %v1193 = vpack.c.bf16 %v1192, %v1192
    %v1195 = vsel %vm228, %v1193, 0
    %1197 = vmatprep.subr.bf16.mxu0 %v487
    %1198 = vmatpush1.bf16.msra.mxu0 %v486
    %1199 = vmatprep.subr.bf16.mxu0 %v489
    %1200 = vmatpush1.bf16.msra.mxu0 %v488
    %1201 = vmatprep.subr.bf16.mxu0 %v491
    %1202 = vmatpush1.bf16.msra.mxu0 %v490
    %1203 = vmatprep.subr.bf16.mxu0 %v493
    %1204 = vmatpush1.bf16.msra.mxu0 %v492
    %1205 = vmatprep.subr.bf16.mxu0 0
    %1206 = vmatpush1.bf16.msra.mxu0 0
    %1207 = vmatprep.subr.bf16.mxu0 0
    %1208 = vmatpush1.bf16.msra.mxu0 0
    %1209 = vmatprep.subr.bf16.mxu0 0
    %1210 = vmatpush1.bf16.msra.mxu0 0
    %1211 = vmatprep.subr.bf16.mxu0 0
    %1212 = vmatpush1.bf16.msra.mxu0 0
    %1213 = vmatprep.subr.bf16.mxu0 0
    %1214 = vmatpush1.bf16.msra.mxu0 0
    %1215 = vmatprep.subr.bf16.mxu0 0
    %1216 = vmatpush1.bf16.msra.mxu0 0
    %1217 = vmatprep.subr.bf16.mxu0 0
    %1218 = vmatpush1.bf16.msra.mxu0 0
    %1219 = vmatprep.subr.bf16.mxu0 0
    %1220 = vmatpush1.bf16.msra.mxu0 0
    %1221 = vmatprep.subr.bf16.mxu0 0
    %1222 = vmatpush1.bf16.msra.mxu0 0
    %1223 = vmatprep.subr.bf16.mxu0 0
    %1224 = vmatpush1.bf16.msra.mxu0 0
    %1225 = vmatprep.subr.bf16.mxu0 0
    %1226 = vmatpush1.bf16.msra.mxu0 0
    %1227 = vmatprep.subr.bf16.mxu0 0
    %1228 = vmatpush1.bf16.msra.mxu0 0
    %1229 = vmatprep.mubr.bf16.mxu0 0
    %1230 = vmatmul.mubr.bf16.gmra.mrb[0].mxu0 %v1195
    %v1231 = vpop.f32.mrb[0].mxu0
    %v1232 = vadd.f32 0.0, %v1231
    %v1233 = vpop.f32.mrb[0].mxu0
    %v1234 = vadd.f32 0.0, %v1233
    %v1235 = vpop.f32.mrb[0].mxu0
    %v1236 = vpop.f32.mrb[0].mxu0
    %1237 = vdwg.mxu0
    %s1238 = scalar_lea.vmem [#allocation2], 112
    %v1239 = vld [vmem:[%s1238] sm:$0xff]
    %v1240 = vadd.f32 %v1232, %v1239
    %s1241 = scalar_lea.vmem [#allocation2], 128
    %v1242 = vld [vmem:[%s1241 + $0x8] sm:$0xff]
    %v1243 = vadd.f32 %v1234, %v1242
    %v1244 = vxor.u32 %v1240, 2147483648
    %v1245 = vmul.f32 %v1244, 1.442695
    %v1246 = vpow.pop %v1245
    %v1247 = vadd.f32 %v1246, 1.0
    %v1248 = vrcp.pop %v1247
    %v1249 = vmul.f32 1.0, %v1248
    %v1250 = vxor.u32 %v1243, 2147483648
    %v1251 = vmul.f32 %v1250, 1.442695
    %v1252 = vpow.pop %v1251
    %v1253 = vadd.f32 %v1252, 1.0
    %v1254 = vrcp.pop %v1253
    %v1255 = vmul.f32 1.0, %v1254
    %v1256 = vmul.f32 %v1249, 2.0
    %v1257 = vsub.f32 %v1256, 1.0
    %v1258 = vmul.f32 %v1255, 2.0
    %v1259 = vsub.f32 %v1258, 1.0
    %v1260 = vmul.f32 %v1249, %v1156
    %1262 = vrot.lane.b32.xlu0 %v1257, 32
    %v1263 = vpop.permute.xlu0 %1262
    %v1265 = vmul.f32 %v1249, %v1263
    %1267 = vrot.lane.b32.xlu0 %v1265, 32
    %v1268 = vpop.permute.xlu0 %1267
    %v1270 = vadd.f32 %v1260, %v1268
    %v1271 = vmul.f32 %v1255, %v1167
    %1273 = vrot.lane.b32.xlu0 %v1259, 32
    %v1274 = vpop.permute.xlu0 %1273
    %v1276 = vmul.f32 %v1255, %v1274
    %1278 = vrot.lane.b32.xlu0 %v1276, 32
    %v1279 = vpop.permute.xlu0 %1278
    %v1281 = vadd.f32 %v1271, %v1279
    %v1282 = vtanh.pop %v1270
    %1284 = vrot.lane.b32.xlu0 %v1282, 32
    %v1285 = vpop.permute.xlu0 %1284
    %v1287 = vmul.f32 %v1249, %v1285
    %v1288 = vtanh.pop %v1281
    %1290 = vrot.lane.b32.xlu0 %v1288, 32
    %v1291 = vpop.permute.xlu0 %1290
    %v1293 = vmul.f32 %v1255, %v1291
    %1295 = vrot.lane.b32.xlu0 %v1287, 64
    %v1296 = vpop.permute.xlu0 %1295
    %s1298 = scalar_lea.vmem [#allocation3], 56
    %1299 = vst.msk [vmem:[%s1298] sm:$0xff] %vm451, %v1296
    %1301 = vrot.lane.b32.xlu0 %v1293, 96
    %v1302 = vpop.permute.xlu0 %1301
    %s1304 = scalar_lea.vmem [#allocation3], 64
    %1305 = vst.msk [vmem:[%s1304] sm:$0xff] %vm458, %v1302
    %v1306 = vsel %vm451, %v1296, %v1302
    %v1307 = vpack.c.bf16 %v1306, %v1306
    %v1309 = vsel %vm228, %v1307, 0
    %1311 = vmatprep.subr.bf16.mxu0 %v487
    %1312 = vmatpush1.bf16.msra.mxu0 %v486
    %1313 = vmatprep.subr.bf16.mxu0 %v489
    %1314 = vmatpush1.bf16.msra.mxu0 %v488
    %1315 = vmatprep.subr.bf16.mxu0 %v491
    %1316 = vmatpush1.bf16.msra.mxu0 %v490
    %1317 = vmatprep.subr.bf16.mxu0 %v493
    %1318 = vmatpush1.bf16.msra.mxu0 %v492
    %1319 = vmatprep.subr.bf16.mxu0 0
    %1320 = vmatpush1.bf16.msra.mxu0 0
    %1321 = vmatprep.subr.bf16.mxu0 0
    %1322 = vmatpush1.bf16.msra.mxu0 0
    %1323 = vmatprep.subr.bf16.mxu0 0
    %1324 = vmatpush1.bf16.msra.mxu0 0
    %1325 = vmatprep.subr.bf16.mxu0 0
    %1326 = vmatpush1.bf16.msra.mxu0 0
    %1327 = vmatprep.subr.bf16.mxu0 0
    %1328 = vmatpush1.bf16.msra.mxu0 0
    %1329 = vmatprep.subr.bf16.mxu0 0
    %1330 = vmatpush1.bf16.msra.mxu0 0
    %1331 = vmatprep.subr.bf16.mxu0 0
    %1332 = vmatpush1.bf16.msra.mxu0 0
    %1333 = vmatprep.subr.bf16.mxu0 0
    %1334 = vmatpush1.bf16.msra.mxu0 0
    %1335 = vmatprep.subr.bf16.mxu0 0
    %1336 = vmatpush1.bf16.msra.mxu0 0
    %1337 = vmatprep.subr.bf16.mxu0 0
    %1338 = vmatpush1.bf16.msra.mxu0 0
    %1339 = vmatprep.subr.bf16.mxu0 0
    %1340 = vmatpush1.bf16.msra.mxu0 0
    %1341 = vmatprep.subr.bf16.mxu0 0
    %1342 = vmatpush1.bf16.msra.mxu0 0
    %1343 = vmatprep.mubr.bf16.mxu0 0
    %1344 = vmatmul.mubr.bf16.gmra.mrb[0].mxu0 %v1309
    %v1345 = vpop.f32.mrb[0].mxu0
    %v1346 = vadd.f32 0.0, %v1345
    %v1347 = vpop.f32.mrb[0].mxu0
    %v1348 = vadd.f32 0.0, %v1347
    %v1349 = vpop.f32.mrb[0].mxu0
    %v1350 = vpop.f32.mrb[0].mxu0
    %1351 = vdwg.mxu0
    %v1352 = vld [vmem:[%s1241] sm:$0xff]
    %v1353 = vadd.f32 %v1346, %v1352
    %v1354 = vld [vmem:[%s1238 + $0x8] sm:$0xff]
    %v1355 = vadd.f32 %v1348, %v1354
    %v1356 = vxor.u32 %v1353, 2147483648
    %v1357 = vmul.f32 %v1356, 1.442695
    %v1358 = vpow.pop %v1357
    %v1359 = vadd.f32 %v1358, 1.0
    %v1360 = vrcp.pop %v1359
    %v1361 = vmul.f32 1.0, %v1360
    %v1362 = vxor.u32 %v1355, 2147483648
    %v1363 = vmul.f32 %v1362, 1.442695
    %v1364 = vpow.pop %v1363
    %v1365 = vadd.f32 %v1364, 1.0
    %v1366 = vrcp.pop %v1365
    %v1367 = vmul.f32 1.0, %v1366
    %v1368 = vmul.f32 %v1361, 2.0
    %v1369 = vsub.f32 %v1368, 1.0
    %v1370 = vmul.f32 %v1367, 2.0
    %v1371 = vsub.f32 %v1370, 1.0
    %v1372 = vmul.f32 %v1361, %v1270
    %1374 = vrot.lane.b32.xlu0 %v1369, 32
    %v1375 = vpop.permute.xlu0 %1374
    %v1377 = vmul.f32 %v1361, %v1375
    %1379 = vrot.lane.b32.xlu0 %v1377, 32
    %v1380 = vpop.permute.xlu0 %1379
    %v1382 = vadd.f32 %v1372, %v1380
    %v1383 = vmul.f32 %v1367, %v1281
    %1385 = vrot.lane.b32.xlu0 %v1371, 32
    %v1386 = vpop.permute.xlu0 %1385
    %v1388 = vmul.f32 %v1367, %v1386
    %1390 = vrot.lane.b32.xlu0 %v1388, 32
    %v1391 = vpop.permute.xlu0 %1390
    %v1393 = vadd.f32 %v1383, %v1391
    %v1394 = vtanh.pop %v1382
    %1396 = vrot.lane.b32.xlu0 %v1394, 32
    %v1397 = vpop.permute.xlu0 %1396
    %v1399 = vmul.f32 %v1361, %v1397
    %v1400 = vtanh.pop %v1393
    %1402 = vrot.lane.b32.xlu0 %v1400, 32
    %v1403 = vpop.permute.xlu0 %1402
    %v1405 = vmul.f32 %v1367, %v1403
    %1407 = vrot.lane.b32.xlu0 %v1399, 64
    %v1408 = vpop.permute.xlu0 %1407
    %1410 = vst.msk [vmem:[%s1304] sm:$0xff] %vm451, %v1408
    %1412 = vrot.lane.b32.xlu0 %v1405, 96
    %v1413 = vpop.permute.xlu0 %1412
    %1415 = vst.msk [vmem:[%s1298] sm:$0xff] %vm458, %v1413
    %v1416 = vsel %vm451, %v1408, %v1413
    %v1417 = vpack.c.bf16 %v1416, %v1416
    %v1419 = vsel %vm228, %v1417, 0
    %1421 = vmatprep.subr.bf16.mxu0 %v487
    %1422 = vmatpush1.bf16.msra.mxu0 %v486
    %1423 = vmatprep.subr.bf16.mxu0 %v489
    %1424 = vmatpush1.bf16.msra.mxu0 %v488
    %1425 = vmatprep.subr.bf16.mxu0 %v491
    %1426 = vmatpush1.bf16.msra.mxu0 %v490
    %1427 = vmatprep.subr.bf16.mxu0 %v493
    %1428 = vmatpush1.bf16.msra.mxu0 %v492
    %1429 = vmatprep.subr.bf16.mxu0 0
    %1430 = vmatpush1.bf16.msra.mxu0 0
    %1431 = vmatprep.subr.bf16.mxu0 0
    %1432 = vmatpush1.bf16.msra.mxu0 0
    %1433 = vmatprep.subr.bf16.mxu0 0
    %1434 = vmatpush1.bf16.msra.mxu0 0
    %1435 = vmatprep.subr.bf16.mxu0 0
    %1436 = vmatpush1.bf16.msra.mxu0 0
    %1437 = vmatprep.subr.bf16.mxu0 0
    %1438 = vmatpush1.bf16.msra.mxu0 0
    %1439 = vmatprep.subr.bf16.mxu0 0
    %1440 = vmatpush1.bf16.msra.mxu0 0
    %1441 = vmatprep.subr.bf16.mxu0 0
    %1442 = vmatpush1.bf16.msra.mxu0 0
    %1443 = vmatprep.subr.bf16.mxu0 0
    %1444 = vmatpush1.bf16.msra.mxu0 0
    %1445 = vmatprep.subr.bf16.mxu0 0
    %1446 = vmatpush1.bf16.msra.mxu0 0
    %1447 = vmatprep.subr.bf16.mxu0 0
    %1448 = vmatpush1.bf16.msra.mxu0 0
    %1449 = vmatprep.subr.bf16.mxu0 0
    %1450 = vmatpush1.bf16.msra.mxu0 0
    %1451 = vmatprep.subr.bf16.mxu0 0
    %1452 = vmatpush1.bf16.msra.mxu0 0
    %1453 = vmatprep.mubr.bf16.mxu0 0
    %1454 = vmatmul.mubr.bf16.gmra.mrb[0].mxu0 %v1419
    %v1455 = vpop.f32.mrb[0].mxu0
    %v1456 = vadd.f32 0.0, %v1455
    %v1457 = vpop.f32.mrb[0].mxu0
    %v1458 = vadd.f32 0.0, %v1457
    %v1459 = vpop.f32.mrb[0].mxu0
    %v1460 = vpop.f32.mrb[0].mxu0
    %1461 = vdwg.mxu0
    %v1462 = vld [vmem:[%s1127] sm:$0xff]
    %v1463 = vadd.f32 %v1456, %v1462
    %v1464 = vld [vmem:[%s1124 + $0x8] sm:$0xff]
    %v1465 = vadd.f32 %v1458, %v1464
    %v1466 = vxor.u32 %v1463, 2147483648
    %v1467 = vmul.f32 %v1466, 1.442695
    %v1468 = vpow.pop %v1467
    %v1469 = vadd.f32 %v1468, 1.0
    %v1470 = vrcp.pop %v1469
    %v1471 = vmul.f32 1.0, %v1470
    %v1472 = vxor.u32 %v1465, 2147483648
    %v1473 = vmul.f32 %v1472, 1.442695
    %v1474 = vpow.pop %v1473
    %v1475 = vadd.f32 %v1474, 1.0
    %v1476 = vrcp.pop %v1475
    %v1477 = vmul.f32 1.0, %v1476
    %v1478 = vmul.f32 %v1471, 2.0
    %v1479 = vsub.f32 %v1478, 1.0
    %v1480 = vmul.f32 %v1477, 2.0
    %v1481 = vsub.f32 %v1480, 1.0
    %v1482 = vmul.f32 %v1471, %v1382
    %1484 = vrot.lane.b32.xlu0 %v1479, 32
    %v1485 = vpop.permute.xlu0 %1484
    %v1487 = vmul.f32 %v1471, %v1485
    %1489 = vrot.lane.b32.xlu0 %v1487, 32
    %v1490 = vpop.permute.xlu0 %1489
    %v1492 = vadd.f32 %v1482, %v1490
    %v1493 = vmul.f32 %v1477, %v1393
    %1495 = vrot.lane.b32.xlu0 %v1481, 32
    %v1496 = vpop.permute.xlu0 %1495
    %v1498 = vmul.f32 %v1477, %v1496
    %1500 = vrot.lane.b32.xlu0 %v1498, 32
    %v1501 = vpop.permute.xlu0 %1500
    %v1503 = vadd.f32 %v1493, %v1501
    %v1504 = vtanh.pop %v1492
    %1506 = vrot.lane.b32.xlu0 %v1504, 32
    %v1507 = vpop.permute.xlu0 %1506
    %v1509 = vmul.f32 %v1471, %v1507
    %v1510 = vtanh.pop %v1503
    %1512 = vrot.lane.b32.xlu0 %v1510, 32
    %v1513 = vpop.permute.xlu0 %1512
    %v1515 = vmul.f32 %v1477, %v1513
    %1517 = vrot.lane.b32.xlu0 %v1509, 64
    %v1518 = vpop.permute.xlu0 %1517
    %1520 = vst.msk [vmem:[%s1190] sm:$0xff] %vm451, %v1518
    %1522 = vrot.lane.b32.xlu0 %v1515, 96
    %v1523 = vpop.permute.xlu0 %1522
    %1525 = vst.msk [vmem:[%s1184] sm:$0xff] %vm458, %v1523
    %v1526 = vsel %vm451, %v1518, %v1523
    %v1527 = vpack.c.bf16 %v1526, %v1526
    %v1529 = vsel %vm228, %v1527, 0
    %1531 = vmatprep.subr.bf16.mxu0 %v487
    %1532 = vmatpush1.bf16.msra.mxu0 %v486
    %1533 = vmatprep.subr.bf16.mxu0 %v489
    %1534 = vmatpush1.bf16.msra.mxu0 %v488
    %1535 = vmatprep.subr.bf16.mxu0 %v491
    %1536 = vmatpush1.bf16.msra.mxu0 %v490
    %1537 = vmatprep.subr.bf16.mxu0 %v493
    %1538 = vmatpush1.bf16.msra.mxu0 %v492
    %1539 = vmatprep.subr.bf16.mxu0 0
    %1540 = vmatpush1.bf16.msra.mxu0 0
    %1541 = vmatprep.subr.bf16.mxu0 0
    %1542 = vmatpush1.bf16.msra.mxu0 0
    %1543 = vmatprep.subr.bf16.mxu0 0
    %1544 = vmatpush1.bf16.msra.mxu0 0
    %1545 = vmatprep.subr.bf16.mxu0 0
    %1546 = vmatpush1.bf16.msra.mxu0 0
    %1547 = vmatprep.subr.bf16.mxu0 0
    %1548 = vmatpush1.bf16.msra.mxu0 0
    %1549 = vmatprep.subr.bf16.mxu0 0
    %1550 = vmatpush1.bf16.msra.mxu0 0
    %1551 = vmatprep.subr.bf16.mxu0 0
    %1552 = vmatpush1.bf16.msra.mxu0 0
    %1553 = vmatprep.subr.bf16.mxu0 0
    %1554 = vmatpush1.bf16.msra.mxu0 0
    %1555 = vmatprep.subr.bf16.mxu0 0
    %1556 = vmatpush1.bf16.msra.mxu0 0
    %1557 = vmatprep.subr.bf16.mxu0 0
    %1558 = vmatpush1.bf16.msra.mxu0 0
    %1559 = vmatprep.subr.bf16.mxu0 0
    %1560 = vmatpush1.bf16.msra.mxu0 0
    %1561 = vmatprep.subr.bf16.mxu0 0
    %1562 = vmatpush1.bf16.msra.mxu0 0
    %1563 = vmatprep.mubr.bf16.mxu0 0
    %1564 = vmatmul.mubr.bf16.gmra.mrb[0].mxu0 %v1529
    %v1565 = vpop.f32.mrb[0].mxu0
    %v1566 = vadd.f32 0.0, %v1565
    %v1567 = vpop.f32.mrb[0].mxu0
    %v1568 = vadd.f32 0.0, %v1567
    %v1569 = vpop.f32.mrb[0].mxu0
    %v1570 = vpop.f32.mrb[0].mxu0
    %1571 = vdwg.mxu0
    %v1572 = vld [vmem:[%s1013] sm:$0xff]
    %v1573 = vadd.f32 %v1566, %v1572
    %v1574 = vld [vmem:[%s1010 + $0x8] sm:$0xff]
    %v1575 = vadd.f32 %v1568, %v1574
    %v1576 = vxor.u32 %v1573, 2147483648
    %v1577 = vmul.f32 %v1576, 1.442695
    %v1578 = vpow.pop %v1577
    %v1579 = vadd.f32 %v1578, 1.0
    %v1580 = vrcp.pop %v1579
    %v1581 = vmul.f32 1.0, %v1580
    %v1582 = vxor.u32 %v1575, 2147483648
    %v1583 = vmul.f32 %v1582, 1.442695
    %v1584 = vpow.pop %v1583
    %v1585 = vadd.f32 %v1584, 1.0
    %v1586 = vrcp.pop %v1585
    %v1587 = vmul.f32 1.0, %v1586
    %v1588 = vmul.f32 %v1581, 2.0
    %v1589 = vsub.f32 %v1588, 1.0
    %v1590 = vmul.f32 %v1587, 2.0
    %v1591 = vsub.f32 %v1590, 1.0
    %v1592 = vmul.f32 %v1581, %v1492
    %1594 = vrot.lane.b32.xlu0 %v1589, 32
    %v1595 = vpop.permute.xlu0 %1594
    %v1597 = vmul.f32 %v1581, %v1595
    %1599 = vrot.lane.b32.xlu0 %v1597, 32
    %v1600 = vpop.permute.xlu0 %1599
    %v1602 = vadd.f32 %v1592, %v1600
    %v1603 = vmul.f32 %v1587, %v1503
    %1605 = vrot.lane.b32.xlu0 %v1591, 32
    %v1606 = vpop.permute.xlu0 %1605
    %v1608 = vmul.f32 %v1587, %v1606
    %1610 = vrot.lane.b32.xlu0 %v1608, 32
    %v1611 = vpop.permute.xlu0 %1610
    %v1613 = vadd.f32 %v1603, %v1611
    %v1614 = vtanh.pop %v1602
    %1616 = vrot.lane.b32.xlu0 %v1614, 32
    %v1617 = vpop.permute.xlu0 %1616
    %v1619 = vmul.f32 %v1581, %v1617
    %v1620 = vtanh.pop %v1613
    %1622 = vrot.lane.b32.xlu0 %v1620, 32
    %v1623 = vpop.permute.xlu0 %1622
    %v1625 = vmul.f32 %v1587, %v1623
    %1627 = vrot.lane.b32.xlu0 %v1619, 64
    %v1628 = vpop.permute.xlu0 %1627
    %1630 = vst.msk [vmem:[%s1076] sm:$0xff] %vm451, %v1628
    %1632 = vrot.lane.b32.xlu0 %v1625, 96
    %v1633 = vpop.permute.xlu0 %1632
    %1635 = vst.msk [vmem:[%s1070] sm:$0xff] %vm458, %v1633
    %v1636 = vsel %vm451, %v1628, %v1633
    %v1637 = vpack.c.bf16 %v1636, %v1636
    %v1639 = vsel %vm228, %v1637, 0
    %1641 = vmatprep.subr.bf16.mxu0 %v487
    %1642 = vmatpush1.bf16.msra.mxu0 %v486
    %1643 = vmatprep.subr.bf16.mxu0 %v489
    %1644 = vmatpush1.bf16.msra.mxu0 %v488
    %1645 = vmatprep.subr.bf16.mxu0 %v491
    %1646 = vmatpush1.bf16.msra.mxu0 %v490
    %1647 = vmatprep.subr.bf16.mxu0 %v493
    %1648 = vmatpush1.bf16.msra.mxu0 %v492
    %1649 = vmatprep.subr.bf16.mxu0 0
    %1650 = vmatpush1.bf16.msra.mxu0 0
    %1651 = vmatprep.subr.bf16.mxu0 0
    %1652 = vmatpush1.bf16.msra.mxu0 0
    %1653 = vmatprep.subr.bf16.mxu0 0
    %1654 = vmatpush1.bf16.msra.mxu0 0
    %1655 = vmatprep.subr.bf16.mxu0 0
    %1656 = vmatpush1.bf16.msra.mxu0 0
    %1657 = vmatprep.subr.bf16.mxu0 0
    %1658 = vmatpush1.bf16.msra.mxu0 0
    %1659 = vmatprep.subr.bf16.mxu0 0
    %1660 = vmatpush1.bf16.msra.mxu0 0
    %1661 = vmatprep.subr.bf16.mxu0 0
    %1662 = vmatpush1.bf16.msra.mxu0 0
    %1663 = vmatprep.subr.bf16.mxu0 0
    %1664 = vmatpush1.bf16.msra.mxu0 0
    %1665 = vmatprep.subr.bf16.mxu0 0
    %1666 = vmatpush1.bf16.msra.mxu0 0
    %1667 = vmatprep.subr.bf16.mxu0 0
    %1668 = vmatpush1.bf16.msra.mxu0 0
    %1669 = vmatprep.subr.bf16.mxu0 0
    %1670 = vmatpush1.bf16.msra.mxu0 0
    %1671 = vmatprep.subr.bf16.mxu0 0
    %1672 = vmatpush1.bf16.msra.mxu0 0
    %1673 = vmatprep.mubr.bf16.mxu0 0
    %1674 = vmatmul.mubr.bf16.gmra.mrb[0].mxu0 %v1639
    %v1675 = vpop.f32.mrb[0].mxu0
    %v1676 = vadd.f32 0.0, %v1675
    %v1677 = vpop.f32.mrb[0].mxu0
    %v1678 = vadd.f32 0.0, %v1677
    %v1679 = vpop.f32.mrb[0].mxu0
    %v1680 = vpop.f32.mrb[0].mxu0
    %1681 = vdwg.mxu0
    %v1682 = vld [vmem:[%s899] sm:$0xff]
    %v1683 = vadd.f32 %v1676, %v1682
    %v1684 = vld [vmem:[%s896 + $0x8] sm:$0xff]
    %v1685 = vadd.f32 %v1678, %v1684
    %v1686 = vxor.u32 %v1683, 2147483648
    %v1687 = vmul.f32 %v1686, 1.442695
    %v1688 = vpow.pop %v1687
    %v1689 = vadd.f32 %v1688, 1.0
    %v1690 = vrcp.pop %v1689
    %v1691 = vmul.f32 1.0, %v1690
    %v1692 = vxor.u32 %v1685, 2147483648
    %v1693 = vmul.f32 %v1692, 1.442695
    %v1694 = vpow.pop %v1693
    %v1695 = vadd.f32 %v1694, 1.0
    %v1696 = vrcp.pop %v1695
    %v1697 = vmul.f32 1.0, %v1696
    %v1698 = vmul.f32 %v1691, 2.0
    %v1699 = vsub.f32 %v1698, 1.0
    %v1700 = vmul.f32 %v1697, 2.0
    %v1701 = vsub.f32 %v1700, 1.0
    %v1702 = vmul.f32 %v1691, %v1602
    %1704 = vrot.lane.b32.xlu0 %v1699, 32
    %v1705 = vpop.permute.xlu0 %1704
    %v1707 = vmul.f32 %v1691, %v1705
    %1709 = vrot.lane.b32.xlu0 %v1707, 32
    %v1710 = vpop.permute.xlu0 %1709
    %v1712 = vadd.f32 %v1702, %v1710
    %v1713 = vmul.f32 %v1697, %v1613
    %1715 = vrot.lane.b32.xlu0 %v1701, 32
    %v1716 = vpop.permute.xlu0 %1715
    %v1718 = vmul.f32 %v1697, %v1716
    %1720 = vrot.lane.b32.xlu0 %v1718, 32
    %v1721 = vpop.permute.xlu0 %1720
    %v1723 = vadd.f32 %v1713, %v1721
    %v1724 = vtanh.pop %v1712
    %1726 = vrot.lane.b32.xlu0 %v1724, 32
    %v1727 = vpop.permute.xlu0 %1726
    %v1729 = vmul.f32 %v1691, %v1727
    %v1730 = vtanh.pop %v1723
    %1732 = vrot.lane.b32.xlu0 %v1730, 32
    %v1733 = vpop.permute.xlu0 %1732
    %v1735 = vmul.f32 %v1697, %v1733
    %1737 = vrot.lane.b32.xlu0 %v1729, 64
    %v1738 = vpop.permute.xlu0 %1737
    %1740 = vst.msk [vmem:[%s962] sm:$0xff] %vm451, %v1738
    %1742 = vrot.lane.b32.xlu0 %v1735, 96
    %v1743 = vpop.permute.xlu0 %1742
    %1745 = vst.msk [vmem:[%s956] sm:$0xff] %vm458, %v1743
    %v1746 = vsel %vm451, %v1738, %v1743
    %v1747 = vpack.c.bf16 %v1746, %v1746
    %v1749 = vsel %vm228, %v1747, 0
    %1751 = vmatprep.subr.bf16.mxu0 %v487
    %1752 = vmatpush1.bf16.msra.mxu0 %v486
    %1753 = vmatprep.subr.bf16.mxu0 %v489
    %1754 = vmatpush1.bf16.msra.mxu0 %v488
    %1755 = vmatprep.subr.bf16.mxu0 %v491
    %1756 = vmatpush1.bf16.msra.mxu0 %v490
    %1757 = vmatprep.subr.bf16.mxu0 %v493
    %1758 = vmatpush1.bf16.msra.mxu0 %v492
    %1759 = vmatprep.subr.bf16.mxu0 0
    %1760 = vmatpush1.bf16.msra.mxu0 0
    %1761 = vmatprep.subr.bf16.mxu0 0
    %1762 = vmatpush1.bf16.msra.mxu0 0
    %1763 = vmatprep.subr.bf16.mxu0 0
    %1764 = vmatpush1.bf16.msra.mxu0 0
    %1765 = vmatprep.subr.bf16.mxu0 0
    %1766 = vmatpush1.bf16.msra.mxu0 0
    %1767 = vmatprep.subr.bf16.mxu0 0
    %1768 = vmatpush1.bf16.msra.mxu0 0
    %1769 = vmatprep.subr.bf16.mxu0 0
    %1770 = vmatpush1.bf16.msra.mxu0 0
    %1771 = vmatprep.subr.bf16.mxu0 0
    %1772 = vmatpush1.bf16.msra.mxu0 0
    %1773 = vmatprep.subr.bf16.mxu0 0
    %1774 = vmatpush1.bf16.msra.mxu0 0
    %1775 = vmatprep.subr.bf16.mxu0 0
    %1776 = vmatpush1.bf16.msra.mxu0 0
    %1777 = vmatprep.subr.bf16.mxu0 0
    %1778 = vmatpush1.bf16.msra.mxu0 0
    %1779 = vmatprep.subr.bf16.mxu0 0
    %1780 = vmatpush1.bf16.msra.mxu0 0
    %1781 = vmatprep.subr.bf16.mxu0 0
    %1782 = vmatpush1.bf16.msra.mxu0 0
    %1783 = vmatprep.mubr.bf16.mxu0 0
    %1784 = vmatmul.mubr.bf16.gmra.mrb[0].mxu0 %v1749
    %v1785 = vpop.f32.mrb[0].mxu0
    %v1786 = vadd.f32 0.0, %v1785
    %v1787 = vpop.f32.mrb[0].mxu0
    %v1788 = vadd.f32 0.0, %v1787
    %v1789 = vpop.f32.mrb[0].mxu0
    %v1790 = vpop.f32.mrb[0].mxu0
    %1791 = vdwg.mxu0
    %v1792 = vld [vmem:[%s785] sm:$0xff]
    %v1793 = vadd.f32 %v1786, %v1792
    %v1794 = vld [vmem:[%s782 + $0x8] sm:$0xff]
    %v1795 = vadd.f32 %v1788, %v1794
    %v1796 = vxor.u32 %v1793, 2147483648
    %v1797 = vmul.f32 %v1796, 1.442695
    %v1798 = vpow.pop %v1797
    %v1799 = vadd.f32 %v1798, 1.0
    %v1800 = vrcp.pop %v1799
    %v1801 = vmul.f32 1.0, %v1800
    %v1802 = vxor.u32 %v1795, 2147483648
    %v1803 = vmul.f32 %v1802, 1.442695
    %v1804 = vpow.pop %v1803
    %v1805 = vadd.f32 %v1804, 1.0
    %v1806 = vrcp.pop %v1805
    %v1807 = vmul.f32 1.0, %v1806
    %v1808 = vmul.f32 %v1801, 2.0
    %v1809 = vsub.f32 %v1808, 1.0
    %v1810 = vmul.f32 %v1807, 2.0
    %v1811 = vsub.f32 %v1810, 1.0
    %v1812 = vmul.f32 %v1801, %v1712
    %1814 = vrot.lane.b32.xlu0 %v1809, 32
    %v1815 = vpop.permute.xlu0 %1814
    %v1817 = vmul.f32 %v1801, %v1815
    %1819 = vrot.lane.b32.xlu0 %v1817, 32
    %v1820 = vpop.permute.xlu0 %1819
    %v1822 = vadd.f32 %v1812, %v1820
    %v1823 = vmul.f32 %v1807, %v1723
    %1825 = vrot.lane.b32.xlu0 %v1811, 32
    %v1826 = vpop.permute.xlu0 %1825
    %v1828 = vmul.f32 %v1807, %v1826
    %1830 = vrot.lane.b32.xlu0 %v1828, 32
    %v1831 = vpop.permute.xlu0 %1830
    %v1833 = vadd.f32 %v1823, %v1831
    %v1834 = vtanh.pop %v1822
    %1836 = vrot.lane.b32.xlu0 %v1834, 32
    %v1837 = vpop.permute.xlu0 %1836
    %v1839 = vmul.f32 %v1801, %v1837
    %v1840 = vtanh.pop %v1833
    %1842 = vrot.lane.b32.xlu0 %v1840, 32
    %v1843 = vpop.permute.xlu0 %1842
    %v1845 = vmul.f32 %v1807, %v1843
    %1847 = vrot.lane.b32.xlu0 %v1839, 64
    %v1848 = vpop.permute.xlu0 %1847
    %1850 = vst.msk [vmem:[%s848] sm:$0xff] %vm451, %v1848
    %1852 = vrot.lane.b32.xlu0 %v1845, 96
    %v1853 = vpop.permute.xlu0 %1852
    %1855 = vst.msk [vmem:[%s842] sm:$0xff] %vm458, %v1853
    %v1856 = vsel %vm451, %v1848, %v1853
    %v1857 = vpack.c.bf16 %v1856, %v1856
    %v1859 = vsel %vm228, %v1857, 0
    %1861 = vmatprep.subr.bf16.mxu0 %v487
    %1862 = vmatpush1.bf16.msra.mxu0 %v486
    %1863 = vmatprep.subr.bf16.mxu0 %v489
    %1864 = vmatpush1.bf16.msra.mxu0 %v488
    %1865 = vmatprep.subr.bf16.mxu0 %v491
    %1866 = vmatpush1.bf16.msra.mxu0 %v490
    %1867 = vmatprep.subr.bf16.mxu0 %v493
    %1868 = vmatpush1.bf16.msra.mxu0 %v492
    %1869 = vmatprep.subr.bf16.mxu0 0
    %1870 = vmatpush1.bf16.msra.mxu0 0
    %1871 = vmatprep.subr.bf16.mxu0 0
    %1872 = vmatpush1.bf16.msra.mxu0 0
    %1873 = vmatprep.subr.bf16.mxu0 0
    %1874 = vmatpush1.bf16.msra.mxu0 0
    %1875 = vmatprep.subr.bf16.mxu0 0
    %1876 = vmatpush1.bf16.msra.mxu0 0
    %1877 = vmatprep.subr.bf16.mxu0 0
    %1878 = vmatpush1.bf16.msra.mxu0 0
    %1879 = vmatprep.subr.bf16.mxu0 0
    %1880 = vmatpush1.bf16.msra.mxu0 0
    %1881 = vmatprep.subr.bf16.mxu0 0
    %1882 = vmatpush1.bf16.msra.mxu0 0
    %1883 = vmatprep.subr.bf16.mxu0 0
    %1884 = vmatpush1.bf16.msra.mxu0 0
    %1885 = vmatprep.subr.bf16.mxu0 0
    %1886 = vmatpush1.bf16.msra.mxu0 0
    %1887 = vmatprep.subr.bf16.mxu0 0
    %1888 = vmatpush1.bf16.msra.mxu0 0
    %1889 = vmatprep.subr.bf16.mxu0 0
    %1890 = vmatpush1.bf16.msra.mxu0 0
    %1891 = vmatprep.subr.bf16.mxu0 0
    %1892 = vmatpush1.bf16.msra.mxu0 0
    %1893 = vmatprep.mubr.bf16.mxu0 0
    %1894 = vmatmul.mubr.bf16.gmra.mrb[0].mxu0 %v1859
    %v1895 = vpop.f32.mrb[0].mxu0
    %v1896 = vadd.f32 0.0, %v1895
    %v1897 = vpop.f32.mrb[0].mxu0
    %v1898 = vadd.f32 0.0, %v1897
    %v1899 = vpop.f32.mrb[0].mxu0
    %v1900 = vpop.f32.mrb[0].mxu0
    %1901 = vdwg.mxu0
    %v1902 = vld [vmem:[%s671] sm:$0xff]
    %v1903 = vadd.f32 %v1896, %v1902
    %v1904 = vld [vmem:[%s668 + $0x8] sm:$0xff]
    %v1905 = vadd.f32 %v1898, %v1904
    %v1906 = vxor.u32 %v1903, 2147483648
    %v1907 = vmul.f32 %v1906, 1.442695
    %v1908 = vpow.pop %v1907
    %v1909 = vadd.f32 %v1908, 1.0
    %v1910 = vrcp.pop %v1909
    %v1911 = vmul.f32 1.0, %v1910
    %v1912 = vxor.u32 %v1905, 2147483648
    %v1913 = vmul.f32 %v1912, 1.442695
    %v1914 = vpow.pop %v1913
    %v1915 = vadd.f32 %v1914, 1.0
    %v1916 = vrcp.pop %v1915
    %v1917 = vmul.f32 1.0, %v1916
    %v1918 = vmul.f32 %v1911, 2.0
    %v1919 = vsub.f32 %v1918, 1.0
    %v1920 = vmul.f32 %v1917, 2.0
    %v1921 = vsub.f32 %v1920, 1.0
    %v1922 = vmul.f32 %v1911, %v1822
    %1924 = vrot.lane.b32.xlu0 %v1919, 32
    %v1925 = vpop.permute.xlu0 %1924
    %v1927 = vmul.f32 %v1911, %v1925
    %1929 = vrot.lane.b32.xlu0 %v1927, 32
    %v1930 = vpop.permute.xlu0 %1929
    %v1932 = vadd.f32 %v1922, %v1930
    %v1933 = vmul.f32 %v1917, %v1833
    %1935 = vrot.lane.b32.xlu0 %v1921, 32
    %v1936 = vpop.permute.xlu0 %1935
    %v1938 = vmul.f32 %v1917, %v1936
    %1940 = vrot.lane.b32.xlu0 %v1938, 32
    %v1941 = vpop.permute.xlu0 %1940
    %v1943 = vadd.f32 %v1933, %v1941
    %v1944 = vtanh.pop %v1932
    %1946 = vrot.lane.b32.xlu0 %v1944, 32
    %v1947 = vpop.permute.xlu0 %1946
    %v1949 = vmul.f32 %v1911, %v1947
    %v1950 = vtanh.pop %v1943
    %1952 = vrot.lane.b32.xlu0 %v1950, 32
    %v1953 = vpop.permute.xlu0 %1952
    %v1955 = vmul.f32 %v1917, %v1953
    %1957 = vrot.lane.b32.xlu0 %v1949, 64
    %v1958 = vpop.permute.xlu0 %1957
    %1960 = vst.msk [vmem:[%s734] sm:$0xff] %vm451, %v1958
    %1962 = vrot.lane.b32.xlu0 %v1955, 96
    %v1963 = vpop.permute.xlu0 %1962
    %1965 = vst.msk [vmem:[%s728] sm:$0xff] %vm458, %v1963
    %v1966 = vsel %vm451, %v1958, %v1963
    %v1967 = vpack.c.bf16 %v1966, %v1966
    %v1969 = vsel %vm228, %v1967, 0
    %1971 = vmatprep.subr.bf16.mxu0 %v487
    %1972 = vmatpush1.bf16.msra.mxu0 %v486
    %1973 = vmatprep.subr.bf16.mxu0 %v489
    %1974 = vmatpush1.bf16.msra.mxu0 %v488
    %1975 = vmatprep.subr.bf16.mxu0 %v491
    %1976 = vmatpush1.bf16.msra.mxu0 %v490
    %1977 = vmatprep.subr.bf16.mxu0 %v493
    %1978 = vmatpush1.bf16.msra.mxu0 %v492
    %1979 = vmatprep.subr.bf16.mxu0 0
    %1980 = vmatpush1.bf16.msra.mxu0 0
    %1981 = vmatprep.subr.bf16.mxu0 0
    %1982 = vmatpush1.bf16.msra.mxu0 0
    %1983 = vmatprep.subr.bf16.mxu0 0
    %1984 = vmatpush1.bf16.msra.mxu0 0
    %1985 = vmatprep.subr.bf16.mxu0 0
    %1986 = vmatpush1.bf16.msra.mxu0 0
    %1987 = vmatprep.subr.bf16.mxu0 0
    %1988 = vmatpush1.bf16.msra.mxu0 0
    %1989 = vmatprep.subr.bf16.mxu0 0
    %1990 = vmatpush1.bf16.msra.mxu0 0
    %1991 = vmatprep.subr.bf16.mxu0 0
    %1992 = vmatpush1.bf16.msra.mxu0 0
    %1993 = vmatprep.subr.bf16.mxu0 0
    %1994 = vmatpush1.bf16.msra.mxu0 0
    %1995 = vmatprep.subr.bf16.mxu0 0
    %1996 = vmatpush1.bf16.msra.mxu0 0
    %1997 = vmatprep.subr.bf16.mxu0 0
    %1998 = vmatpush1.bf16.msra.mxu0 0
    %1999 = vmatprep.subr.bf16.mxu0 0
    %2000 = vmatpush1.bf16.msra.mxu0 0
    %2001 = vmatprep.subr.bf16.mxu0 0
    %2002 = vmatpush1.bf16.msra.mxu0 0
    %2003 = vmatprep.mubr.bf16.mxu0 0
    %2004 = vmatmul.mubr.bf16.gmra.mrb[0].mxu0 %v1969
    %v2005 = vpop.f32.mrb[0].mxu0
    %v2006 = vadd.f32 0.0, %v2005
    %v2007 = vpop.f32.mrb[0].mxu0
    %v2008 = vadd.f32 0.0, %v2007
    %v2009 = vpop.f32.mrb[0].mxu0
    %v2010 = vpop.f32.mrb[0].mxu0
    %2011 = vdwg.mxu0
    %v2012 = vld [vmem:[%s549] sm:$0xff]
    %v2013 = vadd.f32 %v2006, %v2012
    %v2014 = vld [vmem:[%s546 + $0x8] sm:$0xff]
    %v2015 = vadd.f32 %v2008, %v2014
    %v2016 = vxor.u32 %v2013, 2147483648
    %v2017 = vmul.f32 %v2016, 1.442695
    %v2018 = vpow.pop %v2017
    %v2019 = vadd.f32 %v2018, 1.0
    %v2020 = vrcp.pop %v2019
    %v2021 = vmul.f32 1.0, %v2020
    %v2022 = vxor.u32 %v2015, 2147483648
    %v2023 = vmul.f32 %v2022, 1.442695
    %v2024 = vpow.pop %v2023
    %v2025 = vadd.f32 %v2024, 1.0
    %v2026 = vrcp.pop %v2025
    %v2027 = vmul.f32 1.0, %v2026
    %v2028 = vmul.f32 %v2021, 2.0
    %v2029 = vsub.f32 %v2028, 1.0
    %v2030 = vmul.f32 %v2027, 2.0
    %v2031 = vsub.f32 %v2030, 1.0
    %v2032 = vmul.f32 %v2021, %v1932
    %2034 = vrot.lane.b32.xlu0 %v2029, 32
    %v2035 = vpop.permute.xlu0 %2034
    %v2037 = vmul.f32 %v2021, %v2035
    %2039 = vrot.lane.b32.xlu0 %v2037, 32
    %v2040 = vpop.permute.xlu0 %2039
    %v2042 = vadd.f32 %v2032, %v2040
    %v2043 = vmul.f32 %v2027, %v1943
    %2045 = vrot.lane.b32.xlu0 %v2031, 32
    %v2046 = vpop.permute.xlu0 %2045
    %v2048 = vmul.f32 %v2027, %v2046
    %2050 = vrot.lane.b32.xlu0 %v2048, 32
    %v2051 = vpop.permute.xlu0 %2050
    %v2053 = vadd.f32 %v2043, %v2051
    %v2054 = vtanh.pop %v2042
    %2056 = vrot.lane.b32.xlu0 %v2054, 32
    %v2057 = vpop.permute.xlu0 %2056
    %v2059 = vmul.f32 %v2021, %v2057
    %v2060 = vtanh.pop %v2053
    %2062 = vrot.lane.b32.xlu0 %v2060, 32
    %v2063 = vpop.permute.xlu0 %2062
    %v2065 = vmul.f32 %v2027, %v2063
    %2067 = vrot.lane.b32.xlu0 %v2059, 64
    %v2068 = vpop.permute.xlu0 %2067
    %2070 = vst.msk [vmem:[%s620] sm:$0xff] %vm451, %v2068
    %2072 = vrot.lane.b32.xlu0 %v2065, 96
    %v2073 = vpop.permute.xlu0 %2072
    %2075 = vst.msk [vmem:[%s614] sm:$0xff] %vm458, %v2073
    %v2076 = vsel %vm451, %v2068, %v2073
    %v2077 = vpack.c.bf16 %v2076, %v2076
    %v2079 = vsel %vm228, %v2077, 0
    %2081 = vmatprep.subr.bf16.mxu0 %v487
    %2082 = vmatpush1.bf16.msra.mxu0 %v486
    %2083 = vmatprep.subr.bf16.mxu0 %v489
    %2084 = vmatpush1.bf16.msra.mxu0 %v488
    %2085 = vmatprep.subr.bf16.mxu0 %v491
    %2086 = vmatpush1.bf16.msra.mxu0 %v490
    %2087 = vmatprep.subr.bf16.mxu0 %v493
    %2088 = vmatpush1.bf16.msra.mxu0 %v492
    %2089 = vmatprep.subr.bf16.mxu0 0
    %2090 = vmatpush1.bf16.msra.mxu0 0
    %2091 = vmatprep.subr.bf16.mxu0 0
    %2092 = vmatpush1.bf16.msra.mxu0 0
    %2093 = vmatprep.subr.bf16.mxu0 0
    %2094 = vmatpush1.bf16.msra.mxu0 0
    %2095 = vmatprep.subr.bf16.mxu0 0
    %2096 = vmatpush1.bf16.msra.mxu0 0
    %2097 = vmatprep.subr.bf16.mxu0 0
    %2098 = vmatpush1.bf16.msra.mxu0 0
    %2099 = vmatprep.subr.bf16.mxu0 0
    %2100 = vmatpush1.bf16.msra.mxu0 0
    %2101 = vmatprep.subr.bf16.mxu0 0
    %2102 = vmatpush1.bf16.msra.mxu0 0
    %2103 = vmatprep.subr.bf16.mxu0 0
    %2104 = vmatpush1.bf16.msra.mxu0 0
    %2105 = vmatprep.subr.bf16.mxu0 0
    %2106 = vmatpush1.bf16.msra.mxu0 0
    %2107 = vmatprep.subr.bf16.mxu0 0
    %2108 = vmatpush1.bf16.msra.mxu0 0
    %2109 = vmatprep.subr.bf16.mxu0 0
    %2110 = vmatpush1.bf16.msra.mxu0 0
    %2111 = vmatprep.subr.bf16.mxu0 0
    %2112 = vmatpush1.bf16.msra.mxu0 0
    %2113 = vmatprep.mubr.bf16.mxu0 0
    %2114 = vmatmul.mubr.bf16.gmra.mrb[0].mxu0 %v2079
    %v2115 = vpop.f32.mrb[0].mxu0
    %v2116 = vadd.f32 0.0, %v2115
    %v2117 = vpop.f32.mrb[0].mxu0
    %v2118 = vadd.f32 0.0, %v2117
    %v2119 = vpop.f32.mrb[0].mxu0
    %v2120 = vpop.f32.mrb[0].mxu0
    %2121 = vdwg.mxu0
    %v2122 = vld [vmem:[%s407] sm:$0xff]
    %v2123 = vadd.f32 %v2116, %v2122
    %v2124 = vld [vmem:[#allocation2 + $0x8] sm:$0xff]
    %v2125 = vadd.f32 %v2118, %v2124
    %v2126 = vxor.u32 %v2123, 2147483648
    %v2127 = vmul.f32 %v2126, 1.442695
    %v2128 = vpow.pop %v2127
    %v2129 = vadd.f32 %v2128, 1.0
    %v2130 = vrcp.pop %v2129
    %v2131 = vmul.f32 1.0, %v2130
    %v2132 = vxor.u32 %v2125, 2147483648
    %v2133 = vmul.f32 %v2132, 1.442695
    %v2134 = vpow.pop %v2133
    %v2135 = vadd.f32 %v2134, 1.0
    %v2136 = vrcp.pop %v2135
    %v2137 = vmul.f32 1.0, %v2136
    %v2138 = vmul.f32 %v2131, 2.0
    %v2139 = vsub.f32 %v2138, 1.0
    %v2140 = vmul.f32 %v2137, 2.0
    %v2141 = vsub.f32 %v2140, 1.0
    %v2142 = vmul.f32 %v2131, %v2042
    %2144 = vrot.lane.b32.xlu0 %v2139, 32
    %v2145 = vpop.permute.xlu0 %2144
    %v2147 = vmul.f32 %v2131, %v2145
    %2149 = vrot.lane.b32.xlu0 %v2147, 32
    %v2150 = vpop.permute.xlu0 %2149
    %v2152 = vadd.f32 %v2142, %v2150
    %v2153 = vmul.f32 %v2137, %v2053
    %2155 = vrot.lane.b32.xlu0 %v2141, 32
    %v2156 = vpop.permute.xlu0 %2155
    %v2158 = vmul.f32 %v2137, %v2156
    %2160 = vrot.lane.b32.xlu0 %v2158, 32
    %v2161 = vpop.permute.xlu0 %2160
    %v2163 = vadd.f32 %v2153, %v2161
    %v2164 = vtanh.pop %v2152
    %2166 = vrot.lane.b32.xlu0 %v2164, 32
    %v2167 = vpop.permute.xlu0 %2166
    %v2169 = vmul.f32 %v2131, %v2167
    %v2170 = vtanh.pop %v2163
    %2172 = vrot.lane.b32.xlu0 %v2170, 32
    %v2173 = vpop.permute.xlu0 %2172
    %v2175 = vmul.f32 %v2137, %v2173
    %2177 = vrot.lane.b32.xlu0 %v2169, 64
    %v2178 = vpop.permute.xlu0 %2177
    %2180 = vst.msk [vmem:[%s457] sm:$0xff] %vm451, %v2178
    %2182 = vrot.lane.b32.xlu0 %v2175, 96
    %v2183 = vpop.permute.xlu0 %2182
    %2185 = vst.msk [vmem:[#allocation3] sm:$0xff] %vm458, %v2183
    %v2186 = vld [vmem:[#allocation3] sm:$0xff]
    %v2187 = vld [vmem:[#allocation3 + $0x8] sm:$0xff]
    %v2188 = vld [vmem:[#allocation3 + $0x10] sm:$0xff]
    %v2189 = vld [vmem:[#allocation3 + $0x18] sm:$0xff]
    %v2190 = vld [vmem:[#allocation3 + $0x20] sm:$0xff]
    %v2191 = vld [vmem:[#allocation3 + $0x28] sm:$0xff]
    %v2192 = vld [vmem:[#allocation3 + $0x30] sm:$0xff]
    %v2193 = vld [vmem:[#allocation3 + $0x38] sm:$0xff]
    %v2194 = vld [vmem:[#allocation3 + $0x40] sm:$0xff]
    %v2195 = vld [vmem:[#allocation3 + $0x48] sm:$0xff]
    %v2196 = vld [vmem:[#allocation3 + $0x50] sm:$0xff]
    %v2197 = vld [vmem:[#allocation3 + $0x58] sm:$0xff]
    %v2198 = vld [vmem:[#allocation3 + $0x60] sm:$0xff]
    %v2199 = vld [vmem:[#allocation3 + $0x68] sm:$0xff]
    %v2200 = vld [vmem:[#allocation3 + $0x70] sm:$0xff]
    %v2201 = vld [vmem:[#allocation3 + $0x78] sm:$0xff]
    %v2202 = vpack.c.bf16 %v2187, %v2186
    %v2203 = vpack.c.bf16 %v2189, %v2188
    %v2204 = vpack.c.bf16 %v2191, %v2190
    %v2205 = vpack.c.bf16 %v2193, %v2192
    %v2206 = vpack.c.bf16 %v2195, %v2194
    %v2207 = vpack.c.bf16 %v2197, %v2196
    %v2208 = vpack.c.bf16 %v2199, %v2198
    %v2209 = vpack.c.bf16 %v2201, %v2200
    %v2210 = vld [vmem:[#allocation10] sm:$0xff]
    %v2211 = vld [vmem:[#allocation10 + $0x8] sm:$0xff]
    %v2212 = vld [vmem:[#allocation10 + $0x10] sm:$0xff]
    %v2213 = vld [vmem:[#allocation10 + $0x18] sm:$0xff]
    %v2214 = vld [vmem:[#allocation10 + $0x20] sm:$0xff]
    %v2215 = vld [vmem:[#allocation10 + $0x28] sm:$0xff]
    %v2216 = vld [vmem:[#allocation10 + $0x30] sm:$0xff]
    %v2217 = vld [vmem:[#allocation10 + $0x38] sm:$0xff]
    %v2218 = vld [vmem:[%s5] sm:$0x3]
    %v2220 = vlaneseq
    %v2221 = vshrl.u32 %v2220, 7
    %v2222 = vsub.s32 0, %v2221
    %v2223 = vrot.slane %v2218, %v2222
    %v2224 = vlaneseq
    %v2225 = vshrl.u32 %v2224, 7
    %v2226 = vsub.s32 1, %v2225
    %v2227 = vrot.slane %v2218, %v2226
    %v2238 = vunpack.c.l.b16 %v2210
    %v2239 = vunpack.c.h.b16 %v2210
    %v2240 = vunpack.c.l.b16 %v2211
    %v2241 = vunpack.c.h.b16 %v2211
    %v2242 = vunpack.c.l.b16 %v2212
    %v2243 = vunpack.c.h.b16 %v2212
    %v2244 = vunpack.c.l.b16 %v2213
    %v2245 = vunpack.c.h.b16 %v2213
    %v2246 = vunpack.c.l.b16 %v2214
    %v2247 = vunpack.c.h.b16 %v2214
    %v2248 = vunpack.c.l.b16 %v2215
    %v2249 = vunpack.c.h.b16 %v2215
    %v2250 = vunpack.c.l.b16 %v2216
    %v2251 = vunpack.c.h.b16 %v2216
    %v2252 = vunpack.c.l.b16 %v2217
    %v2253 = vunpack.c.h.b16 %v2217
    %v2254 = vpack.c.b16 %v2240, %v2238
    %v2255 = vpack.c.b16 %v2241, %v2239
    %v2256 = vpack.c.b16 %v2244, %v2242
    %v2257 = vpack.c.b16 %v2245, %v2243
    %v2258 = vpack.c.b16 %v2248, %v2246
    %v2259 = vpack.c.b16 %v2249, %v2247
    %v2260 = vpack.c.b16 %v2252, %v2250
    %v2261 = vpack.c.b16 %v2253, %v2251
    %v2271 = vsel %vm228, %v2202, 0
    %v2274 = vsel %vm228, %v2203, 0
    %v2277 = vsel %vm228, %v2204, 0
    %v2280 = vsel %vm228, %v2205, 0
    %v2283 = vsel %vm228, %v2206, 0
    %v2286 = vsel %vm228, %v2207, 0
    %v2289 = vsel %vm228, %v2208, 0
    %v2292 = vsel %vm228, %v2209, 0
    %2294 = vmatprep.subr.bf16.mxu0 %v2255
    %2295 = vmatpush1.bf16.msra.mxu0 %v2254
    %2296 = vmatprep.subr.bf16.mxu0 %v2257
    %2297 = vmatpush1.bf16.msra.mxu0 %v2256
    %2298 = vmatprep.subr.bf16.mxu0 %v2259
    %2299 = vmatpush1.bf16.msra.mxu0 %v2258
    %2300 = vmatprep.subr.bf16.mxu0 %v2261
    %2301 = vmatpush1.bf16.msra.mxu0 %v2260
    %2302 = vmatprep.subr.bf16.mxu0 0
    %2303 = vmatpush1.bf16.msra.mxu0 0
    %2304 = vmatprep.subr.bf16.mxu0 0
    %2305 = vmatpush1.bf16.msra.mxu0 0
    %2306 = vmatprep.subr.bf16.mxu0 0
    %2307 = vmatpush1.bf16.msra.mxu0 0
    %2308 = vmatprep.subr.bf16.mxu0 0
    %2309 = vmatpush1.bf16.msra.mxu0 0
    %2310 = vmatprep.subr.bf16.mxu0 0
    %2311 = vmatpush1.bf16.msra.mxu0 0
    %2312 = vmatprep.subr.bf16.mxu0 0
    %2313 = vmatpush1.bf16.msra.mxu0 0
    %2314 = vmatprep.subr.bf16.mxu0 0
    %2315 = vmatpush1.bf16.msra.mxu0 0
    %2316 = vmatprep.subr.bf16.mxu0 0
    %2317 = vmatpush1.bf16.msra.mxu0 0
    %2318 = vmatprep.subr.bf16.mxu0 0
    %2319 = vmatpush1.bf16.msra.mxu0 0
    %2320 = vmatprep.subr.bf16.mxu0 0
    %2321 = vmatpush1.bf16.msra.mxu0 0
    %2322 = vmatprep.subr.bf16.mxu0 0
    %2323 = vmatpush1.bf16.msra.mxu0 0
    %2324 = vmatprep.subr.bf16.mxu0 0
    %2325 = vmatpush1.bf16.msra.mxu0 0
    %2326 = vmatprep.mubr.bf16.mxu0 0
    %2327 = vmatmul.mubr.bf16.gmra.mrb[0].mxu0 %v2271
    %v2328 = vpop.f32.mrb[0].mxu0
    %v2329 = vadd.f32 %v2223, %v2328
    %v2330 = vpop.f32.mrb[0].mxu0
    %v2331 = vadd.f32 %v2227, %v2330
    %v2332 = vpop.f32.mrb[0].mxu0
    %v2333 = vadd.f32 %v2223, %v2332
    %v2334 = vpop.f32.mrb[0].mxu0
    %v2335 = vadd.f32 %v2227, %v2334
    %2336 = vmatprep.mubr.bf16.mxu0 0
    %2337 = vmatmul.mubr.bf16.gmra.mrb[0].mxu0 %v2274
    %v2338 = vpop.f32.mrb[0].mxu0
    %v2339 = vadd.f32 %v2223, %v2338
    %v2340 = vpop.f32.mrb[0].mxu0
    %v2341 = vadd.f32 %v2227, %v2340
    %v2342 = vpop.f32.mrb[0].mxu0
    %v2343 = vadd.f32 %v2223, %v2342
    %v2344 = vpop.f32.mrb[0].mxu0
    %v2345 = vadd.f32 %v2227, %v2344
    %2346 = vmatprep.mubr.bf16.mxu0 0
    %2347 = vmatmul.mubr.bf16.gmra.mrb[0].mxu0 %v2277
    %v2348 = vpop.f32.mrb[0].mxu0
    %v2349 = vadd.f32 %v2223, %v2348
    %v2350 = vpop.f32.mrb[0].mxu0
    %v2351 = vadd.f32 %v2227, %v2350
    %v2352 = vpop.f32.mrb[0].mxu0
    %v2353 = vadd.f32 %v2223, %v2352
    %v2354 = vpop.f32.mrb[0].mxu0
    %v2355 = vadd.f32 %v2227, %v2354
    %2356 = vmatprep.mubr.bf16.mxu0 0
    %2357 = vmatmul.mubr.bf16.gmra.mrb[0].mxu0 %v2280
    %v2358 = vpop.f32.mrb[0].mxu0
    %v2359 = vadd.f32 %v2223, %v2358
    %v2360 = vpop.f32.mrb[0].mxu0
    %v2361 = vadd.f32 %v2227, %v2360
    %v2362 = vpop.f32.mrb[0].mxu0
    %v2363 = vadd.f32 %v2223, %v2362
    %v2364 = vpop.f32.mrb[0].mxu0
    %v2365 = vadd.f32 %v2227, %v2364
    %2366 = vmatprep.mubr.bf16.mxu0 0
    %2367 = vmatmul.mubr.bf16.gmra.mrb[0].mxu0 %v2283
    %v2368 = vpop.f32.mrb[0].mxu0
    %v2369 = vadd.f32 %v2223, %v2368
    %v2370 = vpop.f32.mrb[0].mxu0
    %v2371 = vadd.f32 %v2227, %v2370
    %v2372 = vpop.f32.mrb[0].mxu0
    %v2373 = vadd.f32 %v2223, %v2372
    %v2374 = vpop.f32.mrb[0].mxu0
    %v2375 = vadd.f32 %v2227, %v2374
    %2376 = vmatprep.mubr.bf16.mxu0 0
    %2377 = vmatmul.mubr.bf16.gmra.mrb[0].mxu0 %v2286
    %v2378 = vpop.f32.mrb[0].mxu0
    %v2379 = vadd.f32 %v2223, %v2378
    %v2380 = vpop.f32.mrb[0].mxu0
    %v2381 = vadd.f32 %v2227, %v2380
    %v2382 = vpop.f32.mrb[0].mxu0
    %v2383 = vadd.f32 %v2223, %v2382
    %v2384 = vpop.f32.mrb[0].mxu0
    %v2385 = vadd.f32 %v2227, %v2384
    %2386 = vmatprep.mubr.bf16.mxu0 0
    %2387 = vmatmul.mubr.bf16.gmra.mrb[0].mxu0 %v2289
    %v2388 = vpop.f32.mrb[0].mxu0
    %v2389 = vadd.f32 %v2223, %v2388
    %v2390 = vpop.f32.mrb[0].mxu0
    %v2391 = vadd.f32 %v2227, %v2390
    %v2392 = vpop.f32.mrb[0].mxu0
    %v2393 = vadd.f32 %v2223, %v2392
    %v2394 = vpop.f32.mrb[0].mxu0
    %v2395 = vadd.f32 %v2227, %v2394
    %2396 = vmatprep.mubr.bf16.mxu0 0
    %2397 = vmatmul.mubr.bf16.gmra.mrb[0].mxu0 %v2292
    %v2398 = vpop.f32.mrb[0].mxu0
    %v2399 = vadd.f32 %v2223, %v2398
    %v2400 = vpop.f32.mrb[0].mxu0
    %v2401 = vadd.f32 %v2227, %v2400
    %v2402 = vpop.f32.mrb[0].mxu0
    %v2403 = vadd.f32 %v2223, %v2402
    %v2404 = vpop.f32.mrb[0].mxu0
    %v2405 = vadd.f32 %v2227, %v2404
    %2406 = vdwg.mxu0
    %2407 = vst [vmem:[#allocation2] sm:$0xff] %v2329
    %2408 = vst [vmem:[#allocation2 + $0x8] sm:$0xff] %v2331
    %2409 = vst [vmem:[#allocation2 + $0x10] sm:$0xff] %v2333
    %2410 = vst [vmem:[#allocation2 + $0x18] sm:$0xff] %v2335
    %2411 = vst [vmem:[#allocation2 + $0x20] sm:$0xff] %v2339
    %2412 = vst [vmem:[#allocation2 + $0x28] sm:$0xff] %v2341
    %2413 = vst [vmem:[#allocation2 + $0x30] sm:$0xff] %v2343
    %2414 = vst [vmem:[#allocation2 + $0x38] sm:$0xff] %v2345
    %2415 = vst [vmem:[#allocation2 + $0x40] sm:$0xff] %v2349
    %2416 = vst [vmem:[#allocation2 + $0x48] sm:$0xff] %v2351
    %2417 = vst [vmem:[#allocation2 + $0x50] sm:$0xff] %v2353
    %2418 = vst [vmem:[#allocation2 + $0x58] sm:$0xff] %v2355
    %2419 = vst [vmem:[#allocation2 + $0x60] sm:$0xff] %v2359
    %2420 = vst [vmem:[#allocation2 + $0x68] sm:$0xff] %v2361
    %2421 = vst [vmem:[#allocation2 + $0x70] sm:$0xff] %v2363
    %2422 = vst [vmem:[#allocation2 + $0x78] sm:$0xff] %v2365
    %2423 = vst [vmem:[#allocation2 + $0x80] sm:$0xff] %v2369
    %2424 = vst [vmem:[#allocation2 + $0x88] sm:$0xff] %v2371
    %2425 = vst [vmem:[#allocation2 + $0x90] sm:$0xff] %v2373
    %2426 = vst [vmem:[#allocation2 + $0x98] sm:$0xff] %v2375
    %2427 = vst [vmem:[#allocation2 + $0xa0] sm:$0xff] %v2379
    %2428 = vst [vmem:[#allocation2 + $0xa8] sm:$0xff] %v2381
    %2429 = vst [vmem:[#allocation2 + $0xb0] sm:$0xff] %v2383
    %2430 = vst [vmem:[#allocation2 + $0xb8] sm:$0xff] %v2385
    %2431 = vst [vmem:[#allocation2 + $0xc0] sm:$0xff] %v2389
    %2432 = vst [vmem:[#allocation2 + $0xc8] sm:$0xff] %v2391
    %2433 = vst [vmem:[#allocation2 + $0xd0] sm:$0xff] %v2393
    %2434 = vst [vmem:[#allocation2 + $0xd8] sm:$0xff] %v2395
    %2435 = vst [vmem:[#allocation2 + $0xe0] sm:$0xff] %v2399
    %2436 = vst [vmem:[#allocation2 + $0xe8] sm:$0xff] %v2401
    %2437 = vst [vmem:[#allocation2 + $0xf0] sm:$0xff] %v2403
    %2438 = vst [vmem:[#allocation2 + $0xf8] sm:$0xff] %v2405
    %v2439 = vld [vmem:[#allocation12] sm:$0xff]
    %v2440 = vld [vmem:[#allocation12 + $0x8] sm:$0xff]
    %v2441 = vld [vmem:[#allocation12 + $0x10] sm:$0xff]
    %v2442 = vld [vmem:[#allocation12 + $0x18] sm:$0xff]
    %v2443 = vld [vmem:[#allocation12 + $0x20] sm:$0xff]
    %v2444 = vld [vmem:[#allocation12 + $0x28] sm:$0xff]
    %v2445 = vld [vmem:[#allocation12 + $0x30] sm:$0xff]
    %v2446 = vld [vmem:[#allocation12 + $0x38] sm:$0xff]
    %v2447 = vld [vmem:[#allocation2] sm:$0xff]
    %v2448 = vld [vmem:[%s407 + $0x8] sm:$0xff]
    %v2449 = vxor.u32 %v2447, 2147483648
    %v2450 = vmul.f32 %v2449, 1.442695
    %v2451 = vpow.pop %v2450
    %v2452 = vadd.f32 %v2451, 1.0
    %v2453 = vrcp.pop %v2452
    %v2454 = vmul.f32 1.0, %v2453
    %v2455 = vxor.u32 %v2448, 2147483648
    %v2456 = vmul.f32 %v2455, 1.442695
    %v2457 = vpow.pop %v2456
    %v2458 = vadd.f32 %v2457, 1.0
    %v2459 = vrcp.pop %v2458
    %v2460 = vmul.f32 1.0, %v2459
    %v2461 = vmul.f32 %v2454, 2.0
    %v2462 = vsub.f32 %v2461, 1.0
    %v2463 = vmul.f32 %v2460, 2.0
    %v2464 = vsub.f32 %v2463, 1.0
    %2466 = vrot.lane.b32.xlu0 %v2462, 32
    %v2467 = vpop.permute.xlu0 %2466
    %v2469 = vmul.f32 %v2454, %v2467
    %2471 = vrot.lane.b32.xlu0 %v2464, 32
    %v2472 = vpop.permute.xlu0 %2471
    %v2474 = vmul.f32 %v2460, %v2472
    %v2475 = vtanh.pop %v2469
    %2477 = vrot.lane.b32.xlu0 %v2475, 64
    %v2478 = vpop.permute.xlu0 %2477
    %v2480 = vmul.f32 %v2454, %v2478
    %v2481 = vtanh.pop %v2474
    %2483 = vrot.lane.b32.xlu0 %v2481, 64
    %v2484 = vpop.permute.xlu0 %2483
    %v2486 = vmul.f32 %v2460, %v2484
    %2488 = vrot.lane.b32.xlu0 %v2480, 64
    %v2489 = vpop.permute.xlu0 %2488
    %2492 = vrot.lane.b32.xlu0 %v2486, 96
    %v2493 = vpop.permute.xlu0 %2492
    %v2495 = vsel %vm451, %v2489, %v2493
    %v2496 = vpack.c.bf16 %v2495, %v2495
    %v2505 = vunpack.c.l.b16 %v2439
    %v2506 = vunpack.c.h.b16 %v2439
    %v2507 = vunpack.c.l.b16 %v2440
    %v2508 = vunpack.c.h.b16 %v2440
    %v2509 = vunpack.c.l.b16 %v2441
    %v2510 = vunpack.c.h.b16 %v2441
    %v2511 = vunpack.c.l.b16 %v2442
    %v2512 = vunpack.c.h.b16 %v2442
    %v2513 = vunpack.c.l.b16 %v2443
    %v2514 = vunpack.c.h.b16 %v2443
    %v2515 = vunpack.c.l.b16 %v2444
    %v2516 = vunpack.c.h.b16 %v2444
    %v2517 = vunpack.c.l.b16 %v2445
    %v2518 = vunpack.c.h.b16 %v2445
    %v2519 = vunpack.c.l.b16 %v2446
    %v2520 = vunpack.c.h.b16 %v2446
    %v2521 = vpack.c.b16 %v2507, %v2505
    %v2522 = vpack.c.b16 %v2508, %v2506
    %v2523 = vpack.c.b16 %v2511, %v2509
    %v2524 = vpack.c.b16 %v2512, %v2510
    %v2525 = vpack.c.b16 %v2515, %v2513
    %v2526 = vpack.c.b16 %v2516, %v2514
    %v2527 = vpack.c.b16 %v2519, %v2517
    %v2528 = vpack.c.b16 %v2520, %v2518
    %v2538 = vsel %vm228, %v2496, 0
    %2540 = vmatprep.subr.bf16.mxu0 %v2522
    %2541 = vmatpush1.bf16.msra.mxu0 %v2521
    %2542 = vmatprep.subr.bf16.mxu0 %v2524
    %2543 = vmatpush1.bf16.msra.mxu0 %v2523
    %2544 = vmatprep.subr.bf16.mxu0 %v2526
    %2545 = vmatpush1.bf16.msra.mxu0 %v2525
    %2546 = vmatprep.subr.bf16.mxu0 %v2528
    %2547 = vmatpush1.bf16.msra.mxu0 %v2527
    %2548 = vmatprep.subr.bf16.mxu0 0
    %2549 = vmatpush1.bf16.msra.mxu0 0
    %2550 = vmatprep.subr.bf16.mxu0 0
    %2551 = vmatpush1.bf16.msra.mxu0 0
    %2552 = vmatprep.subr.bf16.mxu0 0
    %2553 = vmatpush1.bf16.msra.mxu0 0
    %2554 = vmatprep.subr.bf16.mxu0 0
    %2555 = vmatpush1.bf16.msra.mxu0 0
    %2556 = vmatprep.subr.bf16.mxu0 0
    %2557 = vmatpush1.bf16.msra.mxu0 0
    %2558 = vmatprep.subr.bf16.mxu0 0
    %2559 = vmatpush1.bf16.msra.mxu0 0
    %2560 = vmatprep.subr.bf16.mxu0 0
    %2561 = vmatpush1.bf16.msra.mxu0 0
    %2562 = vmatprep.subr.bf16.mxu0 0
    %2563 = vmatpush1.bf16.msra.mxu0 0
    %2564 = vmatprep.subr.bf16.mxu0 0
    %2565 = vmatpush1.bf16.msra.mxu0 0
    %2566 = vmatprep.subr.bf16.mxu0 0
    %2567 = vmatpush1.bf16.msra.mxu0 0
    %2568 = vmatprep.subr.bf16.mxu0 0
    %2569 = vmatpush1.bf16.msra.mxu0 0
    %2570 = vmatprep.subr.bf16.mxu0 0
    %2571 = vmatpush1.bf16.msra.mxu0 0
    %2572 = vmatprep.mubr.bf16.mxu0 0
    %2573 = vmatmul.mubr.bf16.gmra.mrb[0].mxu0 %v2538
    %v2574 = vpop.f32.mrb[0].mxu0
    %v2575 = vadd.f32 0.0, %v2574
    %v2576 = vpop.f32.mrb[0].mxu0
    %v2577 = vadd.f32 0.0, %v2576
    %v2578 = vpop.f32.mrb[0].mxu0
    %v2579 = vpop.f32.mrb[0].mxu0
    %2580 = vdwg.mxu0
    %v2581 = vld [vmem:[%s546] sm:$0xff]
    %v2582 = vadd.f32 %v2575, %v2581
    %v2583 = vld [vmem:[%s549 + $0x8] sm:$0xff]
    %v2584 = vadd.f32 %v2577, %v2583
    %v2585 = vxor.u32 %v2582, 2147483648
    %v2586 = vmul.f32 %v2585, 1.442695
    %v2587 = vpow.pop %v2586
    %v2588 = vadd.f32 %v2587, 1.0
    %v2589 = vrcp.pop %v2588
    %v2590 = vmul.f32 1.0, %v2589
    %v2591 = vxor.u32 %v2584, 2147483648
    %v2592 = vmul.f32 %v2591, 1.442695
    %v2593 = vpow.pop %v2592
    %v2594 = vadd.f32 %v2593, 1.0
    %v2595 = vrcp.pop %v2594
    %v2596 = vmul.f32 1.0, %v2595
    %v2597 = vmul.f32 %v2590, 2.0
    %v2598 = vsub.f32 %v2597, 1.0
    %v2599 = vmul.f32 %v2596, 2.0
    %v2600 = vsub.f32 %v2599, 1.0
    %2602 = vrot.lane.b32.xlu0 %v2469, 32
    %v2603 = vpop.permute.xlu0 %2602
    %v2605 = vmul.f32 %v2590, %v2603
    %2607 = vrot.lane.b32.xlu0 %v2598, 32
    %v2608 = vpop.permute.xlu0 %2607
    %v2610 = vmul.f32 %v2590, %v2608
    %2612 = vrot.lane.b32.xlu0 %v2610, 32
    %v2613 = vpop.permute.xlu0 %2612
    %v2615 = vadd.f32 %v2605, %v2613
    %2617 = vrot.lane.b32.xlu0 %v2474, 32
    %v2618 = vpop.permute.xlu0 %2617
    %v2620 = vmul.f32 %v2596, %v2618
    %2622 = vrot.lane.b32.xlu0 %v2600, 32
    %v2623 = vpop.permute.xlu0 %2622
    %v2625 = vmul.f32 %v2596, %v2623
    %2627 = vrot.lane.b32.xlu0 %v2625, 32
    %v2628 = vpop.permute.xlu0 %2627
    %v2630 = vadd.f32 %v2620, %v2628
    %v2631 = vtanh.pop %v2615
    %2633 = vrot.lane.b32.xlu0 %v2631, 32
    %v2634 = vpop.permute.xlu0 %2633
    %v2636 = vmul.f32 %v2590, %v2634
    %v2637 = vtanh.pop %v2630
    %2639 = vrot.lane.b32.xlu0 %v2637, 32
    %v2640 = vpop.permute.xlu0 %2639
    %v2642 = vmul.f32 %v2596, %v2640
    %2644 = vrot.lane.b32.xlu0 %v2636, 64
    %v2645 = vpop.permute.xlu0 %2644
    %2648 = vrot.lane.b32.xlu0 %v2642, 96
    %v2649 = vpop.permute.xlu0 %2648
    %v2651 = vsel %vm451, %v2645, %v2649
    %v2652 = vpack.c.bf16 %v2651, %v2651
    %v2654 = vsel %vm228, %v2652, 0
    %2656 = vmatprep.subr.bf16.mxu0 %v2522
    %2657 = vmatpush1.bf16.msra.mxu0 %v2521
    %2658 = vmatprep.subr.bf16.mxu0 %v2524
    %2659 = vmatpush1.bf16.msra.mxu0 %v2523
    %2660 = vmatprep.subr.bf16.mxu0 %v2526
    %2661 = vmatpush1.bf16.msra.mxu0 %v2525
    %2662 = vmatprep.subr.bf16.mxu0 %v2528
    %2663 = vmatpush1.bf16.msra.mxu0 %v2527
    %2664 = vmatprep.subr.bf16.mxu0 0
    %2665 = vmatpush1.bf16.msra.mxu0 0
    %2666 = vmatprep.subr.bf16.mxu0 0
    %2667 = vmatpush1.bf16.msra.mxu0 0
    %2668 = vmatprep.subr.bf16.mxu0 0
    %2669 = vmatpush1.bf16.msra.mxu0 0
    %2670 = vmatprep.subr.bf16.mxu0 0
    %2671 = vmatpush1.bf16.msra.mxu0 0
    %2672 = vmatprep.subr.bf16.mxu0 0
    %2673 = vmatpush1.bf16.msra.mxu0 0
    %2674 = vmatprep.subr.bf16.mxu0 0
    %2675 = vmatpush1.bf16.msra.mxu0 0
    %2676 = vmatprep.subr.bf16.mxu0 0
    %2677 = vmatpush1.bf16.msra.mxu0 0
    %2678 = vmatprep.subr.bf16.mxu0 0
    %2679 = vmatpush1.bf16.msra.mxu0 0
    %2680 = vmatprep.subr.bf16.mxu0 0
    %2681 = vmatpush1.bf16.msra.mxu0 0
    %2682 = vmatprep.subr.bf16.mxu0 0
    %2683 = vmatpush1.bf16.msra.mxu0 0
    %2684 = vmatprep.subr.bf16.mxu0 0
    %2685 = vmatpush1.bf16.msra.mxu0 0
    %2686 = vmatprep.subr.bf16.mxu0 0
    %2687 = vmatpush1.bf16.msra.mxu0 0
    %2688 = vmatprep.mubr.bf16.mxu0 0
    %2689 = vmatmul.mubr.bf16.gmra.mrb[0].mxu0 %v2654
    %v2690 = vpop.f32.mrb[0].mxu0
    %v2691 = vadd.f32 0.0, %v2690
    %v2692 = vpop.f32.mrb[0].mxu0
    %v2693 = vadd.f32 0.0, %v2692
    %v2694 = vpop.f32.mrb[0].mxu0
    %v2695 = vpop.f32.mrb[0].mxu0
    %2696 = vdwg.mxu0
    %v2697 = vld [vmem:[%s668] sm:$0xff]
    %v2698 = vadd.f32 %v2691, %v2697
    %v2699 = vld [vmem:[%s671 + $0x8] sm:$0xff]
    %v2700 = vadd.f32 %v2693, %v2699
    %v2701 = vxor.u32 %v2698, 2147483648
    %v2702 = vmul.f32 %v2701, 1.442695
    %v2703 = vpow.pop %v2702
    %v2704 = vadd.f32 %v2703, 1.0
    %v2705 = vrcp.pop %v2704
    %v2706 = vmul.f32 1.0, %v2705
    %v2707 = vxor.u32 %v2700, 2147483648
    %v2708 = vmul.f32 %v2707, 1.442695
    %v2709 = vpow.pop %v2708
    %v2710 = vadd.f32 %v2709, 1.0
    %v2711 = vrcp.pop %v2710
    %v2712 = vmul.f32 1.0, %v2711
    %v2713 = vmul.f32 %v2706, 2.0
    %v2714 = vsub.f32 %v2713, 1.0
    %v2715 = vmul.f32 %v2712, 2.0
    %v2716 = vsub.f32 %v2715, 1.0
    %v2717 = vmul.f32 %v2706, %v2615
    %2719 = vrot.lane.b32.xlu0 %v2714, 32
    %v2720 = vpop.permute.xlu0 %2719
    %v2722 = vmul.f32 %v2706, %v2720
    %2724 = vrot.lane.b32.xlu0 %v2722, 32
    %v2725 = vpop.permute.xlu0 %2724
    %v2727 = vadd.f32 %v2717, %v2725
    %v2728 = vmul.f32 %v2712, %v2630
    %2730 = vrot.lane.b32.xlu0 %v2716, 32
    %v2731 = vpop.permute.xlu0 %2730
    %v2733 = vmul.f32 %v2712, %v2731
    %2735 = vrot.lane.b32.xlu0 %v2733, 32
    %v2736 = vpop.permute.xlu0 %2735
    %v2738 = vadd.f32 %v2728, %v2736
    %v2739 = vtanh.pop %v2727
    %2741 = vrot.lane.b32.xlu0 %v2739, 32
    %v2742 = vpop.permute.xlu0 %2741
    %v2744 = vmul.f32 %v2706, %v2742
    %v2745 = vtanh.pop %v2738
    %2747 = vrot.lane.b32.xlu0 %v2745, 32
    %v2748 = vpop.permute.xlu0 %2747
    %v2750 = vmul.f32 %v2712, %v2748
    %2752 = vrot.lane.b32.xlu0 %v2744, 64
    %v2753 = vpop.permute.xlu0 %2752
    %2756 = vrot.lane.b32.xlu0 %v2750, 96
    %v2757 = vpop.permute.xlu0 %2756
    %v2759 = vsel %vm451, %v2753, %v2757
    %v2760 = vpack.c.bf16 %v2759, %v2759
    %v2762 = vsel %vm228, %v2760, 0
    %2764 = vmatprep.subr.bf16.mxu0 %v2522
    %2765 = vmatpush1.bf16.msra.mxu0 %v2521
    %2766 = vmatprep.subr.bf16.mxu0 %v2524
    %2767 = vmatpush1.bf16.msra.mxu0 %v2523
    %2768 = vmatprep.subr.bf16.mxu0 %v2526
    %2769 = vmatpush1.bf16.msra.mxu0 %v2525
    %2770 = vmatprep.subr.bf16.mxu0 %v2528
    %2771 = vmatpush1.bf16.msra.mxu0 %v2527
    %2772 = vmatprep.subr.bf16.mxu0 0
    %2773 = vmatpush1.bf16.msra.mxu0 0
    %2774 = vmatprep.subr.bf16.mxu0 0
    %2775 = vmatpush1.bf16.msra.mxu0 0
    %2776 = vmatprep.subr.bf16.mxu0 0
    %2777 = vmatpush1.bf16.msra.mxu0 0
    %2778 = vmatprep.subr.bf16.mxu0 0
    %2779 = vmatpush1.bf16.msra.mxu0 0
    %2780 = vmatprep.subr.bf16.mxu0 0
    %2781 = vmatpush1.bf16.msra.mxu0 0
    %2782 = vmatprep.subr.bf16.mxu0 0
    %2783 = vmatpush1.bf16.msra.mxu0 0
    %2784 = vmatprep.subr.bf16.mxu0 0
    %2785 = vmatpush1.bf16.msra.mxu0 0
    %2786 = vmatprep.subr.bf16.mxu0 0
    %2787 = vmatpush1.bf16.msra.mxu0 0
    %2788 = vmatprep.subr.bf16.mxu0 0
    %2789 = vmatpush1.bf16.msra.mxu0 0
    %2790 = vmatprep.subr.bf16.mxu0 0
    %2791 = vmatpush1.bf16.msra.mxu0 0
    %2792 = vmatprep.subr.bf16.mxu0 0
    %2793 = vmatpush1.bf16.msra.mxu0 0
    %2794 = vmatprep.subr.bf16.mxu0 0
    %2795 = vmatpush1.bf16.msra.mxu0 0
    %2796 = vmatprep.mubr.bf16.mxu0 0
    %2797 = vmatmul.mubr.bf16.gmra.mrb[0].mxu0 %v2762
    %v2798 = vpop.f32.mrb[0].mxu0
    %v2799 = vadd.f32 0.0, %v2798
    %v2800 = vpop.f32.mrb[0].mxu0
    %v2801 = vadd.f32 0.0, %v2800
    %v2802 = vpop.f32.mrb[0].mxu0
    %v2803 = vpop.f32.mrb[0].mxu0
    %2804 = vdwg.mxu0
    %v2805 = vld [vmem:[%s782] sm:$0xff]
    %v2806 = vadd.f32 %v2799, %v2805
    %v2807 = vld [vmem:[%s785 + $0x8] sm:$0xff]
    %v2808 = vadd.f32 %v2801, %v2807
    %v2809 = vxor.u32 %v2806, 2147483648
    %v2810 = vmul.f32 %v2809, 1.442695
    %v2811 = vpow.pop %v2810
    %v2812 = vadd.f32 %v2811, 1.0
    %v2813 = vrcp.pop %v2812
    %v2814 = vmul.f32 1.0, %v2813
    %v2815 = vxor.u32 %v2808, 2147483648
    %v2816 = vmul.f32 %v2815, 1.442695
    %v2817 = vpow.pop %v2816
    %v2818 = vadd.f32 %v2817, 1.0
    %v2819 = vrcp.pop %v2818
    %v2820 = vmul.f32 1.0, %v2819
    %v2821 = vmul.f32 %v2814, 2.0
    %v2822 = vsub.f32 %v2821, 1.0
    %v2823 = vmul.f32 %v2820, 2.0
    %v2824 = vsub.f32 %v2823, 1.0
    %v2825 = vmul.f32 %v2814, %v2727
    %2827 = vrot.lane.b32.xlu0 %v2822, 32
    %v2828 = vpop.permute.xlu0 %2827
    %v2830 = vmul.f32 %v2814, %v2828
    %2832 = vrot.lane.b32.xlu0 %v2830, 32
    %v2833 = vpop.permute.xlu0 %2832
    %v2835 = vadd.f32 %v2825, %v2833
    %v2836 = vmul.f32 %v2820, %v2738
    %2838 = vrot.lane.b32.xlu0 %v2824, 32
    %v2839 = vpop.permute.xlu0 %2838
    %v2841 = vmul.f32 %v2820, %v2839
    %2843 = vrot.lane.b32.xlu0 %v2841, 32
    %v2844 = vpop.permute.xlu0 %2843
    %v2846 = vadd.f32 %v2836, %v2844
    %v2847 = vtanh.pop %v2835
    %2849 = vrot.lane.b32.xlu0 %v2847, 32
    %v2850 = vpop.permute.xlu0 %2849
    %v2852 = vmul.f32 %v2814, %v2850
    %v2853 = vtanh.pop %v2846
    %2855 = vrot.lane.b32.xlu0 %v2853, 32
    %v2856 = vpop.permute.xlu0 %2855
    %v2858 = vmul.f32 %v2820, %v2856
    %2860 = vrot.lane.b32.xlu0 %v2852, 64
    %v2861 = vpop.permute.xlu0 %2860
    %2864 = vrot.lane.b32.xlu0 %v2858, 96
    %v2865 = vpop.permute.xlu0 %2864
    %v2867 = vsel %vm451, %v2861, %v2865
    %v2868 = vpack.c.bf16 %v2867, %v2867
    %v2870 = vsel %vm228, %v2868, 0
    %2872 = vmatprep.subr.bf16.mxu0 %v2522
    %2873 = vmatpush1.bf16.msra.mxu0 %v2521
    %2874 = vmatprep.subr.bf16.mxu0 %v2524
    %2875 = vmatpush1.bf16.msra.mxu0 %v2523
    %2876 = vmatprep.subr.bf16.mxu0 %v2526
    %2877 = vmatpush1.bf16.msra.mxu0 %v2525
    %2878 = vmatprep.subr.bf16.mxu0 %v2528
    %2879 = vmatpush1.bf16.msra.mxu0 %v2527
    %2880 = vmatprep.subr.bf16.mxu0 0
    %2881 = vmatpush1.bf16.msra.mxu0 0
    %2882 = vmatprep.subr.bf16.mxu0 0
    %2883 = vmatpush1.bf16.msra.mxu0 0
    %2884 = vmatprep.subr.bf16.mxu0 0
    %2885 = vmatpush1.bf16.msra.mxu0 0
    %2886 = vmatprep.subr.bf16.mxu0 0
    %2887 = vmatpush1.bf16.msra.mxu0 0
    %2888 = vmatprep.subr.bf16.mxu0 0
    %2889 = vmatpush1.bf16.msra.mxu0 0
    %2890 = vmatprep.subr.bf16.mxu0 0
    %2891 = vmatpush1.bf16.msra.mxu0 0
    %2892 = vmatprep.subr.bf16.mxu0 0
    %2893 = vmatpush1.bf16.msra.mxu0 0
    %2894 = vmatprep.subr.bf16.mxu0 0
    %2895 = vmatpush1.bf16.msra.mxu0 0
    %2896 = vmatprep.subr.bf16.mxu0 0
    %2897 = vmatpush1.bf16.msra.mxu0 0
    %2898 = vmatprep.subr.bf16.mxu0 0
    %2899 = vmatpush1.bf16.msra.mxu0 0
    %2900 = vmatprep.subr.bf16.mxu0 0
    %2901 = vmatpush1.bf16.msra.mxu0 0
    %2902 = vmatprep.subr.bf16.mxu0 0
    %2903 = vmatpush1.bf16.msra.mxu0 0
    %2904 = vmatprep.mubr.bf16.mxu0 0
    %2905 = vmatmul.mubr.bf16.gmra.mrb[0].mxu0 %v2870
    %v2906 = vpop.f32.mrb[0].mxu0
    %v2907 = vadd.f32 0.0, %v2906
    %v2908 = vpop.f32.mrb[0].mxu0
    %v2909 = vadd.f32 0.0, %v2908
    %v2910 = vpop.f32.mrb[0].mxu0
    %v2911 = vpop.f32.mrb[0].mxu0
    %2912 = vdwg.mxu0
    %v2913 = vld [vmem:[%s896] sm:$0xff]
    %v2914 = vadd.f32 %v2907, %v2913
    %v2915 = vld [vmem:[%s899 + $0x8] sm:$0xff]
    %v2916 = vadd.f32 %v2909, %v2915
    %v2917 = vxor.u32 %v2914, 2147483648
    %v2918 = vmul.f32 %v2917, 1.442695
    %v2919 = vpow.pop %v2918
    %v2920 = vadd.f32 %v2919, 1.0
    %v2921 = vrcp.pop %v2920
    %v2922 = vmul.f32 1.0, %v2921
    %v2923 = vxor.u32 %v2916, 2147483648
    %v2924 = vmul.f32 %v2923, 1.442695
    %v2925 = vpow.pop %v2924
    %v2926 = vadd.f32 %v2925, 1.0
    %v2927 = vrcp.pop %v2926
    %v2928 = vmul.f32 1.0, %v2927
    %v2929 = vmul.f32 %v2922, 2.0
    %v2930 = vsub.f32 %v2929, 1.0
    %v2931 = vmul.f32 %v2928, 2.0
    %v2932 = vsub.f32 %v2931, 1.0
    %v2933 = vmul.f32 %v2922, %v2835
    %2935 = vrot.lane.b32.xlu0 %v2930, 32
    %v2936 = vpop.permute.xlu0 %2935
    %v2938 = vmul.f32 %v2922, %v2936
    %2940 = vrot.lane.b32.xlu0 %v2938, 32
    %v2941 = vpop.permute.xlu0 %2940
    %v2943 = vadd.f32 %v2933, %v2941
    %v2944 = vmul.f32 %v2928, %v2846
    %2946 = vrot.lane.b32.xlu0 %v2932, 32
    %v2947 = vpop.permute.xlu0 %2946
    %v2949 = vmul.f32 %v2928, %v2947
    %2951 = vrot.lane.b32.xlu0 %v2949, 32
    %v2952 = vpop.permute.xlu0 %2951
    %v2954 = vadd.f32 %v2944, %v2952
    %v2955 = vtanh.pop %v2943
    %2957 = vrot.lane.b32.xlu0 %v2955, 32
    %v2958 = vpop.permute.xlu0 %2957
    %v2960 = vmul.f32 %v2922, %v2958
    %v2961 = vtanh.pop %v2954
    %2963 = vrot.lane.b32.xlu0 %v2961, 32
    %v2964 = vpop.permute.xlu0 %2963
    %v2966 = vmul.f32 %v2928, %v2964
    %2968 = vrot.lane.b32.xlu0 %v2960, 64
    %v2969 = vpop.permute.xlu0 %2968
    %2972 = vrot.lane.b32.xlu0 %v2966, 96
    %v2973 = vpop.permute.xlu0 %2972
    %v2975 = vsel %vm451, %v2969, %v2973
    %v2976 = vpack.c.bf16 %v2975, %v2975
    %v2978 = vsel %vm228, %v2976, 0
    %2980 = vmatprep.subr.bf16.mxu0 %v2522
    %2981 = vmatpush1.bf16.msra.mxu0 %v2521
    %2982 = vmatprep.subr.bf16.mxu0 %v2524
    %2983 = vmatpush1.bf16.msra.mxu0 %v2523
    %2984 = vmatprep.subr.bf16.mxu0 %v2526
    %2985 = vmatpush1.bf16.msra.mxu0 %v2525
    %2986 = vmatprep.subr.bf16.mxu0 %v2528
    %2987 = vmatpush1.bf16.msra.mxu0 %v2527
    %2988 = vmatprep.subr.bf16.mxu0 0
    %2989 = vmatpush1.bf16.msra.mxu0 0
    %2990 = vmatprep.subr.bf16.mxu0 0
    %2991 = vmatpush1.bf16.msra.mxu0 0
    %2992 = vmatprep.subr.bf16.mxu0 0
    %2993 = vmatpush1.bf16.msra.mxu0 0
    %2994 = vmatprep.subr.bf16.mxu0 0
    %2995 = vmatpush1.bf16.msra.mxu0 0
    %2996 = vmatprep.subr.bf16.mxu0 0
    %2997 = vmatpush1.bf16.msra.mxu0 0
    %2998 = vmatprep.subr.bf16.mxu0 0
    %2999 = vmatpush1.bf16.msra.mxu0 0
    %3000 = vmatprep.subr.bf16.mxu0 0
    %3001 = vmatpush1.bf16.msra.mxu0 0
    %3002 = vmatprep.subr.bf16.mxu0 0
    %3003 = vmatpush1.bf16.msra.mxu0 0
    %3004 = vmatprep.subr.bf16.mxu0 0
    %3005 = vmatpush1.bf16.msra.mxu0 0
    %3006 = vmatprep.subr.bf16.mxu0 0
    %3007 = vmatpush1.bf16.msra.mxu0 0
    %3008 = vmatprep.subr.bf16.mxu0 0
    %3009 = vmatpush1.bf16.msra.mxu0 0
    %3010 = vmatprep.subr.bf16.mxu0 0
    %3011 = vmatpush1.bf16.msra.mxu0 0
    %3012 = vmatprep.mubr.bf16.mxu0 0
    %3013 = vmatmul.mubr.bf16.gmra.mrb[0].mxu0 %v2978
    %v3014 = vpop.f32.mrb[0].mxu0
    %v3015 = vadd.f32 0.0, %v3014
    %v3016 = vpop.f32.mrb[0].mxu0
    %v3017 = vadd.f32 0.0, %v3016
    %v3018 = vpop.f32.mrb[0].mxu0
    %v3019 = vpop.f32.mrb[0].mxu0
    %3020 = vdwg.mxu0
    %v3021 = vld [vmem:[%s1010] sm:$0xff]
    %v3022 = vadd.f32 %v3015, %v3021
    %v3023 = vld [vmem:[%s1013 + $0x8] sm:$0xff]
    %v3024 = vadd.f32 %v3017, %v3023
    %v3025 = vxor.u32 %v3022, 2147483648
    %v3026 = vmul.f32 %v3025, 1.442695
    %v3027 = vpow.pop %v3026
    %v3028 = vadd.f32 %v3027, 1.0
    %v3029 = vrcp.pop %v3028
    %v3030 = vmul.f32 1.0, %v3029
    %v3031 = vxor.u32 %v3024, 2147483648
    %v3032 = vmul.f32 %v3031, 1.442695
    %v3033 = vpow.pop %v3032
    %v3034 = vadd.f32 %v3033, 1.0
    %v3035 = vrcp.pop %v3034
    %v3036 = vmul.f32 1.0, %v3035
    %v3037 = vmul.f32 %v3030, 2.0
    %v3038 = vsub.f32 %v3037, 1.0
    %v3039 = vmul.f32 %v3036, 2.0
    %v3040 = vsub.f32 %v3039, 1.0
    %v3041 = vmul.f32 %v3030, %v2943
    %3043 = vrot.lane.b32.xlu0 %v3038, 32
    %v3044 = vpop.permute.xlu0 %3043
    %v3046 = vmul.f32 %v3030, %v3044
    %3048 = vrot.lane.b32.xlu0 %v3046, 32
    %v3049 = vpop.permute.xlu0 %3048
    %v3051 = vadd.f32 %v3041, %v3049
    %v3052 = vmul.f32 %v3036, %v2954
    %3054 = vrot.lane.b32.xlu0 %v3040, 32
    %v3055 = vpop.permute.xlu0 %3054
    %v3057 = vmul.f32 %v3036, %v3055
    %3059 = vrot.lane.b32.xlu0 %v3057, 32
    %v3060 = vpop.permute.xlu0 %3059
    %v3062 = vadd.f32 %v3052, %v3060
    %v3063 = vtanh.pop %v3051
    %3065 = vrot.lane.b32.xlu0 %v3063, 32
    %v3066 = vpop.permute.xlu0 %3065
    %v3068 = vmul.f32 %v3030, %v3066
    %v3069 = vtanh.pop %v3062
    %3071 = vrot.lane.b32.xlu0 %v3069, 32
    %v3072 = vpop.permute.xlu0 %3071
    %v3074 = vmul.f32 %v3036, %v3072
    %3076 = vrot.lane.b32.xlu0 %v3068, 64
    %v3077 = vpop.permute.xlu0 %3076
    %3080 = vrot.lane.b32.xlu0 %v3074, 96
    %v3081 = vpop.permute.xlu0 %3080
    %v3083 = vsel %vm451, %v3077, %v3081
    %v3084 = vpack.c.bf16 %v3083, %v3083
    %v3086 = vsel %vm228, %v3084, 0
    %3088 = vmatprep.subr.bf16.mxu0 %v2522
    %3089 = vmatpush1.bf16.msra.mxu0 %v2521
    %3090 = vmatprep.subr.bf16.mxu0 %v2524
    %3091 = vmatpush1.bf16.msra.mxu0 %v2523
    %3092 = vmatprep.subr.bf16.mxu0 %v2526
    %3093 = vmatpush1.bf16.msra.mxu0 %v2525
    %3094 = vmatprep.subr.bf16.mxu0 %v2528
    %3095 = vmatpush1.bf16.msra.mxu0 %v2527
    %3096 = vmatprep.subr.bf16.mxu0 0
    %3097 = vmatpush1.bf16.msra.mxu0 0
    %3098 = vmatprep.subr.bf16.mxu0 0
    %3099 = vmatpush1.bf16.msra.mxu0 0
    %3100 = vmatprep.subr.bf16.mxu0 0
    %3101 = vmatpush1.bf16.msra.mxu0 0
    %3102 = vmatprep.subr.bf16.mxu0 0
    %3103 = vmatpush1.bf16.msra.mxu0 0
    %3104 = vmatprep.subr.bf16.mxu0 0
    %3105 = vmatpush1.bf16.msra.mxu0 0
    %3106 = vmatprep.subr.bf16.mxu0 0
    %3107 = vmatpush1.bf16.msra.mxu0 0
    %3108 = vmatprep.subr.bf16.mxu0 0
    %3109 = vmatpush1.bf16.msra.mxu0 0
    %3110 = vmatprep.subr.bf16.mxu0 0
    %3111 = vmatpush1.bf16.msra.mxu0 0
    %3112 = vmatprep.subr.bf16.mxu0 0
    %3113 = vmatpush1.bf16.msra.mxu0 0
    %3114 = vmatprep.subr.bf16.mxu0 0
    %3115 = vmatpush1.bf16.msra.mxu0 0
    %3116 = vmatprep.subr.bf16.mxu0 0
    %3117 = vmatpush1.bf16.msra.mxu0 0
    %3118 = vmatprep.subr.bf16.mxu0 0
    %3119 = vmatpush1.bf16.msra.mxu0 0
    %3120 = vmatprep.mubr.bf16.mxu0 0
    %3121 = vmatmul.mubr.bf16.gmra.mrb[0].mxu0 %v3086
    %v3122 = vpop.f32.mrb[0].mxu0
    %v3123 = vadd.f32 0.0, %v3122
    %v3124 = vpop.f32.mrb[0].mxu0
    %v3125 = vadd.f32 0.0, %v3124
    %v3126 = vpop.f32.mrb[0].mxu0
    %v3127 = vpop.f32.mrb[0].mxu0
    %3128 = vdwg.mxu0
    %v3129 = vld [vmem:[%s1124] sm:$0xff]
    %v3130 = vadd.f32 %v3123, %v3129
    %v3131 = vld [vmem:[%s1127 + $0x8] sm:$0xff]
    %v3132 = vadd.f32 %v3125, %v3131
    %v3133 = vxor.u32 %v3130, 2147483648
    %v3134 = vmul.f32 %v3133, 1.442695
    %v3135 = vpow.pop %v3134
    %v3136 = vadd.f32 %v3135, 1.0
    %v3137 = vrcp.pop %v3136
    %v3138 = vmul.f32 1.0, %v3137
    %v3139 = vxor.u32 %v3132, 2147483648
    %v3140 = vmul.f32 %v3139, 1.442695
    %v3141 = vpow.pop %v3140
    %v3142 = vadd.f32 %v3141, 1.0
    %v3143 = vrcp.pop %v3142
    %v3144 = vmul.f32 1.0, %v3143
    %v3145 = vmul.f32 %v3138, 2.0
    %v3146 = vsub.f32 %v3145, 1.0
    %v3147 = vmul.f32 %v3144, 2.0
    %v3148 = vsub.f32 %v3147, 1.0
    %v3149 = vmul.f32 %v3138, %v3051
    %3151 = vrot.lane.b32.xlu0 %v3146, 32
    %v3152 = vpop.permute.xlu0 %3151
    %v3154 = vmul.f32 %v3138, %v3152
    %3156 = vrot.lane.b32.xlu0 %v3154, 32
    %v3157 = vpop.permute.xlu0 %3156
    %v3159 = vadd.f32 %v3149, %v3157
    %v3160 = vmul.f32 %v3144, %v3062
    %3162 = vrot.lane.b32.xlu0 %v3148, 32
    %v3163 = vpop.permute.xlu0 %3162
    %v3165 = vmul.f32 %v3144, %v3163
    %3167 = vrot.lane.b32.xlu0 %v3165, 32
    %v3168 = vpop.permute.xlu0 %3167
    %v3170 = vadd.f32 %v3160, %v3168
    %v3171 = vtanh.pop %v3159
    %3173 = vrot.lane.b32.xlu0 %v3171, 32
    %v3174 = vpop.permute.xlu0 %3173
    %v3176 = vmul.f32 %v3138, %v3174
    %v3177 = vtanh.pop %v3170
    %3179 = vrot.lane.b32.xlu0 %v3177, 32
    %v3180 = vpop.permute.xlu0 %3179
    %v3182 = vmul.f32 %v3144, %v3180
    %3184 = vrot.lane.b32.xlu0 %v3176, 64
    %v3185 = vpop.permute.xlu0 %3184
    %3188 = vrot.lane.b32.xlu0 %v3182, 96
    %v3189 = vpop.permute.xlu0 %3188
    %v3191 = vsel %vm451, %v3185, %v3189
    %v3192 = vpack.c.bf16 %v3191, %v3191
    %v3194 = vsel %vm228, %v3192, 0
    %3196 = vmatprep.subr.bf16.mxu0 %v2522
    %3197 = vmatpush1.bf16.msra.mxu0 %v2521
    %3198 = vmatprep.subr.bf16.mxu0 %v2524
    %3199 = vmatpush1.bf16.msra.mxu0 %v2523
    %3200 = vmatprep.subr.bf16.mxu0 %v2526
    %3201 = vmatpush1.bf16.msra.mxu0 %v2525
    %3202 = vmatprep.subr.bf16.mxu0 %v2528
    %3203 = vmatpush1.bf16.msra.mxu0 %v2527
    %3204 = vmatprep.subr.bf16.mxu0 0
    %3205 = vmatpush1.bf16.msra.mxu0 0
    %3206 = vmatprep.subr.bf16.mxu0 0
    %3207 = vmatpush1.bf16.msra.mxu0 0
    %3208 = vmatprep.subr.bf16.mxu0 0
    %3209 = vmatpush1.bf16.msra.mxu0 0
    %3210 = vmatprep.subr.bf16.mxu0 0
    %3211 = vmatpush1.bf16.msra.mxu0 0
    %3212 = vmatprep.subr.bf16.mxu0 0
    %3213 = vmatpush1.bf16.msra.mxu0 0
    %3214 = vmatprep.subr.bf16.mxu0 0
    %3215 = vmatpush1.bf16.msra.mxu0 0
    %3216 = vmatprep.subr.bf16.mxu0 0
    %3217 = vmatpush1.bf16.msra.mxu0 0
    %3218 = vmatprep.subr.bf16.mxu0 0
    %3219 = vmatpush1.bf16.msra.mxu0 0
    %3220 = vmatprep.subr.bf16.mxu0 0
    %3221 = vmatpush1.bf16.msra.mxu0 0
    %3222 = vmatprep.subr.bf16.mxu0 0
    %3223 = vmatpush1.bf16.msra.mxu0 0
    %3224 = vmatprep.subr.bf16.mxu0 0
    %3225 = vmatpush1.bf16.msra.mxu0 0
    %3226 = vmatprep.subr.bf16.mxu0 0
    %3227 = vmatpush1.bf16.msra.mxu0 0
    %3228 = vmatprep.mubr.bf16.mxu0 0
    %3229 = vmatmul.mubr.bf16.gmra.mrb[0].mxu0 %v3194
    %v3230 = vpop.f32.mrb[0].mxu0
    %v3231 = vadd.f32 0.0, %v3230
    %v3232 = vpop.f32.mrb[0].mxu0
    %v3233 = vadd.f32 0.0, %v3232
    %v3234 = vpop.f32.mrb[0].mxu0
    %v3235 = vpop.f32.mrb[0].mxu0
    %3236 = vdwg.mxu0
    %v3237 = vld [vmem:[%s1238] sm:$0xff]
    %v3238 = vadd.f32 %v3231, %v3237
    %v3239 = vld [vmem:[%s1241 + $0x8] sm:$0xff]
    %v3240 = vadd.f32 %v3233, %v3239
    %v3241 = vxor.u32 %v3238, 2147483648
    %v3242 = vmul.f32 %v3241, 1.442695
    %v3243 = vpow.pop %v3242
    %v3244 = vadd.f32 %v3243, 1.0
    %v3245 = vrcp.pop %v3244
    %v3246 = vmul.f32 1.0, %v3245
    %v3247 = vxor.u32 %v3240, 2147483648
    %v3248 = vmul.f32 %v3247, 1.442695
    %v3249 = vpow.pop %v3248
    %v3250 = vadd.f32 %v3249, 1.0
    %v3251 = vrcp.pop %v3250
    %v3252 = vmul.f32 1.0, %v3251
    %v3253 = vmul.f32 %v3246, 2.0
    %v3254 = vsub.f32 %v3253, 1.0
    %v3255 = vmul.f32 %v3252, 2.0
    %v3256 = vsub.f32 %v3255, 1.0
    %v3257 = vmul.f32 %v3246, %v3159
    %3259 = vrot.lane.b32.xlu0 %v3254, 32
    %v3260 = vpop.permute.xlu0 %3259
    %v3262 = vmul.f32 %v3246, %v3260
    %3264 = vrot.lane.b32.xlu0 %v3262, 32
    %v3265 = vpop.permute.xlu0 %3264
    %v3267 = vadd.f32 %v3257, %v3265
    %v3268 = vmul.f32 %v3252, %v3170
    %3270 = vrot.lane.b32.xlu0 %v3256, 32
    %v3271 = vpop.permute.xlu0 %3270
    %v3273 = vmul.f32 %v3252, %v3271
    %3275 = vrot.lane.b32.xlu0 %v3273, 32
    %v3276 = vpop.permute.xlu0 %3275
    %v3278 = vadd.f32 %v3268, %v3276
    %v3279 = vtanh.pop %v3267
    %3281 = vrot.lane.b32.xlu0 %v3279, 32
    %v3282 = vpop.permute.xlu0 %3281
    %v3284 = vmul.f32 %v3246, %v3282
    %v3285 = vtanh.pop %v3278
    %3287 = vrot.lane.b32.xlu0 %v3285, 32
    %v3288 = vpop.permute.xlu0 %3287
    %v3290 = vmul.f32 %v3252, %v3288
    %3292 = vrot.lane.b32.xlu0 %v3284, 64
    %v3293 = vpop.permute.xlu0 %3292
    %3296 = vrot.lane.b32.xlu0 %v3290, 96
    %v3297 = vpop.permute.xlu0 %3296
    %v3299 = vsel %vm451, %v3293, %v3297
    %v3300 = vpack.c.bf16 %v3299, %v3299
    %v3302 = vsel %vm228, %v3300, 0
    %3304 = vmatprep.subr.bf16.mxu0 %v2522
    %3305 = vmatpush1.bf16.msra.mxu0 %v2521
    %3306 = vmatprep.subr.bf16.mxu0 %v2524
    %3307 = vmatpush1.bf16.msra.mxu0 %v2523
    %3308 = vmatprep.subr.bf16.mxu0 %v2526
    %3309 = vmatpush1.bf16.msra.mxu0 %v2525
    %3310 = vmatprep.subr.bf16.mxu0 %v2528
    %3311 = vmatpush1.bf16.msra.mxu0 %v2527
    %3312 = vmatprep.subr.bf16.mxu0 0
    %3313 = vmatpush1.bf16.msra.mxu0 0
    %3314 = vmatprep.subr.bf16.mxu0 0
    %3315 = vmatpush1.bf16.msra.mxu0 0
    %3316 = vmatprep.subr.bf16.mxu0 0
    %3317 = vmatpush1.bf16.msra.mxu0 0
    %3318 = vmatprep.subr.bf16.mxu0 0
    %3319 = vmatpush1.bf16.msra.mxu0 0
    %3320 = vmatprep.subr.bf16.mxu0 0
    %3321 = vmatpush1.bf16.msra.mxu0 0
    %3322 = vmatprep.subr.bf16.mxu0 0
    %3323 = vmatpush1.bf16.msra.mxu0 0
    %3324 = vmatprep.subr.bf16.mxu0 0
    %3325 = vmatpush1.bf16.msra.mxu0 0
    %3326 = vmatprep.subr.bf16.mxu0 0
    %3327 = vmatpush1.bf16.msra.mxu0 0
    %3328 = vmatprep.subr.bf16.mxu0 0
    %3329 = vmatpush1.bf16.msra.mxu0 0
    %3330 = vmatprep.subr.bf16.mxu0 0
    %3331 = vmatpush1.bf16.msra.mxu0 0
    %3332 = vmatprep.subr.bf16.mxu0 0
    %3333 = vmatpush1.bf16.msra.mxu0 0
    %3334 = vmatprep.subr.bf16.mxu0 0
    %3335 = vmatpush1.bf16.msra.mxu0 0
    %3336 = vmatprep.mubr.bf16.mxu0 0
    %3337 = vmatmul.mubr.bf16.gmra.mrb[0].mxu0 %v3302
    %v3338 = vpop.f32.mrb[0].mxu0
    %v3339 = vadd.f32 0.0, %v3338
    %v3340 = vpop.f32.mrb[0].mxu0
    %v3341 = vadd.f32 0.0, %v3340
    %v3342 = vpop.f32.mrb[0].mxu0
    %v3343 = vpop.f32.mrb[0].mxu0
    %3344 = vdwg.mxu0
    %v3345 = vld [vmem:[%s1241] sm:$0xff]
    %v3346 = vadd.f32 %v3339, %v3345
    %v3347 = vld [vmem:[%s1238 + $0x8] sm:$0xff]
    %v3348 = vadd.f32 %v3341, %v3347
    %v3349 = vxor.u32 %v3346, 2147483648
    %v3350 = vmul.f32 %v3349, 1.442695
    %v3351 = vpow.pop %v3350
    %v3352 = vadd.f32 %v3351, 1.0
    %v3353 = vrcp.pop %v3352
    %v3354 = vmul.f32 1.0, %v3353
    %v3355 = vxor.u32 %v3348, 2147483648
    %v3356 = vmul.f32 %v3355, 1.442695
    %v3357 = vpow.pop %v3356
    %v3358 = vadd.f32 %v3357, 1.0
    %v3359 = vrcp.pop %v3358
    %v3360 = vmul.f32 1.0, %v3359
    %v3361 = vmul.f32 %v3354, 2.0
    %v3362 = vsub.f32 %v3361, 1.0
    %v3363 = vmul.f32 %v3360, 2.0
    %v3364 = vsub.f32 %v3363, 1.0
    %v3365 = vmul.f32 %v3354, %v3267
    %3367 = vrot.lane.b32.xlu0 %v3362, 32
    %v3368 = vpop.permute.xlu0 %3367
    %v3370 = vmul.f32 %v3354, %v3368
    %3372 = vrot.lane.b32.xlu0 %v3370, 32
    %v3373 = vpop.permute.xlu0 %3372
    %v3375 = vadd.f32 %v3365, %v3373
    %v3376 = vmul.f32 %v3360, %v3278
    %3378 = vrot.lane.b32.xlu0 %v3364, 32
    %v3379 = vpop.permute.xlu0 %3378
    %v3381 = vmul.f32 %v3360, %v3379
    %3383 = vrot.lane.b32.xlu0 %v3381, 32
    %v3384 = vpop.permute.xlu0 %3383
    %v3386 = vadd.f32 %v3376, %v3384
    %v3387 = vtanh.pop %v3375
    %3389 = vrot.lane.b32.xlu0 %v3387, 32
    %v3390 = vpop.permute.xlu0 %3389
    %v3392 = vmul.f32 %v3354, %v3390
    %v3393 = vtanh.pop %v3386
    %3395 = vrot.lane.b32.xlu0 %v3393, 32
    %v3396 = vpop.permute.xlu0 %3395
    %v3398 = vmul.f32 %v3360, %v3396
    %3400 = vrot.lane.b32.xlu0 %v3392, 64
    %v3401 = vpop.permute.xlu0 %3400
    %3404 = vrot.lane.b32.xlu0 %v3398, 96
    %v3405 = vpop.permute.xlu0 %3404
    %v3407 = vsel %vm451, %v3401, %v3405
    %v3408 = vpack.c.bf16 %v3407, %v3407
    %v3410 = vsel %vm228, %v3408, 0
    %3412 = vmatprep.subr.bf16.mxu0 %v2522
    %3413 = vmatpush1.bf16.msra.mxu0 %v2521
    %3414 = vmatprep.subr.bf16.mxu0 %v2524
    %3415 = vmatpush1.bf16.msra.mxu0 %v2523
    %3416 = vmatprep.subr.bf16.mxu0 %v2526
    %3417 = vmatpush1.bf16.msra.mxu0 %v2525
    %3418 = vmatprep.subr.bf16.mxu0 %v2528
    %3419 = vmatpush1.bf16.msra.mxu0 %v2527
    %3420 = vmatprep.subr.bf16.mxu0 0
    %3421 = vmatpush1.bf16.msra.mxu0 0
    %3422 = vmatprep.subr.bf16.mxu0 0
    %3423 = vmatpush1.bf16.msra.mxu0 0
    %3424 = vmatprep.subr.bf16.mxu0 0
    %3425 = vmatpush1.bf16.msra.mxu0 0
    %3426 = vmatprep.subr.bf16.mxu0 0
    %3427 = vmatpush1.bf16.msra.mxu0 0
    %3428 = vmatprep.subr.bf16.mxu0 0
    %3429 = vmatpush1.bf16.msra.mxu0 0
    %3430 = vmatprep.subr.bf16.mxu0 0
    %3431 = vmatpush1.bf16.msra.mxu0 0
    %3432 = vmatprep.subr.bf16.mxu0 0
    %3433 = vmatpush1.bf16.msra.mxu0 0
    %3434 = vmatprep.subr.bf16.mxu0 0
    %3435 = vmatpush1.bf16.msra.mxu0 0
    %3436 = vmatprep.subr.bf16.mxu0 0
    %3437 = vmatpush1.bf16.msra.mxu0 0
    %3438 = vmatprep.subr.bf16.mxu0 0
    %3439 = vmatpush1.bf16.msra.mxu0 0
    %3440 = vmatprep.subr.bf16.mxu0 0
    %3441 = vmatpush1.bf16.msra.mxu0 0
    %3442 = vmatprep.subr.bf16.mxu0 0
    %3443 = vmatpush1.bf16.msra.mxu0 0
    %3444 = vmatprep.mubr.bf16.mxu0 0
    %3445 = vmatmul.mubr.bf16.gmra.mrb[0].mxu0 %v3410
    %v3446 = vpop.f32.mrb[0].mxu0
    %v3447 = vadd.f32 0.0, %v3446
    %v3448 = vpop.f32.mrb[0].mxu0
    %v3449 = vadd.f32 0.0, %v3448
    %v3450 = vpop.f32.mrb[0].mxu0
    %v3451 = vpop.f32.mrb[0].mxu0
    %3452 = vdwg.mxu0
    %v3453 = vld [vmem:[%s1127] sm:$0xff]
    %v3454 = vadd.f32 %v3447, %v3453
    %v3455 = vld [vmem:[%s1124 + $0x8] sm:$0xff]
    %v3456 = vadd.f32 %v3449, %v3455
    %v3457 = vxor.u32 %v3454, 2147483648
    %v3458 = vmul.f32 %v3457, 1.442695
    %v3459 = vpow.pop %v3458
    %v3460 = vadd.f32 %v3459, 1.0
    %v3461 = vrcp.pop %v3460
    %v3462 = vmul.f32 1.0, %v3461
    %v3463 = vxor.u32 %v3456, 2147483648
    %v3464 = vmul.f32 %v3463, 1.442695
    %v3465 = vpow.pop %v3464
    %v3466 = vadd.f32 %v3465, 1.0
    %v3467 = vrcp.pop %v3466
    %v3468 = vmul.f32 1.0, %v3467
    %v3469 = vmul.f32 %v3462, 2.0
    %v3470 = vsub.f32 %v3469, 1.0
    %v3471 = vmul.f32 %v3468, 2.0
    %v3472 = vsub.f32 %v3471, 1.0
    %v3473 = vmul.f32 %v3462, %v3375
    %3475 = vrot.lane.b32.xlu0 %v3470, 32
    %v3476 = vpop.permute.xlu0 %3475
    %v3478 = vmul.f32 %v3462, %v3476
    %3480 = vrot.lane.b32.xlu0 %v3478, 32
    %v3481 = vpop.permute.xlu0 %3480
    %v3483 = vadd.f32 %v3473, %v3481
    %v3484 = vmul.f32 %v3468, %v3386
    %3486 = vrot.lane.b32.xlu0 %v3472, 32
    %v3487 = vpop.permute.xlu0 %3486
    %v3489 = vmul.f32 %v3468, %v3487
    %3491 = vrot.lane.b32.xlu0 %v3489, 32
    %v3492 = vpop.permute.xlu0 %3491
    %v3494 = vadd.f32 %v3484, %v3492
    %v3495 = vtanh.pop %v3483
    %3497 = vrot.lane.b32.xlu0 %v3495, 32
    %v3498 = vpop.permute.xlu0 %3497
    %v3500 = vmul.f32 %v3462, %v3498
    %v3501 = vtanh.pop %v3494
    %3503 = vrot.lane.b32.xlu0 %v3501, 32
    %v3504 = vpop.permute.xlu0 %3503
    %v3506 = vmul.f32 %v3468, %v3504
    %3508 = vrot.lane.b32.xlu0 %v3500, 64
    %v3509 = vpop.permute.xlu0 %3508
    %3512 = vrot.lane.b32.xlu0 %v3506, 96
    %v3513 = vpop.permute.xlu0 %3512
    %v3515 = vsel %vm451, %v3509, %v3513
    %v3516 = vpack.c.bf16 %v3515, %v3515
    %v3518 = vsel %vm228, %v3516, 0
    %3520 = vmatprep.subr.bf16.mxu0 %v2522
    %3521 = vmatpush1.bf16.msra.mxu0 %v2521
    %3522 = vmatprep.subr.bf16.mxu0 %v2524
    %3523 = vmatpush1.bf16.msra.mxu0 %v2523
    %3524 = vmatprep.subr.bf16.mxu0 %v2526
    %3525 = vmatpush1.bf16.msra.mxu0 %v2525
    %3526 = vmatprep.subr.bf16.mxu0 %v2528
    %3527 = vmatpush1.bf16.msra.mxu0 %v2527
    %3528 = vmatprep.subr.bf16.mxu0 0
    %3529 = vmatpush1.bf16.msra.mxu0 0
    %3530 = vmatprep.subr.bf16.mxu0 0
    %3531 = vmatpush1.bf16.msra.mxu0 0
    %3532 = vmatprep.subr.bf16.mxu0 0
    %3533 = vmatpush1.bf16.msra.mxu0 0
    %3534 = vmatprep.subr.bf16.mxu0 0
    %3535 = vmatpush1.bf16.msra.mxu0 0
    %3536 = vmatprep.subr.bf16.mxu0 0
    %3537 = vmatpush1.bf16.msra.mxu0 0
    %3538 = vmatprep.subr.bf16.mxu0 0
    %3539 = vmatpush1.bf16.msra.mxu0 0
    %3540 = vmatprep.subr.bf16.mxu0 0
    %3541 = vmatpush1.bf16.msra.mxu0 0
    %3542 = vmatprep.subr.bf16.mxu0 0
    %3543 = vmatpush1.bf16.msra.mxu0 0
    %3544 = vmatprep.subr.bf16.mxu0 0
    %3545 = vmatpush1.bf16.msra.mxu0 0
    %3546 = vmatprep.subr.bf16.mxu0 0
    %3547 = vmatpush1.bf16.msra.mxu0 0
    %3548 = vmatprep.subr.bf16.mxu0 0
    %3549 = vmatpush1.bf16.msra.mxu0 0
    %3550 = vmatprep.subr.bf16.mxu0 0
    %3551 = vmatpush1.bf16.msra.mxu0 0
    %3552 = vmatprep.mubr.bf16.mxu0 0
    %3553 = vmatmul.mubr.bf16.gmra.mrb[0].mxu0 %v3518
    %v3554 = vpop.f32.mrb[0].mxu0
    %v3555 = vadd.f32 0.0, %v3554
    %v3556 = vpop.f32.mrb[0].mxu0
    %v3557 = vadd.f32 0.0, %v3556
    %v3558 = vpop.f32.mrb[0].mxu0
    %v3559 = vpop.f32.mrb[0].mxu0
    %3560 = vdwg.mxu0
    %v3561 = vld [vmem:[%s1013] sm:$0xff]
    %v3562 = vadd.f32 %v3555, %v3561
    %v3563 = vld [vmem:[%s1010 + $0x8] sm:$0xff]
    %v3564 = vadd.f32 %v3557, %v3563
    %v3565 = vxor.u32 %v3562, 2147483648
    %v3566 = vmul.f32 %v3565, 1.442695
    %v3567 = vpow.pop %v3566
    %v3568 = vadd.f32 %v3567, 1.0
    %v3569 = vrcp.pop %v3568
    %v3570 = vmul.f32 1.0, %v3569
    %v3571 = vxor.u32 %v3564, 2147483648
    %v3572 = vmul.f32 %v3571, 1.442695
    %v3573 = vpow.pop %v3572
    %v3574 = vadd.f32 %v3573, 1.0
    %v3575 = vrcp.pop %v3574
    %v3576 = vmul.f32 1.0, %v3575
    %v3577 = vmul.f32 %v3570, 2.0
    %v3578 = vsub.f32 %v3577, 1.0
    %v3579 = vmul.f32 %v3576, 2.0
    %v3580 = vsub.f32 %v3579, 1.0
    %v3581 = vmul.f32 %v3570, %v3483
    %3583 = vrot.lane.b32.xlu0 %v3578, 32
    %v3584 = vpop.permute.xlu0 %3583
    %v3586 = vmul.f32 %v3570, %v3584
    %3588 = vrot.lane.b32.xlu0 %v3586, 32
    %v3589 = vpop.permute.xlu0 %3588
    %v3591 = vadd.f32 %v3581, %v3589
    %v3592 = vmul.f32 %v3576, %v3494
    %3594 = vrot.lane.b32.xlu0 %v3580, 32
    %v3595 = vpop.permute.xlu0 %3594
    %v3597 = vmul.f32 %v3576, %v3595
    %3599 = vrot.lane.b32.xlu0 %v3597, 32
    %v3600 = vpop.permute.xlu0 %3599
    %v3602 = vadd.f32 %v3592, %v3600
    %v3603 = vtanh.pop %v3591
    %3605 = vrot.lane.b32.xlu0 %v3603, 32
    %v3606 = vpop.permute.xlu0 %3605
    %v3608 = vmul.f32 %v3570, %v3606
    %v3609 = vtanh.pop %v3602
    %3611 = vrot.lane.b32.xlu0 %v3609, 32
    %v3612 = vpop.permute.xlu0 %3611
    %v3614 = vmul.f32 %v3576, %v3612
    %3616 = vrot.lane.b32.xlu0 %v3608, 64
    %v3617 = vpop.permute.xlu0 %3616
    %3620 = vrot.lane.b32.xlu0 %v3614, 96
    %v3621 = vpop.permute.xlu0 %3620
    %v3623 = vsel %vm451, %v3617, %v3621
    %v3624 = vpack.c.bf16 %v3623, %v3623
    %v3626 = vsel %vm228, %v3624, 0
    %3628 = vmatprep.subr.bf16.mxu0 %v2522
    %3629 = vmatpush1.bf16.msra.mxu0 %v2521
    %3630 = vmatprep.subr.bf16.mxu0 %v2524
    %3631 = vmatpush1.bf16.msra.mxu0 %v2523
    %3632 = vmatprep.subr.bf16.mxu0 %v2526
    %3633 = vmatpush1.bf16.msra.mxu0 %v2525
    %3634 = vmatprep.subr.bf16.mxu0 %v2528
    %3635 = vmatpush1.bf16.msra.mxu0 %v2527
    %3636 = vmatprep.subr.bf16.mxu0 0
    %3637 = vmatpush1.bf16.msra.mxu0 0
    %3638 = vmatprep.subr.bf16.mxu0 0
    %3639 = vmatpush1.bf16.msra.mxu0 0
    %3640 = vmatprep.subr.bf16.mxu0 0
    %3641 = vmatpush1.bf16.msra.mxu0 0
    %3642 = vmatprep.subr.bf16.mxu0 0
    %3643 = vmatpush1.bf16.msra.mxu0 0
    %3644 = vmatprep.subr.bf16.mxu0 0
    %3645 = vmatpush1.bf16.msra.mxu0 0
    %3646 = vmatprep.subr.bf16.mxu0 0
    %3647 = vmatpush1.bf16.msra.mxu0 0
    %3648 = vmatprep.subr.bf16.mxu0 0
    %3649 = vmatpush1.bf16.msra.mxu0 0
    %3650 = vmatprep.subr.bf16.mxu0 0
    %3651 = vmatpush1.bf16.msra.mxu0 0
    %3652 = vmatprep.subr.bf16.mxu0 0
    %3653 = vmatpush1.bf16.msra.mxu0 0
    %3654 = vmatprep.subr.bf16.mxu0 0
    %3655 = vmatpush1.bf16.msra.mxu0 0
    %3656 = vmatprep.subr.bf16.mxu0 0
    %3657 = vmatpush1.bf16.msra.mxu0 0
    %3658 = vmatprep.subr.bf16.mxu0 0
    %3659 = vmatpush1.bf16.msra.mxu0 0
    %3660 = vmatprep.mubr.bf16.mxu0 0
    %3661 = vmatmul.mubr.bf16.gmra.mrb[0].mxu0 %v3626
    %v3662 = vpop.f32.mrb[0].mxu0
    %v3663 = vadd.f32 0.0, %v3662
    %v3664 = vpop.f32.mrb[0].mxu0
    %v3665 = vadd.f32 0.0, %v3664
    %v3666 = vpop.f32.mrb[0].mxu0
    %v3667 = vpop.f32.mrb[0].mxu0
    %3668 = vdwg.mxu0
    %v3669 = vld [vmem:[%s899] sm:$0xff]
    %v3670 = vadd.f32 %v3663, %v3669
    %v3671 = vld [vmem:[%s896 + $0x8] sm:$0xff]
    %v3672 = vadd.f32 %v3665, %v3671
    %v3673 = vxor.u32 %v3670, 2147483648
    %v3674 = vmul.f32 %v3673, 1.442695
    %v3675 = vpow.pop %v3674
    %v3676 = vadd.f32 %v3675, 1.0
    %v3677 = vrcp.pop %v3676
    %v3678 = vmul.f32 1.0, %v3677
    %v3679 = vxor.u32 %v3672, 2147483648
    %v3680 = vmul.f32 %v3679, 1.442695
    %v3681 = vpow.pop %v3680
    %v3682 = vadd.f32 %v3681, 1.0
    %v3683 = vrcp.pop %v3682
    %v3684 = vmul.f32 1.0, %v3683
    %v3685 = vmul.f32 %v3678, 2.0
    %v3686 = vsub.f32 %v3685, 1.0
    %v3687 = vmul.f32 %v3684, 2.0
    %v3688 = vsub.f32 %v3687, 1.0
    %v3689 = vmul.f32 %v3678, %v3591
    %3691 = vrot.lane.b32.xlu0 %v3686, 32
    %v3692 = vpop.permute.xlu0 %3691
    %v3694 = vmul.f32 %v3678, %v3692
    %3696 = vrot.lane.b32.xlu0 %v3694, 32
    %v3697 = vpop.permute.xlu0 %3696
    %v3699 = vadd.f32 %v3689, %v3697
    %v3700 = vmul.f32 %v3684, %v3602
    %3702 = vrot.lane.b32.xlu0 %v3688, 32
    %v3703 = vpop.permute.xlu0 %3702
    %v3705 = vmul.f32 %v3684, %v3703
    %3707 = vrot.lane.b32.xlu0 %v3705, 32
    %v3708 = vpop.permute.xlu0 %3707
    %v3710 = vadd.f32 %v3700, %v3708
    %v3711 = vtanh.pop %v3699
    %3713 = vrot.lane.b32.xlu0 %v3711, 32
    %v3714 = vpop.permute.xlu0 %3713
    %v3716 = vmul.f32 %v3678, %v3714
    %v3717 = vtanh.pop %v3710
    %3719 = vrot.lane.b32.xlu0 %v3717, 32
    %v3720 = vpop.permute.xlu0 %3719
    %v3722 = vmul.f32 %v3684, %v3720
    %3724 = vrot.lane.b32.xlu0 %v3716, 64
    %v3725 = vpop.permute.xlu0 %3724
    %3728 = vrot.lane.b32.xlu0 %v3722, 96
    %v3729 = vpop.permute.xlu0 %3728
    %v3731 = vsel %vm451, %v3725, %v3729
    %v3732 = vpack.c.bf16 %v3731, %v3731
    %v3734 = vsel %vm228, %v3732, 0
    %3736 = vmatprep.subr.bf16.mxu0 %v2522
    %3737 = vmatpush1.bf16.msra.mxu0 %v2521
    %3738 = vmatprep.subr.bf16.mxu0 %v2524
    %3739 = vmatpush1.bf16.msra.mxu0 %v2523
    %3740 = vmatprep.subr.bf16.mxu0 %v2526
    %3741 = vmatpush1.bf16.msra.mxu0 %v2525
    %3742 = vmatprep.subr.bf16.mxu0 %v2528
    %3743 = vmatpush1.bf16.msra.mxu0 %v2527
    %3744 = vmatprep.subr.bf16.mxu0 0
    %3745 = vmatpush1.bf16.msra.mxu0 0
    %3746 = vmatprep.subr.bf16.mxu0 0
    %3747 = vmatpush1.bf16.msra.mxu0 0
    %3748 = vmatprep.subr.bf16.mxu0 0
    %3749 = vmatpush1.bf16.msra.mxu0 0
    %3750 = vmatprep.subr.bf16.mxu0 0
    %3751 = vmatpush1.bf16.msra.mxu0 0
    %3752 = vmatprep.subr.bf16.mxu0 0
    %3753 = vmatpush1.bf16.msra.mxu0 0
    %3754 = vmatprep.subr.bf16.mxu0 0
    %3755 = vmatpush1.bf16.msra.mxu0 0
    %3756 = vmatprep.subr.bf16.mxu0 0
    %3757 = vmatpush1.bf16.msra.mxu0 0
    %3758 = vmatprep.subr.bf16.mxu0 0
    %3759 = vmatpush1.bf16.msra.mxu0 0
    %3760 = vmatprep.subr.bf16.mxu0 0
    %3761 = vmatpush1.bf16.msra.mxu0 0
    %3762 = vmatprep.subr.bf16.mxu0 0
    %3763 = vmatpush1.bf16.msra.mxu0 0
    %3764 = vmatprep.subr.bf16.mxu0 0
    %3765 = vmatpush1.bf16.msra.mxu0 0
    %3766 = vmatprep.subr.bf16.mxu0 0
    %3767 = vmatpush1.bf16.msra.mxu0 0
    %3768 = vmatprep.mubr.bf16.mxu0 0
    %3769 = vmatmul.mubr.bf16.gmra.mrb[0].mxu0 %v3734
    %v3770 = vpop.f32.mrb[0].mxu0
    %v3771 = vadd.f32 0.0, %v3770
    %v3772 = vpop.f32.mrb[0].mxu0
    %v3773 = vadd.f32 0.0, %v3772
    %v3774 = vpop.f32.mrb[0].mxu0
    %v3775 = vpop.f32.mrb[0].mxu0
    %3776 = vdwg.mxu0
    %v3777 = vld [vmem:[%s785] sm:$0xff]
    %v3778 = vadd.f32 %v3771, %v3777
    %v3779 = vld [vmem:[%s782 + $0x8] sm:$0xff]
    %v3780 = vadd.f32 %v3773, %v3779
    %v3781 = vxor.u32 %v3778, 2147483648
    %v3782 = vmul.f32 %v3781, 1.442695
    %v3783 = vpow.pop %v3782
    %v3784 = vadd.f32 %v3783, 1.0
    %v3785 = vrcp.pop %v3784
    %v3786 = vmul.f32 1.0, %v3785
    %v3787 = vxor.u32 %v3780, 2147483648
    %v3788 = vmul.f32 %v3787, 1.442695
    %v3789 = vpow.pop %v3788
    %v3790 = vadd.f32 %v3789, 1.0
    %v3791 = vrcp.pop %v3790
    %v3792 = vmul.f32 1.0, %v3791
    %v3793 = vmul.f32 %v3786, 2.0
    %v3794 = vsub.f32 %v3793, 1.0
    %v3795 = vmul.f32 %v3792, 2.0
    %v3796 = vsub.f32 %v3795, 1.0
    %v3797 = vmul.f32 %v3786, %v3699
    %3799 = vrot.lane.b32.xlu0 %v3794, 32
    %v3800 = vpop.permute.xlu0 %3799
    %v3802 = vmul.f32 %v3786, %v3800
    %3804 = vrot.lane.b32.xlu0 %v3802, 32
    %v3805 = vpop.permute.xlu0 %3804
    %v3807 = vadd.f32 %v3797, %v3805
    %v3808 = vmul.f32 %v3792, %v3710
    %3810 = vrot.lane.b32.xlu0 %v3796, 32
    %v3811 = vpop.permute.xlu0 %3810
    %v3813 = vmul.f32 %v3792, %v3811
    %3815 = vrot.lane.b32.xlu0 %v3813, 32
    %v3816 = vpop.permute.xlu0 %3815
    %v3818 = vadd.f32 %v3808, %v3816
    %v3819 = vtanh.pop %v3807
    %3821 = vrot.lane.b32.xlu0 %v3819, 32
    %v3822 = vpop.permute.xlu0 %3821
    %v3824 = vmul.f32 %v3786, %v3822
    %v3825 = vtanh.pop %v3818
    %3827 = vrot.lane.b32.xlu0 %v3825, 32
    %v3828 = vpop.permute.xlu0 %3827
    %v3830 = vmul.f32 %v3792, %v3828
    %3832 = vrot.lane.b32.xlu0 %v3824, 64
    %v3833 = vpop.permute.xlu0 %3832
    %3836 = vrot.lane.b32.xlu0 %v3830, 96
    %v3837 = vpop.permute.xlu0 %3836
    %v3839 = vsel %vm451, %v3833, %v3837
    %v3840 = vpack.c.bf16 %v3839, %v3839
    %v3842 = vsel %vm228, %v3840, 0
    %3844 = vmatprep.subr.bf16.mxu0 %v2522
    %3845 = vmatpush1.bf16.msra.mxu0 %v2521
    %3846 = vmatprep.subr.bf16.mxu0 %v2524
    %3847 = vmatpush1.bf16.msra.mxu0 %v2523
    %3848 = vmatprep.subr.bf16.mxu0 %v2526
    %3849 = vmatpush1.bf16.msra.mxu0 %v2525
    %3850 = vmatprep.subr.bf16.mxu0 %v2528
    %3851 = vmatpush1.bf16.msra.mxu0 %v2527
    %3852 = vmatprep.subr.bf16.mxu0 0
    %3853 = vmatpush1.bf16.msra.mxu0 0
    %3854 = vmatprep.subr.bf16.mxu0 0
    %3855 = vmatpush1.bf16.msra.mxu0 0
    %3856 = vmatprep.subr.bf16.mxu0 0
    %3857 = vmatpush1.bf16.msra.mxu0 0
    %3858 = vmatprep.subr.bf16.mxu0 0
    %3859 = vmatpush1.bf16.msra.mxu0 0
    %3860 = vmatprep.subr.bf16.mxu0 0
    %3861 = vmatpush1.bf16.msra.mxu0 0
    %3862 = vmatprep.subr.bf16.mxu0 0
    %3863 = vmatpush1.bf16.msra.mxu0 0
    %3864 = vmatprep.subr.bf16.mxu0 0
    %3865 = vmatpush1.bf16.msra.mxu0 0
    %3866 = vmatprep.subr.bf16.mxu0 0
    %3867 = vmatpush1.bf16.msra.mxu0 0
    %3868 = vmatprep.subr.bf16.mxu0 0
    %3869 = vmatpush1.bf16.msra.mxu0 0
    %3870 = vmatprep.subr.bf16.mxu0 0
    %3871 = vmatpush1.bf16.msra.mxu0 0
    %3872 = vmatprep.subr.bf16.mxu0 0
    %3873 = vmatpush1.bf16.msra.mxu0 0
    %3874 = vmatprep.subr.bf16.mxu0 0
    %3875 = vmatpush1.bf16.msra.mxu0 0
    %3876 = vmatprep.mubr.bf16.mxu0 0
    %3877 = vmatmul.mubr.bf16.gmra.mrb[0].mxu0 %v3842
    %v3878 = vpop.f32.mrb[0].mxu0
    %v3879 = vadd.f32 0.0, %v3878
    %v3880 = vpop.f32.mrb[0].mxu0
    %v3881 = vadd.f32 0.0, %v3880
    %v3882 = vpop.f32.mrb[0].mxu0
    %v3883 = vpop.f32.mrb[0].mxu0
    %3884 = vdwg.mxu0
    %v3885 = vld [vmem:[%s671] sm:$0xff]
    %v3886 = vadd.f32 %v3879, %v3885
    %v3887 = vld [vmem:[%s668 + $0x8] sm:$0xff]
    %v3888 = vadd.f32 %v3881, %v3887
    %v3889 = vxor.u32 %v3886, 2147483648
    %v3890 = vmul.f32 %v3889, 1.442695
    %v3891 = vpow.pop %v3890
    %v3892 = vadd.f32 %v3891, 1.0
    %v3893 = vrcp.pop %v3892
    %v3894 = vmul.f32 1.0, %v3893
    %v3895 = vxor.u32 %v3888, 2147483648
    %v3896 = vmul.f32 %v3895, 1.442695
    %v3897 = vpow.pop %v3896
    %v3898 = vadd.f32 %v3897, 1.0
    %v3899 = vrcp.pop %v3898
    %v3900 = vmul.f32 1.0, %v3899
    %v3901 = vmul.f32 %v3894, 2.0
    %v3902 = vsub.f32 %v3901, 1.0
    %v3903 = vmul.f32 %v3900, 2.0
    %v3904 = vsub.f32 %v3903, 1.0
    %v3905 = vmul.f32 %v3894, %v3807
    %3907 = vrot.lane.b32.xlu0 %v3902, 32
    %v3908 = vpop.permute.xlu0 %3907
    %v3910 = vmul.f32 %v3894, %v3908
    %3912 = vrot.lane.b32.xlu0 %v3910, 32
    %v3913 = vpop.permute.xlu0 %3912
    %v3915 = vadd.f32 %v3905, %v3913
    %v3916 = vmul.f32 %v3900, %v3818
    %3918 = vrot.lane.b32.xlu0 %v3904, 32
    %v3919 = vpop.permute.xlu0 %3918
    %v3921 = vmul.f32 %v3900, %v3919
    %3923 = vrot.lane.b32.xlu0 %v3921, 32
    %v3924 = vpop.permute.xlu0 %3923
    %v3926 = vadd.f32 %v3916, %v3924
    %v3927 = vtanh.pop %v3915
    %3929 = vrot.lane.b32.xlu0 %v3927, 32
    %v3930 = vpop.permute.xlu0 %3929
    %v3932 = vmul.f32 %v3894, %v3930
    %v3933 = vtanh.pop %v3926
    %3935 = vrot.lane.b32.xlu0 %v3933, 32
    %v3936 = vpop.permute.xlu0 %3935
    %v3938 = vmul.f32 %v3900, %v3936
    %3940 = vrot.lane.b32.xlu0 %v3932, 64
    %v3941 = vpop.permute.xlu0 %3940
    %3944 = vrot.lane.b32.xlu0 %v3938, 96
    %v3945 = vpop.permute.xlu0 %3944
    %v3947 = vsel %vm451, %v3941, %v3945
    %v3948 = vpack.c.bf16 %v3947, %v3947
    %v3950 = vsel %vm228, %v3948, 0
    %3952 = vmatprep.subr.bf16.mxu0 %v2522
    %3953 = vmatpush1.bf16.msra.mxu0 %v2521
    %3954 = vmatprep.subr.bf16.mxu0 %v2524
    %3955 = vmatpush1.bf16.msra.mxu0 %v2523
    %3956 = vmatprep.subr.bf16.mxu0 %v2526
    %3957 = vmatpush1.bf16.msra.mxu0 %v2525
    %3958 = vmatprep.subr.bf16.mxu0 %v2528
    %3959 = vmatpush1.bf16.msra.mxu0 %v2527
    %3960 = vmatprep.subr.bf16.mxu0 0
    %3961 = vmatpush1.bf16.msra.mxu0 0
    %3962 = vmatprep.subr.bf16.mxu0 0
    %3963 = vmatpush1.bf16.msra.mxu0 0
    %3964 = vmatprep.subr.bf16.mxu0 0
    %3965 = vmatpush1.bf16.msra.mxu0 0
    %3966 = vmatprep.subr.bf16.mxu0 0
    %3967 = vmatpush1.bf16.msra.mxu0 0
    %3968 = vmatprep.subr.bf16.mxu0 0
    %3969 = vmatpush1.bf16.msra.mxu0 0
    %3970 = vmatprep.subr.bf16.mxu0 0
    %3971 = vmatpush1.bf16.msra.mxu0 0
    %3972 = vmatprep.subr.bf16.mxu0 0
    %3973 = vmatpush1.bf16.msra.mxu0 0
    %3974 = vmatprep.subr.bf16.mxu0 0
    %3975 = vmatpush1.bf16.msra.mxu0 0
    %3976 = vmatprep.subr.bf16.mxu0 0
    %3977 = vmatpush1.bf16.msra.mxu0 0
    %3978 = vmatprep.subr.bf16.mxu0 0
    %3979 = vmatpush1.bf16.msra.mxu0 0
    %3980 = vmatprep.subr.bf16.mxu0 0
    %3981 = vmatpush1.bf16.msra.mxu0 0
    %3982 = vmatprep.subr.bf16.mxu0 0
    %3983 = vmatpush1.bf16.msra.mxu0 0
    %3984 = vmatprep.mubr.bf16.mxu0 0
    %3985 = vmatmul.mubr.bf16.gmra.mrb[0].mxu0 %v3950
    %v3986 = vpop.f32.mrb[0].mxu0
    %v3987 = vadd.f32 0.0, %v3986
    %v3988 = vpop.f32.mrb[0].mxu0
    %v3989 = vadd.f32 0.0, %v3988
    %v3990 = vpop.f32.mrb[0].mxu0
    %v3991 = vpop.f32.mrb[0].mxu0
    %3992 = vdwg.mxu0
    %v3993 = vld [vmem:[%s549] sm:$0xff]
    %v3994 = vadd.f32 %v3987, %v3993
    %v3995 = vld [vmem:[%s546 + $0x8] sm:$0xff]
    %v3996 = vadd.f32 %v3989, %v3995
    %v3997 = vxor.u32 %v3994, 2147483648
    %v3998 = vmul.f32 %v3997, 1.442695
    %v3999 = vpow.pop %v3998
    %v4000 = vadd.f32 %v3999, 1.0
    %v4001 = vrcp.pop %v4000
    %v4002 = vmul.f32 1.0, %v4001
    %v4003 = vxor.u32 %v3996, 2147483648
    %v4004 = vmul.f32 %v4003, 1.442695
    %v4005 = vpow.pop %v4004
    %v4006 = vadd.f32 %v4005, 1.0
    %v4007 = vrcp.pop %v4006
    %v4008 = vmul.f32 1.0, %v4007
    %v4009 = vmul.f32 %v4002, 2.0
    %v4010 = vsub.f32 %v4009, 1.0
    %v4011 = vmul.f32 %v4008, 2.0
    %v4012 = vsub.f32 %v4011, 1.0
    %v4013 = vmul.f32 %v4002, %v3915
    %4015 = vrot.lane.b32.xlu0 %v4010, 32
    %v4016 = vpop.permute.xlu0 %4015
    %v4018 = vmul.f32 %v4002, %v4016
    %4020 = vrot.lane.b32.xlu0 %v4018, 32
    %v4021 = vpop.permute.xlu0 %4020
    %v4023 = vadd.f32 %v4013, %v4021
    %v4024 = vmul.f32 %v4008, %v3926
    %4026 = vrot.lane.b32.xlu0 %v4012, 32
    %v4027 = vpop.permute.xlu0 %4026
    %v4029 = vmul.f32 %v4008, %v4027
    %4031 = vrot.lane.b32.xlu0 %v4029, 32
    %v4032 = vpop.permute.xlu0 %4031
    %v4034 = vadd.f32 %v4024, %v4032
    %v4035 = vtanh.pop %v4023
    %4037 = vrot.lane.b32.xlu0 %v4035, 32
    %v4038 = vpop.permute.xlu0 %4037
    %v4040 = vmul.f32 %v4002, %v4038
    %v4041 = vtanh.pop %v4034
    %4043 = vrot.lane.b32.xlu0 %v4041, 32
    %v4044 = vpop.permute.xlu0 %4043
    %v4046 = vmul.f32 %v4008, %v4044
    %4048 = vrot.lane.b32.xlu0 %v4040, 64
    %v4049 = vpop.permute.xlu0 %4048
    %4052 = vrot.lane.b32.xlu0 %v4046, 96
    %v4053 = vpop.permute.xlu0 %4052
    %v4055 = vsel %vm451, %v4049, %v4053
    %v4056 = vpack.c.bf16 %v4055, %v4055
    %v4058 = vsel %vm228, %v4056, 0
    %4060 = vmatprep.subr.bf16.mxu0 %v2522
    %4061 = vmatpush1.bf16.msra.mxu0 %v2521
    %4062 = vmatprep.subr.bf16.mxu0 %v2524
    %4063 = vmatpush1.bf16.msra.mxu0 %v2523
    %4064 = vmatprep.subr.bf16.mxu0 %v2526
    %4065 = vmatpush1.bf16.msra.mxu0 %v2525
    %4066 = vmatprep.subr.bf16.mxu0 %v2528
    %4067 = vmatpush1.bf16.msra.mxu0 %v2527
    %4068 = vmatprep.subr.bf16.mxu0 0
    %4069 = vmatpush1.bf16.msra.mxu0 0
    %4070 = vmatprep.subr.bf16.mxu0 0
    %4071 = vmatpush1.bf16.msra.mxu0 0
    %4072 = vmatprep.subr.bf16.mxu0 0
    %4073 = vmatpush1.bf16.msra.mxu0 0
    %4074 = vmatprep.subr.bf16.mxu0 0
    %4075 = vmatpush1.bf16.msra.mxu0 0
    %4076 = vmatprep.subr.bf16.mxu0 0
    %4077 = vmatpush1.bf16.msra.mxu0 0
    %4078 = vmatprep.subr.bf16.mxu0 0
    %4079 = vmatpush1.bf16.msra.mxu0 0
    %4080 = vmatprep.subr.bf16.mxu0 0
    %4081 = vmatpush1.bf16.msra.mxu0 0
    %4082 = vmatprep.subr.bf16.mxu0 0
    %4083 = vmatpush1.bf16.msra.mxu0 0
    %4084 = vmatprep.subr.bf16.mxu0 0
    %4085 = vmatpush1.bf16.msra.mxu0 0
    %4086 = vmatprep.subr.bf16.mxu0 0
    %4087 = vmatpush1.bf16.msra.mxu0 0
    %4088 = vmatprep.subr.bf16.mxu0 0
    %4089 = vmatpush1.bf16.msra.mxu0 0
    %4090 = vmatprep.subr.bf16.mxu0 0
    %4091 = vmatpush1.bf16.msra.mxu0 0
    %4092 = vmatprep.mubr.bf16.mxu0 0
    %4093 = vmatmul.mubr.bf16.gmra.mrb[0].mxu0 %v4058
    %v4094 = vpop.f32.mrb[0].mxu0
    %v4095 = vadd.f32 0.0, %v4094
    %v4096 = vpop.f32.mrb[0].mxu0
    %v4097 = vadd.f32 0.0, %v4096
    %v4098 = vpop.f32.mrb[0].mxu0
    %v4099 = vpop.f32.mrb[0].mxu0
    %4100 = vdwg.mxu0
    %v4101 = vld [vmem:[%s407] sm:$0xff]
    %v4102 = vadd.f32 %v4095, %v4101
    %v4103 = vld [vmem:[#allocation2 + $0x8] sm:$0xff]
    %v4104 = vadd.f32 %v4097, %v4103
    %v4105 = vxor.u32 %v4102, 2147483648
    %v4106 = vmul.f32 %v4105, 1.442695
    %v4107 = vpow.pop %v4106
    %v4108 = vadd.f32 %v4107, 1.0
    %v4109 = vrcp.pop %v4108
    %v4110 = vmul.f32 1.0, %v4109
    %v4111 = vxor.u32 %v4104, 2147483648
    %v4112 = vmul.f32 %v4111, 1.442695
    %v4113 = vpow.pop %v4112
    %v4114 = vadd.f32 %v4113, 1.0
    %v4115 = vrcp.pop %v4114
    %v4116 = vmul.f32 1.0, %v4115
    %v4117 = vmul.f32 %v4110, 2.0
    %v4118 = vsub.f32 %v4117, 1.0
    %v4119 = vmul.f32 %v4116, 2.0
    %v4120 = vsub.f32 %v4119, 1.0
    %v4121 = vmul.f32 %v4110, %v4023
    %4123 = vrot.lane.b32.xlu0 %v4118, 32
    %v4124 = vpop.permute.xlu0 %4123
    %v4126 = vmul.f32 %v4110, %v4124
    %4128 = vrot.lane.b32.xlu0 %v4126, 32
    %v4129 = vpop.permute.xlu0 %4128
    %v4131 = vadd.f32 %v4121, %v4129
    %v4132 = vmul.f32 %v4116, %v4034
    %4134 = vrot.lane.b32.xlu0 %v4120, 32
    %v4135 = vpop.permute.xlu0 %4134
    %v4137 = vmul.f32 %v4116, %v4135
    %4139 = vrot.lane.b32.xlu0 %v4137, 32
    %v4140 = vpop.permute.xlu0 %4139
    %v4142 = vadd.f32 %v4132, %v4140
    %v4143 = vtanh.pop %v4131
    %4145 = vrot.lane.b32.xlu0 %v4143, 32
    %v4146 = vpop.permute.xlu0 %4145
    %v4148 = vmul.f32 %v4110, %v4146
    %v4149 = vtanh.pop %v4142
    %4151 = vrot.lane.b32.xlu0 %v4149, 32
    %v4152 = vpop.permute.xlu0 %4151
    %v4154 = vmul.f32 %v4116, %v4152
    %4156 = vrot.lane.b32.xlu0 %v4154, 32
    %v4157 = vpop.permute.xlu0 %4156
    %v4159 = vsel %vm451, %v2178, %v2183
    %v4160 = vsel %vm228, %v4159, %v4148
    %vm4161 = vcmask 785408
    %v4162 = vsel %vm4161, %v4160, %v4157
    %4163 = vst [vmem:[#allocation13] sm:$0xff] %v4162
    // Predicated region
    $region50: #{tpu_custom_call.1} parent=1 // pred_check
      _
    $region51: #{tpu_custom_call.1} parent=1 // pred_check_branch
      %4165 = sbr.rel (0) target = $region53
    $region52: #{tpu_custom_call.1} parent=1 // pred_region
      %s4167 = ssub.s32 128, 128
      %4168 = vsyncadd [#allocation6], %s4167
      %s4170 = sshll.u32 [#allocation13], 4
      %s4171 = int_to_ptr.vmem [resolvable:$true] %s4170
      %4173 = dma.vmem_to_hbm [thread:$0]  %s4171, 128, %s7, [#allocation6]
    $region53: #{tpu_custom_call.1} parent=1 // pred_fallthru
      _
    // Predicated region
    $region54: #{tpu_custom_call.1} parent=1 // pred_check
      _
    $region55: #{tpu_custom_call.1} parent=1 // pred_check_branch
      %4175 = sbr.rel (0) target = $region57
    $region56: #{tpu_custom_call.1} parent=1 // pred_region
      %4176 = dma.done [#allocation6], 128
    $region57: #{tpu_custom_call.1} parent=1 // pred_fallthru
      _
    %4177 = vsyncpa [#allocation5], 1
    %4178 = vsyncpa [#allocation8], 1
    %4179 = vsyncpa [#allocation11], 1
    %4180 = vsyncpa [#allocation6], 1

</llo_original>
